<compile_context>
chip_gen: v7x
topology: tpu7x:2x2x1
jax: 0.10.0
libtpu: 0.0.40
codegen_flags: <defaults>
</compile_context>

<pallas_src>
import functools

import numpy as np
import jax
import jax.numpy as jnp
from jax.experimental import pallas as pl
from jax.experimental.pallas import tpu as pltpu


# ----------------------------------------------------------------------------
# Constant pooling / padding selection matrices (0/1, built host-side once).
# ----------------------------------------------------------------------------
def _pool1_select():
    # (272, 807): row p = (i+1)*16 + (j+1) of the zero-padded 17x16 conv2 input
    # grid picks the pooled value at conv1 "wide grid" (28 x 30) flat row
    # 60*i + 2*j.  All other rows stay zero == conv2's zero padding.
    s = np.zeros((17 * 16, 807), np.float32)
    for i in range(14):
        for j in range(14):
            s[(i + 1) * 16 + (j + 1), 60 * i + 2 * j] = 1.0
    return jnp.asarray(s, jnp.bfloat16)


def _pool2_select():
    # (49, 205): row 7*i + j picks the pooled value at conv2 "wide grid"
    # (14 x 16) flat row 32*i + 2*j.  Output order == NHWC flatten of (7,7,128).
    s = np.zeros((49, 205), np.float32)
    for i in range(7):
        for j in range(7):
            s[7 * i + j, 32 * i + 2 * j] = 1.0
    return jnp.asarray(s, jnp.bfloat16)


# ----------------------------------------------------------------------------
# Pallas kernels
# ----------------------------------------------------------------------------
def features_kernel(p1_ref, w1_ref, b1_ref, w2_ref, b2_ref, s1_ref, s2_ref,
                    o_ref):
    """Fused conv1+ReLU+pool1+conv2+ReLU+pool2 for one batch sample."""
    # ---- conv1 (1 -> 64, k=3, pad=1): im2col rows over the 28x30 "wide" grid.
    y1 = jnp.dot(p1_ref[0], w1_ref[...],
                 preferred_element_type=jnp.float32)              # (840, 64) f32
    y1 = jnp.maximum(y1 + b1_ref[...], 0.0)                       # bias + ReLU

    # ---- MaxPool2d(2,2) on the 28x30 wide grid (row stride 30): 4-way max of
    #      shifted row slices; garbage columns (w=28,29) are never selected.
    m1 = jnp.maximum(jnp.maximum(y1[0:807], y1[1:808]),
                     jnp.maximum(y1[30:837], y1[31:838]))         # (807, 64)

    # ---- compact stride-2 rows + zero-pad into the 17x16 conv2 input grid
    #      via a 0/1 selection matmul (MXU), then cast to bf16 for conv2.
    x2 = jnp.dot(s1_ref[...], m1.astype(jnp.bfloat16),
                 preferred_element_type=jnp.float32)              # (272, 64)
    x2 = x2.astype(jnp.bfloat16)

    # ---- conv2 (64 -> 128, k=3, pad=1): 9 shifted contiguous slabs, each a
    #      (224, 64) x (64, 128) matmul accumulated in f32.
    w2 = w2_ref[...]                                              # (576, 128) bf16
    acc = jnp.zeros((224, 128), jnp.float32)
    for ky in range(3):
        for kx in range(3):
            off = ky * 16 + kx
            t = ky * 3 + kx
            acc += jnp.dot(x2[off:off + 224], w2[t * 64:(t + 1) * 64, :],
                           preferred_element_type=jnp.float32)
    y2 = jnp.maximum(acc + b2_ref[...], 0.0)                      # (224, 128)

    # ---- MaxPool2d(2,2) on the 14x16 wide grid (row stride 16).
    m2 = jnp.maximum(jnp.maximum(y2[0:205], y2[1:206]),
                     jnp.maximum(y2[16:221], y2[17:222]))         # (205, 128)

    # ---- compact to the (49, 128) pooled feature (NHWC flatten order).
    feat = jnp.dot(s2_ref[...], m2.astype(jnp.bfloat16),
                   preferred_element_type=jnp.float32)            # (49, 128)
    o_ref[0] = feat.astype(o_ref.dtype)


def classifier_kernel(x_ref, w1_ref, b1_ref, w2_ref, b2_ref, o_ref, acc_ref):
    """K-tiled: acc += x_k @ w1_k ; at last k: relu(acc+b1) @ w2 + b2."""
    k = pl.program_id(0)

    @pl.when(k == 0)
    def _():
        acc_ref[...] = jnp.zeros_like(acc_ref)

    acc_ref[...] += jnp.dot(x_ref[...], w1_ref[...],
                            preferred_element_type=jnp.float32)

    @pl.when(k == pl.num_programs(0) - 1)
    def _():
        h = jnp.maximum(acc_ref[...] + b1_ref[...], 0.0)
        # nn.Dropout(p=0.5): eval-mode identity.
        # TODO(synk): train-mode dropout RNG has no torch-exact equivalent.
        o_ref[...] = (jnp.dot(h.astype(jnp.bfloat16), w2_ref[...],
                              preferred_element_type=jnp.float32)
                      + b2_ref[...]).astype(o_ref.dtype)


# ----------------------------------------------------------------------------
# Pallas call wrappers
# ----------------------------------------------------------------------------
def features_fused(p1, w1, b1, w2, b2, s1, s2):
    """p1: (B, 840, 9) bf16 conv1 patches. Returns (B, 49, 128) bf16 features."""
    B = p1.shape[0]
    return pl.pallas_call(
        features_kernel,
        out_shape=jax.ShapeDtypeStruct((B, 49, 128), jnp.bfloat16),
        grid=(B,),
        in_specs=[
            pl.BlockSpec((1, 840, 9), lambda b: (b, 0, 0)),
            pl.BlockSpec((9, 64), lambda b: (0, 0)),
            pl.BlockSpec((1, 64), lambda b: (0, 0)),
            pl.BlockSpec((576, 128), lambda b: (0, 0)),
            pl.BlockSpec((1, 128), lambda b: (0, 0)),
            pl.BlockSpec((272, 807), lambda b: (0, 0)),
            pl.BlockSpec((49, 205), lambda b: (0, 0)),
        ],
        out_specs=pl.BlockSpec((1, 49, 128), lambda b: (b, 0, 0)),
        compiler_params=pltpu.CompilerParams(
            dimension_semantics=("parallel",)),
    )(p1, w1, b1.reshape(1, 64), w2, b2.reshape(1, 128), s1, s2)


def classifier(x, w1, b1, w2, b2, tk=896):
    """x: (B, 6272) bf16 -> (B, 10) f32. K tiled by tk (multiple of 128)."""
    B, K = x.shape
    N1 = w1.shape[1]
    N2 = w2.shape[1]
    assert K % tk == 0 and tk % 128 == 0
    nk = K // tk
    return pl.pallas_call(
        classifier_kernel,
        out_shape=jax.ShapeDtypeStruct((B, N2), jnp.float32),
        grid_spec=pltpu.PrefetchScalarGridSpec(
            num_scalar_prefetch=0,
            grid=(nk,),
            in_specs=[pl.BlockSpec((B, tk), lambda k: (0, k)),
                      pl.BlockSpec((tk, N1), lambda k: (k, 0)),
                      pl.BlockSpec((1, N1), lambda k: (0, 0)),
                      pl.BlockSpec((N1, N2), lambda k: (0, 0)),
                      pl.BlockSpec((1, N2), lambda k: (0, 0))],
            out_specs=pl.BlockSpec((B, N2), lambda k: (0, 0)),
            scratch_shapes=[pltpu.VMEM((B, N1), jnp.float32)]),
        compiler_params=pltpu.CompilerParams(
            dimension_semantics=("arbitrary",)),
    )(x, w1, b1.reshape(1, N1), w2, b2.reshape(1, N2))


# ----------------------------------------------------------------------------
# Glue: cheap conv1 patch build (Cin=1, ~15 KB/sample; everything else fused)
# ----------------------------------------------------------------------------
def conv1_patches(x_b_28_28):
    """(B, 28, 28) f32 -> (B, 840, 9) bf16 'wide grid' im2col rows for conv1."""
    B = x_b_28_28.shape[0]
    xpad = jnp.pad(x_b_28_28, ((0, 0), (1, 2), (1, 1)))   # (B, 31, 30)
    xflat = xpad.reshape(B, 31 * 30)
    offs = [ky * 30 + kx for ky in range(3) for kx in range(3)]
    p1 = jnp.stack([xflat[:, o:o + 840] for o in offs], axis=-1)  # (B, 840, 9)
    return p1.astype(jnp.bfloat16)


# ----------------------------------------------------------------------------
# Full forward pass
# ----------------------------------------------------------------------------
@functools.partial(jax.jit, static_argnames=())
def vggnet_forward(x_nchw, params):
    B = x_nchw.shape[0]
    x = x_nchw.reshape(B, 28, 28).astype(jnp.float32)      # Cin = 1

    p1 = conv1_patches(x)                                  # (B, 840, 9) bf16
    feat = features_fused(p1,
                          params["w_conv1"], params["b_conv1"],
                          params["w_conv2"], params["b_conv2"],
                          params["pool1_sel"], params["pool2_sel"])  # (B,49,128)
    feat = feat.reshape(B, 49 * 128)                       # NHWC flatten, bf16

    return classifier(feat, params["w_fc1"], params["b_fc1"],
                      params["w_fc2"], params["b_fc2"])


def init_params(key):
    ks = jax.random.split(key, 8)

    def rand(k, shape, fan_in, dtype=jnp.float32):
        return (jax.random.normal(k, shape, jnp.float32)
                / jnp.sqrt(fan_in)).astype(dtype)

    return {
        # conv weights stored as (9*Cin, Cout), rows ordered (ky, kx, cin); bf16
        "w_conv1": rand(ks[0], (9 * 1, 64), 9 * 1, jnp.bfloat16),
        "b_conv1": rand(ks[1], (64,), 9 * 1),
        "w_conv2": rand(ks[2], (9 * 64, 128), 9 * 64, jnp.bfloat16),
        "b_conv2": rand(ks[3], (128,), 9 * 64),
        "w_fc1":   rand(ks[4], (128 * 7 * 7, 1024), 128 * 7 * 7, jnp.bfloat16),
        "b_fc1":   rand(ks[5], (1024,), 128 * 7 * 7),
        "w_fc2":   rand(ks[6], (1024, 10), 1024, jnp.bfloat16),
        "b_fc2":   rand(ks[7], (10,), 1024),
        # constant 0/1 pooling/padding selection matrices (not trainable)
        "pool1_sel": _pool1_select(),
        "pool2_sel": _pool2_select(),
    }


if __name__ == "__main__":
    key = jax.random.PRNGKey(0)
    k_x, k_p = jax.random.split(key)

    # MNIST-like input: batch=2, 1 channel, 28x28 (required by Linear(128*7*7, ...))
    x = jax.random.normal(k_x, (2, 1, 28, 28), jnp.float32)
    params = init_params(k_p)

    out = vggnet_forward(x, params)
    out = jax.block_until_ready(out)

    assert out.shape == (2, 10), out.shape
    assert bool(jnp.all(jnp.isfinite(out)))
    print("KERNEL_OK")
</pallas_src>

<mosaic_0001>
module attributes {stable_mosaic.version = 11 : i64} {
  func.func @features_kernel(%arg0: i32, %arg1: memref<1x840x9xbf16, #tpu.memory_space<vmem>>, %arg2: memref<9x64xbf16, #tpu.memory_space<vmem>>, %arg3: memref<1x64xf32, #tpu.memory_space<vmem>>, %arg4: memref<576x128xbf16, #tpu.memory_space<vmem>>, %arg5: memref<1x128xf32, #tpu.memory_space<vmem>>, %arg6: memref<272x807xbf16, #tpu.memory_space<vmem>>, %arg7: memref<49x205xbf16, #tpu.memory_space<vmem>>, %arg8: memref<1x49x128xbf16, #tpu.memory_space<vmem>>) attributes {dimension_semantics = [#tpu.dimension_semantics<parallel>], iteration_bounds = array<i64: 2>, scalar_prefetch = 0 : i64, scratch_operands = 0 : i64, tpu.core_type = #tpu.core_type<tc>, window_params = [{transform_indices = @transform_0, window_bounds = array<i64: 1, 840, 9>}, {pipeline_mode = #tpu.pipeline_mode<synchronous>, transform_indices = @transform_1, window_bounds = array<i64: 9, 64>}, {pipeline_mode = #tpu.pipeline_mode<synchronous>, transform_indices = @transform_2, window_bounds = array<i64: 1, 64>}, {pipeline_mode = #tpu.pipeline_mode<synchronous>, transform_indices = @transform_3, window_bounds = array<i64: 576, 128>}, {pipeline_mode = #tpu.pipeline_mode<synchronous>, transform_indices = @transform_4, window_bounds = array<i64: 1, 128>}, {pipeline_mode = #tpu.pipeline_mode<synchronous>, transform_indices = @transform_5, window_bounds = array<i64: 272, 807>}, {pipeline_mode = #tpu.pipeline_mode<synchronous>, transform_indices = @transform_6, window_bounds = array<i64: 49, 205>}, {transform_indices = @transform_7, window_bounds = array<i64: 1, 49, 128>}]} {
    %c0 = arith.constant 0 : index
    %c0_0 = arith.constant 0 : index
    %c0_1 = arith.constant 0 : index
    %0 = vector.load %arg1[%c0, %c0_0, %c0_1] : memref<1x840x9xbf16, #tpu.memory_space<vmem>>, vector<1x840x9xbf16>
    %1 = vector.shape_cast %0 : vector<1x840x9xbf16> to vector<840x9xbf16>
    %c0_2 = arith.constant 0 : index
    %c0_3 = arith.constant 0 : index
    %2 = vector.load %arg2[%c0_2, %c0_3] : memref<9x64xbf16, #tpu.memory_space<vmem>>, vector<9x64xbf16>
    %cst = arith.constant dense<0.000000e+00> : vector<840x64xf32>
    %3 = tpu.matmul %1, %2, %cst {dimension_numbers = #tpu.dot_dimension_numbers<[1], [0], [0], [1], [0, 0, 1, 1], [], []>} : vector<840x9xbf16>, vector<9x64xbf16>, vector<840x64xf32> -> vector<840x64xf32>
    %c0_4 = arith.constant 0 : index
    %c0_5 = arith.constant 0 : index
    %4 = vector.load %arg3[%c0_4, %c0_5] : memref<1x64xf32, #tpu.memory_space<vmem>>, vector<1x64xf32>
    %5 = vector.broadcast %4 : vector<1x64xf32> to vector<840x64xf32>
    %6 = arith.addf %3, %5 : vector<840x64xf32>
    %cst_6 = arith.constant 0.000000e+00 : f32
    %7 = vector.broadcast %cst_6 : f32 to vector<840x64xf32>
    %8 = arith.maximumf %6, %7 : vector<840x64xf32>
    %9 = vector.extract_strided_slice %8 {offsets = [0, 0], sizes = [807, 64], strides = [1, 1]} : vector<840x64xf32> to vector<807x64xf32>
    %10 = vector.extract_strided_slice %8 {offsets = [1, 0], sizes = [807, 64], strides = [1, 1]} : vector<840x64xf32> to vector<807x64xf32>
    %11 = arith.maximumf %9, %10 : vector<807x64xf32>
    %12 = vector.extract_strided_slice %8 {offsets = [30, 0], sizes = [807, 64], strides = [1, 1]} : vector<840x64xf32> to vector<807x64xf32>
    %13 = vector.extract_strided_slice %8 {offsets = [31, 0], sizes = [807, 64], strides = [1, 1]} : vector<840x64xf32> to vector<807x64xf32>
    %14 = arith.maximumf %12, %13 : vector<807x64xf32>
    %15 = arith.maximumf %11, %14 : vector<807x64xf32>
    %c0_7 = arith.constant 0 : index
    %c0_8 = arith.constant 0 : index
    %16 = vector.load %arg6[%c0_7, %c0_8] : memref<272x807xbf16, #tpu.memory_space<vmem>>, vector<272x807xbf16>
    %17 = arith.truncf %15 : vector<807x64xf32> to vector<807x64xbf16>
    %cst_9 = arith.constant dense<0.000000e+00> : vector<272x64xf32>
    %18 = tpu.matmul %16, %17, %cst_9 {dimension_numbers = #tpu.dot_dimension_numbers<[1], [0], [0], [1], [0, 0, 1, 1], [], []>} : vector<272x807xbf16>, vector<807x64xbf16>, vector<272x64xf32> -> vector<272x64xf32>
    %19 = arith.truncf %18 : vector<272x64xf32> to vector<272x64xbf16>
    %c0_10 = arith.constant 0 : index
    %c0_11 = arith.constant 0 : index
    %20 = vector.load %arg4[%c0_10, %c0_11] : memref<576x128xbf16, #tpu.memory_space<vmem>>, vector<576x128xbf16>
    %cst_12 = arith.constant 0.000000e+00 : f32
    %21 = vector.broadcast %cst_12 : f32 to vector<224x128xf32>
    %22 = vector.extract_strided_slice %19 {offsets = [0, 0], sizes = [224, 64], strides = [1, 1]} : vector<272x64xbf16> to vector<224x64xbf16>
    %23 = vector.extract_strided_slice %20 {offsets = [0, 0], sizes = [64, 128], strides = [1, 1]} : vector<576x128xbf16> to vector<64x128xbf16>
    %cst_13 = arith.constant dense<0.000000e+00> : vector<224x128xf32>
    %24 = tpu.matmul %22, %23, %cst_13 {dimension_numbers = #tpu.dot_dimension_numbers<[1], [0], [0], [1], [0, 0, 1, 1], [], []>} : vector<224x64xbf16>, vector<64x128xbf16>, vector<224x128xf32> -> vector<224x128xf32>
    %25 = arith.addf %21, %24 : vector<224x128xf32>
    %26 = vector.extract_strided_slice %19 {offsets = [1, 0], sizes = [224, 64], strides = [1, 1]} : vector<272x64xbf16> to vector<224x64xbf16>
    %27 = vector.extract_strided_slice %20 {offsets = [64, 0], sizes = [64, 128], strides = [1, 1]} : vector<576x128xbf16> to vector<64x128xbf16>
    %cst_14 = arith.constant dense<0.000000e+00> : vector<224x128xf32>
    %28 = tpu.matmul %26, %27, %cst_14 {dimension_numbers = #tpu.dot_dimension_numbers<[1], [0], [0], [1], [0, 0, 1, 1], [], []>} : vector<224x64xbf16>, vector<64x128xbf16>, vector<224x128xf32> -> vector<224x128xf32>
    %29 = arith.addf %25, %28 : vector<224x128xf32>
    %30 = vector.extract_strided_slice %19 {offsets = [2, 0], sizes = [224, 64], strides = [1, 1]} : vector<272x64xbf16> to vector<224x64xbf16>
    %31 = vector.extract_strided_slice %20 {offsets = [128, 0], sizes = [64, 128], strides = [1, 1]} : vector<576x128xbf16> to vector<64x128xbf16>
    %cst_15 = arith.constant dense<0.000000e+00> : vector<224x128xf32>
    %32 = tpu.matmul %30, %31, %cst_15 {dimension_numbers = #tpu.dot_dimension_numbers<[1], [0], [0], [1], [0, 0, 1, 1], [], []>} : vector<224x64xbf16>, vector<64x128xbf16>, vector<224x128xf32> -> vector<224x128xf32>
    %33 = arith.addf %29, %32 : vector<224x128xf32>
    %34 = vector.extract_strided_slice %19 {offsets = [16, 0], sizes = [224, 64], strides = [1, 1]} : vector<272x64xbf16> to vector<224x64xbf16>
    %35 = vector.extract_strided_slice %20 {offsets = [192, 0], sizes = [64, 128], strides = [1, 1]} : vector<576x128xbf16> to vector<64x128xbf16>
    %cst_16 = arith.constant dense<0.000000e+00> : vector<224x128xf32>
    %36 = tpu.matmul %34, %35, %cst_16 {dimension_numbers = #tpu.dot_dimension_numbers<[1], [0], [0], [1], [0, 0, 1, 1], [], []>} : vector<224x64xbf16>, vector<64x128xbf16>, vector<224x128xf32> -> vector<224x128xf32>
    %37 = arith.addf %33, %36 : vector<224x128xf32>
    %38 = vector.extract_strided_slice %19 {offsets = [17, 0], sizes = [224, 64], strides = [1, 1]} : vector<272x64xbf16> to vector<224x64xbf16>
    %39 = vector.extract_strided_slice %20 {offsets = [256, 0], sizes = [64, 128], strides = [1, 1]} : vector<576x128xbf16> to vector<64x128xbf16>
    %cst_17 = arith.constant dense<0.000000e+00> : vector<224x128xf32>
    %40 = tpu.matmul %38, %39, %cst_17 {dimension_numbers = #tpu.dot_dimension_numbers<[1], [0], [0], [1], [0, 0, 1, 1], [], []>} : vector<224x64xbf16>, vector<64x128xbf16>, vector<224x128xf32> -> vector<224x128xf32>
    %41 = arith.addf %37, %40 : vector<224x128xf32>
    %42 = vector.extract_strided_slice %19 {offsets = [18, 0], sizes = [224, 64], strides = [1, 1]} : vector<272x64xbf16> to vector<224x64xbf16>
    %43 = vector.extract_strided_slice %20 {offsets = [320, 0], sizes = [64, 128], strides = [1, 1]} : vector<576x128xbf16> to vector<64x128xbf16>
    %cst_18 = arith.constant dense<0.000000e+00> : vector<224x128xf32>
    %44 = tpu.matmul %42, %43, %cst_18 {dimension_numbers = #tpu.dot_dimension_numbers<[1], [0], [0], [1], [0, 0, 1, 1], [], []>} : vector<224x64xbf16>, vector<64x128xbf16>, vector<224x128xf32> -> vector<224x128xf32>
    %45 = arith.addf %41, %44 : vector<224x128xf32>
    %46 = vector.extract_strided_slice %19 {offsets = [32, 0], sizes = [224, 64], strides = [1, 1]} : vector<272x64xbf16> to vector<224x64xbf16>
    %47 = vector.extract_strided_slice %20 {offsets = [384, 0], sizes = [64, 128], strides = [1, 1]} : vector<576x128xbf16> to vector<64x128xbf16>
    %cst_19 = arith.constant dense<0.000000e+00> : vector<224x128xf32>
    %48 = tpu.matmul %46, %47, %cst_19 {dimension_numbers = #tpu.dot_dimension_numbers<[1], [0], [0], [1], [0, 0, 1, 1], [], []>} : vector<224x64xbf16>, vector<64x128xbf16>, vector<224x128xf32> -> vector<224x128xf32>
    %49 = arith.addf %45, %48 : vector<224x128xf32>
    %50 = vector.extract_strided_slice %19 {offsets = [33, 0], sizes = [224, 64], strides = [1, 1]} : vector<272x64xbf16> to vector<224x64xbf16>
    %51 = vector.extract_strided_slice %20 {offsets = [448, 0], sizes = [64, 128], strides = [1, 1]} : vector<576x128xbf16> to vector<64x128xbf16>
    %cst_20 = arith.constant dense<0.000000e+00> : vector<224x128xf32>
    %52 = tpu.matmul %50, %51, %cst_20 {dimension_numbers = #tpu.dot_dimension_numbers<[1], [0], [0], [1], [0, 0, 1, 1], [], []>} : vector<224x64xbf16>, vector<64x128xbf16>, vector<224x128xf32> -> vector<224x128xf32>
    %53 = arith.addf %49, %52 : vector<224x128xf32>
    %54 = vector.extract_strided_slice %19 {offsets = [34, 0], sizes = [224, 64], strides = [1, 1]} : vector<272x64xbf16> to vector<224x64xbf16>
    %55 = vector.extract_strided_slice %20 {offsets = [512, 0], sizes = [64, 128], strides = [1, 1]} : vector<576x128xbf16> to vector<64x128xbf16>
    %cst_21 = arith.constant dense<0.000000e+00> : vector<224x128xf32>
    %56 = tpu.matmul %54, %55, %cst_21 {dimension_numbers = #tpu.dot_dimension_numbers<[1], [0], [0], [1], [0, 0, 1, 1], [], []>} : vector<224x64xbf16>, vector<64x128xbf16>, vector<224x128xf32> -> vector<224x128xf32>
    %57 = arith.addf %53, %56 : vector<224x128xf32>
    %c0_22 = arith.constant 0 : index
    %c0_23 = arith.constant 0 : index
    %58 = vector.load %arg5[%c0_22, %c0_23] : memref<1x128xf32, #tpu.memory_space<vmem>>, vector<1x128xf32>
    %59 = vector.broadcast %58 : vector<1x128xf32> to vector<224x128xf32>
    %60 = arith.addf %57, %59 : vector<224x128xf32>
    %cst_24 = arith.constant 0.000000e+00 : f32
    %61 = vector.broadcast %cst_24 : f32 to vector<224x128xf32>
    %62 = arith.maximumf %60, %61 : vector<224x128xf32>
    %63 = vector.extract_strided_slice %62 {offsets = [0, 0], sizes = [205, 128], strides = [1, 1]} : vector<224x128xf32> to vector<205x128xf32>
    %64 = vector.extract_strided_slice %62 {offsets = [1, 0], sizes = [205, 128], strides = [1, 1]} : vector<224x128xf32> to vector<205x128xf32>
    %65 = arith.maximumf %63, %64 : vector<205x128xf32>
    %66 = vector.extract_strided_slice %62 {offsets = [16, 0], sizes = [205, 128], strides = [1, 1]} : vector<224x128xf32> to vector<205x128xf32>
    %67 = vector.extract_strided_slice %62 {offsets = [17, 0], sizes = [205, 128], strides = [1, 1]} : vector<224x128xf32> to vector<205x128xf32>
    %68 = arith.maximumf %66, %67 : vector<205x128xf32>
    %69 = arith.maximumf %65, %68 : vector<205x128xf32>
    %c0_25 = arith.constant 0 : index
    %c0_26 = arith.constant 0 : index
    %70 = vector.load %arg7[%c0_25, %c0_26] : memref<49x205xbf16, #tpu.memory_space<vmem>>, vector<49x205xbf16>
    %71 = arith.truncf %69 : vector<205x128xf32> to vector<205x128xbf16>
    %cst_27 = arith.constant dense<0.000000e+00> : vector<49x128xf32>
    %72 = tpu.matmul %70, %71, %cst_27 {dimension_numbers = #tpu.dot_dimension_numbers<[1], [0], [0], [1], [0, 0, 1, 1], [], []>} : vector<49x205xbf16>, vector<205x128xbf16>, vector<49x128xf32> -> vector<49x128xf32>
    %73 = arith.truncf %72 : vector<49x128xf32> to vector<49x128xbf16>
    %c0_28 = arith.constant 0 : index
    %c0_29 = arith.constant 0 : index
    %c0_30 = arith.constant 0 : index
    %74 = vector.load %arg8[%c0_28, %c0_29, %c0_30] : memref<1x49x128xbf16, #tpu.memory_space<vmem>>, vector<1x49x128xbf16>
    %75 = vector.shape_cast %74 : vector<1x49x128xbf16> to vector<49x128xbf16>
    %76 = vector.shape_cast %73 : vector<49x128xbf16> to vector<1x49x128xbf16>
    tpu.vector_store %arg8[%c0_28, %c0_29, %c0_30], %76 {strides = array<i32>} : memref<1x49x128xbf16, #tpu.memory_space<vmem>>, vector<1x49x128xbf16>,
    return
  }
  func.func @transform_0(%arg0: i32) -> (i32, i32, i32) {
    %c0_i32 = arith.constant 0 : i32
    %c0_i32_0 = arith.constant 0 : i32
    %c0_i32_1 = arith.constant 0 : i32
    return %arg0, %c0_i32, %c0_i32_0 : i32, i32, i32
  }
  func.func @transform_1(%arg0: i32) -> (i32, i32) {
    %c0_i32 = arith.constant 0 : i32
    %c0_i32_0 = arith.constant 0 : i32
    %c0_i32_1 = arith.constant 0 : i32
    return %c0_i32, %c0_i32_0 : i32, i32
  }
  func.func @transform_2(%arg0: i32) -> (i32, i32) {
    %c0_i32 = arith.constant 0 : i32
    %c0_i32_0 = arith.constant 0 : i32
    %c0_i32_1 = arith.constant 0 : i32
    return %c0_i32, %c0_i32_0 : i32, i32
  }
  func.func @transform_3(%arg0: i32) -> (i32, i32) {
    %c0_i32 = arith.constant 0 : i32
    %c0_i32_0 = arith.constant 0 : i32
    %c0_i32_1 = arith.constant 0 : i32
    return %c0_i32, %c0_i32_0 : i32, i32
  }
  func.func @transform_4(%arg0: i32) -> (i32, i32) {
    %c0_i32 = arith.constant 0 : i32
    %c0_i32_0 = arith.constant 0 : i32
    %c0_i32_1 = arith.constant 0 : i32
    return %c0_i32, %c0_i32_0 : i32, i32
  }
  func.func @transform_5(%arg0: i32) -> (i32, i32) {
    %c0_i32 = arith.constant 0 : i32
    %c0_i32_0 = arith.constant 0 : i32
    %c0_i32_1 = arith.constant 0 : i32
    return %c0_i32, %c0_i32_0 : i32, i32
  }
  func.func @transform_6(%arg0: i32) -> (i32, i32) {
    %c0_i32 = arith.constant 0 : i32
    %c0_i32_0 = arith.constant 0 : i32
    %c0_i32_1 = arith.constant 0 : i32
    return %c0_i32, %c0_i32_0 : i32, i32
  }
  func.func @transform_7(%arg0: i32) -> (i32, i32, i32) {
    %c0_i32 = arith.constant 0 : i32
    %c0_i32_0 = arith.constant 0 : i32
    %c0_i32_1 = arith.constant 0 : i32
    return %arg0, %c0_i32, %c0_i32_0 : i32, i32, i32
  }
}

module attributes {stable_mosaic.version = 11 : i64} {
  func.func @classifier_kernel(%arg0: i32, %arg1: memref<2x896xbf16, #tpu.memory_space<vmem>>, %arg2: memref<896x1024xbf16, #tpu.memory_space<vmem>>, %arg3: memref<1x1024xf32, #tpu.memory_space<vmem>>, %arg4: memref<1024x10xbf16, #tpu.memory_space<vmem>>, %arg5: memref<1x10xf32, #tpu.memory_space<vmem>>, %arg6: memref<2x10xf32, #tpu.memory_space<vmem>>, %arg7: memref<2x1024xf32, #tpu.memory_space<vmem>>) attributes {dimension_semantics = [#tpu.dimension_semantics<arbitrary>], iteration_bounds = array<i64: 7>, scalar_prefetch = 0 : i64, scratch_operands = 1 : i64, tpu.core_type = #tpu.core_type<tc>, window_params = [{transform_indices = @transform_0, window_bounds = array<i64: 2, 896>}, {transform_indices = @transform_1, window_bounds = array<i64: 896, 1024>}, {pipeline_mode = #tpu.pipeline_mode<synchronous>, transform_indices = @transform_2, window_bounds = array<i64: 1, 1024>}, {pipeline_mode = #tpu.pipeline_mode<synchronous>, transform_indices = @transform_3, window_bounds = array<i64: 1024, 10>}, {pipeline_mode = #tpu.pipeline_mode<synchronous>, transform_indices = @transform_4, window_bounds = array<i64: 1, 10>}, {pipeline_mode = #tpu.pipeline_mode<synchronous>, transform_indices = @transform_5, window_bounds = array<i64: 2, 10>}]} {
    %c0_i32 = arith.constant 0 : i32
    %0 = arith.cmpi eq, %arg0, %c0_i32 : i32
    %1 = arith.extui %0 : i1 to i32
    %c0_i32_0 = arith.constant 0 : i32
    %2 = arith.cmpi ne, %1, %c0_i32_0 : i32
    scf.if %2 {
      %cst_9 = arith.constant 0.000000e+00 : f32
      %12 = vector.broadcast %cst_9 : f32 to vector<2x1024xf32>
      %c0_10 = arith.constant 0 : index
      %c0_11 = arith.constant 0 : index
      %13 = vector.load %arg7[%c0_10, %c0_11] : memref<2x1024xf32, #tpu.memory_space<vmem>>, vector<2x1024xf32>
      tpu.vector_store %arg7[%c0_10, %c0_11], %12 {strides = array<i32>} : memref<2x1024xf32, #tpu.memory_space<vmem>>, vector<2x1024xf32>,
    } else {
    }
    %c0 = arith.constant 0 : index
    %c0_1 = arith.constant 0 : index
    %3 = vector.load %arg7[%c0, %c0_1] : memref<2x1024xf32, #tpu.memory_space<vmem>>, vector<2x1024xf32>
    %c0_2 = arith.constant 0 : index
    %c0_3 = arith.constant 0 : index
    %4 = vector.load %arg1[%c0_2, %c0_3] : memref<2x896xbf16, #tpu.memory_space<vmem>>, vector<2x896xbf16>
    %c0_4 = arith.constant 0 : index
    %c0_5 = arith.constant 0 : index
    %5 = vector.load %arg2[%c0_4, %c0_5] : memref<896x1024xbf16, #tpu.memory_space<vmem>>, vector<896x1024xbf16>
    %cst = arith.constant dense<0.000000e+00> : vector<2x1024xf32>
    %6 = tpu.matmul %4, %5, %cst {dimension_numbers = #tpu.dot_dimension_numbers<[1], [0], [0], [1], [0, 0, 1, 1], [], []>} : vector<2x896xbf16>, vector<896x1024xbf16>, vector<2x1024xf32> -> vector<2x1024xf32>
    %7 = arith.addf %3, %6 : vector<2x1024xf32>
    %c0_6 = arith.constant 0 : index
    %c0_7 = arith.constant 0 : index
    %8 = vector.load %arg7[%c0_6, %c0_7] : memref<2x1024xf32, #tpu.memory_space<vmem>>, vector<2x1024xf32>
    tpu.vector_store %arg7[%c0_6, %c0_7], %7 {strides = array<i32>} : memref<2x1024xf32, #tpu.memory_space<vmem>>, vector<2x1024xf32>,
    %c6_i32 = arith.constant 6 : i32
    %9 = arith.cmpi eq, %arg0, %c6_i32 : i32
    %10 = arith.extui %9 : i1 to i32
    %c0_i32_8 = arith.constant 0 : i32
    %11 = arith.cmpi ne, %10, %c0_i32_8 : i32
    scf.if %11 {
      %c0_9 = arith.constant 0 : index
      %c0_10 = arith.constant 0 : index
      %12 = vector.load %arg7[%c0_9, %c0_10] : memref<2x1024xf32, #tpu.memory_space<vmem>>, vector<2x1024xf32>
      %c0_11 = arith.constant 0 : index
      %c0_12 = arith.constant 0 : index
      %13 = vector.load %arg3[%c0_11, %c0_12] : memref<1x1024xf32, #tpu.memory_space<vmem>>, vector<1x1024xf32>
      %14 = vector.broadcast %13 : vector<1x1024xf32> to vector<2x1024xf32>
      %15 = arith.addf %12, %14 : vector<2x1024xf32>
      %cst_13 = arith.constant 0.000000e+00 : f32
      %16 = vector.broadcast %cst_13 : f32 to vector<2x1024xf32>
      %17 = arith.maximumf %15, %16 : vector<2x1024xf32>
      %18 = arith.truncf %17 : vector<2x1024xf32> to vector<2x1024xbf16>
      %c0_14 = arith.constant 0 : index
      %c0_15 = arith.constant 0 : index
      %19 = vector.load %arg4[%c0_14, %c0_15] : memref<1024x10xbf16, #tpu.memory_space<vmem>>, vector<1024x10xbf16>
      %cst_16 = arith.constant dense<0.000000e+00> : vector<2x10xf32>
      %20 = tpu.matmul %18, %19, %cst_16 {dimension_numbers = #tpu.dot_dimension_numbers<[1], [0], [0], [1], [0, 0, 1, 1], [], []>} : vector<2x1024xbf16>, vector<1024x10xbf16>, vector<2x10xf32> -> vector<2x10xf32>
      %c0_17 = arith.constant 0 : index
      %c0_18 = arith.constant 0 : index
      %21 = vector.load %arg5[%c0_17, %c0_18] : memref<1x10xf32, #tpu.memory_space<vmem>>, vector<1x10xf32>
      %22 = vector.broadcast %21 : vector<1x10xf32> to vector<2x10xf32>
      %23 = arith.addf %20, %22 : vector<2x10xf32>
      %c0_19 = arith.constant 0 : index
      %c0_20 = arith.constant 0 : index
      %24 = vector.load %arg6[%c0_19, %c0_20] : memref<2x10xf32, #tpu.memory_space<vmem>>, vector<2x10xf32>
      tpu.vector_store %arg6[%c0_19, %c0_20], %23 {strides = array<i32>} : memref<2x10xf32, #tpu.memory_space<vmem>>, vector<2x10xf32>,
    } else {
    }
    return
  }
  func.func @transform_0(%arg0: i32) -> (i32, i32) {
    %c0_i32 = arith.constant 0 : i32
    %c0_i32_0 = arith.constant 0 : i32
    return %c0_i32, %arg0 : i32, i32
  }
  func.func @transform_1(%arg0: i32) -> (i32, i32) {
    %c0_i32 = arith.constant 0 : i32
    %c0_i32_0 = arith.constant 0 : i32
    return %arg0, %c0_i32 : i32, i32
  }
  func.func @transform_2(%arg0: i32) -> (i32, i32) {
    %c0_i32 = arith.constant 0 : i32
    %c0_i32_0 = arith.constant 0 : i32
    %c0_i32_1 = arith.constant 0 : i32
    return %c0_i32, %c0_i32_0 : i32, i32
  }
  func.func @transform_3(%arg0: i32) -> (i32, i32) {
    %c0_i32 = arith.constant 0 : i32
    %c0_i32_0 = arith.constant 0 : i32
    %c0_i32_1 = arith.constant 0 : i32
    return %c0_i32, %c0_i32_0 : i32, i32
  }
  func.func @transform_4(%arg0: i32) -> (i32, i32) {
    %c0_i32 = arith.constant 0 : i32
    %c0_i32_0 = arith.constant 0 : i32
    %c0_i32_1 = arith.constant 0 : i32
    return %c0_i32, %c0_i32_0 : i32, i32
  }
  func.func @transform_5(%arg0: i32) -> (i32, i32) {
    %c0_i32 = arith.constant 0 : i32
    %c0_i32_0 = arith.constant 0 : i32
    %c0_i32_1 = arith.constant 0 : i32
    return %c0_i32, %c0_i32_0 : i32, i32
  }
}

</mosaic_0001>

<llo_original>
// kernel: vggnet_forward.3
$region0: #{vggnet_forward.3}
  #allocation0 [shape = 'u32[]', space=smem, size = 0x4, offset = 0x4, fixed_abs, tag = 'smem constant byte address 0x4 - core index']
  #allocation1 [shape = 'u32[144,128]{1,0:T(1,128)}', space=vmem, size = 0x12000, scoped, tag = 'internal scratch']
  #allocation2 [shape = 'f32[2,1024]{1,0:T(2,128)}', space=vmem, size = 0x2000, scoped, tag = 'scratch operand']
  %s0 = inlined_call_operand.vmem [shape: bf16[2,6272], index: 0, kind: input, shape index: {}]
  %s1 = inlined_call_operand.hbm [shape: bf16[6272,1024], index: 1, kind: input, shape index: {}]
  %s2 = inlined_call_operand.hbm [shape: f32[1,1024], index: 2, kind: input, shape index: {}]
  %s3 = inlined_call_operand.vmem [shape: bf16[1024,10], index: 3, kind: input, shape index: {}]
  %s4 = inlined_call_operand.hbm [shape: f32[1,10], index: 4, kind: input, shape index: {}]
  %s5 = inlined_call_operand.hbm [shape: f32[2,10], index: 5, kind: output, shape index: {}]
  %s6 = sld [smem:[#allocation0]]
  $region73: #{vggnet_forward.3} parent=0
    _
  %s8 = ssub.s32 1, %s6
  %s9 = scalar_select 0, %s8, %s6
  $region1: #{vggnet_forward.3} parent=0
    #allocation3 [shape = 'u8[3670016]{0}', space=vmem, size = 0x380000, scoped, tag = 'input window, operand 1']
    #allocation4 [shape = 's32[2]{0}', space=sflag, size = 0x8, scoped, tag = 'scoped memory for vggnet_forward.3']
    #allocation5 [shape = 's32[2]{0}', space=sflag, size = 0x8, scoped, tag = 'scoped memory for vggnet_forward.3']
    #allocation6 [shape = 'u8[4096]{0}', space=vmem, size = 0x1000, scoped, tag = 'input window, operand 2, single buffered']
    #allocation7 [shape = 's32[1]{0}', space=sflag, size = 0x4, scoped, tag = 'scoped memory for vggnet_forward.3']
    #allocation8 [shape = 'u8[512]{0}', space=vmem, size = 0x400, scoped, tag = 'input window, operand 4, single buffered']
    #allocation9 [shape = 'u8[1024]{0}', space=vmem, size = 0x400, scoped, tag = 'output window, operand 0, single buffered']
    %10 = vsyncpa [#allocation4], 0
    %s11 = scalar_lea.sflag [#allocation4], 1
    %12 = vsyncpa %s11, 0
    %13 = vsyncpa [#allocation7], 0
    %14 = vsyncpa [#allocation5], 0
    loop: start=0, step=1, limit=9
    $region2: #{vggnet_forward.3} parent=1 // loop_pre_header
      _
    $region3: #{vggnet_forward.3} parent=1 // loop_header
      %s16 = sphi 0, %s20
      %p17 = scmp.ge.s32.totalorder %s16, 9
      %s26 = sphi 0, %s28
      %s29 = sphi 0, %s26
      %s30 = sphi 0, %s29
      %s46 = sphi 0, %s30
      %s52 = sphi 0, %s54
      %s55 = sphi 0, %s52
      %s56 = sphi 0, %s55
      %s72 = sphi 0, %s56
      %s76 = sphi 0, %s76
      %s78 = sphi 0, %s76
      %s79 = sphi 0, %s78
      %s93 = sphi 0, %s79
      %s97 = sphi 0, %s97
      %s99 = sphi 0, %s97
      %s100 = sphi 0, %s99
      %s114 = sphi 0, %s100
      %s118 = sphi 0, %s118
      %s120 = sphi 0, %s118
      %s121 = sphi 0, %s120
      %s135 = sphi 0, %s121
      %s139 = sphi 0, %s139
      %s141 = sphi 0, %s139
      %s142 = sphi 0, %s141
      %s156 = sphi 0, %s142
    $region4: #{vggnet_forward.3} parent=1 // loop_header_branch
      %19 = sbr.rel (%p17) target = $region8
    $region5: #{vggnet_forward.3} parent=1 // loop_body
      %s21 = ssub.s32 %s16, 1
      %s22 = ssub.s32 %s16, 2
      %s23 = sadd.s32 %s16, 1
      %s24 = ssub.s32 %s16, %s23
      %p25 = scmp.eq.s32.totalorder %s24, 0
      %s27 = sadd.s32 %s26, 1
      %s28 = scalar_select %p25, %s26, %s27
      %p31 = pneg %p25
      %p32 = scmp.eq.s32.totalorder %s16, 6
      %p33 = por %p31, %p32
      %p34 = scmp.ne.s32.totalorder %s26, %s29
      %p35 = scmp.eq.s32.totalorder %s16, 0
      %p36 = por %p34, %p35
      %p37 = scmp.ne.s32.totalorder %s26, %s29
      %p38 = scmp.eq.s32.totalorder %s21, 6
      %p39 = por %p37, %p38
      %p40 = scmp.ne.s32.totalorder %s29, %s30
      %p41 = scmp.eq.s32.totalorder %s21, 0
      %p42 = por %p40, %p41
      %p43 = scmp.ne.s32.totalorder %s29, %s30
      %p44 = scmp.eq.s32.totalorder %s22, 6
      %p45 = por %p43, %p44
      %p47 = scmp.ne.s32.totalorder %s30, %s46
      %p48 = scmp.eq.s32.totalorder %s22, 0
      %p49 = por %p47, %p48
      %s50 = ssub.s32 %s16, %s23
      %p51 = scmp.eq.s32.totalorder %s50, 0
      %s53 = sadd.s32 %s52, 1
      %s54 = scalar_select %p51, %s52, %s53
      %p57 = pneg %p51
      %p58 = scmp.eq.s32.totalorder %s16, 6
      %p59 = por %p57, %p58
      %p60 = scmp.ne.s32.totalorder %s52, %s55
      %p61 = scmp.eq.s32.totalorder %s16, 0
      %p62 = por %p60, %p61
      %p63 = scmp.ne.s32.totalorder %s52, %s55
      %p64 = scmp.eq.s32.totalorder %s21, 6
      %p65 = por %p63, %p64
      %p66 = scmp.ne.s32.totalorder %s55, %s56
      %p67 = scmp.eq.s32.totalorder %s21, 0
      %p68 = por %p66, %p67
      %p69 = scmp.ne.s32.totalorder %s55, %s56
      %p70 = scmp.eq.s32.totalorder %s22, 6
      %p71 = por %p69, %p70
      %p73 = scmp.ne.s32.totalorder %s56, %s72
      %p74 = scmp.eq.s32.totalorder %s22, 0
      %p75 = por %p73, %p74
      %s77 = sadd.s32 %s76, 1
      %p80 = scmp.eq.s32.totalorder %s16, 6
      %p81 = scmp.ne.s32.totalorder %s76, %s78
      %p82 = scmp.eq.s32.totalorder %s16, 0
      %p83 = por %p81, %p82
      %p84 = scmp.ne.s32.totalorder %s76, %s78
      %p85 = scmp.eq.s32.totalorder %s21, 6
      %p86 = por %p84, %p85
      %p87 = scmp.ne.s32.totalorder %s78, %s79
      %p88 = scmp.eq.s32.totalorder %s21, 0
      %p89 = por %p87, %p88
      %p90 = scmp.ne.s32.totalorder %s78, %s79
      %p91 = scmp.eq.s32.totalorder %s22, 6
      %p92 = por %p90, %p91
      %p94 = scmp.ne.s32.totalorder %s79, %s93
      %p95 = scmp.eq.s32.totalorder %s22, 0
      %p96 = por %p94, %p95
      %s98 = sadd.s32 %s97, 1
      %p101 = scmp.eq.s32.totalorder %s16, 6
      %p102 = scmp.ne.s32.totalorder %s97, %s99
      %p103 = scmp.eq.s32.totalorder %s16, 0
      %p104 = por %p102, %p103
      %p105 = scmp.ne.s32.totalorder %s97, %s99
      %p106 = scmp.eq.s32.totalorder %s21, 6
      %p107 = por %p105, %p106
      %p108 = scmp.ne.s32.totalorder %s99, %s100
      %p109 = scmp.eq.s32.totalorder %s21, 0
      %p110 = por %p108, %p109
      %p111 = scmp.ne.s32.totalorder %s99, %s100
      %p112 = scmp.eq.s32.totalorder %s22, 6
      %p113 = por %p111, %p112
      %p115 = scmp.ne.s32.totalorder %s100, %s114
      %p116 = scmp.eq.s32.totalorder %s22, 0
      %p117 = por %p115, %p116
      %s119 = sadd.s32 %s118, 1
      %p122 = scmp.eq.s32.totalorder %s16, 6
      %p123 = scmp.ne.s32.totalorder %s118, %s120
      %p124 = scmp.eq.s32.totalorder %s16, 0
      %p125 = por %p123, %p124
      %p126 = scmp.ne.s32.totalorder %s118, %s120
      %p127 = scmp.eq.s32.totalorder %s21, 6
      %p128 = por %p126, %p127
      %p129 = scmp.ne.s32.totalorder %s120, %s121
      %p130 = scmp.eq.s32.totalorder %s21, 0
      %p131 = por %p129, %p130
      %p132 = scmp.ne.s32.totalorder %s120, %s121
      %p133 = scmp.eq.s32.totalorder %s22, 6
      %p134 = por %p132, %p133
      %p136 = scmp.ne.s32.totalorder %s121, %s135
      %p137 = scmp.eq.s32.totalorder %s22, 0
      %p138 = por %p136, %p137
      %s140 = sadd.s32 %s139, 1
      %p143 = scmp.eq.s32.totalorder %s16, 6
      %p144 = scmp.ne.s32.totalorder %s139, %s141
      %p145 = scmp.eq.s32.totalorder %s16, 0
      %p146 = por %p144, %p145
      %p147 = scmp.ne.s32.totalorder %s139, %s141
      %p148 = scmp.eq.s32.totalorder %s21, 6
      %p149 = por %p147, %p148
      %p150 = scmp.ne.s32.totalorder %s141, %s142
      %p151 = scmp.eq.s32.totalorder %s21, 0
      %p152 = por %p150, %p151
      %p153 = scmp.ne.s32.totalorder %s141, %s142
      %p154 = scmp.eq.s32.totalorder %s22, 6
      %p155 = por %p153, %p154
      %p157 = scmp.ne.s32.totalorder %s142, %s156
      %p158 = scmp.eq.s32.totalorder %s22, 0
      %p159 = por %p157, %p158
      %p160 = scmp.le.s32.totalorder 1, %s16
      %p161 = scmp.lt.s32.totalorder %s16, 8
      %p162 = pnand %p160, %p161
      %p163 = pneg %p162
      // Predicated region
      $region9: #{vggnet_forward.3} parent=5 // pred_check
        _
      $region10: #{vggnet_forward.3} parent=5 // pred_check_branch
        %165 = sbr.rel (%p162) target = $region12
      $region11: #{vggnet_forward.3} parent=5 // pred_region
        %s166 = ssub.s32 %s16, 1
        // Predicated region
        $region13: #{vggnet_forward.3} parent=11 // pred_check
          %p167 = pneg %p89
        $region14: #{vggnet_forward.3} parent=11 // pred_check_branch
          %169 = sbr.rel (%p167) target = $region16
        $region15: #{vggnet_forward.3} parent=11 // pred_region
          %s171 = ssub.s32 128, 128
          %172 = vsyncadd [#allocation7], %s171
          %s174 = sshll.u32 [#allocation6], 4
          %s175 = int_to_ptr.vmem [resolvable:$true] %s174
          %177 = dma.hbm_to_vmem [thread:$0]  %s2, 128, %s175, [#allocation7]
        $region16: #{vggnet_forward.3} parent=11 // pred_fallthru
          _
        // Predicated region
        $region17: #{vggnet_forward.3} parent=11 // pred_check
          %p178 = pneg %p110
        $region18: #{vggnet_forward.3} parent=11 // pred_check_branch
          %180 = sbr.rel (%p178) target = $region20
        $region19: #{vggnet_forward.3} parent=11 // pred_region
          _
        $region20: #{vggnet_forward.3} parent=11 // pred_fallthru
          _
        // Predicated region
        $region21: #{vggnet_forward.3} parent=11 // pred_check
          %p181 = pneg %p131
        $region22: #{vggnet_forward.3} parent=11 // pred_check_branch
          %183 = sbr.rel (%p181) target = $region24
        $region23: #{vggnet_forward.3} parent=11 // pred_region
          %s185 = ssub.s32 16, 16
          %186 = vsyncadd [#allocation7], %s185
          %s188 = sshll.u32 [#allocation8], 4
          %s189 = int_to_ptr.vmem [resolvable:$true] %s188
          %191 = dma.hbm_to_vmem [thread:$0]  %s4, 16, %s189, [#allocation7]
        $region24: #{vggnet_forward.3} parent=11 // pred_fallthru
          _
      $region12: #{vggnet_forward.3} parent=5 // pred_fallthru
        _
      %p192 = scmp.lt.s32.totalorder %s16, 7
      // Predicated region
      $region25: #{vggnet_forward.3} parent=5 // pred_check
        %p193 = pneg %p192
      $region26: #{vggnet_forward.3} parent=5 // pred_check_branch
        %195 = sbr.rel (%p193) target = $region28
      $region27: #{vggnet_forward.3} parent=5 // pred_region
        // Predicated region
        $region29: #{vggnet_forward.3} parent=27 // pred_check
          %p196 = pneg %p36
        $region30: #{vggnet_forward.3} parent=27 // pred_check_branch
          %198 = sbr.rel (%p196) target = $region32
        $region31: #{vggnet_forward.3} parent=27 // pred_region
          %s199 = smul.u32 7, %s16
          %p200 = scmp.lt.s32.totalorder %s199, 48
          %s201 = scalar_select %p200, %s199, 48
          %s202 = scalar_lea.vmem %s0, %s201
          %s203 = smul.u32 7, %s16
        $region32: #{vggnet_forward.3} parent=27 // pred_fallthru
          _
        // Predicated region
        $region33: #{vggnet_forward.3} parent=27 // pred_check
          %p204 = pneg %p62
        $region34: #{vggnet_forward.3} parent=27 // pred_check_branch
          %206 = sbr.rel (%p204) target = $region36
        $region35: #{vggnet_forward.3} parent=27 // pred_region
          %s207 = sand.u32 %s52, 1
          %s208 = scalar_lea.sflag [#allocation4], %s207
          %s209 = sand.u32 %s52, 1
          %s210 = smul.addr %s209, 3584
          %s211 = scalar_lea.vmem [#allocation3], %s210
          %s212 = smul.u32 112, %s16
          %s214 = ssub.s32 57344, 57344
          %215 = vsyncadd %s208, %s214
          %s216 = smul.addr %s212, 8
          %s217 = smul.addr %s216, 64
          %s218 = scalar_lea.hbm %s1, %s217
          %s219 = sshll.u32 %s211, 4
          %s220 = int_to_ptr.vmem [resolvable:$true] %s219
          %225 = dma.hbm_to_vmem [thread:$0]  %s218, 57344, %s220, %s208, 512, 512, 32
        $region36: #{vggnet_forward.3} parent=27 // pred_fallthru
          _
      $region28: #{vggnet_forward.3} parent=5 // pred_fallthru
        _
      %p226 = scmp.le.s32.totalorder 1, %s16
      %p227 = scmp.lt.s32.totalorder %s16, 8
      %p228 = pnand %p226, %p227
      %p229 = pneg %p228
      // Predicated region
      $region37: #{vggnet_forward.3} parent=5 // pred_check
        _
      $region38: #{vggnet_forward.3} parent=5 // pred_check_branch
        %231 = sbr.rel (%p228) target = $region40
      $region39: #{vggnet_forward.3} parent=5 // pred_region
        %s232 = ssub.s32 %s16, 1
        %s233 = sand.u32 %s55, 1
        %s234 = scalar_lea.sflag [#allocation4], %s233
        %s235 = sand.u32 %s55, 1
        %s236 = smul.addr %s235, 3584
        %s237 = scalar_lea.vmem [#allocation3], %s236
        // Predicated region
        $region41: #{vggnet_forward.3} parent=39 // pred_check
          %p238 = pneg %p68
        $region42: #{vggnet_forward.3} parent=39 // pred_check_branch
          %240 = sbr.rel (%p238) target = $region44
        $region43: #{vggnet_forward.3} parent=39 // pred_region
          %241 = dma.done %s234, 57344
        $region44: #{vggnet_forward.3} parent=39 // pred_fallthru
          _
        // Predicated region
        $region45: #{vggnet_forward.3} parent=39 // pred_check
          %p242 = pneg %p89
        $region46: #{vggnet_forward.3} parent=39 // pred_check_branch
          %244 = sbr.rel (%p242) target = $region48
        $region47: #{vggnet_forward.3} parent=39 // pred_region
          %245 = dma.done [#allocation7], 128
        $region48: #{vggnet_forward.3} parent=39 // pred_fallthru
          _
        // Predicated region
        $region49: #{vggnet_forward.3} parent=39 // pred_check
          %p246 = pneg %p131
        $region50: #{vggnet_forward.3} parent=39 // pred_check_branch
          %248 = sbr.rel (%p246) target = $region52
        $region51: #{vggnet_forward.3} parent=39 // pred_region
          %249 = dma.done [#allocation7], 16
        $region52: #{vggnet_forward.3} parent=39 // pred_fallthru
          _
        %s250 = smul.u32 7, %s21
        %p251 = scmp.lt.s32.totalorder %s250, 48
        %s252 = scalar_select %p251, %s250, 48
        %s253 = scalar_lea.vmem %s0, %s252
        %p254 = pneg %p42
        %p255 = pneg %p39
        %s256 = sand.u32 %s55, 1
        %s257 = scalar_lea.sflag [#allocation4], %s256
        %s258 = sand.u32 %s55, 1
        %s259 = smul.addr %s258, 3584
        %s260 = scalar_lea.vmem [#allocation3], %s259
        %p261 = pneg %p68
        %p262 = pneg %p65
        %p263 = pneg %p89
        %p264 = pneg %p86
        %p265 = pneg %p110
        %p266 = pneg %p107
        %p267 = pneg %p131
        %p268 = pneg %p128
        %p269 = pneg %p152
        %p270 = pneg %p149
        %s271 = smul.u32 7, %s21
        %p272 = scmp.lt.s32.totalorder %s271, 48
        %s273 = scalar_select %p272, %s271, 48
        %s274 = scalar_lea.vmem %s0, %s273
        %s275 = smul.u32 7, %s21
        %s276 = smul.u32 112, %s21
        %p278 = scmp.eq.s32.totalorder %s21, 0
        // Predicated region
        $region53: #{vggnet_forward.3} parent=39 // pred_check
          %p279 = pneg %p278
        $region54: #{vggnet_forward.3} parent=39 // pred_check_branch
          %281 = sbr.rel (%p279) target = $region56
        $region55: #{vggnet_forward.3} parent=39 // pred_region
          %282 = vst [vmem:[#allocation2] sm:$0xff] 0.0
          %283 = vst [vmem:[#allocation2 + $0x8] sm:$0xff] 0.0
        $region56: #{vggnet_forward.3} parent=39 // pred_fallthru
          _
        %v284 = vld [vmem:[#allocation2] sm:$0xff]
        %v285 = vld [vmem:[#allocation2 + $0x8] sm:$0xff]
        %v286 = vld [vmem:[%s274] sm:$0x7f]
        %v287 = vld [vmem:[%s237] sm:$0xff]
        %v288 = vld [vmem:[%s237 + $0x8] sm:$0xff]
        %v289 = vld [vmem:[%s237 + $0x10] sm:$0xff]
        %v290 = vld [vmem:[%s237 + $0x18] sm:$0xff]
        %v291 = vld [vmem:[%s237 + $0x20] sm:$0xff]
        %v292 = vld [vmem:[%s237 + $0x28] sm:$0xff]
        %v293 = vld [vmem:[%s237 + $0x30] sm:$0xff]
        %v294 = vld [vmem:[%s237 + $0x38] sm:$0xff]
        %v295 = vld [vmem:[%s237 + $0x40] sm:$0xff]
        %v296 = vld [vmem:[%s237 + $0x48] sm:$0xff]
        %v297 = vld [vmem:[%s237 + $0x50] sm:$0xff]
        %v298 = vld [vmem:[%s237 + $0x58] sm:$0xff]
        %v299 = vld [vmem:[%s237 + $0x60] sm:$0xff]
        %v300 = vld [vmem:[%s237 + $0x68] sm:$0xff]
        %v301 = vld [vmem:[%s237 + $0x70] sm:$0xff]
        %v302 = vld [vmem:[%s237 + $0x78] sm:$0xff]
        %v303 = vld [vmem:[%s237 + $0x80] sm:$0xff]
        %v304 = vld [vmem:[%s237 + $0x88] sm:$0xff]
        %v305 = vld [vmem:[%s237 + $0x90] sm:$0xff]
        %v306 = vld [vmem:[%s237 + $0x98] sm:$0xff]
        %v307 = vld [vmem:[%s237 + $0xa0] sm:$0xff]
        %v308 = vld [vmem:[%s237 + $0xa8] sm:$0xff]
        %v309 = vld [vmem:[%s237 + $0xb0] sm:$0xff]
        %v310 = vld [vmem:[%s237 + $0xb8] sm:$0xff]
        %v311 = vld [vmem:[%s237 + $0xc0] sm:$0xff]
        %v312 = vld [vmem:[%s237 + $0xc8] sm:$0xff]
        %v313 = vld [vmem:[%s237 + $0xd0] sm:$0xff]
        %v314 = vld [vmem:[%s237 + $0xd8] sm:$0xff]
        %v315 = vld [vmem:[%s237 + $0xe0] sm:$0xff]
        %v316 = vld [vmem:[%s237 + $0xe8] sm:$0xff]
        %v317 = vld [vmem:[%s237 + $0xf0] sm:$0xff]
        %v318 = vld [vmem:[%s237 + $0xf8] sm:$0xff]
        %v319 = vld [vmem:[%s237 + $0x100] sm:$0xff]
        %v320 = vld [vmem:[%s237 + $0x108] sm:$0xff]
        %v321 = vld [vmem:[%s237 + $0x110] sm:$0xff]
        %v322 = vld [vmem:[%s237 + $0x118] sm:$0xff]
        %v323 = vld [vmem:[%s237 + $0x120] sm:$0xff]
        %v324 = vld [vmem:[%s237 + $0x128] sm:$0xff]
        %v325 = vld [vmem:[%s237 + $0x130] sm:$0xff]
        %v326 = vld [vmem:[%s237 + $0x138] sm:$0xff]
        %v327 = vld [vmem:[%s237 + $0x140] sm:$0xff]
        %v328 = vld [vmem:[%s237 + $0x148] sm:$0xff]
        %v329 = vld [vmem:[%s237 + $0x150] sm:$0xff]
        %v330 = vld [vmem:[%s237 + $0x158] sm:$0xff]
        %v331 = vld [vmem:[%s237 + $0x160] sm:$0xff]
        %v332 = vld [vmem:[%s237 + $0x168] sm:$0xff]
        %v333 = vld [vmem:[%s237 + $0x170] sm:$0xff]
        %v334 = vld [vmem:[%s237 + $0x178] sm:$0xff]
        %v335 = vld [vmem:[%s237 + $0x180] sm:$0xff]
        %v336 = vld [vmem:[%s237 + $0x188] sm:$0xff]
        %v337 = vld [vmem:[%s237 + $0x190] sm:$0xff]
        %v338 = vld [vmem:[%s237 + $0x198] sm:$0xff]
        %v339 = vld [vmem:[%s237 + $0x1a0] sm:$0xff]
        %v340 = vld [vmem:[%s237 + $0x1a8] sm:$0xff]
        %v341 = vld [vmem:[%s237 + $0x1b0] sm:$0xff]
        %v342 = vld [vmem:[%s237 + $0x1b8] sm:$0xff]
        %v343 = vld [vmem:[%s237 + $0x1c0] sm:$0xff]
        %v344 = vld [vmem:[%s237 + $0x1c8] sm:$0xff]
        %v345 = vld [vmem:[%s237 + $0x1d0] sm:$0xff]
        %v346 = vld [vmem:[%s237 + $0x1d8] sm:$0xff]
        %v347 = vld [vmem:[%s237 + $0x1e0] sm:$0xff]
        %v348 = vld [vmem:[%s237 + $0x1e8] sm:$0xff]
        %v349 = vld [vmem:[%s237 + $0x1f0] sm:$0xff]
        %v350 = vld [vmem:[%s237 + $0x1f8] sm:$0xff]
        %v351 = vld [vmem:[%s237 + $0x200] sm:$0xff]
        %v352 = vld [vmem:[%s237 + $0x208] sm:$0xff]
        %v353 = vld [vmem:[%s237 + $0x210] sm:$0xff]
        %v354 = vld [vmem:[%s237 + $0x218] sm:$0xff]
        %v355 = vld [vmem:[%s237 + $0x220] sm:$0xff]
        %v356 = vld [vmem:[%s237 + $0x228] sm:$0xff]
        %v357 = vld [vmem:[%s237 + $0x230] sm:$0xff]
        %v358 = vld [vmem:[%s237 + $0x238] sm:$0xff]
        %v359 = vld [vmem:[%s237 + $0x240] sm:$0xff]
        %v360 = vld [vmem:[%s237 + $0x248] sm:$0xff]
        %v361 = vld [vmem:[%s237 + $0x250] sm:$0xff]
        %v362 = vld [vmem:[%s237 + $0x258] sm:$0xff]
        %v363 = vld [vmem:[%s237 + $0x260] sm:$0xff]
        %v364 = vld [vmem:[%s237 + $0x268] sm:$0xff]
        %v365 = vld [vmem:[%s237 + $0x270] sm:$0xff]
        %v366 = vld [vmem:[%s237 + $0x278] sm:$0xff]
        %v367 = vld [vmem:[%s237 + $0x280] sm:$0xff]
        %v368 = vld [vmem:[%s237 + $0x288] sm:$0xff]
        %v369 = vld [vmem:[%s237 + $0x290] sm:$0xff]
        %v370 = vld [vmem:[%s237 + $0x298] sm:$0xff]
        %v371 = vld [vmem:[%s237 + $0x2a0] sm:$0xff]
        %v372 = vld [vmem:[%s237 + $0x2a8] sm:$0xff]
        %v373 = vld [vmem:[%s237 + $0x2b0] sm:$0xff]
        %v374 = vld [vmem:[%s237 + $0x2b8] sm:$0xff]
        %v375 = vld [vmem:[%s237 + $0x2c0] sm:$0xff]
        %v376 = vld [vmem:[%s237 + $0x2c8] sm:$0xff]
        %v377 = vld [vmem:[%s237 + $0x2d0] sm:$0xff]
        %v378 = vld [vmem:[%s237 + $0x2d8] sm:$0xff]
        %v379 = vld [vmem:[%s237 + $0x2e0] sm:$0xff]
        %v380 = vld [vmem:[%s237 + $0x2e8] sm:$0xff]
        %v381 = vld [vmem:[%s237 + $0x2f0] sm:$0xff]
        %v382 = vld [vmem:[%s237 + $0x2f8] sm:$0xff]
        %v383 = vld [vmem:[%s237 + $0x300] sm:$0xff]
        %v384 = vld [vmem:[%s237 + $0x308] sm:$0xff]
        %v385 = vld [vmem:[%s237 + $0x310] sm:$0xff]
        %v386 = vld [vmem:[%s237 + $0x318] sm:$0xff]
        %v387 = vld [vmem:[%s237 + $0x320] sm:$0xff]
        %v388 = vld [vmem:[%s237 + $0x328] sm:$0xff]
        %v389 = vld [vmem:[%s237 + $0x330] sm:$0xff]
        %v390 = vld [vmem:[%s237 + $0x338] sm:$0xff]
        %v391 = vld [vmem:[%s237 + $0x340] sm:$0xff]
        %v392 = vld [vmem:[%s237 + $0x348] sm:$0xff]
        %v393 = vld [vmem:[%s237 + $0x350] sm:$0xff]
        %v394 = vld [vmem:[%s237 + $0x358] sm:$0xff]
        %v395 = vld [vmem:[%s237 + $0x360] sm:$0xff]
        %v396 = vld [vmem:[%s237 + $0x368] sm:$0xff]
        %v397 = vld [vmem:[%s237 + $0x370] sm:$0xff]
        %v398 = vld [vmem:[%s237 + $0x378] sm:$0xff]
        %v399 = vld [vmem:[%s237 + $0x380] sm:$0xff]
        %v400 = vld [vmem:[%s237 + $0x388] sm:$0xff]
        %v401 = vld [vmem:[%s237 + $0x390] sm:$0xff]
        %v402 = vld [vmem:[%s237 + $0x398] sm:$0xff]
        %v403 = vld [vmem:[%s237 + $0x3a0] sm:$0xff]
        %v404 = vld [vmem:[%s237 + $0x3a8] sm:$0xff]
        %v405 = vld [vmem:[%s237 + $0x3b0] sm:$0xff]
        %v406 = vld [vmem:[%s237 + $0x3b8] sm:$0xff]
        %v407 = vld [vmem:[%s237 + $0x3c0] sm:$0xff]
        %v408 = vld [vmem:[%s237 + $0x3c8] sm:$0xff]
        %v409 = vld [vmem:[%s237 + $0x3d0] sm:$0xff]
        %v410 = vld [vmem:[%s237 + $0x3d8] sm:$0xff]
        %v411 = vld [vmem:[%s237 + $0x3e0] sm:$0xff]
        %v412 = vld [vmem:[%s237 + $0x3e8] sm:$0xff]
        %v413 = vld [vmem:[%s237 + $0x3f0] sm:$0xff]
        %v414 = vld [vmem:[%s237 + $0x3f8] sm:$0xff]
        %v415 = vld [vmem:[%s237 + $0x400] sm:$0xff]
        %v416 = vld [vmem:[%s237 + $0x408] sm:$0xff]
        %v417 = vld [vmem:[%s237 + $0x410] sm:$0xff]
        %v418 = vld [vmem:[%s237 + $0x418] sm:$0xff]
        %v419 = vld [vmem:[%s237 + $0x420] sm:$0xff]
        %v420 = vld [vmem:[%s237 + $0x428] sm:$0xff]
        %v421 = vld [vmem:[%s237 + $0x430] sm:$0xff]
        %v422 = vld [vmem:[%s237 + $0x438] sm:$0xff]
        %v423 = vld [vmem:[%s237 + $0x440] sm:$0xff]
        %v424 = vld [vmem:[%s237 + $0x448] sm:$0xff]
        %v425 = vld [vmem:[%s237 + $0x450] sm:$0xff]
        %v426 = vld [vmem:[%s237 + $0x458] sm:$0xff]
        %v427 = vld [vmem:[%s237 + $0x460] sm:$0xff]
        %v428 = vld [vmem:[%s237 + $0x468] sm:$0xff]
        %v429 = vld [vmem:[%s237 + $0x470] sm:$0xff]
        %v430 = vld [vmem:[%s237 + $0x478] sm:$0xff]
        %v431 = vld [vmem:[%s237 + $0x480] sm:$0xff]
        %v432 = vld [vmem:[%s237 + $0x488] sm:$0xff]
        %v433 = vld [vmem:[%s237 + $0x490] sm:$0xff]
        %v434 = vld [vmem:[%s237 + $0x498] sm:$0xff]
        %v435 = vld [vmem:[%s237 + $0x4a0] sm:$0xff]
        %v436 = vld [vmem:[%s237 + $0x4a8] sm:$0xff]
        %v437 = vld [vmem:[%s237 + $0x4b0] sm:$0xff]
        %v438 = vld [vmem:[%s237 + $0x4b8] sm:$0xff]
        %v439 = vld [vmem:[%s237 + $0x4c0] sm:$0xff]
        %v440 = vld [vmem:[%s237 + $0x4c8] sm:$0xff]
        %v441 = vld [vmem:[%s237 + $0x4d0] sm:$0xff]
        %v442 = vld [vmem:[%s237 + $0x4d8] sm:$0xff]
        %v443 = vld [vmem:[%s237 + $0x4e0] sm:$0xff]
        %v444 = vld [vmem:[%s237 + $0x4e8] sm:$0xff]
        %v445 = vld [vmem:[%s237 + $0x4f0] sm:$0xff]
        %v446 = vld [vmem:[%s237 + $0x4f8] sm:$0xff]
        %v447 = vld [vmem:[%s237 + $0x500] sm:$0xff]
        %v448 = vld [vmem:[%s237 + $0x508] sm:$0xff]
        %v449 = vld [vmem:[%s237 + $0x510] sm:$0xff]
        %v450 = vld [vmem:[%s237 + $0x518] sm:$0xff]
        %v451 = vld [vmem:[%s237 + $0x520] sm:$0xff]
        %v452 = vld [vmem:[%s237 + $0x528] sm:$0xff]
        %v453 = vld [vmem:[%s237 + $0x530] sm:$0xff]
        %v454 = vld [vmem:[%s237 + $0x538] sm:$0xff]
        %v455 = vld [vmem:[%s237 + $0x540] sm:$0xff]
        %v456 = vld [vmem:[%s237 + $0x548] sm:$0xff]
        %v457 = vld [vmem:[%s237 + $0x550] sm:$0xff]
        %v458 = vld [vmem:[%s237 + $0x558] sm:$0xff]
        %v459 = vld [vmem:[%s237 + $0x560] sm:$0xff]
        %v460 = vld [vmem:[%s237 + $0x568] sm:$0xff]
        %v461 = vld [vmem:[%s237 + $0x570] sm:$0xff]
        %v462 = vld [vmem:[%s237 + $0x578] sm:$0xff]
        %v463 = vld [vmem:[%s237 + $0x580] sm:$0xff]
        %v464 = vld [vmem:[%s237 + $0x588] sm:$0xff]
        %v465 = vld [vmem:[%s237 + $0x590] sm:$0xff]
        %v466 = vld [vmem:[%s237 + $0x598] sm:$0xff]
        %v467 = vld [vmem:[%s237 + $0x5a0] sm:$0xff]
        %v468 = vld [vmem:[%s237 + $0x5a8] sm:$0xff]
        %v469 = vld [vmem:[%s237 + $0x5b0] sm:$0xff]
        %v470 = vld [vmem:[%s237 + $0x5b8] sm:$0xff]
        %v471 = vld [vmem:[%s237 + $0x5c0] sm:$0xff]
        %v472 = vld [vmem:[%s237 + $0x5c8] sm:$0xff]
        %v473 = vld [vmem:[%s237 + $0x5d0] sm:$0xff]
        %v474 = vld [vmem:[%s237 + $0x5d8] sm:$0xff]
        %v475 = vld [vmem:[%s237 + $0x5e0] sm:$0xff]
        %v476 = vld [vmem:[%s237 + $0x5e8] sm:$0xff]
        %v477 = vld [vmem:[%s237 + $0x5f0] sm:$0xff]
        %v478 = vld [vmem:[%s237 + $0x5f8] sm:$0xff]
        %v479 = vld [vmem:[%s237 + $0x600] sm:$0xff]
        %v480 = vld [vmem:[%s237 + $0x608] sm:$0xff]
        %v481 = vld [vmem:[%s237 + $0x610] sm:$0xff]
        %v482 = vld [vmem:[%s237 + $0x618] sm:$0xff]
        %v483 = vld [vmem:[%s237 + $0x620] sm:$0xff]
        %v484 = vld [vmem:[%s237 + $0x628] sm:$0xff]
        %v485 = vld [vmem:[%s237 + $0x630] sm:$0xff]
        %v486 = vld [vmem:[%s237 + $0x638] sm:$0xff]
        %v487 = vld [vmem:[%s237 + $0x640] sm:$0xff]
        %v488 = vld [vmem:[%s237 + $0x648] sm:$0xff]
        %v489 = vld [vmem:[%s237 + $0x650] sm:$0xff]
        %v490 = vld [vmem:[%s237 + $0x658] sm:$0xff]
        %v491 = vld [vmem:[%s237 + $0x660] sm:$0xff]
        %v492 = vld [vmem:[%s237 + $0x668] sm:$0xff]
        %v493 = vld [vmem:[%s237 + $0x670] sm:$0xff]
        %v494 = vld [vmem:[%s237 + $0x678] sm:$0xff]
        %v495 = vld [vmem:[%s237 + $0x680] sm:$0xff]
        %v496 = vld [vmem:[%s237 + $0x688] sm:$0xff]
        %v497 = vld [vmem:[%s237 + $0x690] sm:$0xff]
        %v498 = vld [vmem:[%s237 + $0x698] sm:$0xff]
        %v499 = vld [vmem:[%s237 + $0x6a0] sm:$0xff]
        %v500 = vld [vmem:[%s237 + $0x6a8] sm:$0xff]
        %v501 = vld [vmem:[%s237 + $0x6b0] sm:$0xff]
        %v502 = vld [vmem:[%s237 + $0x6b8] sm:$0xff]
        %v503 = vld [vmem:[%s237 + $0x6c0] sm:$0xff]
        %v504 = vld [vmem:[%s237 + $0x6c8] sm:$0xff]
        %v505 = vld [vmem:[%s237 + $0x6d0] sm:$0xff]
        %v506 = vld [vmem:[%s237 + $0x6d8] sm:$0xff]
        %v507 = vld [vmem:[%s237 + $0x6e0] sm:$0xff]
        %v508 = vld [vmem:[%s237 + $0x6e8] sm:$0xff]
        %v509 = vld [vmem:[%s237 + $0x6f0] sm:$0xff]
        %v510 = vld [vmem:[%s237 + $0x6f8] sm:$0xff]
        %v511 = vld [vmem:[%s237 + $0x700] sm:$0xff]
        %v512 = vld [vmem:[%s237 + $0x708] sm:$0xff]
        %v513 = vld [vmem:[%s237 + $0x710] sm:$0xff]
        %v514 = vld [vmem:[%s237 + $0x718] sm:$0xff]
        %v515 = vld [vmem:[%s237 + $0x720] sm:$0xff]
        %v516 = vld [vmem:[%s237 + $0x728] sm:$0xff]
        %v517 = vld [vmem:[%s237 + $0x730] sm:$0xff]
        %v518 = vld [vmem:[%s237 + $0x738] sm:$0xff]
        %v519 = vld [vmem:[%s237 + $0x740] sm:$0xff]
        %v520 = vld [vmem:[%s237 + $0x748] sm:$0xff]
        %v521 = vld [vmem:[%s237 + $0x750] sm:$0xff]
        %v522 = vld [vmem:[%s237 + $0x758] sm:$0xff]
        %v523 = vld [vmem:[%s237 + $0x760] sm:$0xff]
        %v524 = vld [vmem:[%s237 + $0x768] sm:$0xff]
        %v525 = vld [vmem:[%s237 + $0x770] sm:$0xff]
        %v526 = vld [vmem:[%s237 + $0x778] sm:$0xff]
        %v527 = vld [vmem:[%s237 + $0x780] sm:$0xff]
        %v528 = vld [vmem:[%s237 + $0x788] sm:$0xff]
        %v529 = vld [vmem:[%s237 + $0x790] sm:$0xff]
        %v530 = vld [vmem:[%s237 + $0x798] sm:$0xff]
        %v531 = vld [vmem:[%s237 + $0x7a0] sm:$0xff]
        %v532 = vld [vmem:[%s237 + $0x7a8] sm:$0xff]
        %v533 = vld [vmem:[%s237 + $0x7b0] sm:$0xff]
        %v534 = vld [vmem:[%s237 + $0x7b8] sm:$0xff]
        %v535 = vld [vmem:[%s237 + $0x7c0] sm:$0xff]
        %v536 = vld [vmem:[%s237 + $0x7c8] sm:$0xff]
        %v537 = vld [vmem:[%s237 + $0x7d0] sm:$0xff]
        %v538 = vld [vmem:[%s237 + $0x7d8] sm:$0xff]
        %v539 = vld [vmem:[%s237 + $0x7e0] sm:$0xff]
        %v540 = vld [vmem:[%s237 + $0x7e8] sm:$0xff]
        %v541 = vld [vmem:[%s237 + $0x7f0] sm:$0xff]
        %v542 = vld [vmem:[%s237 + $0x7f8] sm:$0xff]
        %v543 = vld [vmem:[%s237 + $0x800] sm:$0xff]
        %v544 = vld [vmem:[%s237 + $0x808] sm:$0xff]
        %v545 = vld [vmem:[%s237 + $0x810] sm:$0xff]
        %v546 = vld [vmem:[%s237 + $0x818] sm:$0xff]
        %v547 = vld [vmem:[%s237 + $0x820] sm:$0xff]
        %v548 = vld [vmem:[%s237 + $0x828] sm:$0xff]
        %v549 = vld [vmem:[%s237 + $0x830] sm:$0xff]
        %v550 = vld [vmem:[%s237 + $0x838] sm:$0xff]
        %v551 = vld [vmem:[%s237 + $0x840] sm:$0xff]
        %v552 = vld [vmem:[%s237 + $0x848] sm:$0xff]
        %v553 = vld [vmem:[%s237 + $0x850] sm:$0xff]
        %v554 = vld [vmem:[%s237 + $0x858] sm:$0xff]
        %v555 = vld [vmem:[%s237 + $0x860] sm:$0xff]
        %v556 = vld [vmem:[%s237 + $0x868] sm:$0xff]
        %v557 = vld [vmem:[%s237 + $0x870] sm:$0xff]
        %v558 = vld [vmem:[%s237 + $0x878] sm:$0xff]
        %v559 = vld [vmem:[%s237 + $0x880] sm:$0xff]
        %v560 = vld [vmem:[%s237 + $0x888] sm:$0xff]
        %v561 = vld [vmem:[%s237 + $0x890] sm:$0xff]
        %v562 = vld [vmem:[%s237 + $0x898] sm:$0xff]
        %v563 = vld [vmem:[%s237 + $0x8a0] sm:$0xff]
        %v564 = vld [vmem:[%s237 + $0x8a8] sm:$0xff]
        %v565 = vld [vmem:[%s237 + $0x8b0] sm:$0xff]
        %v566 = vld [vmem:[%s237 + $0x8b8] sm:$0xff]
        %v567 = vld [vmem:[%s237 + $0x8c0] sm:$0xff]
        %v568 = vld [vmem:[%s237 + $0x8c8] sm:$0xff]
        %v569 = vld [vmem:[%s237 + $0x8d0] sm:$0xff]
        %v570 = vld [vmem:[%s237 + $0x8d8] sm:$0xff]
        %v571 = vld [vmem:[%s237 + $0x8e0] sm:$0xff]
        %v572 = vld [vmem:[%s237 + $0x8e8] sm:$0xff]
        %v573 = vld [vmem:[%s237 + $0x8f0] sm:$0xff]
        %v574 = vld [vmem:[%s237 + $0x8f8] sm:$0xff]
        %v575 = vld [vmem:[%s237 + $0x900] sm:$0xff]
        %v576 = vld [vmem:[%s237 + $0x908] sm:$0xff]
        %v577 = vld [vmem:[%s237 + $0x910] sm:$0xff]
        %v578 = vld [vmem:[%s237 + $0x918] sm:$0xff]
        %v579 = vld [vmem:[%s237 + $0x920] sm:$0xff]
        %v580 = vld [vmem:[%s237 + $0x928] sm:$0xff]
        %v581 = vld [vmem:[%s237 + $0x930] sm:$0xff]
        %v582 = vld [vmem:[%s237 + $0x938] sm:$0xff]
        %v583 = vld [vmem:[%s237 + $0x940] sm:$0xff]
        %v584 = vld [vmem:[%s237 + $0x948] sm:$0xff]
        %v585 = vld [vmem:[%s237 + $0x950] sm:$0xff]
        %v586 = vld [vmem:[%s237 + $0x958] sm:$0xff]
        %v587 = vld [vmem:[%s237 + $0x960] sm:$0xff]
        %v588 = vld [vmem:[%s237 + $0x968] sm:$0xff]
        %v589 = vld [vmem:[%s237 + $0x970] sm:$0xff]
        %v590 = vld [vmem:[%s237 + $0x978] sm:$0xff]
        %v591 = vld [vmem:[%s237 + $0x980] sm:$0xff]
        %v592 = vld [vmem:[%s237 + $0x988] sm:$0xff]
        %v593 = vld [vmem:[%s237 + $0x990] sm:$0xff]
        %v594 = vld [vmem:[%s237 + $0x998] sm:$0xff]
        %v595 = vld [vmem:[%s237 + $0x9a0] sm:$0xff]
        %v596 = vld [vmem:[%s237 + $0x9a8] sm:$0xff]
        %v597 = vld [vmem:[%s237 + $0x9b0] sm:$0xff]
        %v598 = vld [vmem:[%s237 + $0x9b8] sm:$0xff]
        %v599 = vld [vmem:[%s237 + $0x9c0] sm:$0xff]
        %v600 = vld [vmem:[%s237 + $0x9c8] sm:$0xff]
        %v601 = vld [vmem:[%s237 + $0x9d0] sm:$0xff]
        %v602 = vld [vmem:[%s237 + $0x9d8] sm:$0xff]
        %v603 = vld [vmem:[%s237 + $0x9e0] sm:$0xff]
        %v604 = vld [vmem:[%s237 + $0x9e8] sm:$0xff]
        %v605 = vld [vmem:[%s237 + $0x9f0] sm:$0xff]
        %v606 = vld [vmem:[%s237 + $0x9f8] sm:$0xff]
        %v607 = vld [vmem:[%s237 + $0xa00] sm:$0xff]
        %v608 = vld [vmem:[%s237 + $0xa08] sm:$0xff]
        %v609 = vld [vmem:[%s237 + $0xa10] sm:$0xff]
        %v610 = vld [vmem:[%s237 + $0xa18] sm:$0xff]
        %v611 = vld [vmem:[%s237 + $0xa20] sm:$0xff]
        %v612 = vld [vmem:[%s237 + $0xa28] sm:$0xff]
        %v613 = vld [vmem:[%s237 + $0xa30] sm:$0xff]
        %v614 = vld [vmem:[%s237 + $0xa38] sm:$0xff]
        %v615 = vld [vmem:[%s237 + $0xa40] sm:$0xff]
        %v616 = vld [vmem:[%s237 + $0xa48] sm:$0xff]
        %v617 = vld [vmem:[%s237 + $0xa50] sm:$0xff]
        %v618 = vld [vmem:[%s237 + $0xa58] sm:$0xff]
        %v619 = vld [vmem:[%s237 + $0xa60] sm:$0xff]
        %v620 = vld [vmem:[%s237 + $0xa68] sm:$0xff]
        %v621 = vld [vmem:[%s237 + $0xa70] sm:$0xff]
        %v622 = vld [vmem:[%s237 + $0xa78] sm:$0xff]
        %v623 = vld [vmem:[%s237 + $0xa80] sm:$0xff]
        %v624 = vld [vmem:[%s237 + $0xa88] sm:$0xff]
        %v625 = vld [vmem:[%s237 + $0xa90] sm:$0xff]
        %v626 = vld [vmem:[%s237 + $0xa98] sm:$0xff]
        %v627 = vld [vmem:[%s237 + $0xaa0] sm:$0xff]
        %v628 = vld [vmem:[%s237 + $0xaa8] sm:$0xff]
        %v629 = vld [vmem:[%s237 + $0xab0] sm:$0xff]
        %v630 = vld [vmem:[%s237 + $0xab8] sm:$0xff]
        %v631 = vld [vmem:[%s237 + $0xac0] sm:$0xff]
        %v632 = vld [vmem:[%s237 + $0xac8] sm:$0xff]
        %v633 = vld [vmem:[%s237 + $0xad0] sm:$0xff]
        %v634 = vld [vmem:[%s237 + $0xad8] sm:$0xff]
        %v635 = vld [vmem:[%s237 + $0xae0] sm:$0xff]
        %v636 = vld [vmem:[%s237 + $0xae8] sm:$0xff]
        %v637 = vld [vmem:[%s237 + $0xaf0] sm:$0xff]
        %v638 = vld [vmem:[%s237 + $0xaf8] sm:$0xff]
        %v639 = vld [vmem:[%s237 + $0xb00] sm:$0xff]
        %v640 = vld [vmem:[%s237 + $0xb08] sm:$0xff]
        %v641 = vld [vmem:[%s237 + $0xb10] sm:$0xff]
        %v642 = vld [vmem:[%s237 + $0xb18] sm:$0xff]
        %v643 = vld [vmem:[%s237 + $0xb20] sm:$0xff]
        %v644 = vld [vmem:[%s237 + $0xb28] sm:$0xff]
        %v645 = vld [vmem:[%s237 + $0xb30] sm:$0xff]
        %v646 = vld [vmem:[%s237 + $0xb38] sm:$0xff]
        %v647 = vld [vmem:[%s237 + $0xb40] sm:$0xff]
        %v648 = vld [vmem:[%s237 + $0xb48] sm:$0xff]
        %v649 = vld [vmem:[%s237 + $0xb50] sm:$0xff]
        %v650 = vld [vmem:[%s237 + $0xb58] sm:$0xff]
        %v651 = vld [vmem:[%s237 + $0xb60] sm:$0xff]
        %v652 = vld [vmem:[%s237 + $0xb68] sm:$0xff]
        %v653 = vld [vmem:[%s237 + $0xb70] sm:$0xff]
        %v654 = vld [vmem:[%s237 + $0xb78] sm:$0xff]
        %v655 = vld [vmem:[%s237 + $0xb80] sm:$0xff]
        %v656 = vld [vmem:[%s237 + $0xb88] sm:$0xff]
        %v657 = vld [vmem:[%s237 + $0xb90] sm:$0xff]
        %v658 = vld [vmem:[%s237 + $0xb98] sm:$0xff]
        %v659 = vld [vmem:[%s237 + $0xba0] sm:$0xff]
        %v660 = vld [vmem:[%s237 + $0xba8] sm:$0xff]
        %v661 = vld [vmem:[%s237 + $0xbb0] sm:$0xff]
        %v662 = vld [vmem:[%s237 + $0xbb8] sm:$0xff]
        %v663 = vld [vmem:[%s237 + $0xbc0] sm:$0xff]
        %v664 = vld [vmem:[%s237 + $0xbc8] sm:$0xff]
        %v665 = vld [vmem:[%s237 + $0xbd0] sm:$0xff]
        %v666 = vld [vmem:[%s237 + $0xbd8] sm:$0xff]
        %v667 = vld [vmem:[%s237 + $0xbe0] sm:$0xff]
        %v668 = vld [vmem:[%s237 + $0xbe8] sm:$0xff]
        %v669 = vld [vmem:[%s237 + $0xbf0] sm:$0xff]
        %v670 = vld [vmem:[%s237 + $0xbf8] sm:$0xff]
        %v671 = vld [vmem:[%s237 + $0xc00] sm:$0xff]
        %v672 = vld [vmem:[%s237 + $0xc08] sm:$0xff]
        %v673 = vld [vmem:[%s237 + $0xc10] sm:$0xff]
        %v674 = vld [vmem:[%s237 + $0xc18] sm:$0xff]
        %v675 = vld [vmem:[%s237 + $0xc20] sm:$0xff]
        %v676 = vld [vmem:[%s237 + $0xc28] sm:$0xff]
        %v677 = vld [vmem:[%s237 + $0xc30] sm:$0xff]
        %v678 = vld [vmem:[%s237 + $0xc38] sm:$0xff]
        %v679 = vld [vmem:[%s237 + $0xc40] sm:$0xff]
        %v680 = vld [vmem:[%s237 + $0xc48] sm:$0xff]
        %v681 = vld [vmem:[%s237 + $0xc50] sm:$0xff]
        %v682 = vld [vmem:[%s237 + $0xc58] sm:$0xff]
        %v683 = vld [vmem:[%s237 + $0xc60] sm:$0xff]
        %v684 = vld [vmem:[%s237 + $0xc68] sm:$0xff]
        %v685 = vld [vmem:[%s237 + $0xc70] sm:$0xff]
        %v686 = vld [vmem:[%s237 + $0xc78] sm:$0xff]
        %v687 = vld [vmem:[%s237 + $0xc80] sm:$0xff]
        %v688 = vld [vmem:[%s237 + $0xc88] sm:$0xff]
        %v689 = vld [vmem:[%s237 + $0xc90] sm:$0xff]
        %v690 = vld [vmem:[%s237 + $0xc98] sm:$0xff]
        %v691 = vld [vmem:[%s237 + $0xca0] sm:$0xff]
        %v692 = vld [vmem:[%s237 + $0xca8] sm:$0xff]
        %v693 = vld [vmem:[%s237 + $0xcb0] sm:$0xff]
        %v694 = vld [vmem:[%s237 + $0xcb8] sm:$0xff]
        %v695 = vld [vmem:[%s237 + $0xcc0] sm:$0xff]
        %v696 = vld [vmem:[%s237 + $0xcc8] sm:$0xff]
        %v697 = vld [vmem:[%s237 + $0xcd0] sm:$0xff]
        %v698 = vld [vmem:[%s237 + $0xcd8] sm:$0xff]
        %v699 = vld [vmem:[%s237 + $0xce0] sm:$0xff]
        %v700 = vld [vmem:[%s237 + $0xce8] sm:$0xff]
        %v701 = vld [vmem:[%s237 + $0xcf0] sm:$0xff]
        %v702 = vld [vmem:[%s237 + $0xcf8] sm:$0xff]
        %v703 = vld [vmem:[%s237 + $0xd00] sm:$0xff]
        %v704 = vld [vmem:[%s237 + $0xd08] sm:$0xff]
        %v705 = vld [vmem:[%s237 + $0xd10] sm:$0xff]
        %v706 = vld [vmem:[%s237 + $0xd18] sm:$0xff]
        %v707 = vld [vmem:[%s237 + $0xd20] sm:$0xff]
        %v708 = vld [vmem:[%s237 + $0xd28] sm:$0xff]
        %v709 = vld [vmem:[%s237 + $0xd30] sm:$0xff]
        %v710 = vld [vmem:[%s237 + $0xd38] sm:$0xff]
        %v711 = vld [vmem:[%s237 + $0xd40] sm:$0xff]
        %v712 = vld [vmem:[%s237 + $0xd48] sm:$0xff]
        %v713 = vld [vmem:[%s237 + $0xd50] sm:$0xff]
        %v714 = vld [vmem:[%s237 + $0xd58] sm:$0xff]
        %v715 = vld [vmem:[%s237 + $0xd60] sm:$0xff]
        %v716 = vld [vmem:[%s237 + $0xd68] sm:$0xff]
        %v717 = vld [vmem:[%s237 + $0xd70] sm:$0xff]
        %v718 = vld [vmem:[%s237 + $0xd78] sm:$0xff]
        %v719 = vld [vmem:[%s237 + $0xd80] sm:$0xff]
        %v720 = vld [vmem:[%s237 + $0xd88] sm:$0xff]
        %v721 = vld [vmem:[%s237 + $0xd90] sm:$0xff]
        %v722 = vld [vmem:[%s237 + $0xd98] sm:$0xff]
        %v723 = vld [vmem:[%s237 + $0xda0] sm:$0xff]
        %v724 = vld [vmem:[%s237 + $0xda8] sm:$0xff]
        %v725 = vld [vmem:[%s237 + $0xdb0] sm:$0xff]
        %v726 = vld [vmem:[%s237 + $0xdb8] sm:$0xff]
        %v727 = vld [vmem:[%s237 + $0xdc0] sm:$0xff]
        %v728 = vld [vmem:[%s237 + $0xdc8] sm:$0xff]
        %v729 = vld [vmem:[%s237 + $0xdd0] sm:$0xff]
        %v730 = vld [vmem:[%s237 + $0xdd8] sm:$0xff]
        %v731 = vld [vmem:[%s237 + $0xde0] sm:$0xff]
        %v732 = vld [vmem:[%s237 + $0xde8] sm:$0xff]
        %v733 = vld [vmem:[%s237 + $0xdf0] sm:$0xff]
        %v734 = vld [vmem:[%s237 + $0xdf8] sm:$0xff]
        %v736 = vcombine.high %v286, %v286
        %v738 = vunpack.c.l.s4 1966171168
        %v739 = vunpack.c.0.s8 %v738
        %v740 = vlaneseq
        %v741 = vshrl.u32 %v740, 7
        %v742 = vsub.s32 %v739, %v741
        %v743 = vrot.slane %v286, %v742
        %v745 = vunpack.c.l.s4 1966171168
        %v746 = vunpack.c.0.s8 %v745
        %v747 = vlaneseq
        %v748 = vshrl.u32 %v747, 7
        %v749 = vsub.s32 %v746, %v748
        %v750 = vrot.slane %v736, %v749
        %v751 = vcombine.high %v743, %v743
        %v752 = vcombine.high %v750, %v750
        %v754 = vunpack.c.l.s4 1966171168
        %v755 = vunpack.c.0.s8 %v754
        %v756 = vlaneseq
        %v757 = vshrl.u32 %v756, 7
        %v758 = vsub.s32 %v755, %v757
        %v759 = vrot.slane %v743, %v758
        %v761 = vunpack.c.l.s4 1966171168
        %v762 = vunpack.c.0.s8 %v761
        %v763 = vlaneseq
        %v764 = vshrl.u32 %v763, 7
        %v765 = vsub.s32 %v762, %v764
        %v766 = vrot.slane %v750, %v765
        %v768 = vunpack.c.l.s4 1966171168
        %v769 = vunpack.c.0.s8 %v768
        %v770 = vlaneseq
        %v771 = vshrl.u32 %v770, 7
        %v772 = vsub.s32 %v769, %v771
        %v773 = vrot.slane %v751, %v772
        %v775 = vunpack.c.l.s4 1966171168
        %v776 = vunpack.c.0.s8 %v775
        %v777 = vlaneseq
        %v778 = vshrl.u32 %v777, 7
        %v779 = vsub.s32 %v776, %v778
        %v780 = vrot.slane %v752, %v779
        %v781 = vcombine.high %v759, %v759
        %v782 = vcombine.high %v766, %v766
        %v783 = vcombine.high %v773, %v773
        %v1239 = vunpack.c.l.b16 %v287
        %v1240 = vunpack.c.h.b16 %v287
        %v1241 = vunpack.c.l.b16 %v288
        %v1242 = vunpack.c.h.b16 %v288
        %v1243 = vunpack.c.l.b16 %v289
        %v1244 = vunpack.c.h.b16 %v289
        %v1245 = vunpack.c.l.b16 %v290
        %v1246 = vunpack.c.h.b16 %v290
        %v1247 = vunpack.c.l.b16 %v291
        %v1248 = vunpack.c.h.b16 %v291
        %v1249 = vunpack.c.l.b16 %v292
        %v1250 = vunpack.c.h.b16 %v292
        %v1251 = vunpack.c.l.b16 %v293
        %v1252 = vunpack.c.h.b16 %v293
        %v1253 = vunpack.c.l.b16 %v294
        %v1254 = vunpack.c.h.b16 %v294
        %v1255 = vunpack.c.l.b16 %v295
        %v1256 = vunpack.c.h.b16 %v295
        %v1257 = vunpack.c.l.b16 %v296
        %v1258 = vunpack.c.h.b16 %v296
        %v1259 = vunpack.c.l.b16 %v297
        %v1260 = vunpack.c.h.b16 %v297
        %v1261 = vunpack.c.l.b16 %v298
        %v1262 = vunpack.c.h.b16 %v298
        %v1263 = vunpack.c.l.b16 %v299
        %v1264 = vunpack.c.h.b16 %v299
        %v1265 = vunpack.c.l.b16 %v300
        %v1266 = vunpack.c.h.b16 %v300
        %v1267 = vunpack.c.l.b16 %v301
        %v1268 = vunpack.c.h.b16 %v301
        %v1269 = vunpack.c.l.b16 %v302
        %v1270 = vunpack.c.h.b16 %v302
        %v1271 = vunpack.c.l.b16 %v303
        %v1272 = vunpack.c.h.b16 %v303
        %v1273 = vunpack.c.l.b16 %v304
        %v1274 = vunpack.c.h.b16 %v304
        %v1275 = vunpack.c.l.b16 %v305
        %v1276 = vunpack.c.h.b16 %v305
        %v1277 = vunpack.c.l.b16 %v306
        %v1278 = vunpack.c.h.b16 %v306
        %v1279 = vunpack.c.l.b16 %v307
        %v1280 = vunpack.c.h.b16 %v307
        %v1281 = vunpack.c.l.b16 %v308
        %v1282 = vunpack.c.h.b16 %v308
        %v1283 = vunpack.c.l.b16 %v309
        %v1284 = vunpack.c.h.b16 %v309
        %v1285 = vunpack.c.l.b16 %v310
        %v1286 = vunpack.c.h.b16 %v310
        %v1287 = vunpack.c.l.b16 %v311
        %v1288 = vunpack.c.h.b16 %v311
        %v1289 = vunpack.c.l.b16 %v312
        %v1290 = vunpack.c.h.b16 %v312
        %v1291 = vunpack.c.l.b16 %v313
        %v1292 = vunpack.c.h.b16 %v313
        %v1293 = vunpack.c.l.b16 %v314
        %v1294 = vunpack.c.h.b16 %v314
        %v1295 = vunpack.c.l.b16 %v315
        %v1296 = vunpack.c.h.b16 %v315
        %v1297 = vunpack.c.l.b16 %v316
        %v1298 = vunpack.c.h.b16 %v316
        %v1299 = vunpack.c.l.b16 %v317
        %v1300 = vunpack.c.h.b16 %v317
        %v1301 = vunpack.c.l.b16 %v318
        %v1302 = vunpack.c.h.b16 %v318
        %v1303 = vunpack.c.l.b16 %v319
        %v1304 = vunpack.c.h.b16 %v319
        %v1305 = vunpack.c.l.b16 %v320
        %v1306 = vunpack.c.h.b16 %v320
        %v1307 = vunpack.c.l.b16 %v321
        %v1308 = vunpack.c.h.b16 %v321
        %v1309 = vunpack.c.l.b16 %v322
        %v1310 = vunpack.c.h.b16 %v322
        %v1311 = vunpack.c.l.b16 %v323
        %v1312 = vunpack.c.h.b16 %v323
        %v1313 = vunpack.c.l.b16 %v324
        %v1314 = vunpack.c.h.b16 %v324
        %v1315 = vunpack.c.l.b16 %v325
        %v1316 = vunpack.c.h.b16 %v325
        %v1317 = vunpack.c.l.b16 %v326
        %v1318 = vunpack.c.h.b16 %v326
        %v1319 = vunpack.c.l.b16 %v327
        %v1320 = vunpack.c.h.b16 %v327
        %v1321 = vunpack.c.l.b16 %v328
        %v1322 = vunpack.c.h.b16 %v328
        %v1323 = vunpack.c.l.b16 %v329
        %v1324 = vunpack.c.h.b16 %v329
        %v1325 = vunpack.c.l.b16 %v330
        %v1326 = vunpack.c.h.b16 %v330
        %v1327 = vunpack.c.l.b16 %v331
        %v1328 = vunpack.c.h.b16 %v331
        %v1329 = vunpack.c.l.b16 %v332
        %v1330 = vunpack.c.h.b16 %v332
        %v1331 = vunpack.c.l.b16 %v333
        %v1332 = vunpack.c.h.b16 %v333
        %v1333 = vunpack.c.l.b16 %v334
        %v1334 = vunpack.c.h.b16 %v334
        %v1335 = vunpack.c.l.b16 %v335
        %v1336 = vunpack.c.h.b16 %v335
        %v1337 = vunpack.c.l.b16 %v336
        %v1338 = vunpack.c.h.b16 %v336
        %v1339 = vunpack.c.l.b16 %v337
        %v1340 = vunpack.c.h.b16 %v337
        %v1341 = vunpack.c.l.b16 %v338
        %v1342 = vunpack.c.h.b16 %v338
        %v1343 = vunpack.c.l.b16 %v339
        %v1344 = vunpack.c.h.b16 %v339
        %v1345 = vunpack.c.l.b16 %v340
        %v1346 = vunpack.c.h.b16 %v340
        %v1347 = vunpack.c.l.b16 %v341
        %v1348 = vunpack.c.h.b16 %v341
        %v1349 = vunpack.c.l.b16 %v342
        %v1350 = vunpack.c.h.b16 %v342
        %v1351 = vunpack.c.l.b16 %v343
        %v1352 = vunpack.c.h.b16 %v343
        %v1353 = vunpack.c.l.b16 %v344
        %v1354 = vunpack.c.h.b16 %v344
        %v1355 = vunpack.c.l.b16 %v345
        %v1356 = vunpack.c.h.b16 %v345
        %v1357 = vunpack.c.l.b16 %v346
        %v1358 = vunpack.c.h.b16 %v346
        %v1359 = vunpack.c.l.b16 %v347
        %v1360 = vunpack.c.h.b16 %v347
        %v1361 = vunpack.c.l.b16 %v348
        %v1362 = vunpack.c.h.b16 %v348
        %v1363 = vunpack.c.l.b16 %v349
        %v1364 = vunpack.c.h.b16 %v349
        %v1365 = vunpack.c.l.b16 %v350
        %v1366 = vunpack.c.h.b16 %v350
        %v1367 = vunpack.c.l.b16 %v351
        %v1368 = vunpack.c.h.b16 %v351
        %v1369 = vunpack.c.l.b16 %v352
        %v1370 = vunpack.c.h.b16 %v352
        %v1371 = vunpack.c.l.b16 %v353
        %v1372 = vunpack.c.h.b16 %v353
        %v1373 = vunpack.c.l.b16 %v354
        %v1374 = vunpack.c.h.b16 %v354
        %v1375 = vunpack.c.l.b16 %v355
        %v1376 = vunpack.c.h.b16 %v355
        %v1377 = vunpack.c.l.b16 %v356
        %v1378 = vunpack.c.h.b16 %v356
        %v1379 = vunpack.c.l.b16 %v357
        %v1380 = vunpack.c.h.b16 %v357
        %v1381 = vunpack.c.l.b16 %v358
        %v1382 = vunpack.c.h.b16 %v358
        %v1383 = vunpack.c.l.b16 %v359
        %v1384 = vunpack.c.h.b16 %v359
        %v1385 = vunpack.c.l.b16 %v360
        %v1386 = vunpack.c.h.b16 %v360
        %v1387 = vunpack.c.l.b16 %v361
        %v1388 = vunpack.c.h.b16 %v361
        %v1389 = vunpack.c.l.b16 %v362
        %v1390 = vunpack.c.h.b16 %v362
        %v1391 = vunpack.c.l.b16 %v363
        %v1392 = vunpack.c.h.b16 %v363
        %v1393 = vunpack.c.l.b16 %v364
        %v1394 = vunpack.c.h.b16 %v364
        %v1395 = vunpack.c.l.b16 %v365
        %v1396 = vunpack.c.h.b16 %v365
        %v1397 = vunpack.c.l.b16 %v366
        %v1398 = vunpack.c.h.b16 %v366
        %v1399 = vunpack.c.l.b16 %v367
        %v1400 = vunpack.c.h.b16 %v367
        %v1401 = vunpack.c.l.b16 %v368
        %v1402 = vunpack.c.h.b16 %v368
        %v1403 = vunpack.c.l.b16 %v369
        %v1404 = vunpack.c.h.b16 %v369
        %v1405 = vunpack.c.l.b16 %v370
        %v1406 = vunpack.c.h.b16 %v370
        %v1407 = vunpack.c.l.b16 %v371
        %v1408 = vunpack.c.h.b16 %v371
        %v1409 = vunpack.c.l.b16 %v372
        %v1410 = vunpack.c.h.b16 %v372
        %v1411 = vunpack.c.l.b16 %v373
        %v1412 = vunpack.c.h.b16 %v373
        %v1413 = vunpack.c.l.b16 %v374
        %v1414 = vunpack.c.h.b16 %v374
        %v1415 = vunpack.c.l.b16 %v375
        %v1416 = vunpack.c.h.b16 %v375
        %v1417 = vunpack.c.l.b16 %v376
        %v1418 = vunpack.c.h.b16 %v376
        %v1419 = vunpack.c.l.b16 %v377
        %v1420 = vunpack.c.h.b16 %v377
        %v1421 = vunpack.c.l.b16 %v378
        %v1422 = vunpack.c.h.b16 %v378
        %v1423 = vunpack.c.l.b16 %v379
        %v1424 = vunpack.c.h.b16 %v379
        %v1425 = vunpack.c.l.b16 %v380
        %v1426 = vunpack.c.h.b16 %v380
        %v1427 = vunpack.c.l.b16 %v381
        %v1428 = vunpack.c.h.b16 %v381
        %v1429 = vunpack.c.l.b16 %v382
        %v1430 = vunpack.c.h.b16 %v382
        %v1431 = vunpack.c.l.b16 %v383
        %v1432 = vunpack.c.h.b16 %v383
        %v1433 = vunpack.c.l.b16 %v384
        %v1434 = vunpack.c.h.b16 %v384
        %v1435 = vunpack.c.l.b16 %v385
        %v1436 = vunpack.c.h.b16 %v385
        %v1437 = vunpack.c.l.b16 %v386
        %v1438 = vunpack.c.h.b16 %v386
        %v1439 = vunpack.c.l.b16 %v387
        %v1440 = vunpack.c.h.b16 %v387
        %v1441 = vunpack.c.l.b16 %v388
        %v1442 = vunpack.c.h.b16 %v388
        %v1443 = vunpack.c.l.b16 %v389
        %v1444 = vunpack.c.h.b16 %v389
        %v1445 = vunpack.c.l.b16 %v390
        %v1446 = vunpack.c.h.b16 %v390
        %v1447 = vunpack.c.l.b16 %v391
        %v1448 = vunpack.c.h.b16 %v391
        %v1449 = vunpack.c.l.b16 %v392
        %v1450 = vunpack.c.h.b16 %v392
        %v1451 = vunpack.c.l.b16 %v393
        %v1452 = vunpack.c.h.b16 %v393
        %v1453 = vunpack.c.l.b16 %v394
        %v1454 = vunpack.c.h.b16 %v394
        %v1455 = vunpack.c.l.b16 %v395
        %v1456 = vunpack.c.h.b16 %v395
        %v1457 = vunpack.c.l.b16 %v396
        %v1458 = vunpack.c.h.b16 %v396
        %v1459 = vunpack.c.l.b16 %v397
        %v1460 = vunpack.c.h.b16 %v397
        %v1461 = vunpack.c.l.b16 %v398
        %v1462 = vunpack.c.h.b16 %v398
        %v1463 = vunpack.c.l.b16 %v399
        %v1464 = vunpack.c.h.b16 %v399
        %v1465 = vunpack.c.l.b16 %v400
        %v1466 = vunpack.c.h.b16 %v400
        %v1467 = vunpack.c.l.b16 %v401
        %v1468 = vunpack.c.h.b16 %v401
        %v1469 = vunpack.c.l.b16 %v402
        %v1470 = vunpack.c.h.b16 %v402
        %v1471 = vunpack.c.l.b16 %v403
        %v1472 = vunpack.c.h.b16 %v403
        %v1473 = vunpack.c.l.b16 %v404
        %v1474 = vunpack.c.h.b16 %v404
        %v1475 = vunpack.c.l.b16 %v405
        %v1476 = vunpack.c.h.b16 %v405
        %v1477 = vunpack.c.l.b16 %v406
        %v1478 = vunpack.c.h.b16 %v406
        %v1479 = vunpack.c.l.b16 %v407
        %v1480 = vunpack.c.h.b16 %v407
        %v1481 = vunpack.c.l.b16 %v408
        %v1482 = vunpack.c.h.b16 %v408
        %v1483 = vunpack.c.l.b16 %v409
        %v1484 = vunpack.c.h.b16 %v409
        %v1485 = vunpack.c.l.b16 %v410
        %v1486 = vunpack.c.h.b16 %v410
        %v1487 = vunpack.c.l.b16 %v411
        %v1488 = vunpack.c.h.b16 %v411
        %v1489 = vunpack.c.l.b16 %v412
        %v1490 = vunpack.c.h.b16 %v412
        %v1491 = vunpack.c.l.b16 %v413
        %v1492 = vunpack.c.h.b16 %v413
        %v1493 = vunpack.c.l.b16 %v414
        %v1494 = vunpack.c.h.b16 %v414
        %v1495 = vunpack.c.l.b16 %v415
        %v1496 = vunpack.c.h.b16 %v415
        %v1497 = vunpack.c.l.b16 %v416
        %v1498 = vunpack.c.h.b16 %v416
        %v1499 = vunpack.c.l.b16 %v417
        %v1500 = vunpack.c.h.b16 %v417
        %v1501 = vunpack.c.l.b16 %v418
        %v1502 = vunpack.c.h.b16 %v418
        %v1503 = vunpack.c.l.b16 %v419
        %v1504 = vunpack.c.h.b16 %v419
        %v1505 = vunpack.c.l.b16 %v420
        %v1506 = vunpack.c.h.b16 %v420
        %v1507 = vunpack.c.l.b16 %v421
        %v1508 = vunpack.c.h.b16 %v421
        %v1509 = vunpack.c.l.b16 %v422
        %v1510 = vunpack.c.h.b16 %v422
        %v1511 = vunpack.c.l.b16 %v423
        %v1512 = vunpack.c.h.b16 %v423
        %v1513 = vunpack.c.l.b16 %v424
        %v1514 = vunpack.c.h.b16 %v424
        %v1515 = vunpack.c.l.b16 %v425
        %v1516 = vunpack.c.h.b16 %v425
        %v1517 = vunpack.c.l.b16 %v426
        %v1518 = vunpack.c.h.b16 %v426
        %v1519 = vunpack.c.l.b16 %v427
        %v1520 = vunpack.c.h.b16 %v427
        %v1521 = vunpack.c.l.b16 %v428
        %v1522 = vunpack.c.h.b16 %v428
        %v1523 = vunpack.c.l.b16 %v429
        %v1524 = vunpack.c.h.b16 %v429
        %v1525 = vunpack.c.l.b16 %v430
        %v1526 = vunpack.c.h.b16 %v430
        %v1527 = vunpack.c.l.b16 %v431
        %v1528 = vunpack.c.h.b16 %v431
        %v1529 = vunpack.c.l.b16 %v432
        %v1530 = vunpack.c.h.b16 %v432
        %v1531 = vunpack.c.l.b16 %v433
        %v1532 = vunpack.c.h.b16 %v433
        %v1533 = vunpack.c.l.b16 %v434
        %v1534 = vunpack.c.h.b16 %v434
        %v1535 = vunpack.c.l.b16 %v435
        %v1536 = vunpack.c.h.b16 %v435
        %v1537 = vunpack.c.l.b16 %v436
        %v1538 = vunpack.c.h.b16 %v436
        %v1539 = vunpack.c.l.b16 %v437
        %v1540 = vunpack.c.h.b16 %v437
        %v1541 = vunpack.c.l.b16 %v438
        %v1542 = vunpack.c.h.b16 %v438
        %v1543 = vunpack.c.l.b16 %v439
        %v1544 = vunpack.c.h.b16 %v439
        %v1545 = vunpack.c.l.b16 %v440
        %v1546 = vunpack.c.h.b16 %v440
        %v1547 = vunpack.c.l.b16 %v441
        %v1548 = vunpack.c.h.b16 %v441
        %v1549 = vunpack.c.l.b16 %v442
        %v1550 = vunpack.c.h.b16 %v442
        %v1551 = vunpack.c.l.b16 %v443
        %v1552 = vunpack.c.h.b16 %v443
        %v1553 = vunpack.c.l.b16 %v444
        %v1554 = vunpack.c.h.b16 %v444
        %v1555 = vunpack.c.l.b16 %v445
        %v1556 = vunpack.c.h.b16 %v445
        %v1557 = vunpack.c.l.b16 %v446
        %v1558 = vunpack.c.h.b16 %v446
        %v1559 = vunpack.c.l.b16 %v447
        %v1560 = vunpack.c.h.b16 %v447
        %v1561 = vunpack.c.l.b16 %v448
        %v1562 = vunpack.c.h.b16 %v448
        %v1563 = vunpack.c.l.b16 %v449
        %v1564 = vunpack.c.h.b16 %v449
        %v1565 = vunpack.c.l.b16 %v450
        %v1566 = vunpack.c.h.b16 %v450
        %v1567 = vunpack.c.l.b16 %v451
        %v1568 = vunpack.c.h.b16 %v451
        %v1569 = vunpack.c.l.b16 %v452
        %v1570 = vunpack.c.h.b16 %v452
        %v1571 = vunpack.c.l.b16 %v453
        %v1572 = vunpack.c.h.b16 %v453
        %v1573 = vunpack.c.l.b16 %v454
        %v1574 = vunpack.c.h.b16 %v454
        %v1575 = vunpack.c.l.b16 %v455
        %v1576 = vunpack.c.h.b16 %v455
        %v1577 = vunpack.c.l.b16 %v456
        %v1578 = vunpack.c.h.b16 %v456
        %v1579 = vunpack.c.l.b16 %v457
        %v1580 = vunpack.c.h.b16 %v457
        %v1581 = vunpack.c.l.b16 %v458
        %v1582 = vunpack.c.h.b16 %v458
        %v1583 = vunpack.c.l.b16 %v459
        %v1584 = vunpack.c.h.b16 %v459
        %v1585 = vunpack.c.l.b16 %v460
        %v1586 = vunpack.c.h.b16 %v460
        %v1587 = vunpack.c.l.b16 %v461
        %v1588 = vunpack.c.h.b16 %v461
        %v1589 = vunpack.c.l.b16 %v462
        %v1590 = vunpack.c.h.b16 %v462
        %v1591 = vunpack.c.l.b16 %v463
        %v1592 = vunpack.c.h.b16 %v463
        %v1593 = vunpack.c.l.b16 %v464
        %v1594 = vunpack.c.h.b16 %v464
        %v1595 = vunpack.c.l.b16 %v465
        %v1596 = vunpack.c.h.b16 %v465
        %v1597 = vunpack.c.l.b16 %v466
        %v1598 = vunpack.c.h.b16 %v466
        %v1599 = vunpack.c.l.b16 %v467
        %v1600 = vunpack.c.h.b16 %v467
        %v1601 = vunpack.c.l.b16 %v468
        %v1602 = vunpack.c.h.b16 %v468
        %v1603 = vunpack.c.l.b16 %v469
        %v1604 = vunpack.c.h.b16 %v469
        %v1605 = vunpack.c.l.b16 %v470
        %v1606 = vunpack.c.h.b16 %v470
        %v1607 = vunpack.c.l.b16 %v471
        %v1608 = vunpack.c.h.b16 %v471
        %v1609 = vunpack.c.l.b16 %v472
        %v1610 = vunpack.c.h.b16 %v472
        %v1611 = vunpack.c.l.b16 %v473
        %v1612 = vunpack.c.h.b16 %v473
        %v1613 = vunpack.c.l.b16 %v474
        %v1614 = vunpack.c.h.b16 %v474
        %v1615 = vunpack.c.l.b16 %v475
        %v1616 = vunpack.c.h.b16 %v475
        %v1617 = vunpack.c.l.b16 %v476
        %v1618 = vunpack.c.h.b16 %v476
        %v1619 = vunpack.c.l.b16 %v477
        %v1620 = vunpack.c.h.b16 %v477
        %v1621 = vunpack.c.l.b16 %v478
        %v1622 = vunpack.c.h.b16 %v478
        %v1623 = vunpack.c.l.b16 %v479
        %v1624 = vunpack.c.h.b16 %v479
        %v1625 = vunpack.c.l.b16 %v480
        %v1626 = vunpack.c.h.b16 %v480
        %v1627 = vunpack.c.l.b16 %v481
        %v1628 = vunpack.c.h.b16 %v481
        %v1629 = vunpack.c.l.b16 %v482
        %v1630 = vunpack.c.h.b16 %v482
        %v1631 = vunpack.c.l.b16 %v483
        %v1632 = vunpack.c.h.b16 %v483
        %v1633 = vunpack.c.l.b16 %v484
        %v1634 = vunpack.c.h.b16 %v484
        %v1635 = vunpack.c.l.b16 %v485
        %v1636 = vunpack.c.h.b16 %v485
        %v1637 = vunpack.c.l.b16 %v486
        %v1638 = vunpack.c.h.b16 %v486
        %v1639 = vunpack.c.l.b16 %v487
        %v1640 = vunpack.c.h.b16 %v487
        %v1641 = vunpack.c.l.b16 %v488
        %v1642 = vunpack.c.h.b16 %v488
        %v1643 = vunpack.c.l.b16 %v489
        %v1644 = vunpack.c.h.b16 %v489
        %v1645 = vunpack.c.l.b16 %v490
        %v1646 = vunpack.c.h.b16 %v490
        %v1647 = vunpack.c.l.b16 %v491
        %v1648 = vunpack.c.h.b16 %v491
        %v1649 = vunpack.c.l.b16 %v492
        %v1650 = vunpack.c.h.b16 %v492
        %v1651 = vunpack.c.l.b16 %v493
        %v1652 = vunpack.c.h.b16 %v493
        %v1653 = vunpack.c.l.b16 %v494
        %v1654 = vunpack.c.h.b16 %v494
        %v1655 = vunpack.c.l.b16 %v495
        %v1656 = vunpack.c.h.b16 %v495
        %v1657 = vunpack.c.l.b16 %v496
        %v1658 = vunpack.c.h.b16 %v496
        %v1659 = vunpack.c.l.b16 %v497
        %v1660 = vunpack.c.h.b16 %v497
        %v1661 = vunpack.c.l.b16 %v498
        %v1662 = vunpack.c.h.b16 %v498
        %v1663 = vunpack.c.l.b16 %v499
        %v1664 = vunpack.c.h.b16 %v499
        %v1665 = vunpack.c.l.b16 %v500
        %v1666 = vunpack.c.h.b16 %v500
        %v1667 = vunpack.c.l.b16 %v501
        %v1668 = vunpack.c.h.b16 %v501
        %v1669 = vunpack.c.l.b16 %v502
        %v1670 = vunpack.c.h.b16 %v502
        %v1671 = vunpack.c.l.b16 %v503
        %v1672 = vunpack.c.h.b16 %v503
        %v1673 = vunpack.c.l.b16 %v504
        %v1674 = vunpack.c.h.b16 %v504
        %v1675 = vunpack.c.l.b16 %v505
        %v1676 = vunpack.c.h.b16 %v505
        %v1677 = vunpack.c.l.b16 %v506
        %v1678 = vunpack.c.h.b16 %v506
        %v1679 = vunpack.c.l.b16 %v507
        %v1680 = vunpack.c.h.b16 %v507
        %v1681 = vunpack.c.l.b16 %v508
        %v1682 = vunpack.c.h.b16 %v508
        %v1683 = vunpack.c.l.b16 %v509
        %v1684 = vunpack.c.h.b16 %v509
        %v1685 = vunpack.c.l.b16 %v510
        %v1686 = vunpack.c.h.b16 %v510
        %v1687 = vunpack.c.l.b16 %v511
        %v1688 = vunpack.c.h.b16 %v511
        %v1689 = vunpack.c.l.b16 %v512
        %v1690 = vunpack.c.h.b16 %v512
        %v1691 = vunpack.c.l.b16 %v513
        %v1692 = vunpack.c.h.b16 %v513
        %v1693 = vunpack.c.l.b16 %v514
        %v1694 = vunpack.c.h.b16 %v514
        %v1695 = vunpack.c.l.b16 %v515
        %v1696 = vunpack.c.h.b16 %v515
        %v1697 = vunpack.c.l.b16 %v516
        %v1698 = vunpack.c.h.b16 %v516
        %v1699 = vunpack.c.l.b16 %v517
        %v1700 = vunpack.c.h.b16 %v517
        %v1701 = vunpack.c.l.b16 %v518
        %v1702 = vunpack.c.h.b16 %v518
        %v1703 = vunpack.c.l.b16 %v519
        %v1704 = vunpack.c.h.b16 %v519
        %v1705 = vunpack.c.l.b16 %v520
        %v1706 = vunpack.c.h.b16 %v520
        %v1707 = vunpack.c.l.b16 %v521
        %v1708 = vunpack.c.h.b16 %v521
        %v1709 = vunpack.c.l.b16 %v522
        %v1710 = vunpack.c.h.b16 %v522
        %v1711 = vunpack.c.l.b16 %v523
        %v1712 = vunpack.c.h.b16 %v523
        %v1713 = vunpack.c.l.b16 %v524
        %v1714 = vunpack.c.h.b16 %v524
        %v1715 = vunpack.c.l.b16 %v525
        %v1716 = vunpack.c.h.b16 %v525
        %v1717 = vunpack.c.l.b16 %v526
        %v1718 = vunpack.c.h.b16 %v526
        %v1719 = vunpack.c.l.b16 %v527
        %v1720 = vunpack.c.h.b16 %v527
        %v1721 = vunpack.c.l.b16 %v528
        %v1722 = vunpack.c.h.b16 %v528
        %v1723 = vunpack.c.l.b16 %v529
        %v1724 = vunpack.c.h.b16 %v529
        %v1725 = vunpack.c.l.b16 %v530
        %v1726 = vunpack.c.h.b16 %v530
        %v1727 = vunpack.c.l.b16 %v531
        %v1728 = vunpack.c.h.b16 %v531
        %v1729 = vunpack.c.l.b16 %v532
        %v1730 = vunpack.c.h.b16 %v532
        %v1731 = vunpack.c.l.b16 %v533
        %v1732 = vunpack.c.h.b16 %v533
        %v1733 = vunpack.c.l.b16 %v534
        %v1734 = vunpack.c.h.b16 %v534
        %v1735 = vunpack.c.l.b16 %v535
        %v1736 = vunpack.c.h.b16 %v535
        %v1737 = vunpack.c.l.b16 %v536
        %v1738 = vunpack.c.h.b16 %v536
        %v1739 = vunpack.c.l.b16 %v537
        %v1740 = vunpack.c.h.b16 %v537
        %v1741 = vunpack.c.l.b16 %v538
        %v1742 = vunpack.c.h.b16 %v538
        %v1743 = vunpack.c.l.b16 %v539
        %v1744 = vunpack.c.h.b16 %v539
        %v1745 = vunpack.c.l.b16 %v540
        %v1746 = vunpack.c.h.b16 %v540
        %v1747 = vunpack.c.l.b16 %v541
        %v1748 = vunpack.c.h.b16 %v541
        %v1749 = vunpack.c.l.b16 %v542
        %v1750 = vunpack.c.h.b16 %v542
        %v1751 = vunpack.c.l.b16 %v543
        %v1752 = vunpack.c.h.b16 %v543
        %v1753 = vunpack.c.l.b16 %v544
        %v1754 = vunpack.c.h.b16 %v544
        %v1755 = vunpack.c.l.b16 %v545
        %v1756 = vunpack.c.h.b16 %v545
        %v1757 = vunpack.c.l.b16 %v546
        %v1758 = vunpack.c.h.b16 %v546
        %v1759 = vunpack.c.l.b16 %v547
        %v1760 = vunpack.c.h.b16 %v547
        %v1761 = vunpack.c.l.b16 %v548
        %v1762 = vunpack.c.h.b16 %v548
        %v1763 = vunpack.c.l.b16 %v549
        %v1764 = vunpack.c.h.b16 %v549
        %v1765 = vunpack.c.l.b16 %v550
        %v1766 = vunpack.c.h.b16 %v550
        %v1767 = vunpack.c.l.b16 %v551
        %v1768 = vunpack.c.h.b16 %v551
        %v1769 = vunpack.c.l.b16 %v552
        %v1770 = vunpack.c.h.b16 %v552
        %v1771 = vunpack.c.l.b16 %v553
        %v1772 = vunpack.c.h.b16 %v553
        %v1773 = vunpack.c.l.b16 %v554
        %v1774 = vunpack.c.h.b16 %v554
        %v1775 = vunpack.c.l.b16 %v555
        %v1776 = vunpack.c.h.b16 %v555
        %v1777 = vunpack.c.l.b16 %v556
        %v1778 = vunpack.c.h.b16 %v556
        %v1779 = vunpack.c.l.b16 %v557
        %v1780 = vunpack.c.h.b16 %v557
        %v1781 = vunpack.c.l.b16 %v558
        %v1782 = vunpack.c.h.b16 %v558
        %v1783 = vunpack.c.l.b16 %v559
        %v1784 = vunpack.c.h.b16 %v559
        %v1785 = vunpack.c.l.b16 %v560
        %v1786 = vunpack.c.h.b16 %v560
        %v1787 = vunpack.c.l.b16 %v561
        %v1788 = vunpack.c.h.b16 %v561
        %v1789 = vunpack.c.l.b16 %v562
        %v1790 = vunpack.c.h.b16 %v562
        %v1791 = vunpack.c.l.b16 %v563
        %v1792 = vunpack.c.h.b16 %v563
        %v1793 = vunpack.c.l.b16 %v564
        %v1794 = vunpack.c.h.b16 %v564
        %v1795 = vunpack.c.l.b16 %v565
        %v1796 = vunpack.c.h.b16 %v565
        %v1797 = vunpack.c.l.b16 %v566
        %v1798 = vunpack.c.h.b16 %v566
        %v1799 = vunpack.c.l.b16 %v567
        %v1800 = vunpack.c.h.b16 %v567
        %v1801 = vunpack.c.l.b16 %v568
        %v1802 = vunpack.c.h.b16 %v568
        %v1803 = vunpack.c.l.b16 %v569
        %v1804 = vunpack.c.h.b16 %v569
        %v1805 = vunpack.c.l.b16 %v570
        %v1806 = vunpack.c.h.b16 %v570
        %v1807 = vunpack.c.l.b16 %v571
        %v1808 = vunpack.c.h.b16 %v571
        %v1809 = vunpack.c.l.b16 %v572
        %v1810 = vunpack.c.h.b16 %v572
        %v1811 = vunpack.c.l.b16 %v573
        %v1812 = vunpack.c.h.b16 %v573
        %v1813 = vunpack.c.l.b16 %v574
        %v1814 = vunpack.c.h.b16 %v574
        %v1815 = vunpack.c.l.b16 %v575
        %v1816 = vunpack.c.h.b16 %v575
        %v1817 = vunpack.c.l.b16 %v576
        %v1818 = vunpack.c.h.b16 %v576
        %v1819 = vunpack.c.l.b16 %v577
        %v1820 = vunpack.c.h.b16 %v577
        %v1821 = vunpack.c.l.b16 %v578
        %v1822 = vunpack.c.h.b16 %v578
        %v1823 = vunpack.c.l.b16 %v579
        %v1824 = vunpack.c.h.b16 %v579
        %v1825 = vunpack.c.l.b16 %v580
        %v1826 = vunpack.c.h.b16 %v580
        %v1827 = vunpack.c.l.b16 %v581
        %v1828 = vunpack.c.h.b16 %v581
        %v1829 = vunpack.c.l.b16 %v582
        %v1830 = vunpack.c.h.b16 %v582
        %v1831 = vunpack.c.l.b16 %v583
        %v1832 = vunpack.c.h.b16 %v583
        %v1833 = vunpack.c.l.b16 %v584
        %v1834 = vunpack.c.h.b16 %v584
        %v1835 = vunpack.c.l.b16 %v585
        %v1836 = vunpack.c.h.b16 %v585
        %v1837 = vunpack.c.l.b16 %v586
        %v1838 = vunpack.c.h.b16 %v586
        %v1839 = vunpack.c.l.b16 %v587
        %v1840 = vunpack.c.h.b16 %v587
        %v1841 = vunpack.c.l.b16 %v588
        %v1842 = vunpack.c.h.b16 %v588
        %v1843 = vunpack.c.l.b16 %v589
        %v1844 = vunpack.c.h.b16 %v589
        %v1845 = vunpack.c.l.b16 %v590
        %v1846 = vunpack.c.h.b16 %v590
        %v1847 = vunpack.c.l.b16 %v591
        %v1848 = vunpack.c.h.b16 %v591
        %v1849 = vunpack.c.l.b16 %v592
        %v1850 = vunpack.c.h.b16 %v592
        %v1851 = vunpack.c.l.b16 %v593
        %v1852 = vunpack.c.h.b16 %v593
        %v1853 = vunpack.c.l.b16 %v594
        %v1854 = vunpack.c.h.b16 %v594
        %v1855 = vunpack.c.l.b16 %v595
        %v1856 = vunpack.c.h.b16 %v595
        %v1857 = vunpack.c.l.b16 %v596
        %v1858 = vunpack.c.h.b16 %v596
        %v1859 = vunpack.c.l.b16 %v597
        %v1860 = vunpack.c.h.b16 %v597
        %v1861 = vunpack.c.l.b16 %v598
        %v1862 = vunpack.c.h.b16 %v598
        %v1863 = vunpack.c.l.b16 %v599
        %v1864 = vunpack.c.h.b16 %v599
        %v1865 = vunpack.c.l.b16 %v600
        %v1866 = vunpack.c.h.b16 %v600
        %v1867 = vunpack.c.l.b16 %v601
        %v1868 = vunpack.c.h.b16 %v601
        %v1869 = vunpack.c.l.b16 %v602
        %v1870 = vunpack.c.h.b16 %v602
        %v1871 = vunpack.c.l.b16 %v603
        %v1872 = vunpack.c.h.b16 %v603
        %v1873 = vunpack.c.l.b16 %v604
        %v1874 = vunpack.c.h.b16 %v604
        %v1875 = vunpack.c.l.b16 %v605
        %v1876 = vunpack.c.h.b16 %v605
        %v1877 = vunpack.c.l.b16 %v606
        %v1878 = vunpack.c.h.b16 %v606
        %v1879 = vunpack.c.l.b16 %v607
        %v1880 = vunpack.c.h.b16 %v607
        %v1881 = vunpack.c.l.b16 %v608
        %v1882 = vunpack.c.h.b16 %v608
        %v1883 = vunpack.c.l.b16 %v609
        %v1884 = vunpack.c.h.b16 %v609
        %v1885 = vunpack.c.l.b16 %v610
        %v1886 = vunpack.c.h.b16 %v610
        %v1887 = vunpack.c.l.b16 %v611
        %v1888 = vunpack.c.h.b16 %v611
        %v1889 = vunpack.c.l.b16 %v612
        %v1890 = vunpack.c.h.b16 %v612
        %v1891 = vunpack.c.l.b16 %v613
        %v1892 = vunpack.c.h.b16 %v613
        %v1893 = vunpack.c.l.b16 %v614
        %v1894 = vunpack.c.h.b16 %v614
        %v1895 = vunpack.c.l.b16 %v615
        %v1896 = vunpack.c.h.b16 %v615
        %v1897 = vunpack.c.l.b16 %v616
        %v1898 = vunpack.c.h.b16 %v616
        %v1899 = vunpack.c.l.b16 %v617
        %v1900 = vunpack.c.h.b16 %v617
        %v1901 = vunpack.c.l.b16 %v618
        %v1902 = vunpack.c.h.b16 %v618
        %v1903 = vunpack.c.l.b16 %v619
        %v1904 = vunpack.c.h.b16 %v619
        %v1905 = vunpack.c.l.b16 %v620
        %v1906 = vunpack.c.h.b16 %v620
        %v1907 = vunpack.c.l.b16 %v621
        %v1908 = vunpack.c.h.b16 %v621
        %v1909 = vunpack.c.l.b16 %v622
        %v1910 = vunpack.c.h.b16 %v622
        %v1911 = vunpack.c.l.b16 %v623
        %v1912 = vunpack.c.h.b16 %v623
        %v1913 = vunpack.c.l.b16 %v624
        %v1914 = vunpack.c.h.b16 %v624
        %v1915 = vunpack.c.l.b16 %v625
        %v1916 = vunpack.c.h.b16 %v625
        %v1917 = vunpack.c.l.b16 %v626
        %v1918 = vunpack.c.h.b16 %v626
        %v1919 = vunpack.c.l.b16 %v627
        %v1920 = vunpack.c.h.b16 %v627
        %v1921 = vunpack.c.l.b16 %v628
        %v1922 = vunpack.c.h.b16 %v628
        %v1923 = vunpack.c.l.b16 %v629
        %v1924 = vunpack.c.h.b16 %v629
        %v1925 = vunpack.c.l.b16 %v630
        %v1926 = vunpack.c.h.b16 %v630
        %v1927 = vunpack.c.l.b16 %v631
        %v1928 = vunpack.c.h.b16 %v631
        %v1929 = vunpack.c.l.b16 %v632
        %v1930 = vunpack.c.h.b16 %v632
        %v1931 = vunpack.c.l.b16 %v633
        %v1932 = vunpack.c.h.b16 %v633
        %v1933 = vunpack.c.l.b16 %v634
        %v1934 = vunpack.c.h.b16 %v634
        %v1935 = vunpack.c.l.b16 %v635
        %v1936 = vunpack.c.h.b16 %v635
        %v1937 = vunpack.c.l.b16 %v636
        %v1938 = vunpack.c.h.b16 %v636
        %v1939 = vunpack.c.l.b16 %v637
        %v1940 = vunpack.c.h.b16 %v637
        %v1941 = vunpack.c.l.b16 %v638
        %v1942 = vunpack.c.h.b16 %v638
        %v1943 = vunpack.c.l.b16 %v639
        %v1944 = vunpack.c.h.b16 %v639
        %v1945 = vunpack.c.l.b16 %v640
        %v1946 = vunpack.c.h.b16 %v640
        %v1947 = vunpack.c.l.b16 %v641
        %v1948 = vunpack.c.h.b16 %v641
        %v1949 = vunpack.c.l.b16 %v642
        %v1950 = vunpack.c.h.b16 %v642
        %v1951 = vunpack.c.l.b16 %v643
        %v1952 = vunpack.c.h.b16 %v643
        %v1953 = vunpack.c.l.b16 %v644
        %v1954 = vunpack.c.h.b16 %v644
        %v1955 = vunpack.c.l.b16 %v645
        %v1956 = vunpack.c.h.b16 %v645
        %v1957 = vunpack.c.l.b16 %v646
        %v1958 = vunpack.c.h.b16 %v646
        %v1959 = vunpack.c.l.b16 %v647
        %v1960 = vunpack.c.h.b16 %v647
        %v1961 = vunpack.c.l.b16 %v648
        %v1962 = vunpack.c.h.b16 %v648
        %v1963 = vunpack.c.l.b16 %v649
        %v1964 = vunpack.c.h.b16 %v649
        %v1965 = vunpack.c.l.b16 %v650
        %v1966 = vunpack.c.h.b16 %v650
        %v1967 = vunpack.c.l.b16 %v651
        %v1968 = vunpack.c.h.b16 %v651
        %v1969 = vunpack.c.l.b16 %v652
        %v1970 = vunpack.c.h.b16 %v652
        %v1971 = vunpack.c.l.b16 %v653
        %v1972 = vunpack.c.h.b16 %v653
        %v1973 = vunpack.c.l.b16 %v654
        %v1974 = vunpack.c.h.b16 %v654
        %v1975 = vunpack.c.l.b16 %v655
        %v1976 = vunpack.c.h.b16 %v655
        %v1977 = vunpack.c.l.b16 %v656
        %v1978 = vunpack.c.h.b16 %v656
        %v1979 = vunpack.c.l.b16 %v657
        %v1980 = vunpack.c.h.b16 %v657
        %v1981 = vunpack.c.l.b16 %v658
        %v1982 = vunpack.c.h.b16 %v658
        %v1983 = vunpack.c.l.b16 %v659
        %v1984 = vunpack.c.h.b16 %v659
        %v1985 = vunpack.c.l.b16 %v660
        %v1986 = vunpack.c.h.b16 %v660
        %v1987 = vunpack.c.l.b16 %v661
        %v1988 = vunpack.c.h.b16 %v661
        %v1989 = vunpack.c.l.b16 %v662
        %v1990 = vunpack.c.h.b16 %v662
        %v1991 = vunpack.c.l.b16 %v663
        %v1992 = vunpack.c.h.b16 %v663
        %v1993 = vunpack.c.l.b16 %v664
        %v1994 = vunpack.c.h.b16 %v664
        %v1995 = vunpack.c.l.b16 %v665
        %v1996 = vunpack.c.h.b16 %v665
        %v1997 = vunpack.c.l.b16 %v666
        %v1998 = vunpack.c.h.b16 %v666
        %v1999 = vunpack.c.l.b16 %v667
        %v2000 = vunpack.c.h.b16 %v667
        %v2001 = vunpack.c.l.b16 %v668
        %v2002 = vunpack.c.h.b16 %v668
        %v2003 = vunpack.c.l.b16 %v669
        %v2004 = vunpack.c.h.b16 %v669
        %v2005 = vunpack.c.l.b16 %v670
        %v2006 = vunpack.c.h.b16 %v670
        %v2007 = vunpack.c.l.b16 %v671
        %v2008 = vunpack.c.h.b16 %v671
        %v2009 = vunpack.c.l.b16 %v672
        %v2010 = vunpack.c.h.b16 %v672
        %v2011 = vunpack.c.l.b16 %v673
        %v2012 = vunpack.c.h.b16 %v673
        %v2013 = vunpack.c.l.b16 %v674
        %v2014 = vunpack.c.h.b16 %v674
        %v2015 = vunpack.c.l.b16 %v675
        %v2016 = vunpack.c.h.b16 %v675
        %v2017 = vunpack.c.l.b16 %v676
        %v2018 = vunpack.c.h.b16 %v676
        %v2019 = vunpack.c.l.b16 %v677
        %v2020 = vunpack.c.h.b16 %v677
        %v2021 = vunpack.c.l.b16 %v678
        %v2022 = vunpack.c.h.b16 %v678
        %v2023 = vunpack.c.l.b16 %v679
        %v2024 = vunpack.c.h.b16 %v679
        %v2025 = vunpack.c.l.b16 %v680
        %v2026 = vunpack.c.h.b16 %v680
        %v2027 = vunpack.c.l.b16 %v681
        %v2028 = vunpack.c.h.b16 %v681
        %v2029 = vunpack.c.l.b16 %v682
        %v2030 = vunpack.c.h.b16 %v682
        %v2031 = vunpack.c.l.b16 %v683
        %v2032 = vunpack.c.h.b16 %v683
        %v2033 = vunpack.c.l.b16 %v684
        %v2034 = vunpack.c.h.b16 %v684
        %v2035 = vunpack.c.l.b16 %v685
        %v2036 = vunpack.c.h.b16 %v685
        %v2037 = vunpack.c.l.b16 %v686
        %v2038 = vunpack.c.h.b16 %v686
        %v2039 = vunpack.c.l.b16 %v687
        %v2040 = vunpack.c.h.b16 %v687
        %v2041 = vunpack.c.l.b16 %v688
        %v2042 = vunpack.c.h.b16 %v688
        %v2043 = vunpack.c.l.b16 %v689
        %v2044 = vunpack.c.h.b16 %v689
        %v2045 = vunpack.c.l.b16 %v690
        %v2046 = vunpack.c.h.b16 %v690
        %v2047 = vunpack.c.l.b16 %v691
        %v2048 = vunpack.c.h.b16 %v691
        %v2049 = vunpack.c.l.b16 %v692
        %v2050 = vunpack.c.h.b16 %v692
        %v2051 = vunpack.c.l.b16 %v693
        %v2052 = vunpack.c.h.b16 %v693
        %v2053 = vunpack.c.l.b16 %v694
        %v2054 = vunpack.c.h.b16 %v694
        %v2055 = vunpack.c.l.b16 %v695
        %v2056 = vunpack.c.h.b16 %v695
        %v2057 = vunpack.c.l.b16 %v696
        %v2058 = vunpack.c.h.b16 %v696
        %v2059 = vunpack.c.l.b16 %v697
        %v2060 = vunpack.c.h.b16 %v697
        %v2061 = vunpack.c.l.b16 %v698
        %v2062 = vunpack.c.h.b16 %v698
        %v2063 = vunpack.c.l.b16 %v699
        %v2064 = vunpack.c.h.b16 %v699
        %v2065 = vunpack.c.l.b16 %v700
        %v2066 = vunpack.c.h.b16 %v700
        %v2067 = vunpack.c.l.b16 %v701
        %v2068 = vunpack.c.h.b16 %v701
        %v2069 = vunpack.c.l.b16 %v702
        %v2070 = vunpack.c.h.b16 %v702
        %v2071 = vunpack.c.l.b16 %v703
        %v2072 = vunpack.c.h.b16 %v703
        %v2073 = vunpack.c.l.b16 %v704
        %v2074 = vunpack.c.h.b16 %v704
        %v2075 = vunpack.c.l.b16 %v705
        %v2076 = vunpack.c.h.b16 %v705
        %v2077 = vunpack.c.l.b16 %v706
        %v2078 = vunpack.c.h.b16 %v706
        %v2079 = vunpack.c.l.b16 %v707
        %v2080 = vunpack.c.h.b16 %v707
        %v2081 = vunpack.c.l.b16 %v708
        %v2082 = vunpack.c.h.b16 %v708
        %v2083 = vunpack.c.l.b16 %v709
        %v2084 = vunpack.c.h.b16 %v709
        %v2085 = vunpack.c.l.b16 %v710
        %v2086 = vunpack.c.h.b16 %v710
        %v2087 = vunpack.c.l.b16 %v711
        %v2088 = vunpack.c.h.b16 %v711
        %v2089 = vunpack.c.l.b16 %v712
        %v2090 = vunpack.c.h.b16 %v712
        %v2091 = vunpack.c.l.b16 %v713
        %v2092 = vunpack.c.h.b16 %v713
        %v2093 = vunpack.c.l.b16 %v714
        %v2094 = vunpack.c.h.b16 %v714
        %v2095 = vunpack.c.l.b16 %v715
        %v2096 = vunpack.c.h.b16 %v715
        %v2097 = vunpack.c.l.b16 %v716
        %v2098 = vunpack.c.h.b16 %v716
        %v2099 = vunpack.c.l.b16 %v717
        %v2100 = vunpack.c.h.b16 %v717
        %v2101 = vunpack.c.l.b16 %v718
        %v2102 = vunpack.c.h.b16 %v718
        %v2103 = vunpack.c.l.b16 %v719
        %v2104 = vunpack.c.h.b16 %v719
        %v2105 = vunpack.c.l.b16 %v720
        %v2106 = vunpack.c.h.b16 %v720
        %v2107 = vunpack.c.l.b16 %v721
        %v2108 = vunpack.c.h.b16 %v721
        %v2109 = vunpack.c.l.b16 %v722
        %v2110 = vunpack.c.h.b16 %v722
        %v2111 = vunpack.c.l.b16 %v723
        %v2112 = vunpack.c.h.b16 %v723
        %v2113 = vunpack.c.l.b16 %v724
        %v2114 = vunpack.c.h.b16 %v724
        %v2115 = vunpack.c.l.b16 %v725
        %v2116 = vunpack.c.h.b16 %v725
        %v2117 = vunpack.c.l.b16 %v726
        %v2118 = vunpack.c.h.b16 %v726
        %v2119 = vunpack.c.l.b16 %v727
        %v2120 = vunpack.c.h.b16 %v727
        %v2121 = vunpack.c.l.b16 %v728
        %v2122 = vunpack.c.h.b16 %v728
        %v2123 = vunpack.c.l.b16 %v729
        %v2124 = vunpack.c.h.b16 %v729
        %v2125 = vunpack.c.l.b16 %v730
        %v2126 = vunpack.c.h.b16 %v730
        %v2127 = vunpack.c.l.b16 %v731
        %v2128 = vunpack.c.h.b16 %v731
        %v2129 = vunpack.c.l.b16 %v732
        %v2130 = vunpack.c.h.b16 %v732
        %v2131 = vunpack.c.l.b16 %v733
        %v2132 = vunpack.c.h.b16 %v733
        %v2133 = vunpack.c.l.b16 %v734
        %v2134 = vunpack.c.h.b16 %v734
        %v2135 = vpack.c.b16 %v1247, %v1239
        %v2136 = vpack.c.b16 %v1248, %v1240
        %v2137 = vpack.c.b16 %v1249, %v1241
        %v2138 = vpack.c.b16 %v1250, %v1242
        %v2139 = vpack.c.b16 %v1251, %v1243
        %v2140 = vpack.c.b16 %v1252, %v1244
        %v2141 = vpack.c.b16 %v1253, %v1245
        %v2142 = vpack.c.b16 %v1254, %v1246
        %v2143 = vpack.c.b16 %v1263, %v1255
        %v2144 = vpack.c.b16 %v1264, %v1256
        %v2145 = vpack.c.b16 %v1265, %v1257
        %v2146 = vpack.c.b16 %v1266, %v1258
        %v2147 = vpack.c.b16 %v1267, %v1259
        %v2148 = vpack.c.b16 %v1268, %v1260
        %v2149 = vpack.c.b16 %v1269, %v1261
        %v2150 = vpack.c.b16 %v1270, %v1262
        %v2151 = vpack.c.b16 %v1279, %v1271
        %v2152 = vpack.c.b16 %v1280, %v1272
        %v2153 = vpack.c.b16 %v1281, %v1273
        %v2154 = vpack.c.b16 %v1282, %v1274
        %v2155 = vpack.c.b16 %v1283, %v1275
        %v2156 = vpack.c.b16 %v1284, %v1276
        %v2157 = vpack.c.b16 %v1285, %v1277
        %v2158 = vpack.c.b16 %v1286, %v1278
        %v2159 = vpack.c.b16 %v1295, %v1287
        %v2160 = vpack.c.b16 %v1296, %v1288
        %v2161 = vpack.c.b16 %v1297, %v1289
        %v2162 = vpack.c.b16 %v1298, %v1290
        %v2163 = vpack.c.b16 %v1299, %v1291
        %v2164 = vpack.c.b16 %v1300, %v1292
        %v2165 = vpack.c.b16 %v1301, %v1293
        %v2166 = vpack.c.b16 %v1302, %v1294
        %v2167 = vpack.c.b16 %v1311, %v1303
        %v2168 = vpack.c.b16 %v1312, %v1304
        %v2169 = vpack.c.b16 %v1313, %v1305
        %v2170 = vpack.c.b16 %v1314, %v1306
        %v2171 = vpack.c.b16 %v1315, %v1307
        %v2172 = vpack.c.b16 %v1316, %v1308
        %v2173 = vpack.c.b16 %v1317, %v1309
        %v2174 = vpack.c.b16 %v1318, %v1310
        %v2175 = vpack.c.b16 %v1327, %v1319
        %v2176 = vpack.c.b16 %v1328, %v1320
        %v2177 = vpack.c.b16 %v1329, %v1321
        %v2178 = vpack.c.b16 %v1330, %v1322
        %v2179 = vpack.c.b16 %v1331, %v1323
        %v2180 = vpack.c.b16 %v1332, %v1324
        %v2181 = vpack.c.b16 %v1333, %v1325
        %v2182 = vpack.c.b16 %v1334, %v1326
        %v2183 = vpack.c.b16 %v1343, %v1335
        %v2184 = vpack.c.b16 %v1344, %v1336
        %v2185 = vpack.c.b16 %v1345, %v1337
        %v2186 = vpack.c.b16 %v1346, %v1338
        %v2187 = vpack.c.b16 %v1347, %v1339
        %v2188 = vpack.c.b16 %v1348, %v1340
        %v2189 = vpack.c.b16 %v1349, %v1341
        %v2190 = vpack.c.b16 %v1350, %v1342
        %v2191 = vpack.c.b16 %v1359, %v1351
        %v2192 = vpack.c.b16 %v1360, %v1352
        %v2193 = vpack.c.b16 %v1361, %v1353
        %v2194 = vpack.c.b16 %v1362, %v1354
        %v2195 = vpack.c.b16 %v1363, %v1355
        %v2196 = vpack.c.b16 %v1364, %v1356
        %v2197 = vpack.c.b16 %v1365, %v1357
        %v2198 = vpack.c.b16 %v1366, %v1358
        %v2199 = vpack.c.b16 %v1375, %v1367
        %v2200 = vpack.c.b16 %v1376, %v1368
        %v2201 = vpack.c.b16 %v1377, %v1369
        %v2202 = vpack.c.b16 %v1378, %v1370
        %v2203 = vpack.c.b16 %v1379, %v1371
        %v2204 = vpack.c.b16 %v1380, %v1372
        %v2205 = vpack.c.b16 %v1381, %v1373
        %v2206 = vpack.c.b16 %v1382, %v1374
        %v2207 = vpack.c.b16 %v1391, %v1383
        %v2208 = vpack.c.b16 %v1392, %v1384
        %v2209 = vpack.c.b16 %v1393, %v1385
        %v2210 = vpack.c.b16 %v1394, %v1386
        %v2211 = vpack.c.b16 %v1395, %v1387
        %v2212 = vpack.c.b16 %v1396, %v1388
        %v2213 = vpack.c.b16 %v1397, %v1389
        %v2214 = vpack.c.b16 %v1398, %v1390
        %v2215 = vpack.c.b16 %v1407, %v1399
        %v2216 = vpack.c.b16 %v1408, %v1400
        %v2217 = vpack.c.b16 %v1409, %v1401
        %v2218 = vpack.c.b16 %v1410, %v1402
        %v2219 = vpack.c.b16 %v1411, %v1403
        %v2220 = vpack.c.b16 %v1412, %v1404
        %v2221 = vpack.c.b16 %v1413, %v1405
        %v2222 = vpack.c.b16 %v1414, %v1406
        %v2223 = vpack.c.b16 %v1423, %v1415
        %v2224 = vpack.c.b16 %v1424, %v1416
        %v2225 = vpack.c.b16 %v1425, %v1417
        %v2226 = vpack.c.b16 %v1426, %v1418
        %v2227 = vpack.c.b16 %v1427, %v1419
        %v2228 = vpack.c.b16 %v1428, %v1420
        %v2229 = vpack.c.b16 %v1429, %v1421
        %v2230 = vpack.c.b16 %v1430, %v1422
        %v2231 = vpack.c.b16 %v1439, %v1431
        %v2232 = vpack.c.b16 %v1440, %v1432
        %v2233 = vpack.c.b16 %v1441, %v1433
        %v2234 = vpack.c.b16 %v1442, %v1434
        %v2235 = vpack.c.b16 %v1443, %v1435
        %v2236 = vpack.c.b16 %v1444, %v1436
        %v2237 = vpack.c.b16 %v1445, %v1437
        %v2238 = vpack.c.b16 %v1446, %v1438
        %v2239 = vpack.c.b16 %v1455, %v1447
        %v2240 = vpack.c.b16 %v1456, %v1448
        %v2241 = vpack.c.b16 %v1457, %v1449
        %v2242 = vpack.c.b16 %v1458, %v1450
        %v2243 = vpack.c.b16 %v1459, %v1451
        %v2244 = vpack.c.b16 %v1460, %v1452
        %v2245 = vpack.c.b16 %v1461, %v1453
        %v2246 = vpack.c.b16 %v1462, %v1454
        %v2247 = vpack.c.b16 %v1471, %v1463
        %v2248 = vpack.c.b16 %v1472, %v1464
        %v2249 = vpack.c.b16 %v1473, %v1465
        %v2250 = vpack.c.b16 %v1474, %v1466
        %v2251 = vpack.c.b16 %v1475, %v1467
        %v2252 = vpack.c.b16 %v1476, %v1468
        %v2253 = vpack.c.b16 %v1477, %v1469
        %v2254 = vpack.c.b16 %v1478, %v1470
        %v2255 = vpack.c.b16 %v1487, %v1479
        %v2256 = vpack.c.b16 %v1488, %v1480
        %v2257 = vpack.c.b16 %v1489, %v1481
        %v2258 = vpack.c.b16 %v1490, %v1482
        %v2259 = vpack.c.b16 %v1491, %v1483
        %v2260 = vpack.c.b16 %v1492, %v1484
        %v2261 = vpack.c.b16 %v1493, %v1485
        %v2262 = vpack.c.b16 %v1494, %v1486
        %v2263 = vpack.c.b16 %v1503, %v1495
        %v2264 = vpack.c.b16 %v1504, %v1496
        %v2265 = vpack.c.b16 %v1505, %v1497
        %v2266 = vpack.c.b16 %v1506, %v1498
        %v2267 = vpack.c.b16 %v1507, %v1499
        %v2268 = vpack.c.b16 %v1508, %v1500
        %v2269 = vpack.c.b16 %v1509, %v1501
        %v2270 = vpack.c.b16 %v1510, %v1502
        %v2271 = vpack.c.b16 %v1519, %v1511
        %v2272 = vpack.c.b16 %v1520, %v1512
        %v2273 = vpack.c.b16 %v1521, %v1513
        %v2274 = vpack.c.b16 %v1522, %v1514
        %v2275 = vpack.c.b16 %v1523, %v1515
        %v2276 = vpack.c.b16 %v1524, %v1516
        %v2277 = vpack.c.b16 %v1525, %v1517
        %v2278 = vpack.c.b16 %v1526, %v1518
        %v2279 = vpack.c.b16 %v1535, %v1527
        %v2280 = vpack.c.b16 %v1536, %v1528
        %v2281 = vpack.c.b16 %v1537, %v1529
        %v2282 = vpack.c.b16 %v1538, %v1530
        %v2283 = vpack.c.b16 %v1539, %v1531
        %v2284 = vpack.c.b16 %v1540, %v1532
        %v2285 = vpack.c.b16 %v1541, %v1533
        %v2286 = vpack.c.b16 %v1542, %v1534
        %v2287 = vpack.c.b16 %v1551, %v1543
        %v2288 = vpack.c.b16 %v1552, %v1544
        %v2289 = vpack.c.b16 %v1553, %v1545
        %v2290 = vpack.c.b16 %v1554, %v1546
        %v2291 = vpack.c.b16 %v1555, %v1547
        %v2292 = vpack.c.b16 %v1556, %v1548
        %v2293 = vpack.c.b16 %v1557, %v1549
        %v2294 = vpack.c.b16 %v1558, %v1550
        %v2295 = vpack.c.b16 %v1567, %v1559
        %v2296 = vpack.c.b16 %v1568, %v1560
        %v2297 = vpack.c.b16 %v1569, %v1561
        %v2298 = vpack.c.b16 %v1570, %v1562
        %v2299 = vpack.c.b16 %v1571, %v1563
        %v2300 = vpack.c.b16 %v1572, %v1564
        %v2301 = vpack.c.b16 %v1573, %v1565
        %v2302 = vpack.c.b16 %v1574, %v1566
        %v2303 = vpack.c.b16 %v1583, %v1575
        %v2304 = vpack.c.b16 %v1584, %v1576
        %v2305 = vpack.c.b16 %v1585, %v1577
        %v2306 = vpack.c.b16 %v1586, %v1578
        %v2307 = vpack.c.b16 %v1587, %v1579
        %v2308 = vpack.c.b16 %v1588, %v1580
        %v2309 = vpack.c.b16 %v1589, %v1581
        %v2310 = vpack.c.b16 %v1590, %v1582
        %v2311 = vpack.c.b16 %v1599, %v1591
        %v2312 = vpack.c.b16 %v1600, %v1592
        %v2313 = vpack.c.b16 %v1601, %v1593
        %v2314 = vpack.c.b16 %v1602, %v1594
        %v2315 = vpack.c.b16 %v1603, %v1595
        %v2316 = vpack.c.b16 %v1604, %v1596
        %v2317 = vpack.c.b16 %v1605, %v1597
        %v2318 = vpack.c.b16 %v1606, %v1598
        %v2319 = vpack.c.b16 %v1615, %v1607
        %v2320 = vpack.c.b16 %v1616, %v1608
        %v2321 = vpack.c.b16 %v1617, %v1609
        %v2322 = vpack.c.b16 %v1618, %v1610
        %v2323 = vpack.c.b16 %v1619, %v1611
        %v2324 = vpack.c.b16 %v1620, %v1612
        %v2325 = vpack.c.b16 %v1621, %v1613
        %v2326 = vpack.c.b16 %v1622, %v1614
        %v2327 = vpack.c.b16 %v1631, %v1623
        %v2328 = vpack.c.b16 %v1632, %v1624
        %v2329 = vpack.c.b16 %v1633, %v1625
        %v2330 = vpack.c.b16 %v1634, %v1626
        %v2331 = vpack.c.b16 %v1635, %v1627
        %v2332 = vpack.c.b16 %v1636, %v1628
        %v2333 = vpack.c.b16 %v1637, %v1629
        %v2334 = vpack.c.b16 %v1638, %v1630
        %v2335 = vpack.c.b16 %v1647, %v1639
        %v2336 = vpack.c.b16 %v1648, %v1640
        %v2337 = vpack.c.b16 %v1649, %v1641
        %v2338 = vpack.c.b16 %v1650, %v1642
        %v2339 = vpack.c.b16 %v1651, %v1643
        %v2340 = vpack.c.b16 %v1652, %v1644
        %v2341 = vpack.c.b16 %v1653, %v1645
        %v2342 = vpack.c.b16 %v1654, %v1646
        %v2343 = vpack.c.b16 %v1663, %v1655
        %v2344 = vpack.c.b16 %v1664, %v1656
        %v2345 = vpack.c.b16 %v1665, %v1657
        %v2346 = vpack.c.b16 %v1666, %v1658
        %v2347 = vpack.c.b16 %v1667, %v1659
        %v2348 = vpack.c.b16 %v1668, %v1660
        %v2349 = vpack.c.b16 %v1669, %v1661
        %v2350 = vpack.c.b16 %v1670, %v1662
        %v2351 = vpack.c.b16 %v1679, %v1671
        %v2352 = vpack.c.b16 %v1680, %v1672
        %v2353 = vpack.c.b16 %v1681, %v1673
        %v2354 = vpack.c.b16 %v1682, %v1674
        %v2355 = vpack.c.b16 %v1683, %v1675
        %v2356 = vpack.c.b16 %v1684, %v1676
        %v2357 = vpack.c.b16 %v1685, %v1677
        %v2358 = vpack.c.b16 %v1686, %v1678
        %v2359 = vpack.c.b16 %v1695, %v1687
        %v2360 = vpack.c.b16 %v1696, %v1688
        %v2361 = vpack.c.b16 %v1697, %v1689
        %v2362 = vpack.c.b16 %v1698, %v1690
        %v2363 = vpack.c.b16 %v1699, %v1691
        %v2364 = vpack.c.b16 %v1700, %v1692
        %v2365 = vpack.c.b16 %v1701, %v1693
        %v2366 = vpack.c.b16 %v1702, %v1694
        %v2367 = vpack.c.b16 %v1711, %v1703
        %v2368 = vpack.c.b16 %v1712, %v1704
        %v2369 = vpack.c.b16 %v1713, %v1705
        %v2370 = vpack.c.b16 %v1714, %v1706
        %v2371 = vpack.c.b16 %v1715, %v1707
        %v2372 = vpack.c.b16 %v1716, %v1708
        %v2373 = vpack.c.b16 %v1717, %v1709
        %v2374 = vpack.c.b16 %v1718, %v1710
        %v2375 = vpack.c.b16 %v1727, %v1719
        %v2376 = vpack.c.b16 %v1728, %v1720
        %v2377 = vpack.c.b16 %v1729, %v1721
        %v2378 = vpack.c.b16 %v1730, %v1722
        %v2379 = vpack.c.b16 %v1731, %v1723
        %v2380 = vpack.c.b16 %v1732, %v1724
        %v2381 = vpack.c.b16 %v1733, %v1725
        %v2382 = vpack.c.b16 %v1734, %v1726
        %v2383 = vpack.c.b16 %v1743, %v1735
        %v2384 = vpack.c.b16 %v1744, %v1736
        %v2385 = vpack.c.b16 %v1745, %v1737
        %v2386 = vpack.c.b16 %v1746, %v1738
        %v2387 = vpack.c.b16 %v1747, %v1739
        %v2388 = vpack.c.b16 %v1748, %v1740
        %v2389 = vpack.c.b16 %v1749, %v1741
        %v2390 = vpack.c.b16 %v1750, %v1742
        %v2391 = vpack.c.b16 %v1759, %v1751
        %v2392 = vpack.c.b16 %v1760, %v1752
        %v2393 = vpack.c.b16 %v1761, %v1753
        %v2394 = vpack.c.b16 %v1762, %v1754
        %v2395 = vpack.c.b16 %v1763, %v1755
        %v2396 = vpack.c.b16 %v1764, %v1756
        %v2397 = vpack.c.b16 %v1765, %v1757
        %v2398 = vpack.c.b16 %v1766, %v1758
        %v2399 = vpack.c.b16 %v1775, %v1767
        %v2400 = vpack.c.b16 %v1776, %v1768
        %v2401 = vpack.c.b16 %v1777, %v1769
        %v2402 = vpack.c.b16 %v1778, %v1770
        %v2403 = vpack.c.b16 %v1779, %v1771
        %v2404 = vpack.c.b16 %v1780, %v1772
        %v2405 = vpack.c.b16 %v1781, %v1773
        %v2406 = vpack.c.b16 %v1782, %v1774
        %v2407 = vpack.c.b16 %v1791, %v1783
        %v2408 = vpack.c.b16 %v1792, %v1784
        %v2409 = vpack.c.b16 %v1793, %v1785
        %v2410 = vpack.c.b16 %v1794, %v1786
        %v2411 = vpack.c.b16 %v1795, %v1787
        %v2412 = vpack.c.b16 %v1796, %v1788
        %v2413 = vpack.c.b16 %v1797, %v1789
        %v2414 = vpack.c.b16 %v1798, %v1790
        %v2415 = vpack.c.b16 %v1807, %v1799
        %v2416 = vpack.c.b16 %v1808, %v1800
        %v2417 = vpack.c.b16 %v1809, %v1801
        %v2418 = vpack.c.b16 %v1810, %v1802
        %v2419 = vpack.c.b16 %v1811, %v1803
        %v2420 = vpack.c.b16 %v1812, %v1804
        %v2421 = vpack.c.b16 %v1813, %v1805
        %v2422 = vpack.c.b16 %v1814, %v1806
        %v2423 = vpack.c.b16 %v1823, %v1815
        %v2424 = vpack.c.b16 %v1824, %v1816
        %v2425 = vpack.c.b16 %v1825, %v1817
        %v2426 = vpack.c.b16 %v1826, %v1818
        %v2427 = vpack.c.b16 %v1827, %v1819
        %v2428 = vpack.c.b16 %v1828, %v1820
        %v2429 = vpack.c.b16 %v1829, %v1821
        %v2430 = vpack.c.b16 %v1830, %v1822
        %v2431 = vpack.c.b16 %v1839, %v1831
        %v2432 = vpack.c.b16 %v1840, %v1832
        %v2433 = vpack.c.b16 %v1841, %v1833
        %v2434 = vpack.c.b16 %v1842, %v1834
        %v2435 = vpack.c.b16 %v1843, %v1835
        %v2436 = vpack.c.b16 %v1844, %v1836
        %v2437 = vpack.c.b16 %v1845, %v1837
        %v2438 = vpack.c.b16 %v1846, %v1838
        %v2439 = vpack.c.b16 %v1855, %v1847
        %v2440 = vpack.c.b16 %v1856, %v1848
        %v2441 = vpack.c.b16 %v1857, %v1849
        %v2442 = vpack.c.b16 %v1858, %v1850
        %v2443 = vpack.c.b16 %v1859, %v1851
        %v2444 = vpack.c.b16 %v1860, %v1852
        %v2445 = vpack.c.b16 %v1861, %v1853
        %v2446 = vpack.c.b16 %v1862, %v1854
        %v2447 = vpack.c.b16 %v1871, %v1863
        %v2448 = vpack.c.b16 %v1872, %v1864
        %v2449 = vpack.c.b16 %v1873, %v1865
        %v2450 = vpack.c.b16 %v1874, %v1866
        %v2451 = vpack.c.b16 %v1875, %v1867
        %v2452 = vpack.c.b16 %v1876, %v1868
        %v2453 = vpack.c.b16 %v1877, %v1869
        %v2454 = vpack.c.b16 %v1878, %v1870
        %v2455 = vpack.c.b16 %v1887, %v1879
        %v2456 = vpack.c.b16 %v1888, %v1880
        %v2457 = vpack.c.b16 %v1889, %v1881
        %v2458 = vpack.c.b16 %v1890, %v1882
        %v2459 = vpack.c.b16 %v1891, %v1883
        %v2460 = vpack.c.b16 %v1892, %v1884
        %v2461 = vpack.c.b16 %v1893, %v1885
        %v2462 = vpack.c.b16 %v1894, %v1886
        %v2463 = vpack.c.b16 %v1903, %v1895
        %v2464 = vpack.c.b16 %v1904, %v1896
        %v2465 = vpack.c.b16 %v1905, %v1897
        %v2466 = vpack.c.b16 %v1906, %v1898
        %v2467 = vpack.c.b16 %v1907, %v1899
        %v2468 = vpack.c.b16 %v1908, %v1900
        %v2469 = vpack.c.b16 %v1909, %v1901
        %v2470 = vpack.c.b16 %v1910, %v1902
        %v2471 = vpack.c.b16 %v1919, %v1911
        %v2472 = vpack.c.b16 %v1920, %v1912
        %v2473 = vpack.c.b16 %v1921, %v1913
        %v2474 = vpack.c.b16 %v1922, %v1914
        %v2475 = vpack.c.b16 %v1923, %v1915
        %v2476 = vpack.c.b16 %v1924, %v1916
        %v2477 = vpack.c.b16 %v1925, %v1917
        %v2478 = vpack.c.b16 %v1926, %v1918
        %v2479 = vpack.c.b16 %v1935, %v1927
        %v2480 = vpack.c.b16 %v1936, %v1928
        %v2481 = vpack.c.b16 %v1937, %v1929
        %v2482 = vpack.c.b16 %v1938, %v1930
        %v2483 = vpack.c.b16 %v1939, %v1931
        %v2484 = vpack.c.b16 %v1940, %v1932
        %v2485 = vpack.c.b16 %v1941, %v1933
        %v2486 = vpack.c.b16 %v1942, %v1934
        %v2487 = vpack.c.b16 %v1951, %v1943
        %v2488 = vpack.c.b16 %v1952, %v1944
        %v2489 = vpack.c.b16 %v1953, %v1945
        %v2490 = vpack.c.b16 %v1954, %v1946
        %v2491 = vpack.c.b16 %v1955, %v1947
        %v2492 = vpack.c.b16 %v1956, %v1948
        %v2493 = vpack.c.b16 %v1957, %v1949
        %v2494 = vpack.c.b16 %v1958, %v1950
        %v2495 = vpack.c.b16 %v1967, %v1959
        %v2496 = vpack.c.b16 %v1968, %v1960
        %v2497 = vpack.c.b16 %v1969, %v1961
        %v2498 = vpack.c.b16 %v1970, %v1962
        %v2499 = vpack.c.b16 %v1971, %v1963
        %v2500 = vpack.c.b16 %v1972, %v1964
        %v2501 = vpack.c.b16 %v1973, %v1965
        %v2502 = vpack.c.b16 %v1974, %v1966
        %v2503 = vpack.c.b16 %v1983, %v1975
        %v2504 = vpack.c.b16 %v1984, %v1976
        %v2505 = vpack.c.b16 %v1985, %v1977
        %v2506 = vpack.c.b16 %v1986, %v1978
        %v2507 = vpack.c.b16 %v1987, %v1979
        %v2508 = vpack.c.b16 %v1988, %v1980
        %v2509 = vpack.c.b16 %v1989, %v1981
        %v2510 = vpack.c.b16 %v1990, %v1982
        %v2511 = vpack.c.b16 %v1999, %v1991
        %v2512 = vpack.c.b16 %v2000, %v1992
        %v2513 = vpack.c.b16 %v2001, %v1993
        %v2514 = vpack.c.b16 %v2002, %v1994
        %v2515 = vpack.c.b16 %v2003, %v1995
        %v2516 = vpack.c.b16 %v2004, %v1996
        %v2517 = vpack.c.b16 %v2005, %v1997
        %v2518 = vpack.c.b16 %v2006, %v1998
        %v2519 = vpack.c.b16 %v2015, %v2007
        %v2520 = vpack.c.b16 %v2016, %v2008
        %v2521 = vpack.c.b16 %v2017, %v2009
        %v2522 = vpack.c.b16 %v2018, %v2010
        %v2523 = vpack.c.b16 %v2019, %v2011
        %v2524 = vpack.c.b16 %v2020, %v2012
        %v2525 = vpack.c.b16 %v2021, %v2013
        %v2526 = vpack.c.b16 %v2022, %v2014
        %v2527 = vpack.c.b16 %v2031, %v2023
        %v2528 = vpack.c.b16 %v2032, %v2024
        %v2529 = vpack.c.b16 %v2033, %v2025
        %v2530 = vpack.c.b16 %v2034, %v2026
        %v2531 = vpack.c.b16 %v2035, %v2027
        %v2532 = vpack.c.b16 %v2036, %v2028
        %v2533 = vpack.c.b16 %v2037, %v2029
        %v2534 = vpack.c.b16 %v2038, %v2030
        %v2535 = vpack.c.b16 %v2047, %v2039
        %v2536 = vpack.c.b16 %v2048, %v2040
        %v2537 = vpack.c.b16 %v2049, %v2041
        %v2538 = vpack.c.b16 %v2050, %v2042
        %v2539 = vpack.c.b16 %v2051, %v2043
        %v2540 = vpack.c.b16 %v2052, %v2044
        %v2541 = vpack.c.b16 %v2053, %v2045
        %v2542 = vpack.c.b16 %v2054, %v2046
        %v2543 = vpack.c.b16 %v2063, %v2055
        %v2544 = vpack.c.b16 %v2064, %v2056
        %v2545 = vpack.c.b16 %v2065, %v2057
        %v2546 = vpack.c.b16 %v2066, %v2058
        %v2547 = vpack.c.b16 %v2067, %v2059
        %v2548 = vpack.c.b16 %v2068, %v2060
        %v2549 = vpack.c.b16 %v2069, %v2061
        %v2550 = vpack.c.b16 %v2070, %v2062
        %v2551 = vpack.c.b16 %v2079, %v2071
        %v2552 = vpack.c.b16 %v2080, %v2072
        %v2553 = vpack.c.b16 %v2081, %v2073
        %v2554 = vpack.c.b16 %v2082, %v2074
        %v2555 = vpack.c.b16 %v2083, %v2075
        %v2556 = vpack.c.b16 %v2084, %v2076
        %v2557 = vpack.c.b16 %v2085, %v2077
        %v2558 = vpack.c.b16 %v2086, %v2078
        %v2559 = vpack.c.b16 %v2095, %v2087
        %v2560 = vpack.c.b16 %v2096, %v2088
        %v2561 = vpack.c.b16 %v2097, %v2089
        %v2562 = vpack.c.b16 %v2098, %v2090
        %v2563 = vpack.c.b16 %v2099, %v2091
        %v2564 = vpack.c.b16 %v2100, %v2092
        %v2565 = vpack.c.b16 %v2101, %v2093
        %v2566 = vpack.c.b16 %v2102, %v2094
        %v2567 = vpack.c.b16 %v2111, %v2103
        %v2568 = vpack.c.b16 %v2112, %v2104
        %v2569 = vpack.c.b16 %v2113, %v2105
        %v2570 = vpack.c.b16 %v2114, %v2106
        %v2571 = vpack.c.b16 %v2115, %v2107
        %v2572 = vpack.c.b16 %v2116, %v2108
        %v2573 = vpack.c.b16 %v2117, %v2109
        %v2574 = vpack.c.b16 %v2118, %v2110
        %v2575 = vpack.c.b16 %v2127, %v2119
        %v2576 = vpack.c.b16 %v2128, %v2120
        %v2577 = vpack.c.b16 %v2129, %v2121
        %v2578 = vpack.c.b16 %v2130, %v2122
        %v2579 = vpack.c.b16 %v2131, %v2123
        %v2580 = vpack.c.b16 %v2132, %v2124
        %v2581 = vpack.c.b16 %v2133, %v2125
        %v2582 = vpack.c.b16 %v2134, %v2126
        %3031 = vmatprep.subr.bf16.mxu0 %v2136
        %3032 = vmatpush1.bf16.msra.mxu0 %v2135
        %3033 = vmatprep.subr.bf16.mxu0 %v2144
        %3034 = vmatpush1.bf16.msra.mxu0 %v2143
        %3035 = vmatprep.subr.bf16.mxu0 %v2152
        %3036 = vmatpush1.bf16.msra.mxu0 %v2151
        %3037 = vmatprep.subr.bf16.mxu0 %v2160
        %3038 = vmatpush1.bf16.msra.mxu0 %v2159
        %3039 = vmatprep.subr.bf16.mxu0 %v2168
        %3040 = vmatpush1.bf16.msra.mxu0 %v2167
        %3041 = vmatprep.subr.bf16.mxu0 %v2176
        %3042 = vmatpush1.bf16.msra.mxu0 %v2175
        %3043 = vmatprep.subr.bf16.mxu0 %v2184
        %3044 = vmatpush1.bf16.msra.mxu0 %v2183
        %3045 = vmatprep.subr.bf16.mxu0 %v2192
        %3046 = vmatpush1.bf16.msra.mxu0 %v2191
        %3047 = vmatprep.subr.bf16.mxu0 %v2200
        %3048 = vmatpush1.bf16.msra.mxu0 %v2199
        %3049 = vmatprep.subr.bf16.mxu0 %v2208
        %3050 = vmatpush1.bf16.msra.mxu0 %v2207
        %3051 = vmatprep.subr.bf16.mxu0 %v2216
        %3052 = vmatpush1.bf16.msra.mxu0 %v2215
        %3053 = vmatprep.subr.bf16.mxu0 %v2224
        %3054 = vmatpush1.bf16.msra.mxu0 %v2223
        %3055 = vmatprep.subr.bf16.mxu0 %v2232
        %3056 = vmatpush1.bf16.msra.mxu0 %v2231
        %3057 = vmatprep.subr.bf16.mxu0 %v2240
        %3058 = vmatpush1.bf16.msra.mxu0 %v2239
        %3059 = vmatprep.subr.bf16.mxu0 %v2248
        %3060 = vmatpush1.bf16.msra.mxu0 %v2247
        %3061 = vmatprep.subr.bf16.mxu0 %v2256
        %3062 = vmatpush1.bf16.msra.mxu0 %v2255
        %3063 = vmatprep.mubr.bf16.mxu0 %v773
        %3064 = vmatmul.mubr.bf16.gmra.mrb[0].mxu0 %v759
        %v3065 = vpop.f32.mrb[0].mxu0
        %v3066 = vadd.f32 0.0, %v3065
        %v3067 = vpop.f32.mrb[0].mxu0
        %v3068 = vadd.f32 0.0, %v3067
        %v3069 = vpop.f32.mrb[0].mxu0
        %v3070 = vpop.f32.mrb[0].mxu0
        %3071 = vdwg.mxu0
        %3072 = vmatprep.subr.bf16.mxu0 %v2264
        %3073 = vmatpush1.bf16.msra.mxu0 %v2263
        %3074 = vmatprep.subr.bf16.mxu0 %v2272
        %3075 = vmatpush1.bf16.msra.mxu0 %v2271
        %3076 = vmatprep.subr.bf16.mxu0 %v2280
        %3077 = vmatpush1.bf16.msra.mxu0 %v2279
        %3078 = vmatprep.subr.bf16.mxu0 %v2288
        %3079 = vmatpush1.bf16.msra.mxu0 %v2287
        %3080 = vmatprep.subr.bf16.mxu0 %v2296
        %3081 = vmatpush1.bf16.msra.mxu0 %v2295
        %3082 = vmatprep.subr.bf16.mxu0 %v2304
        %3083 = vmatpush1.bf16.msra.mxu0 %v2303
        %3084 = vmatprep.subr.bf16.mxu0 %v2312
        %3085 = vmatpush1.bf16.msra.mxu0 %v2311
        %3086 = vmatprep.subr.bf16.mxu0 %v2320
        %3087 = vmatpush1.bf16.msra.mxu0 %v2319
        %3088 = vmatprep.subr.bf16.mxu0 %v2328
        %3089 = vmatpush1.bf16.msra.mxu0 %v2327
        %3090 = vmatprep.subr.bf16.mxu0 %v2336
        %3091 = vmatpush1.bf16.msra.mxu0 %v2335
        %3092 = vmatprep.subr.bf16.mxu0 %v2344
        %3093 = vmatpush1.bf16.msra.mxu0 %v2343
        %3094 = vmatprep.subr.bf16.mxu0 %v2352
        %3095 = vmatpush1.bf16.msra.mxu0 %v2351
        %3096 = vmatprep.subr.bf16.mxu0 %v2360
        %3097 = vmatpush1.bf16.msra.mxu0 %v2359
        %3098 = vmatprep.subr.bf16.mxu0 %v2368
        %3099 = vmatpush1.bf16.msra.mxu0 %v2367
        %3100 = vmatprep.subr.bf16.mxu0 %v2376
        %3101 = vmatpush1.bf16.msra.mxu0 %v2375
        %3102 = vmatprep.subr.bf16.mxu0 %v2384
        %3103 = vmatpush1.bf16.msra.mxu0 %v2383
        %3104 = vmatprep.mubr.bf16.mxu0 %v783
        %3105 = vmatmul.mubr.bf16.gmra.mrb[0].mxu0 %v781
        %v3106 = vpop.f32.mrb[0].mxu0
        %v3107 = vadd.f32 %v3066, %v3106
        %v3108 = vpop.f32.mrb[0].mxu0
        %v3109 = vadd.f32 %v3068, %v3108
        %v3110 = vpop.f32.mrb[0].mxu0
        %v3111 = vpop.f32.mrb[0].mxu0
        %3112 = vdwg.mxu0
        %3113 = vmatprep.subr.bf16.mxu0 %v2392
        %3114 = vmatpush1.bf16.msra.mxu0 %v2391
        %3115 = vmatprep.subr.bf16.mxu0 %v2400
        %3116 = vmatpush1.bf16.msra.mxu0 %v2399
        %3117 = vmatprep.subr.bf16.mxu0 %v2408
        %3118 = vmatpush1.bf16.msra.mxu0 %v2407
        %3119 = vmatprep.subr.bf16.mxu0 %v2416
        %3120 = vmatpush1.bf16.msra.mxu0 %v2415
        %3121 = vmatprep.subr.bf16.mxu0 %v2424
        %3122 = vmatpush1.bf16.msra.mxu0 %v2423
        %3123 = vmatprep.subr.bf16.mxu0 %v2432
        %3124 = vmatpush1.bf16.msra.mxu0 %v2431
        %3125 = vmatprep.subr.bf16.mxu0 %v2440
        %3126 = vmatpush1.bf16.msra.mxu0 %v2439
        %3127 = vmatprep.subr.bf16.mxu0 %v2448
        %3128 = vmatpush1.bf16.msra.mxu0 %v2447
        %3129 = vmatprep.subr.bf16.mxu0 %v2456
        %3130 = vmatpush1.bf16.msra.mxu0 %v2455
        %3131 = vmatprep.subr.bf16.mxu0 %v2464
        %3132 = vmatpush1.bf16.msra.mxu0 %v2463
        %3133 = vmatprep.subr.bf16.mxu0 %v2472
        %3134 = vmatpush1.bf16.msra.mxu0 %v2471
        %3135 = vmatprep.subr.bf16.mxu0 %v2480
        %3136 = vmatpush1.bf16.msra.mxu0 %v2479
        %3137 = vmatprep.subr.bf16.mxu0 %v2488
        %3138 = vmatpush1.bf16.msra.mxu0 %v2487
        %3139 = vmatprep.subr.bf16.mxu0 %v2496
        %3140 = vmatpush1.bf16.msra.mxu0 %v2495
        %3141 = vmatprep.subr.bf16.mxu0 %v2504
        %3142 = vmatpush1.bf16.msra.mxu0 %v2503
        %3143 = vmatprep.subr.bf16.mxu0 %v2512
        %3144 = vmatpush1.bf16.msra.mxu0 %v2511
        %3145 = vmatprep.mubr.bf16.mxu0 %v780
        %3146 = vmatmul.mubr.bf16.gmra.mrb[0].mxu0 %v766
        %v3147 = vpop.f32.mrb[0].mxu0
        %v3148 = vadd.f32 %v3107, %v3147
        %v3149 = vpop.f32.mrb[0].mxu0
        %v3150 = vadd.f32 %v3109, %v3149
        %v3151 = vpop.f32.mrb[0].mxu0
        %v3152 = vpop.f32.mrb[0].mxu0
        %3153 = vdwg.mxu0
        %3154 = vmatprep.subr.bf16.mxu0 %v2520
        %3155 = vmatpush1.bf16.msra.mxu0 %v2519
        %3156 = vmatprep.subr.bf16.mxu0 %v2528
        %3157 = vmatpush1.bf16.msra.mxu0 %v2527
        %3158 = vmatprep.subr.bf16.mxu0 %v2536
        %3159 = vmatpush1.bf16.msra.mxu0 %v2535
        %3160 = vmatprep.subr.bf16.mxu0 %v2544
        %3161 = vmatpush1.bf16.msra.mxu0 %v2543
        %3162 = vmatprep.subr.bf16.mxu0 %v2552
        %3163 = vmatpush1.bf16.msra.mxu0 %v2551
        %3164 = vmatprep.subr.bf16.mxu0 %v2560
        %3165 = vmatpush1.bf16.msra.mxu0 %v2559
        %3166 = vmatprep.subr.bf16.mxu0 %v2568
        %3167 = vmatpush1.bf16.msra.mxu0 %v2567
        %3168 = vmatprep.subr.bf16.mxu0 %v2576
        %3169 = vmatpush1.bf16.msra.mxu0 %v2575
        %3170 = vmatprep.subr.bf16.mxu0 0
        %3171 = vmatpush1.bf16.msra.mxu0 0
        %3172 = vmatprep.subr.bf16.mxu0 0
        %3173 = vmatpush1.bf16.msra.mxu0 0
        %3174 = vmatprep.subr.bf16.mxu0 0
        %3175 = vmatpush1.bf16.msra.mxu0 0
        %3176 = vmatprep.subr.bf16.mxu0 0
        %3177 = vmatpush1.bf16.msra.mxu0 0
        %3178 = vmatprep.subr.bf16.mxu0 0
        %3179 = vmatpush1.bf16.msra.mxu0 0
        %3180 = vmatprep.subr.bf16.mxu0 0
        %3181 = vmatpush1.bf16.msra.mxu0 0
        %3182 = vmatprep.subr.bf16.mxu0 0
        %3183 = vmatpush1.bf16.msra.mxu0 0
        %3184 = vmatprep.subr.bf16.mxu0 0
        %3185 = vmatpush1.bf16.msra.mxu0 0
        %3186 = vmatprep.mubr.bf16.mxu0 0
        %3187 = vmatmul.mubr.bf16.gmra.mrb[0].mxu0 %v782
        %v3188 = vpop.f32.mrb[0].mxu0
        %v3189 = vadd.f32 %v3148, %v3188
        %v3190 = vpop.f32.mrb[0].mxu0
        %v3191 = vadd.f32 %v3150, %v3190
        %v3192 = vpop.f32.mrb[0].mxu0
        %v3193 = vpop.f32.mrb[0].mxu0
        %3194 = vdwg.mxu0
        %3195 = vmatprep.subr.bf16.mxu0 %v2138
        %3196 = vmatpush1.bf16.msra.mxu0 %v2137
        %3197 = vmatprep.subr.bf16.mxu0 %v2146
        %3198 = vmatpush1.bf16.msra.mxu0 %v2145
        %3199 = vmatprep.subr.bf16.mxu0 %v2154
        %3200 = vmatpush1.bf16.msra.mxu0 %v2153
        %3201 = vmatprep.subr.bf16.mxu0 %v2162
        %3202 = vmatpush1.bf16.msra.mxu0 %v2161
        %3203 = vmatprep.subr.bf16.mxu0 %v2170
        %3204 = vmatpush1.bf16.msra.mxu0 %v2169
        %3205 = vmatprep.subr.bf16.mxu0 %v2178
        %3206 = vmatpush1.bf16.msra.mxu0 %v2177
        %3207 = vmatprep.subr.bf16.mxu0 %v2186
        %3208 = vmatpush1.bf16.msra.mxu0 %v2185
        %3209 = vmatprep.subr.bf16.mxu0 %v2194
        %3210 = vmatpush1.bf16.msra.mxu0 %v2193
        %3211 = vmatprep.subr.bf16.mxu0 %v2202
        %3212 = vmatpush1.bf16.msra.mxu0 %v2201
        %3213 = vmatprep.subr.bf16.mxu0 %v2210
        %3214 = vmatpush1.bf16.msra.mxu0 %v2209
        %3215 = vmatprep.subr.bf16.mxu0 %v2218
        %3216 = vmatpush1.bf16.msra.mxu0 %v2217
        %3217 = vmatprep.subr.bf16.mxu0 %v2226
        %3218 = vmatpush1.bf16.msra.mxu0 %v2225
        %3219 = vmatprep.subr.bf16.mxu0 %v2234
        %3220 = vmatpush1.bf16.msra.mxu0 %v2233
        %3221 = vmatprep.subr.bf16.mxu0 %v2242
        %3222 = vmatpush1.bf16.msra.mxu0 %v2241
        %3223 = vmatprep.subr.bf16.mxu0 %v2250
        %3224 = vmatpush1.bf16.msra.mxu0 %v2249
        %3225 = vmatprep.subr.bf16.mxu0 %v2258
        %3226 = vmatpush1.bf16.msra.mxu0 %v2257
        %3227 = vmatprep.mubr.bf16.mxu0 %v773
        %3228 = vmatmul.mubr.bf16.gmra.mrb[0].mxu0 %v759
        %v3229 = vpop.f32.mrb[0].mxu0
        %v3230 = vadd.f32 0.0, %v3229
        %v3231 = vpop.f32.mrb[0].mxu0
        %v3232 = vadd.f32 0.0, %v3231
        %v3233 = vpop.f32.mrb[0].mxu0
        %v3234 = vpop.f32.mrb[0].mxu0
        %3235 = vdwg.mxu0
        %3236 = vmatprep.subr.bf16.mxu0 %v2266
        %3237 = vmatpush1.bf16.msra.mxu0 %v2265
        %3238 = vmatprep.subr.bf16.mxu0 %v2274
        %3239 = vmatpush1.bf16.msra.mxu0 %v2273
        %3240 = vmatprep.subr.bf16.mxu0 %v2282
        %3241 = vmatpush1.bf16.msra.mxu0 %v2281
        %3242 = vmatprep.subr.bf16.mxu0 %v2290
        %3243 = vmatpush1.bf16.msra.mxu0 %v2289
        %3244 = vmatprep.subr.bf16.mxu0 %v2298
        %3245 = vmatpush1.bf16.msra.mxu0 %v2297
        %3246 = vmatprep.subr.bf16.mxu0 %v2306
        %3247 = vmatpush1.bf16.msra.mxu0 %v2305
        %3248 = vmatprep.subr.bf16.mxu0 %v2314
        %3249 = vmatpush1.bf16.msra.mxu0 %v2313
        %3250 = vmatprep.subr.bf16.mxu0 %v2322
        %3251 = vmatpush1.bf16.msra.mxu0 %v2321
        %3252 = vmatprep.subr.bf16.mxu0 %v2330
        %3253 = vmatpush1.bf16.msra.mxu0 %v2329
        %3254 = vmatprep.subr.bf16.mxu0 %v2338
        %3255 = vmatpush1.bf16.msra.mxu0 %v2337
        %3256 = vmatprep.subr.bf16.mxu0 %v2346
        %3257 = vmatpush1.bf16.msra.mxu0 %v2345
        %3258 = vmatprep.subr.bf16.mxu0 %v2354
        %3259 = vmatpush1.bf16.msra.mxu0 %v2353
        %3260 = vmatprep.subr.bf16.mxu0 %v2362
        %3261 = vmatpush1.bf16.msra.mxu0 %v2361
        %3262 = vmatprep.subr.bf16.mxu0 %v2370
        %3263 = vmatpush1.bf16.msra.mxu0 %v2369
        %3264 = vmatprep.subr.bf16.mxu0 %v2378
        %3265 = vmatpush1.bf16.msra.mxu0 %v2377
        %3266 = vmatprep.subr.bf16.mxu0 %v2386
        %3267 = vmatpush1.bf16.msra.mxu0 %v2385
        %3268 = vmatprep.mubr.bf16.mxu0 %v783
        %3269 = vmatmul.mubr.bf16.gmra.mrb[0].mxu0 %v781
        %v3270 = vpop.f32.mrb[0].mxu0
        %v3271 = vadd.f32 %v3230, %v3270
        %v3272 = vpop.f32.mrb[0].mxu0
        %v3273 = vadd.f32 %v3232, %v3272
        %v3274 = vpop.f32.mrb[0].mxu0
        %v3275 = vpop.f32.mrb[0].mxu0
        %3276 = vdwg.mxu0
        %3277 = vmatprep.subr.bf16.mxu0 %v2394
        %3278 = vmatpush1.bf16.msra.mxu0 %v2393
        %3279 = vmatprep.subr.bf16.mxu0 %v2402
        %3280 = vmatpush1.bf16.msra.mxu0 %v2401
        %3281 = vmatprep.subr.bf16.mxu0 %v2410
        %3282 = vmatpush1.bf16.msra.mxu0 %v2409
        %3283 = vmatprep.subr.bf16.mxu0 %v2418
        %3284 = vmatpush1.bf16.msra.mxu0 %v2417
        %3285 = vmatprep.subr.bf16.mxu0 %v2426
        %3286 = vmatpush1.bf16.msra.mxu0 %v2425
        %3287 = vmatprep.subr.bf16.mxu0 %v2434
        %3288 = vmatpush1.bf16.msra.mxu0 %v2433
        %3289 = vmatprep.subr.bf16.mxu0 %v2442
        %3290 = vmatpush1.bf16.msra.mxu0 %v2441
        %3291 = vmatprep.subr.bf16.mxu0 %v2450
        %3292 = vmatpush1.bf16.msra.mxu0 %v2449
        %3293 = vmatprep.subr.bf16.mxu0 %v2458
        %3294 = vmatpush1.bf16.msra.mxu0 %v2457
        %3295 = vmatprep.subr.bf16.mxu0 %v2466
        %3296 = vmatpush1.bf16.msra.mxu0 %v2465
        %3297 = vmatprep.subr.bf16.mxu0 %v2474
        %3298 = vmatpush1.bf16.msra.mxu0 %v2473
        %3299 = vmatprep.subr.bf16.mxu0 %v2482
        %3300 = vmatpush1.bf16.msra.mxu0 %v2481
        %3301 = vmatprep.subr.bf16.mxu0 %v2490
        %3302 = vmatpush1.bf16.msra.mxu0 %v2489
        %3303 = vmatprep.subr.bf16.mxu0 %v2498
        %3304 = vmatpush1.bf16.msra.mxu0 %v2497
        %3305 = vmatprep.subr.bf16.mxu0 %v2506
        %3306 = vmatpush1.bf16.msra.mxu0 %v2505
        %3307 = vmatprep.subr.bf16.mxu0 %v2514
        %3308 = vmatpush1.bf16.msra.mxu0 %v2513
        %3309 = vmatprep.mubr.bf16.mxu0 %v780
        %3310 = vmatmul.mubr.bf16.gmra.mrb[0].mxu0 %v766
        %v3311 = vpop.f32.mrb[0].mxu0
        %v3312 = vadd.f32 %v3271, %v3311
        %v3313 = vpop.f32.mrb[0].mxu0
        %v3314 = vadd.f32 %v3273, %v3313
        %v3315 = vpop.f32.mrb[0].mxu0
        %v3316 = vpop.f32.mrb[0].mxu0
        %3317 = vdwg.mxu0
        %3318 = vmatprep.subr.bf16.mxu0 %v2522
        %3319 = vmatpush1.bf16.msra.mxu0 %v2521
        %3320 = vmatprep.subr.bf16.mxu0 %v2530
        %3321 = vmatpush1.bf16.msra.mxu0 %v2529
        %3322 = vmatprep.subr.bf16.mxu0 %v2538
        %3323 = vmatpush1.bf16.msra.mxu0 %v2537
        %3324 = vmatprep.subr.bf16.mxu0 %v2546
        %3325 = vmatpush1.bf16.msra.mxu0 %v2545
        %3326 = vmatprep.subr.bf16.mxu0 %v2554
        %3327 = vmatpush1.bf16.msra.mxu0 %v2553
        %3328 = vmatprep.subr.bf16.mxu0 %v2562
        %3329 = vmatpush1.bf16.msra.mxu0 %v2561
        %3330 = vmatprep.subr.bf16.mxu0 %v2570
        %3331 = vmatpush1.bf16.msra.mxu0 %v2569
        %3332 = vmatprep.subr.bf16.mxu0 %v2578
        %3333 = vmatpush1.bf16.msra.mxu0 %v2577
        %3334 = vmatprep.subr.bf16.mxu0 0
        %3335 = vmatpush1.bf16.msra.mxu0 0
        %3336 = vmatprep.subr.bf16.mxu0 0
        %3337 = vmatpush1.bf16.msra.mxu0 0
        %3338 = vmatprep.subr.bf16.mxu0 0
        %3339 = vmatpush1.bf16.msra.mxu0 0
        %3340 = vmatprep.subr.bf16.mxu0 0
        %3341 = vmatpush1.bf16.msra.mxu0 0
        %3342 = vmatprep.subr.bf16.mxu0 0
        %3343 = vmatpush1.bf16.msra.mxu0 0
        %3344 = vmatprep.subr.bf16.mxu0 0
        %3345 = vmatpush1.bf16.msra.mxu0 0
        %3346 = vmatprep.subr.bf16.mxu0 0
        %3347 = vmatpush1.bf16.msra.mxu0 0
        %3348 = vmatprep.subr.bf16.mxu0 0
        %3349 = vmatpush1.bf16.msra.mxu0 0
        %3350 = vmatprep.mubr.bf16.mxu0 0
        %3351 = vmatmul.mubr.bf16.gmra.mrb[0].mxu0 %v782
        %v3352 = vpop.f32.mrb[0].mxu0
        %v3353 = vadd.f32 %v3312, %v3352
        %v3354 = vpop.f32.mrb[0].mxu0
        %v3355 = vadd.f32 %v3314, %v3354
        %v3356 = vpop.f32.mrb[0].mxu0
        %v3357 = vpop.f32.mrb[0].mxu0
        %3358 = vdwg.mxu0
        %3359 = vmatprep.subr.bf16.mxu0 %v2140
        %3360 = vmatpush1.bf16.msra.mxu0 %v2139
        %3361 = vmatprep.subr.bf16.mxu0 %v2148
        %3362 = vmatpush1.bf16.msra.mxu0 %v2147
        %3363 = vmatprep.subr.bf16.mxu0 %v2156
        %3364 = vmatpush1.bf16.msra.mxu0 %v2155
        %3365 = vmatprep.subr.bf16.mxu0 %v2164
        %3366 = vmatpush1.bf16.msra.mxu0 %v2163
        %3367 = vmatprep.subr.bf16.mxu0 %v2172
        %3368 = vmatpush1.bf16.msra.mxu0 %v2171
        %3369 = vmatprep.subr.bf16.mxu0 %v2180
        %3370 = vmatpush1.bf16.msra.mxu0 %v2179
        %3371 = vmatprep.subr.bf16.mxu0 %v2188
        %3372 = vmatpush1.bf16.msra.mxu0 %v2187
        %3373 = vmatprep.subr.bf16.mxu0 %v2196
        %3374 = vmatpush1.bf16.msra.mxu0 %v2195
        %3375 = vmatprep.subr.bf16.mxu0 %v2204
        %3376 = vmatpush1.bf16.msra.mxu0 %v2203
        %3377 = vmatprep.subr.bf16.mxu0 %v2212
        %3378 = vmatpush1.bf16.msra.mxu0 %v2211
        %3379 = vmatprep.subr.bf16.mxu0 %v2220
        %3380 = vmatpush1.bf16.msra.mxu0 %v2219
        %3381 = vmatprep.subr.bf16.mxu0 %v2228
        %3382 = vmatpush1.bf16.msra.mxu0 %v2227
        %3383 = vmatprep.subr.bf16.mxu0 %v2236
        %3384 = vmatpush1.bf16.msra.mxu0 %v2235
        %3385 = vmatprep.subr.bf16.mxu0 %v2244
        %3386 = vmatpush1.bf16.msra.mxu0 %v2243
        %3387 = vmatprep.subr.bf16.mxu0 %v2252
        %3388 = vmatpush1.bf16.msra.mxu0 %v2251
        %3389 = vmatprep.subr.bf16.mxu0 %v2260
        %3390 = vmatpush1.bf16.msra.mxu0 %v2259
        %3391 = vmatprep.mubr.bf16.mxu0 %v773
        %3392 = vmatmul.mubr.bf16.gmra.mrb[0].mxu0 %v759
        %v3393 = vpop.f32.mrb[0].mxu0
        %v3394 = vadd.f32 0.0, %v3393
        %v3395 = vpop.f32.mrb[0].mxu0
        %v3396 = vadd.f32 0.0, %v3395
        %v3397 = vpop.f32.mrb[0].mxu0
        %v3398 = vpop.f32.mrb[0].mxu0
        %3399 = vdwg.mxu0
        %3400 = vmatprep.subr.bf16.mxu0 %v2268
        %3401 = vmatpush1.bf16.msra.mxu0 %v2267
        %3402 = vmatprep.subr.bf16.mxu0 %v2276
        %3403 = vmatpush1.bf16.msra.mxu0 %v2275
        %3404 = vmatprep.subr.bf16.mxu0 %v2284
        %3405 = vmatpush1.bf16.msra.mxu0 %v2283
        %3406 = vmatprep.subr.bf16.mxu0 %v2292
        %3407 = vmatpush1.bf16.msra.mxu0 %v2291
        %3408 = vmatprep.subr.bf16.mxu0 %v2300
        %3409 = vmatpush1.bf16.msra.mxu0 %v2299
        %3410 = vmatprep.subr.bf16.mxu0 %v2308
        %3411 = vmatpush1.bf16.msra.mxu0 %v2307
        %3412 = vmatprep.subr.bf16.mxu0 %v2316
        %3413 = vmatpush1.bf16.msra.mxu0 %v2315
        %3414 = vmatprep.subr.bf16.mxu0 %v2324
        %3415 = vmatpush1.bf16.msra.mxu0 %v2323
        %3416 = vmatprep.subr.bf16.mxu0 %v2332
        %3417 = vmatpush1.bf16.msra.mxu0 %v2331
        %3418 = vmatprep.subr.bf16.mxu0 %v2340
        %3419 = vmatpush1.bf16.msra.mxu0 %v2339
        %3420 = vmatprep.subr.bf16.mxu0 %v2348
        %3421 = vmatpush1.bf16.msra.mxu0 %v2347
        %3422 = vmatprep.subr.bf16.mxu0 %v2356
        %3423 = vmatpush1.bf16.msra.mxu0 %v2355
        %3424 = vmatprep.subr.bf16.mxu0 %v2364
        %3425 = vmatpush1.bf16.msra.mxu0 %v2363
        %3426 = vmatprep.subr.bf16.mxu0 %v2372
        %3427 = vmatpush1.bf16.msra.mxu0 %v2371
        %3428 = vmatprep.subr.bf16.mxu0 %v2380
        %3429 = vmatpush1.bf16.msra.mxu0 %v2379
        %3430 = vmatprep.subr.bf16.mxu0 %v2388
        %3431 = vmatpush1.bf16.msra.mxu0 %v2387
        %3432 = vmatprep.mubr.bf16.mxu0 %v783
        %3433 = vmatmul.mubr.bf16.gmra.mrb[0].mxu0 %v781
        %v3434 = vpop.f32.mrb[0].mxu0
        %v3435 = vadd.f32 %v3394, %v3434
        %v3436 = vpop.f32.mrb[0].mxu0
        %v3437 = vadd.f32 %v3396, %v3436
        %v3438 = vpop.f32.mrb[0].mxu0
        %v3439 = vpop.f32.mrb[0].mxu0
        %3440 = vdwg.mxu0
        %3441 = vmatprep.subr.bf16.mxu0 %v2396
        %3442 = vmatpush1.bf16.msra.mxu0 %v2395
        %3443 = vmatprep.subr.bf16.mxu0 %v2404
        %3444 = vmatpush1.bf16.msra.mxu0 %v2403
        %3445 = vmatprep.subr.bf16.mxu0 %v2412
        %3446 = vmatpush1.bf16.msra.mxu0 %v2411
        %3447 = vmatprep.subr.bf16.mxu0 %v2420
        %3448 = vmatpush1.bf16.msra.mxu0 %v2419
        %3449 = vmatprep.subr.bf16.mxu0 %v2428
        %3450 = vmatpush1.bf16.msra.mxu0 %v2427
        %3451 = vmatprep.subr.bf16.mxu0 %v2436
        %3452 = vmatpush1.bf16.msra.mxu0 %v2435
        %3453 = vmatprep.subr.bf16.mxu0 %v2444
        %3454 = vmatpush1.bf16.msra.mxu0 %v2443
        %3455 = vmatprep.subr.bf16.mxu0 %v2452
        %3456 = vmatpush1.bf16.msra.mxu0 %v2451
        %3457 = vmatprep.subr.bf16.mxu0 %v2460
        %3458 = vmatpush1.bf16.msra.mxu0 %v2459
        %3459 = vmatprep.subr.bf16.mxu0 %v2468
        %3460 = vmatpush1.bf16.msra.mxu0 %v2467
        %3461 = vmatprep.subr.bf16.mxu0 %v2476
        %3462 = vmatpush1.bf16.msra.mxu0 %v2475
        %3463 = vmatprep.subr.bf16.mxu0 %v2484
        %3464 = vmatpush1.bf16.msra.mxu0 %v2483
        %3465 = vmatprep.subr.bf16.mxu0 %v2492
        %3466 = vmatpush1.bf16.msra.mxu0 %v2491
        %3467 = vmatprep.subr.bf16.mxu0 %v2500
        %3468 = vmatpush1.bf16.msra.mxu0 %v2499
        %3469 = vmatprep.subr.bf16.mxu0 %v2508
        %3470 = vmatpush1.bf16.msra.mxu0 %v2507
        %3471 = vmatprep.subr.bf16.mxu0 %v2516
        %3472 = vmatpush1.bf16.msra.mxu0 %v2515
        %3473 = vmatprep.mubr.bf16.mxu0 %v780
        %3474 = vmatmul.mubr.bf16.gmra.mrb[0].mxu0 %v766
        %v3475 = vpop.f32.mrb[0].mxu0
        %v3476 = vadd.f32 %v3435, %v3475
        %v3477 = vpop.f32.mrb[0].mxu0
        %v3478 = vadd.f32 %v3437, %v3477
        %v3479 = vpop.f32.mrb[0].mxu0
        %v3480 = vpop.f32.mrb[0].mxu0
        %3481 = vdwg.mxu0
        %3482 = vmatprep.subr.bf16.mxu0 %v2524
        %3483 = vmatpush1.bf16.msra.mxu0 %v2523
        %3484 = vmatprep.subr.bf16.mxu0 %v2532
        %3485 = vmatpush1.bf16.msra.mxu0 %v2531
        %3486 = vmatprep.subr.bf16.mxu0 %v2540
        %3487 = vmatpush1.bf16.msra.mxu0 %v2539
        %3488 = vmatprep.subr.bf16.mxu0 %v2548
        %3489 = vmatpush1.bf16.msra.mxu0 %v2547
        %3490 = vmatprep.subr.bf16.mxu0 %v2556
        %3491 = vmatpush1.bf16.msra.mxu0 %v2555
        %3492 = vmatprep.subr.bf16.mxu0 %v2564
        %3493 = vmatpush1.bf16.msra.mxu0 %v2563
        %3494 = vmatprep.subr.bf16.mxu0 %v2572
        %3495 = vmatpush1.bf16.msra.mxu0 %v2571
        %3496 = vmatprep.subr.bf16.mxu0 %v2580
        %3497 = vmatpush1.bf16.msra.mxu0 %v2579
        %3498 = vmatprep.subr.bf16.mxu0 0
        %3499 = vmatpush1.bf16.msra.mxu0 0
        %3500 = vmatprep.subr.bf16.mxu0 0
        %3501 = vmatpush1.bf16.msra.mxu0 0
        %3502 = vmatprep.subr.bf16.mxu0 0
        %3503 = vmatpush1.bf16.msra.mxu0 0
        %3504 = vmatprep.subr.bf16.mxu0 0
        %3505 = vmatpush1.bf16.msra.mxu0 0
        %3506 = vmatprep.subr.bf16.mxu0 0
        %3507 = vmatpush1.bf16.msra.mxu0 0
        %3508 = vmatprep.subr.bf16.mxu0 0
        %3509 = vmatpush1.bf16.msra.mxu0 0
        %3510 = vmatprep.subr.bf16.mxu0 0
        %3511 = vmatpush1.bf16.msra.mxu0 0
        %3512 = vmatprep.subr.bf16.mxu0 0
        %3513 = vmatpush1.bf16.msra.mxu0 0
        %3514 = vmatprep.mubr.bf16.mxu0 0
        %3515 = vmatmul.mubr.bf16.gmra.mrb[0].mxu0 %v782
        %v3516 = vpop.f32.mrb[0].mxu0
        %v3517 = vadd.f32 %v3476, %v3516
        %v3518 = vpop.f32.mrb[0].mxu0
        %v3519 = vadd.f32 %v3478, %v3518
        %v3520 = vpop.f32.mrb[0].mxu0
        %v3521 = vpop.f32.mrb[0].mxu0
        %3522 = vdwg.mxu0
        %3523 = vmatprep.subr.bf16.mxu0 %v2142
        %3524 = vmatpush1.bf16.msra.mxu0 %v2141
        %3525 = vmatprep.subr.bf16.mxu0 %v2150
        %3526 = vmatpush1.bf16.msra.mxu0 %v2149
        %3527 = vmatprep.subr.bf16.mxu0 %v2158
        %3528 = vmatpush1.bf16.msra.mxu0 %v2157
        %3529 = vmatprep.subr.bf16.mxu0 %v2166
        %3530 = vmatpush1.bf16.msra.mxu0 %v2165
        %3531 = vmatprep.subr.bf16.mxu0 %v2174
        %3532 = vmatpush1.bf16.msra.mxu0 %v2173
        %3533 = vmatprep.subr.bf16.mxu0 %v2182
        %3534 = vmatpush1.bf16.msra.mxu0 %v2181
        %3535 = vmatprep.subr.bf16.mxu0 %v2190
        %3536 = vmatpush1.bf16.msra.mxu0 %v2189
        %3537 = vmatprep.subr.bf16.mxu0 %v2198
        %3538 = vmatpush1.bf16.msra.mxu0 %v2197
        %3539 = vmatprep.subr.bf16.mxu0 %v2206
        %3540 = vmatpush1.bf16.msra.mxu0 %v2205
        %3541 = vmatprep.subr.bf16.mxu0 %v2214
        %3542 = vmatpush1.bf16.msra.mxu0 %v2213
        %3543 = vmatprep.subr.bf16.mxu0 %v2222
        %3544 = vmatpush1.bf16.msra.mxu0 %v2221
        %3545 = vmatprep.subr.bf16.mxu0 %v2230
        %3546 = vmatpush1.bf16.msra.mxu0 %v2229
        %3547 = vmatprep.subr.bf16.mxu0 %v2238
        %3548 = vmatpush1.bf16.msra.mxu0 %v2237
        %3549 = vmatprep.subr.bf16.mxu0 %v2246
        %3550 = vmatpush1.bf16.msra.mxu0 %v2245
        %3551 = vmatprep.subr.bf16.mxu0 %v2254
        %3552 = vmatpush1.bf16.msra.mxu0 %v2253
        %3553 = vmatprep.subr.bf16.mxu0 %v2262
        %3554 = vmatpush1.bf16.msra.mxu0 %v2261
        %3555 = vmatprep.mubr.bf16.mxu0 %v773
        %3556 = vmatmul.mubr.bf16.gmra.mrb[0].mxu0 %v759
        %v3557 = vpop.f32.mrb[0].mxu0
        %v3558 = vadd.f32 0.0, %v3557
        %v3559 = vpop.f32.mrb[0].mxu0
        %v3560 = vadd.f32 0.0, %v3559
        %v3561 = vpop.f32.mrb[0].mxu0
        %v3562 = vpop.f32.mrb[0].mxu0
        %3563 = vdwg.mxu0
        %3564 = vmatprep.subr.bf16.mxu0 %v2270
        %3565 = vmatpush1.bf16.msra.mxu0 %v2269
        %3566 = vmatprep.subr.bf16.mxu0 %v2278
        %3567 = vmatpush1.bf16.msra.mxu0 %v2277
        %3568 = vmatprep.subr.bf16.mxu0 %v2286
        %3569 = vmatpush1.bf16.msra.mxu0 %v2285
        %3570 = vmatprep.subr.bf16.mxu0 %v2294
        %3571 = vmatpush1.bf16.msra.mxu0 %v2293
        %3572 = vmatprep.subr.bf16.mxu0 %v2302
        %3573 = vmatpush1.bf16.msra.mxu0 %v2301
        %3574 = vmatprep.subr.bf16.mxu0 %v2310
        %3575 = vmatpush1.bf16.msra.mxu0 %v2309
        %3576 = vmatprep.subr.bf16.mxu0 %v2318
        %3577 = vmatpush1.bf16.msra.mxu0 %v2317
        %3578 = vmatprep.subr.bf16.mxu0 %v2326
        %3579 = vmatpush1.bf16.msra.mxu0 %v2325
        %3580 = vmatprep.subr.bf16.mxu0 %v2334
        %3581 = vmatpush1.bf16.msra.mxu0 %v2333
        %3582 = vmatprep.subr.bf16.mxu0 %v2342
        %3583 = vmatpush1.bf16.msra.mxu0 %v2341
        %3584 = vmatprep.subr.bf16.mxu0 %v2350
        %3585 = vmatpush1.bf16.msra.mxu0 %v2349
        %3586 = vmatprep.subr.bf16.mxu0 %v2358
        %3587 = vmatpush1.bf16.msra.mxu0 %v2357
        %3588 = vmatprep.subr.bf16.mxu0 %v2366
        %3589 = vmatpush1.bf16.msra.mxu0 %v2365
        %3590 = vmatprep.subr.bf16.mxu0 %v2374
        %3591 = vmatpush1.bf16.msra.mxu0 %v2373
        %3592 = vmatprep.subr.bf16.mxu0 %v2382
        %3593 = vmatpush1.bf16.msra.mxu0 %v2381
        %3594 = vmatprep.subr.bf16.mxu0 %v2390
        %3595 = vmatpush1.bf16.msra.mxu0 %v2389
        %3596 = vmatprep.mubr.bf16.mxu0 %v783
        %3597 = vmatmul.mubr.bf16.gmra.mrb[0].mxu0 %v781
        %v3598 = vpop.f32.mrb[0].mxu0
        %v3599 = vadd.f32 %v3558, %v3598
        %v3600 = vpop.f32.mrb[0].mxu0
        %v3601 = vadd.f32 %v3560, %v3600
        %v3602 = vpop.f32.mrb[0].mxu0
        %v3603 = vpop.f32.mrb[0].mxu0
        %3604 = vdwg.mxu0
        %3605 = vmatprep.subr.bf16.mxu0 %v2398
        %3606 = vmatpush1.bf16.msra.mxu0 %v2397
        %3607 = vmatprep.subr.bf16.mxu0 %v2406
        %3608 = vmatpush1.bf16.msra.mxu0 %v2405
        %3609 = vmatprep.subr.bf16.mxu0 %v2414
        %3610 = vmatpush1.bf16.msra.mxu0 %v2413
        %3611 = vmatprep.subr.bf16.mxu0 %v2422
        %3612 = vmatpush1.bf16.msra.mxu0 %v2421
        %3613 = vmatprep.subr.bf16.mxu0 %v2430
        %3614 = vmatpush1.bf16.msra.mxu0 %v2429
        %3615 = vmatprep.subr.bf16.mxu0 %v2438
        %3616 = vmatpush1.bf16.msra.mxu0 %v2437
        %3617 = vmatprep.subr.bf16.mxu0 %v2446
        %3618 = vmatpush1.bf16.msra.mxu0 %v2445
        %3619 = vmatprep.subr.bf16.mxu0 %v2454
        %3620 = vmatpush1.bf16.msra.mxu0 %v2453
        %3621 = vmatprep.subr.bf16.mxu0 %v2462
        %3622 = vmatpush1.bf16.msra.mxu0 %v2461
        %3623 = vmatprep.subr.bf16.mxu0 %v2470
        %3624 = vmatpush1.bf16.msra.mxu0 %v2469
        %3625 = vmatprep.subr.bf16.mxu0 %v2478
        %3626 = vmatpush1.bf16.msra.mxu0 %v2477
        %3627 = vmatprep.subr.bf16.mxu0 %v2486
        %3628 = vmatpush1.bf16.msra.mxu0 %v2485
        %3629 = vmatprep.subr.bf16.mxu0 %v2494
        %3630 = vmatpush1.bf16.msra.mxu0 %v2493
        %3631 = vmatprep.subr.bf16.mxu0 %v2502
        %3632 = vmatpush1.bf16.msra.mxu0 %v2501
        %3633 = vmatprep.subr.bf16.mxu0 %v2510
        %3634 = vmatpush1.bf16.msra.mxu0 %v2509
        %3635 = vmatprep.subr.bf16.mxu0 %v2518
        %3636 = vmatpush1.bf16.msra.mxu0 %v2517
        %3637 = vmatprep.mubr.bf16.mxu0 %v780
        %3638 = vmatmul.mubr.bf16.gmra.mrb[0].mxu0 %v766
        %v3639 = vpop.f32.mrb[0].mxu0
        %v3640 = vadd.f32 %v3599, %v3639
        %v3641 = vpop.f32.mrb[0].mxu0
        %v3642 = vadd.f32 %v3601, %v3641
        %v3643 = vpop.f32.mrb[0].mxu0
        %v3644 = vpop.f32.mrb[0].mxu0
        %3645 = vdwg.mxu0
        %3646 = vmatprep.subr.bf16.mxu0 %v2526
        %3647 = vmatpush1.bf16.msra.mxu0 %v2525
        %3648 = vmatprep.subr.bf16.mxu0 %v2534
        %3649 = vmatpush1.bf16.msra.mxu0 %v2533
        %3650 = vmatprep.subr.bf16.mxu0 %v2542
        %3651 = vmatpush1.bf16.msra.mxu0 %v2541
        %3652 = vmatprep.subr.bf16.mxu0 %v2550
        %3653 = vmatpush1.bf16.msra.mxu0 %v2549
        %3654 = vmatprep.subr.bf16.mxu0 %v2558
        %3655 = vmatpush1.bf16.msra.mxu0 %v2557
        %3656 = vmatprep.subr.bf16.mxu0 %v2566
        %3657 = vmatpush1.bf16.msra.mxu0 %v2565
        %3658 = vmatprep.subr.bf16.mxu0 %v2574
        %3659 = vmatpush1.bf16.msra.mxu0 %v2573
        %3660 = vmatprep.subr.bf16.mxu0 %v2582
        %3661 = vmatpush1.bf16.msra.mxu0 %v2581
        %3662 = vmatprep.subr.bf16.mxu0 0
        %3663 = vmatpush1.bf16.msra.mxu0 0
        %3664 = vmatprep.subr.bf16.mxu0 0
        %3665 = vmatpush1.bf16.msra.mxu0 0
        %3666 = vmatprep.subr.bf16.mxu0 0
        %3667 = vmatpush1.bf16.msra.mxu0 0
        %3668 = vmatprep.subr.bf16.mxu0 0
        %3669 = vmatpush1.bf16.msra.mxu0 0
        %3670 = vmatprep.subr.bf16.mxu0 0
        %3671 = vmatpush1.bf16.msra.mxu0 0
        %3672 = vmatprep.subr.bf16.mxu0 0
        %3673 = vmatpush1.bf16.msra.mxu0 0
        %3674 = vmatprep.subr.bf16.mxu0 0
        %3675 = vmatpush1.bf16.msra.mxu0 0
        %3676 = vmatprep.subr.bf16.mxu0 0
        %3677 = vmatpush1.bf16.msra.mxu0 0
        %3678 = vmatprep.mubr.bf16.mxu0 0
        %3679 = vmatmul.mubr.bf16.gmra.mrb[0].mxu0 %v782
        %v3680 = vpop.f32.mrb[0].mxu0
        %v3681 = vadd.f32 %v3640, %v3680
        %v3682 = vpop.f32.mrb[0].mxu0
        %v3683 = vadd.f32 %v3642, %v3682
        %v3684 = vpop.f32.mrb[0].mxu0
        %v3685 = vpop.f32.mrb[0].mxu0
        %3686 = vdwg.mxu0
        %v3695 = vcombine.low %v3189, %v3191
        %v3696 = vcombine.low %v3353, %v3355
        %v3698 = vunpack.c.l.s4 1983009808
        %v3699 = vunpack.c.0.s8 %v3698
        %v3700 = vlaneseq
        %v3701 = vshrl.u32 %v3700, 7
        %v3702 = vsub.s32 %v3699, %v3701
        %v3703 = vrot.slane %v3695, %v3702
        %v3705 = vunpack.c.l.s4 1983009808
        %v3706 = vunpack.c.0.s8 %v3705
        %v3707 = vlaneseq
        %v3708 = vshrl.u32 %v3707, 7
        %v3709 = vsub.s32 %v3706, %v3708
        %v3710 = vrot.slane %v3696, %v3709
        %v3711 = vcombine.low %v3703, %v3710
        %v3712 = vcombine.low %v3517, %v3519
        %v3713 = vcombine.low %v3681, %v3683
        %v3715 = vunpack.c.l.s4 1983009808
        %v3716 = vunpack.c.0.s8 %v3715
        %v3717 = vlaneseq
        %v3718 = vshrl.u32 %v3717, 7
        %v3719 = vsub.s32 %v3716, %v3718
        %v3720 = vrot.slane %v3712, %v3719
        %v3722 = vunpack.c.l.s4 1983009808
        %v3723 = vunpack.c.0.s8 %v3722
        %v3724 = vlaneseq
        %v3725 = vshrl.u32 %v3724, 7
        %v3726 = vsub.s32 %v3723, %v3725
        %v3727 = vrot.slane %v3713, %v3726
        %v3728 = vcombine.low %v3720, %v3727
        %v3731 = vadd.f32 %v284, %v3711
        %v3732 = vadd.f32 %v285, %v3728
        %3733 = vst [vmem:[#allocation2] sm:$0xff] %v3731
        %3734 = vst [vmem:[#allocation2 + $0x8] sm:$0xff] %v3732
        %p3735 = scmp.eq.s32.totalorder %s21, 6
        // Predicated region
        $region57: #{vggnet_forward.3} parent=39 // pred_check
          %p3736 = pneg %p3735
        $region58: #{vggnet_forward.3} parent=39 // pred_check_branch
          %3738 = sbr.rel (%p3736) target = $region60
        $region59: #{vggnet_forward.3} parent=39 // pred_region
          %v3739 = vld [vmem:[#allocation2] sm:$0xff]
          %v3740 = vld [vmem:[#allocation2 + $0x8] sm:$0xff]
          %v3741 = vld [vmem:[#allocation6] sm:$0xff]
          %v3743 = vlaneseq
          %v3744 = vshrl.u32 %v3743, 7
          %v3745 = vsub.s32 0, %v3744
          %v3746 = vrot.slane %v3741, %v3745
          %v3747 = vlaneseq
          %v3748 = vshrl.u32 %v3747, 7
          %v3749 = vsub.s32 1, %v3748
          %v3750 = vrot.slane %v3741, %v3749
          %v3751 = vlaneseq
          %v3752 = vshrl.u32 %v3751, 7
          %v3753 = vsub.s32 2, %v3752
          %v3754 = vrot.slane %v3741, %v3753
          %v3755 = vlaneseq
          %v3756 = vshrl.u32 %v3755, 7
          %v3757 = vsub.s32 3, %v3756
          %v3758 = vrot.slane %v3741, %v3757
          %v3759 = vlaneseq
          %v3760 = vshrl.u32 %v3759, 7
          %v3761 = vsub.s32 4, %v3760
          %v3762 = vrot.slane %v3741, %v3761
          %v3763 = vlaneseq
          %v3764 = vshrl.u32 %v3763, 7
          %v3765 = vsub.s32 5, %v3764
          %v3766 = vrot.slane %v3741, %v3765
          %v3767 = vlaneseq
          %v3768 = vshrl.u32 %v3767, 7
          %v3769 = vsub.s32 6, %v3768
          %v3770 = vrot.slane %v3741, %v3769
          %v3771 = vlaneseq
          %v3772 = vshrl.u32 %v3771, 7
          %v3773 = vsub.s32 7, %v3772
          %v3774 = vrot.slane %v3741, %v3773
          %v3775 = vcombine.low %v3746, %v3750
          %v3776 = vcombine.low %v3754, %v3758
          %v3778 = vunpack.c.l.s4 1983009808
          %v3779 = vunpack.c.0.s8 %v3778
          %v3780 = vlaneseq
          %v3781 = vshrl.u32 %v3780, 7
          %v3782 = vsub.s32 %v3779, %v3781
          %v3783 = vrot.slane %v3775, %v3782
          %v3785 = vunpack.c.l.s4 1983009808
          %v3786 = vunpack.c.0.s8 %v3785
          %v3787 = vlaneseq
          %v3788 = vshrl.u32 %v3787, 7
          %v3789 = vsub.s32 %v3786, %v3788
          %v3790 = vrot.slane %v3776, %v3789
          %v3791 = vcombine.low %v3783, %v3790
          %v3792 = vcombine.low %v3762, %v3766
          %v3793 = vcombine.low %v3770, %v3774
          %v3795 = vunpack.c.l.s4 1983009808
          %v3796 = vunpack.c.0.s8 %v3795
          %v3797 = vlaneseq
          %v3798 = vshrl.u32 %v3797, 7
          %v3799 = vsub.s32 %v3796, %v3798
          %v3800 = vrot.slane %v3792, %v3799
          %v3802 = vunpack.c.l.s4 1983009808
          %v3803 = vunpack.c.0.s8 %v3802
          %v3804 = vlaneseq
          %v3805 = vshrl.u32 %v3804, 7
          %v3806 = vsub.s32 %v3803, %v3805
          %v3807 = vrot.slane %v3793, %v3806
          %v3808 = vcombine.low %v3800, %v3807
          %v3811 = vadd.f32 %v3739, %v3791
          %v3812 = vadd.f32 %v3740, %v3808
          %v3813 = vmax.f32 %v3811, 0.0
          %v3814 = vmax.f32 %v3812, 0.0
          %v3817 = vcombine.high %v3813, %v3813
          %v3819 = vunpack.c.l.s4 1983009808
          %v3820 = vunpack.c.0.s8 %v3819
          %v3821 = vlaneseq
          %v3822 = vshrl.u32 %v3821, 7
          %v3823 = vsub.s32 %v3820, %v3822
          %v3824 = vrot.slane %v3813, %v3823
          %v3826 = vunpack.c.l.s4 1983009808
          %v3827 = vunpack.c.0.s8 %v3826
          %v3828 = vlaneseq
          %v3829 = vshrl.u32 %v3828, 7
          %v3830 = vsub.s32 %v3827, %v3829
          %v3831 = vrot.slane %v3817, %v3830
          %v3832 = vcombine.high %v3824, %v3824
          %v3833 = vcombine.high %v3831, %v3831
          %v3834 = vcombine.high %v3814, %v3814
          %v3836 = vunpack.c.l.s4 1983009808
          %v3837 = vunpack.c.0.s8 %v3836
          %v3838 = vlaneseq
          %v3839 = vshrl.u32 %v3838, 7
          %v3840 = vsub.s32 %v3837, %v3839
          %v3841 = vrot.slane %v3814, %v3840
          %v3843 = vunpack.c.l.s4 1983009808
          %v3844 = vunpack.c.0.s8 %v3843
          %v3845 = vlaneseq
          %v3846 = vshrl.u32 %v3845, 7
          %v3847 = vsub.s32 %v3844, %v3846
          %v3848 = vrot.slane %v3834, %v3847
          %v3849 = vcombine.high %v3841, %v3841
          %v3850 = vcombine.high %v3848, %v3848
          %v3859 = vpack.c.bf16 %v3824, %v3824
          %v3860 = vpack.c.bf16 %v3832, %v3832
          %v3861 = vpack.c.bf16 %v3831, %v3831
          %v3862 = vpack.c.bf16 %v3833, %v3833
          %v3863 = vpack.c.bf16 %v3841, %v3841
          %v3864 = vpack.c.bf16 %v3849, %v3849
          %v3865 = vpack.c.bf16 %v3848, %v3848
          %v3866 = vpack.c.bf16 %v3850, %v3850
          %v3867 = vld [vmem:[%s3] sm:$0xf]
          %v3868 = vld [vmem:[%s3 + $0x4] sm:$0xf]
          %v3869 = vld [vmem:[%s3 + $0x8] sm:$0xf]
          %v3870 = vld [vmem:[%s3 + $0xc] sm:$0xf]
          %v3871 = vld [vmem:[%s3 + $0x10] sm:$0xf]
          %v3872 = vld [vmem:[%s3 + $0x14] sm:$0xf]
          %v3873 = vld [vmem:[%s3 + $0x18] sm:$0xf]
          %v3874 = vld [vmem:[%s3 + $0x1c] sm:$0xf]
          %v3875 = vld [vmem:[%s3 + $0x20] sm:$0xf]
          %v3876 = vld [vmem:[%s3 + $0x24] sm:$0xf]
          %v3877 = vld [vmem:[%s3 + $0x28] sm:$0xf]
          %v3878 = vld [vmem:[%s3 + $0x2c] sm:$0xf]
          %v3879 = vld [vmem:[%s3 + $0x30] sm:$0xf]
          %v3880 = vld [vmem:[%s3 + $0x34] sm:$0xf]
          %v3881 = vld [vmem:[%s3 + $0x38] sm:$0xf]
          %v3882 = vld [vmem:[%s3 + $0x3c] sm:$0xf]
          %v3883 = vld [vmem:[%s3 + $0x40] sm:$0xf]
          %v3884 = vld [vmem:[%s3 + $0x44] sm:$0xf]
          %v3885 = vld [vmem:[%s3 + $0x48] sm:$0xf]
          %v3886 = vld [vmem:[%s3 + $0x4c] sm:$0xf]
          %v3887 = vld [vmem:[%s3 + $0x50] sm:$0xf]
          %v3888 = vld [vmem:[%s3 + $0x54] sm:$0xf]
          %v3889 = vld [vmem:[%s3 + $0x58] sm:$0xf]
          %v3890 = vld [vmem:[%s3 + $0x5c] sm:$0xf]
          %v3891 = vld [vmem:[%s3 + $0x60] sm:$0xf]
          %v3892 = vld [vmem:[%s3 + $0x64] sm:$0xf]
          %v3893 = vld [vmem:[%s3 + $0x68] sm:$0xf]
          %v3894 = vld [vmem:[%s3 + $0x6c] sm:$0xf]
          %v3895 = vld [vmem:[%s3 + $0x70] sm:$0xf]
          %v3896 = vld [vmem:[%s3 + $0x74] sm:$0xf]
          %v3897 = vld [vmem:[%s3 + $0x78] sm:$0xf]
          %v3898 = vld [vmem:[%s3 + $0x7c] sm:$0xf]
          %v3899 = vld [vmem:[%s3 + $0x80] sm:$0xf]
          %v3900 = vld [vmem:[%s3 + $0x84] sm:$0xf]
          %v3901 = vld [vmem:[%s3 + $0x88] sm:$0xf]
          %v3902 = vld [vmem:[%s3 + $0x8c] sm:$0xf]
          %v3903 = vld [vmem:[%s3 + $0x90] sm:$0xf]
          %v3904 = vld [vmem:[%s3 + $0x94] sm:$0xf]
          %v3905 = vld [vmem:[%s3 + $0x98] sm:$0xf]
          %v3906 = vld [vmem:[%s3 + $0x9c] sm:$0xf]
          %v3907 = vld [vmem:[%s3 + $0xa0] sm:$0xf]
          %v3908 = vld [vmem:[%s3 + $0xa4] sm:$0xf]
          %v3909 = vld [vmem:[%s3 + $0xa8] sm:$0xf]
          %v3910 = vld [vmem:[%s3 + $0xac] sm:$0xf]
          %v3911 = vld [vmem:[%s3 + $0xb0] sm:$0xf]
          %v3912 = vld [vmem:[%s3 + $0xb4] sm:$0xf]
          %v3913 = vld [vmem:[%s3 + $0xb8] sm:$0xf]
          %v3914 = vld [vmem:[%s3 + $0xbc] sm:$0xf]
          %v3915 = vld [vmem:[%s3 + $0xc0] sm:$0xf]
          %v3916 = vld [vmem:[%s3 + $0xc4] sm:$0xf]
          %v3917 = vld [vmem:[%s3 + $0xc8] sm:$0xf]
          %v3918 = vld [vmem:[%s3 + $0xcc] sm:$0xf]
          %v3919 = vld [vmem:[%s3 + $0xd0] sm:$0xf]
          %v3920 = vld [vmem:[%s3 + $0xd4] sm:$0xf]
          %v3921 = vld [vmem:[%s3 + $0xd8] sm:$0xf]
          %v3922 = vld [vmem:[%s3 + $0xdc] sm:$0xf]
          %v3923 = vld [vmem:[%s3 + $0xe0] sm:$0xf]
          %v3924 = vld [vmem:[%s3 + $0xe4] sm:$0xf]
          %v3925 = vld [vmem:[%s3 + $0xe8] sm:$0xf]
          %v3926 = vld [vmem:[%s3 + $0xec] sm:$0xf]
          %v3927 = vld [vmem:[%s3 + $0xf0] sm:$0xf]
          %v3928 = vld [vmem:[%s3 + $0xf4] sm:$0xf]
          %v3929 = vld [vmem:[%s3 + $0xf8] sm:$0xf]
          %v3930 = vld [vmem:[%s3 + $0xfc] sm:$0xf]
          %v3931 = vld [vmem:[%s3 + $0x100] sm:$0xf]
          %v3932 = vld [vmem:[%s3 + $0x104] sm:$0xf]
          %v3933 = vld [vmem:[%s3 + $0x108] sm:$0xf]
          %v3934 = vld [vmem:[%s3 + $0x10c] sm:$0xf]
          %v3935 = vld [vmem:[%s3 + $0x110] sm:$0xf]
          %v3936 = vld [vmem:[%s3 + $0x114] sm:$0xf]
          %v3937 = vld [vmem:[%s3 + $0x118] sm:$0xf]
          %v3938 = vld [vmem:[%s3 + $0x11c] sm:$0xf]
          %v3939 = vld [vmem:[%s3 + $0x120] sm:$0xf]
          %v3940 = vld [vmem:[%s3 + $0x124] sm:$0xf]
          %v3941 = vld [vmem:[%s3 + $0x128] sm:$0xf]
          %v3942 = vld [vmem:[%s3 + $0x12c] sm:$0xf]
          %v3943 = vld [vmem:[%s3 + $0x130] sm:$0xf]
          %v3944 = vld [vmem:[%s3 + $0x134] sm:$0xf]
          %v3945 = vld [vmem:[%s3 + $0x138] sm:$0xf]
          %v3946 = vld [vmem:[%s3 + $0x13c] sm:$0xf]
          %v3947 = vld [vmem:[%s3 + $0x140] sm:$0xf]
          %v3948 = vld [vmem:[%s3 + $0x144] sm:$0xf]
          %v3949 = vld [vmem:[%s3 + $0x148] sm:$0xf]
          %v3950 = vld [vmem:[%s3 + $0x14c] sm:$0xf]
          %v3951 = vld [vmem:[%s3 + $0x150] sm:$0xf]
          %v3952 = vld [vmem:[%s3 + $0x154] sm:$0xf]
          %v3953 = vld [vmem:[%s3 + $0x158] sm:$0xf]
          %v3954 = vld [vmem:[%s3 + $0x15c] sm:$0xf]
          %v3955 = vld [vmem:[%s3 + $0x160] sm:$0xf]
          %v3956 = vld [vmem:[%s3 + $0x164] sm:$0xf]
          %v3957 = vld [vmem:[%s3 + $0x168] sm:$0xf]
          %v3958 = vld [vmem:[%s3 + $0x16c] sm:$0xf]
          %v3959 = vld [vmem:[%s3 + $0x170] sm:$0xf]
          %v3960 = vld [vmem:[%s3 + $0x174] sm:$0xf]
          %v3961 = vld [vmem:[%s3 + $0x178] sm:$0xf]
          %v3962 = vld [vmem:[%s3 + $0x17c] sm:$0xf]
          %v3963 = vld [vmem:[%s3 + $0x180] sm:$0xf]
          %v3964 = vld [vmem:[%s3 + $0x184] sm:$0xf]
          %v3965 = vld [vmem:[%s3 + $0x188] sm:$0xf]
          %v3966 = vld [vmem:[%s3 + $0x18c] sm:$0xf]
          %v3967 = vld [vmem:[%s3 + $0x190] sm:$0xf]
          %v3968 = vld [vmem:[%s3 + $0x194] sm:$0xf]
          %v3969 = vld [vmem:[%s3 + $0x198] sm:$0xf]
          %v3970 = vld [vmem:[%s3 + $0x19c] sm:$0xf]
          %v3971 = vld [vmem:[%s3 + $0x1a0] sm:$0xf]
          %v3972 = vld [vmem:[%s3 + $0x1a4] sm:$0xf]
          %v3973 = vld [vmem:[%s3 + $0x1a8] sm:$0xf]
          %v3974 = vld [vmem:[%s3 + $0x1ac] sm:$0xf]
          %v3975 = vld [vmem:[%s3 + $0x1b0] sm:$0xf]
          %v3976 = vld [vmem:[%s3 + $0x1b4] sm:$0xf]
          %v3977 = vld [vmem:[%s3 + $0x1b8] sm:$0xf]
          %v3978 = vld [vmem:[%s3 + $0x1bc] sm:$0xf]
          %v3979 = vld [vmem:[%s3 + $0x1c0] sm:$0xf]
          %v3980 = vld [vmem:[%s3 + $0x1c4] sm:$0xf]
          %v3981 = vld [vmem:[%s3 + $0x1c8] sm:$0xf]
          %v3982 = vld [vmem:[%s3 + $0x1cc] sm:$0xf]
          %v3983 = vld [vmem:[%s3 + $0x1d0] sm:$0xf]
          %v3984 = vld [vmem:[%s3 + $0x1d4] sm:$0xf]
          %v3985 = vld [vmem:[%s3 + $0x1d8] sm:$0xf]
          %v3986 = vld [vmem:[%s3 + $0x1dc] sm:$0xf]
          %v3987 = vld [vmem:[%s3 + $0x1e0] sm:$0xf]
          %v3988 = vld [vmem:[%s3 + $0x1e4] sm:$0xf]
          %v3989 = vld [vmem:[%s3 + $0x1e8] sm:$0xf]
          %v3990 = vld [vmem:[%s3 + $0x1ec] sm:$0xf]
          %v3991 = vld [vmem:[%s3 + $0x1f0] sm:$0xf]
          %v3992 = vld [vmem:[%s3 + $0x1f4] sm:$0xf]
          %v3993 = vld [vmem:[%s3 + $0x1f8] sm:$0xf]
          %v3994 = vld [vmem:[%s3 + $0x1fc] sm:$0xf]
          %v3995 = vld [vmem:[#allocation8] sm:$0x1]
          %v3997 = vlaneseq
          %v3998 = vshrl.u32 %v3997, 7
          %v3999 = vsub.s32 0, %v3998
          %v4000 = vrot.slane %v3995, %v3999
          %v4130 = vunpack.c.l.b16 %v3867
          %v4131 = vunpack.c.l.b16 %v3868
          %v4132 = vunpack.c.l.b16 %v3869
          %v4133 = vunpack.c.l.b16 %v3870
          %v4134 = vunpack.c.l.b16 %v3871
          %v4135 = vunpack.c.l.b16 %v3872
          %v4136 = vunpack.c.l.b16 %v3873
          %v4137 = vunpack.c.l.b16 %v3874
          %v4138 = vunpack.c.l.b16 %v3875
          %v4139 = vunpack.c.l.b16 %v3876
          %v4140 = vunpack.c.l.b16 %v3877
          %v4141 = vunpack.c.l.b16 %v3878
          %v4142 = vunpack.c.l.b16 %v3879
          %v4143 = vunpack.c.l.b16 %v3880
          %v4144 = vunpack.c.l.b16 %v3881
          %v4145 = vunpack.c.l.b16 %v3882
          %v4146 = vunpack.c.l.b16 %v3883
          %v4147 = vunpack.c.l.b16 %v3884
          %v4148 = vunpack.c.l.b16 %v3885
          %v4149 = vunpack.c.l.b16 %v3886
          %v4150 = vunpack.c.l.b16 %v3887
          %v4151 = vunpack.c.l.b16 %v3888
          %v4152 = vunpack.c.l.b16 %v3889
          %v4153 = vunpack.c.l.b16 %v3890
          %v4154 = vunpack.c.l.b16 %v3891
          %v4155 = vunpack.c.l.b16 %v3892
          %v4156 = vunpack.c.l.b16 %v3893
          %v4157 = vunpack.c.l.b16 %v3894
          %v4158 = vunpack.c.l.b16 %v3895
          %v4159 = vunpack.c.l.b16 %v3896
          %v4160 = vunpack.c.l.b16 %v3897
          %v4161 = vunpack.c.l.b16 %v3898
          %v4162 = vunpack.c.l.b16 %v3899
          %v4163 = vunpack.c.l.b16 %v3900
          %v4164 = vunpack.c.l.b16 %v3901
          %v4165 = vunpack.c.l.b16 %v3902
          %v4166 = vunpack.c.l.b16 %v3903
          %v4167 = vunpack.c.l.b16 %v3904
          %v4168 = vunpack.c.l.b16 %v3905
          %v4169 = vunpack.c.l.b16 %v3906
          %v4170 = vunpack.c.l.b16 %v3907
          %v4171 = vunpack.c.l.b16 %v3908
          %v4172 = vunpack.c.l.b16 %v3909
          %v4173 = vunpack.c.l.b16 %v3910
          %v4174 = vunpack.c.l.b16 %v3911
          %v4175 = vunpack.c.l.b16 %v3912
          %v4176 = vunpack.c.l.b16 %v3913
          %v4177 = vunpack.c.l.b16 %v3914
          %v4178 = vunpack.c.l.b16 %v3915
          %v4179 = vunpack.c.l.b16 %v3916
          %v4180 = vunpack.c.l.b16 %v3917
          %v4181 = vunpack.c.l.b16 %v3918
          %v4182 = vunpack.c.l.b16 %v3919
          %v4183 = vunpack.c.l.b16 %v3920
          %v4184 = vunpack.c.l.b16 %v3921
          %v4185 = vunpack.c.l.b16 %v3922
          %v4186 = vunpack.c.l.b16 %v3923
          %v4187 = vunpack.c.l.b16 %v3924
          %v4188 = vunpack.c.l.b16 %v3925
          %v4189 = vunpack.c.l.b16 %v3926
          %v4190 = vunpack.c.l.b16 %v3927
          %v4191 = vunpack.c.l.b16 %v3928
          %v4192 = vunpack.c.l.b16 %v3929
          %v4193 = vunpack.c.l.b16 %v3930
          %v4194 = vunpack.c.l.b16 %v3931
          %v4195 = vunpack.c.l.b16 %v3932
          %v4196 = vunpack.c.l.b16 %v3933
          %v4197 = vunpack.c.l.b16 %v3934
          %v4198 = vunpack.c.l.b16 %v3935
          %v4199 = vunpack.c.l.b16 %v3936
          %v4200 = vunpack.c.l.b16 %v3937
          %v4201 = vunpack.c.l.b16 %v3938
          %v4202 = vunpack.c.l.b16 %v3939
          %v4203 = vunpack.c.l.b16 %v3940
          %v4204 = vunpack.c.l.b16 %v3941
          %v4205 = vunpack.c.l.b16 %v3942
          %v4206 = vunpack.c.l.b16 %v3943
          %v4207 = vunpack.c.l.b16 %v3944
          %v4208 = vunpack.c.l.b16 %v3945
          %v4209 = vunpack.c.l.b16 %v3946
          %v4210 = vunpack.c.l.b16 %v3947
          %v4211 = vunpack.c.l.b16 %v3948
          %v4212 = vunpack.c.l.b16 %v3949
          %v4213 = vunpack.c.l.b16 %v3950
          %v4214 = vunpack.c.l.b16 %v3951
          %v4215 = vunpack.c.l.b16 %v3952
          %v4216 = vunpack.c.l.b16 %v3953
          %v4217 = vunpack.c.l.b16 %v3954
          %v4218 = vunpack.c.l.b16 %v3955
          %v4219 = vunpack.c.l.b16 %v3956
          %v4220 = vunpack.c.l.b16 %v3957
          %v4221 = vunpack.c.l.b16 %v3958
          %v4222 = vunpack.c.l.b16 %v3959
          %v4223 = vunpack.c.l.b16 %v3960
          %v4224 = vunpack.c.l.b16 %v3961
          %v4225 = vunpack.c.l.b16 %v3962
          %v4226 = vunpack.c.l.b16 %v3963
          %v4227 = vunpack.c.l.b16 %v3964
          %v4228 = vunpack.c.l.b16 %v3965
          %v4229 = vunpack.c.l.b16 %v3966
          %v4230 = vunpack.c.l.b16 %v3967
          %v4231 = vunpack.c.l.b16 %v3968
          %v4232 = vunpack.c.l.b16 %v3969
          %v4233 = vunpack.c.l.b16 %v3970
          %v4234 = vunpack.c.l.b16 %v3971
          %v4235 = vunpack.c.l.b16 %v3972
          %v4236 = vunpack.c.l.b16 %v3973
          %v4237 = vunpack.c.l.b16 %v3974
          %v4238 = vunpack.c.l.b16 %v3975
          %v4239 = vunpack.c.l.b16 %v3976
          %v4240 = vunpack.c.l.b16 %v3977
          %v4241 = vunpack.c.l.b16 %v3978
          %v4242 = vunpack.c.l.b16 %v3979
          %v4243 = vunpack.c.l.b16 %v3980
          %v4244 = vunpack.c.l.b16 %v3981
          %v4245 = vunpack.c.l.b16 %v3982
          %v4246 = vunpack.c.l.b16 %v3983
          %v4247 = vunpack.c.l.b16 %v3984
          %v4248 = vunpack.c.l.b16 %v3985
          %v4249 = vunpack.c.l.b16 %v3986
          %v4250 = vunpack.c.l.b16 %v3987
          %v4251 = vunpack.c.l.b16 %v3988
          %v4252 = vunpack.c.l.b16 %v3989
          %v4253 = vunpack.c.l.b16 %v3990
          %v4254 = vunpack.c.l.b16 %v3991
          %v4255 = vunpack.c.l.b16 %v3992
          %v4256 = vunpack.c.l.b16 %v3993
          %v4257 = vunpack.c.l.b16 %v3994
          %v4258 = vpack.c.b16 %v4131, %v4130
          %v4259 = vpack.c.b16 %v4133, %v4132
          %v4260 = vpack.c.b16 %v4135, %v4134
          %v4261 = vpack.c.b16 %v4137, %v4136
          %v4262 = vpack.c.b16 %v4139, %v4138
          %v4263 = vpack.c.b16 %v4141, %v4140
          %v4264 = vpack.c.b16 %v4143, %v4142
          %v4265 = vpack.c.b16 %v4145, %v4144
          %v4266 = vpack.c.b16 %v4147, %v4146
          %v4267 = vpack.c.b16 %v4149, %v4148
          %v4268 = vpack.c.b16 %v4151, %v4150
          %v4269 = vpack.c.b16 %v4153, %v4152
          %v4270 = vpack.c.b16 %v4155, %v4154
          %v4271 = vpack.c.b16 %v4157, %v4156
          %v4272 = vpack.c.b16 %v4159, %v4158
          %v4273 = vpack.c.b16 %v4161, %v4160
          %v4274 = vpack.c.b16 %v4163, %v4162
          %v4275 = vpack.c.b16 %v4165, %v4164
          %v4276 = vpack.c.b16 %v4167, %v4166
          %v4277 = vpack.c.b16 %v4169, %v4168
          %v4278 = vpack.c.b16 %v4171, %v4170
          %v4279 = vpack.c.b16 %v4173, %v4172
          %v4280 = vpack.c.b16 %v4175, %v4174
          %v4281 = vpack.c.b16 %v4177, %v4176
          %v4282 = vpack.c.b16 %v4179, %v4178
          %v4283 = vpack.c.b16 %v4181, %v4180
          %v4284 = vpack.c.b16 %v4183, %v4182
          %v4285 = vpack.c.b16 %v4185, %v4184
          %v4286 = vpack.c.b16 %v4187, %v4186
          %v4287 = vpack.c.b16 %v4189, %v4188
          %v4288 = vpack.c.b16 %v4191, %v4190
          %v4289 = vpack.c.b16 %v4193, %v4192
          %v4290 = vpack.c.b16 %v4195, %v4194
          %v4291 = vpack.c.b16 %v4197, %v4196
          %v4292 = vpack.c.b16 %v4199, %v4198
          %v4293 = vpack.c.b16 %v4201, %v4200
          %v4294 = vpack.c.b16 %v4203, %v4202
          %v4295 = vpack.c.b16 %v4205, %v4204
          %v4296 = vpack.c.b16 %v4207, %v4206
          %v4297 = vpack.c.b16 %v4209, %v4208
          %v4298 = vpack.c.b16 %v4211, %v4210
          %v4299 = vpack.c.b16 %v4213, %v4212
          %v4300 = vpack.c.b16 %v4215, %v4214
          %v4301 = vpack.c.b16 %v4217, %v4216
          %v4302 = vpack.c.b16 %v4219, %v4218
          %v4303 = vpack.c.b16 %v4221, %v4220
          %v4304 = vpack.c.b16 %v4223, %v4222
          %v4305 = vpack.c.b16 %v4225, %v4224
          %v4306 = vpack.c.b16 %v4227, %v4226
          %v4307 = vpack.c.b16 %v4229, %v4228
          %v4308 = vpack.c.b16 %v4231, %v4230
          %v4309 = vpack.c.b16 %v4233, %v4232
          %v4310 = vpack.c.b16 %v4235, %v4234
          %v4311 = vpack.c.b16 %v4237, %v4236
          %v4312 = vpack.c.b16 %v4239, %v4238
          %v4313 = vpack.c.b16 %v4241, %v4240
          %v4314 = vpack.c.b16 %v4243, %v4242
          %v4315 = vpack.c.b16 %v4245, %v4244
          %v4316 = vpack.c.b16 %v4247, %v4246
          %v4317 = vpack.c.b16 %v4249, %v4248
          %v4318 = vpack.c.b16 %v4251, %v4250
          %v4319 = vpack.c.b16 %v4253, %v4252
          %v4320 = vpack.c.b16 %v4255, %v4254
          %v4321 = vpack.c.b16 %v4257, %v4256
          %4386 = vmatprep.subr.bf16.mxu0 0
          %4387 = vmatpush1.bf16.msra.mxu0 %v4258
          %4388 = vmatprep.subr.bf16.mxu0 0
          %4389 = vmatpush1.bf16.msra.mxu0 %v4259
          %4390 = vmatprep.subr.bf16.mxu0 0
          %4391 = vmatpush1.bf16.msra.mxu0 %v4260
          %4392 = vmatprep.subr.bf16.mxu0 0
          %4393 = vmatpush1.bf16.msra.mxu0 %v4261
          %4394 = vmatprep.subr.bf16.mxu0 0
          %4395 = vmatpush1.bf16.msra.mxu0 %v4262
          %4396 = vmatprep.subr.bf16.mxu0 0
          %4397 = vmatpush1.bf16.msra.mxu0 %v4263
          %4398 = vmatprep.subr.bf16.mxu0 0
          %4399 = vmatpush1.bf16.msra.mxu0 %v4264
          %4400 = vmatprep.subr.bf16.mxu0 0
          %4401 = vmatpush1.bf16.msra.mxu0 %v4265
          %4402 = vmatprep.subr.bf16.mxu0 0
          %4403 = vmatpush1.bf16.msra.mxu0 %v4266
          %4404 = vmatprep.subr.bf16.mxu0 0
          %4405 = vmatpush1.bf16.msra.mxu0 %v4267
          %4406 = vmatprep.subr.bf16.mxu0 0
          %4407 = vmatpush1.bf16.msra.mxu0 %v4268
          %4408 = vmatprep.subr.bf16.mxu0 0
          %4409 = vmatpush1.bf16.msra.mxu0 %v4269
          %4410 = vmatprep.subr.bf16.mxu0 0
          %4411 = vmatpush1.bf16.msra.mxu0 %v4270
          %4412 = vmatprep.subr.bf16.mxu0 0
          %4413 = vmatpush1.bf16.msra.mxu0 %v4271
          %4414 = vmatprep.subr.bf16.mxu0 0
          %4415 = vmatpush1.bf16.msra.mxu0 %v4272
          %4416 = vmatprep.subr.bf16.mxu0 0
          %4417 = vmatpush1.bf16.msra.mxu0 %v4273
          %4418 = vmatprep.mubr.bf16.mxu0 %v3860
          %4419 = vmatmul.mubr.bf16.gmra.mrb[0].mxu0 %v3859
          %v4420 = vpop.f32.mrb[0].mxu0
          %v4421 = vadd.f32 %v4000, %v4420
          %v4422 = vpop.f32.mrb[0].mxu0
          %v4423 = vpop.f32.mrb[0].mxu0
          %v4424 = vpop.f32.mrb[0].mxu0
          %4425 = vdwg.mxu0
          %4426 = vmatprep.subr.bf16.mxu0 0
          %4427 = vmatpush1.bf16.msra.mxu0 %v4274
          %4428 = vmatprep.subr.bf16.mxu0 0
          %4429 = vmatpush1.bf16.msra.mxu0 %v4275
          %4430 = vmatprep.subr.bf16.mxu0 0
          %4431 = vmatpush1.bf16.msra.mxu0 %v4276
          %4432 = vmatprep.subr.bf16.mxu0 0
          %4433 = vmatpush1.bf16.msra.mxu0 %v4277
          %4434 = vmatprep.subr.bf16.mxu0 0
          %4435 = vmatpush1.bf16.msra.mxu0 %v4278
          %4436 = vmatprep.subr.bf16.mxu0 0
          %4437 = vmatpush1.bf16.msra.mxu0 %v4279
          %4438 = vmatprep.subr.bf16.mxu0 0
          %4439 = vmatpush1.bf16.msra.mxu0 %v4280
          %4440 = vmatprep.subr.bf16.mxu0 0
          %4441 = vmatpush1.bf16.msra.mxu0 %v4281
          %4442 = vmatprep.subr.bf16.mxu0 0
          %4443 = vmatpush1.bf16.msra.mxu0 %v4282
          %4444 = vmatprep.subr.bf16.mxu0 0
          %4445 = vmatpush1.bf16.msra.mxu0 %v4283
          %4446 = vmatprep.subr.bf16.mxu0 0
          %4447 = vmatpush1.bf16.msra.mxu0 %v4284
          %4448 = vmatprep.subr.bf16.mxu0 0
          %4449 = vmatpush1.bf16.msra.mxu0 %v4285
          %4450 = vmatprep.subr.bf16.mxu0 0
          %4451 = vmatpush1.bf16.msra.mxu0 %v4286
          %4452 = vmatprep.subr.bf16.mxu0 0
          %4453 = vmatpush1.bf16.msra.mxu0 %v4287
          %4454 = vmatprep.subr.bf16.mxu0 0
          %4455 = vmatpush1.bf16.msra.mxu0 %v4288
          %4456 = vmatprep.subr.bf16.mxu0 0
          %4457 = vmatpush1.bf16.msra.mxu0 %v4289
          %4458 = vmatprep.mubr.bf16.mxu0 %v3862
          %4459 = vmatmul.mubr.bf16.gmra.mrb[0].mxu0 %v3861
          %v4460 = vpop.f32.mrb[0].mxu0
          %v4461 = vadd.f32 %v4421, %v4460
          %v4462 = vpop.f32.mrb[0].mxu0
          %v4463 = vpop.f32.mrb[0].mxu0
          %v4464 = vpop.f32.mrb[0].mxu0
          %4465 = vdwg.mxu0
          %4466 = vmatprep.subr.bf16.mxu0 0
          %4467 = vmatpush1.bf16.msra.mxu0 %v4290
          %4468 = vmatprep.subr.bf16.mxu0 0
          %4469 = vmatpush1.bf16.msra.mxu0 %v4291
          %4470 = vmatprep.subr.bf16.mxu0 0
          %4471 = vmatpush1.bf16.msra.mxu0 %v4292
          %4472 = vmatprep.subr.bf16.mxu0 0
          %4473 = vmatpush1.bf16.msra.mxu0 %v4293
          %4474 = vmatprep.subr.bf16.mxu0 0
          %4475 = vmatpush1.bf16.msra.mxu0 %v4294
          %4476 = vmatprep.subr.bf16.mxu0 0
          %4477 = vmatpush1.bf16.msra.mxu0 %v4295
          %4478 = vmatprep.subr.bf16.mxu0 0
          %4479 = vmatpush1.bf16.msra.mxu0 %v4296
          %4480 = vmatprep.subr.bf16.mxu0 0
          %4481 = vmatpush1.bf16.msra.mxu0 %v4297
          %4482 = vmatprep.subr.bf16.mxu0 0
          %4483 = vmatpush1.bf16.msra.mxu0 %v4298
          %4484 = vmatprep.subr.bf16.mxu0 0
          %4485 = vmatpush1.bf16.msra.mxu0 %v4299
          %4486 = vmatprep.subr.bf16.mxu0 0
          %4487 = vmatpush1.bf16.msra.mxu0 %v4300
          %4488 = vmatprep.subr.bf16.mxu0 0
          %4489 = vmatpush1.bf16.msra.mxu0 %v4301
          %4490 = vmatprep.subr.bf16.mxu0 0
          %4491 = vmatpush1.bf16.msra.mxu0 %v4302
          %4492 = vmatprep.subr.bf16.mxu0 0
          %4493 = vmatpush1.bf16.msra.mxu0 %v4303
          %4494 = vmatprep.subr.bf16.mxu0 0
          %4495 = vmatpush1.bf16.msra.mxu0 %v4304
          %4496 = vmatprep.subr.bf16.mxu0 0
          %4497 = vmatpush1.bf16.msra.mxu0 %v4305
          %4498 = vmatprep.mubr.bf16.mxu0 %v3864
          %4499 = vmatmul.mubr.bf16.gmra.mrb[0].mxu0 %v3863
          %v4500 = vpop.f32.mrb[0].mxu0
          %v4501 = vadd.f32 %v4461, %v4500
          %v4502 = vpop.f32.mrb[0].mxu0
          %v4503 = vpop.f32.mrb[0].mxu0
          %v4504 = vpop.f32.mrb[0].mxu0
          %4505 = vdwg.mxu0
          %4506 = vmatprep.subr.bf16.mxu0 0
          %4507 = vmatpush1.bf16.msra.mxu0 %v4306
          %4508 = vmatprep.subr.bf16.mxu0 0
          %4509 = vmatpush1.bf16.msra.mxu0 %v4307
          %4510 = vmatprep.subr.bf16.mxu0 0
          %4511 = vmatpush1.bf16.msra.mxu0 %v4308
          %4512 = vmatprep.subr.bf16.mxu0 0
          %4513 = vmatpush1.bf16.msra.mxu0 %v4309
          %4514 = vmatprep.subr.bf16.mxu0 0
          %4515 = vmatpush1.bf16.msra.mxu0 %v4310
          %4516 = vmatprep.subr.bf16.mxu0 0
          %4517 = vmatpush1.bf16.msra.mxu0 %v4311
          %4518 = vmatprep.subr.bf16.mxu0 0
          %4519 = vmatpush1.bf16.msra.mxu0 %v4312
          %4520 = vmatprep.subr.bf16.mxu0 0
          %4521 = vmatpush1.bf16.msra.mxu0 %v4313
          %4522 = vmatprep.subr.bf16.mxu0 0
          %4523 = vmatpush1.bf16.msra.mxu0 %v4314
          %4524 = vmatprep.subr.bf16.mxu0 0
          %4525 = vmatpush1.bf16.msra.mxu0 %v4315
          %4526 = vmatprep.subr.bf16.mxu0 0
          %4527 = vmatpush1.bf16.msra.mxu0 %v4316
          %4528 = vmatprep.subr.bf16.mxu0 0
          %4529 = vmatpush1.bf16.msra.mxu0 %v4317
          %4530 = vmatprep.subr.bf16.mxu0 0
          %4531 = vmatpush1.bf16.msra.mxu0 %v4318
          %4532 = vmatprep.subr.bf16.mxu0 0
          %4533 = vmatpush1.bf16.msra.mxu0 %v4319
          %4534 = vmatprep.subr.bf16.mxu0 0
          %4535 = vmatpush1.bf16.msra.mxu0 %v4320
          %4536 = vmatprep.subr.bf16.mxu0 0
          %4537 = vmatpush1.bf16.msra.mxu0 %v4321
          %4538 = vmatprep.mubr.bf16.mxu0 %v3866
          %4539 = vmatmul.mubr.bf16.gmra.mrb[0].mxu0 %v3865
          %v4540 = vpop.f32.mrb[0].mxu0
          %v4541 = vadd.f32 %v4501, %v4540
          %v4542 = vpop.f32.mrb[0].mxu0
          %v4543 = vpop.f32.mrb[0].mxu0
          %v4544 = vpop.f32.mrb[0].mxu0
          %4545 = vdwg.mxu0
          %vm4546 = vcmask 74752
          %4547 = vst.msk [vmem:[#allocation9] sm:$0x3] %vm4546, %v4541
        $region60: #{vggnet_forward.3} parent=39 // pred_fallthru
          _
        // Predicated region
        $region61: #{vggnet_forward.3} parent=39 // pred_check
          %p4548 = pneg %p149
        $region62: #{vggnet_forward.3} parent=39 // pred_check_branch
          %4550 = sbr.rel (%p4548) target = $region64
        $region63: #{vggnet_forward.3} parent=39 // pred_region
          %s4552 = ssub.s32 32, 32
          %4553 = vsyncadd [#allocation5], %s4552
          %s4555 = sshll.u32 [#allocation9], 4
          %s4556 = int_to_ptr.vmem [resolvable:$true] %s4555
          %4558 = dma.vmem_to_hbm [thread:$0]  %s4556, 32, %s5, [#allocation5]
        $region64: #{vggnet_forward.3} parent=39 // pred_fallthru
          _
        // Predicated region
        $region65: #{vggnet_forward.3} parent=39 // pred_check
          %p4559 = pneg %p149
        $region66: #{vggnet_forward.3} parent=39 // pred_check_branch
          %4561 = sbr.rel (%p4559) target = $region68
        $region67: #{vggnet_forward.3} parent=39 // pred_region
          %4562 = dma.done [#allocation5], 32
        $region68: #{vggnet_forward.3} parent=39 // pred_fallthru
          _
      $region40: #{vggnet_forward.3} parent=5 // pred_fallthru
        _
      %p4563 = scmp.le.s32.totalorder 2, %s16
      // Predicated region
      $region69: #{vggnet_forward.3} parent=5 // pred_check
        %p4564 = pneg %p4563
      $region70: #{vggnet_forward.3} parent=5 // pred_check_branch
        %4566 = sbr.rel (%p4564) target = $region72
      $region71: #{vggnet_forward.3} parent=5 // pred_region
        %s4567 = ssub.s32 %s16, 2
      $region72: #{vggnet_forward.3} parent=5 // pred_fallthru
        _
    $region6: #{vggnet_forward.3} parent=1 // loop_footer
      %s20 = sadd.s32 1, %s16
    $region7: #{vggnet_forward.3} parent=1 // loop_footer_branch
      %15 = sbr.rel target = $region3
    $region8: #{vggnet_forward.3} parent=1 // loop_exit
      _
    %4568 = vsyncpa [#allocation4], 1
    %s4569 = scalar_lea.sflag [#allocation4], 1
    %4570 = vsyncpa %s4569, 1
    %4571 = vsyncpa [#allocation7], 1
    %4572 = vsyncpa [#allocation5], 1
    %s4573 = scalar_lea.sflag [#allocation5], 1
    %4574 = vsyncpa %s4573, 1

// kernel: vggnet_forward.2
$region0: #{vggnet_forward.2}
  #allocation0 [shape = 'u32[]', space=smem, size = 0x4, offset = 0x4, fixed_abs, tag = 'smem constant byte address 0x4 - core index']
  #allocation1 [shape = 'u32[144,128]{1,0:T(1,128)}', space=vmem, size = 0x12000, scoped, tag = 'internal scratch']
  %s0 = inlined_call_operand.vmem [shape: bf16[2,840,9], index: 0, kind: input, shape index: {}]
  %s1 = inlined_call_operand.hbm [shape: bf16[9,64], index: 1, kind: input, shape index: {}]
  %s2 = inlined_call_operand.hbm [shape: f32[1,64], index: 2, kind: input, shape index: {}]
  %s3 = inlined_call_operand.hbm [shape: bf16[576,128], index: 3, kind: input, shape index: {}]
  %s4 = inlined_call_operand.hbm [shape: f32[1,128], index: 4, kind: input, shape index: {}]
  %s5 = inlined_call_operand.hbm [shape: bf16[272,807], index: 5, kind: input, shape index: {}]
  %s6 = inlined_call_operand.hbm [shape: bf16[49,205], index: 6, kind: input, shape index: {}]
  %s7 = inlined_call_operand.vmem [shape: bf16[2,49,128], index: 7, kind: output, shape index: {}]
  %s8 = sld [smem:[#allocation0]]
  $region85: #{vggnet_forward.2} parent=0
    _
  %s10 = ssub.s32 1, %s8
  %s11 = scalar_select 0, %s10, %s8
  $region1: #{vggnet_forward.2} parent=0
    #allocation2 [shape = 'u8[4096]{0}', space=vmem, size = 0x1000, scoped, tag = 'input window, operand 1, single buffered']
    #allocation3 [shape = 's32[2]{0}', space=sflag, size = 0x8, scoped, tag = 'scoped memory for vggnet_forward.2']
    #allocation4 [shape = 'u8[512]{0}', space=vmem, size = 0x400, scoped, tag = 'input window, operand 2, single buffered']
    #allocation5 [shape = 's32[1]{0}', space=sflag, size = 0x4, scoped, tag = 'scoped memory for vggnet_forward.2']
    #allocation6 [shape = 'u8[147456]{0}', space=vmem, size = 0x24000, scoped, tag = 'input window, operand 3, single buffered']
    #allocation7 [shape = 'u8[512]{0}', space=vmem, size = 0x400, scoped, tag = 'input window, operand 4, single buffered']
    #allocation8 [shape = 's32[1]{0}', space=sflag, size = 0x4, scoped, tag = 'scoped memory for vggnet_forward.2']
    #allocation9 [shape = 'u8[487424]{0}', space=vmem, size = 0x77000, scoped, tag = 'input window, operand 5, single buffered']
    #allocation10 [shape = 'u8[28672]{0}', space=vmem, size = 0x7000, scoped, tag = 'input window, operand 6, single buffered']
    #allocation11 [shape = 's32[1]{0}', space=sflag, size = 0x4, scoped, tag = 'scoped memory for vggnet_forward.2']
    %12 = vsyncpa [#allocation3], 0
    %13 = vsyncpa [#allocation5], 0
    %14 = vsyncpa [#allocation8], 0
    %15 = vsyncpa [#allocation11], 0
    loop: start=0, step=1, limit=4
    $region2: #{vggnet_forward.2} parent=1 // loop_pre_header
      _
    $region3: #{vggnet_forward.2} parent=1 // loop_header
      %s17 = sphi 0, %s21
      %p18 = scmp.ge.s32.totalorder %s17, 4
      %s27 = sphi 0, %s29
      %s30 = sphi 0, %s27
      %s31 = sphi 0, %s30
      %s47 = sphi 0, %s31
      %s51 = sphi 0, %s51
      %s53 = sphi 0, %s51
      %s54 = sphi 0, %s53
      %s68 = sphi 0, %s54
      %s72 = sphi 0, %s72
      %s74 = sphi 0, %s72
      %s75 = sphi 0, %s74
      %s89 = sphi 0, %s75
      %s93 = sphi 0, %s93
      %s95 = sphi 0, %s93
      %s96 = sphi 0, %s95
      %s110 = sphi 0, %s96
      %s114 = sphi 0, %s114
      %s116 = sphi 0, %s114
      %s117 = sphi 0, %s116
      %s131 = sphi 0, %s117
      %s135 = sphi 0, %s135
      %s137 = sphi 0, %s135
      %s138 = sphi 0, %s137
      %s152 = sphi 0, %s138
      %s156 = sphi 0, %s156
      %s158 = sphi 0, %s156
      %s159 = sphi 0, %s158
      %s173 = sphi 0, %s159
      %s179 = sphi 0, %s181
      %s182 = sphi 0, %s179
      %s183 = sphi 0, %s182
      %s199 = sphi 0, %s183
    $region4: #{vggnet_forward.2} parent=1 // loop_header_branch
      %20 = sbr.rel (%p18) target = $region8
    $region5: #{vggnet_forward.2} parent=1 // loop_body
      %s22 = ssub.s32 %s17, 1
      %s23 = ssub.s32 %s17, 2
      %s24 = sadd.s32 %s17, 1
      %s25 = ssub.s32 %s17, %s24
      %p26 = scmp.eq.s32.totalorder %s25, 0
      %s28 = sadd.s32 %s27, 1
      %s29 = scalar_select %p26, %s27, %s28
      %p32 = pneg %p26
      %p33 = scmp.eq.s32.totalorder %s17, 1
      %p34 = por %p32, %p33
      %p35 = scmp.ne.s32.totalorder %s27, %s30
      %p36 = scmp.eq.s32.totalorder %s17, 0
      %p37 = por %p35, %p36
      %p38 = scmp.ne.s32.totalorder %s27, %s30
      %p39 = scmp.eq.s32.totalorder %s22, 1
      %p40 = por %p38, %p39
      %p41 = scmp.ne.s32.totalorder %s30, %s31
      %p42 = scmp.eq.s32.totalorder %s22, 0
      %p43 = por %p41, %p42
      %p44 = scmp.ne.s32.totalorder %s30, %s31
      %p45 = scmp.eq.s32.totalorder %s23, 1
      %p46 = por %p44, %p45
      %p48 = scmp.ne.s32.totalorder %s31, %s47
      %p49 = scmp.eq.s32.totalorder %s23, 0
      %p50 = por %p48, %p49
      %s52 = sadd.s32 %s51, 1
      %p55 = scmp.eq.s32.totalorder %s17, 1
      %p56 = scmp.ne.s32.totalorder %s51, %s53
      %p57 = scmp.eq.s32.totalorder %s17, 0
      %p58 = por %p56, %p57
      %p59 = scmp.ne.s32.totalorder %s51, %s53
      %p60 = scmp.eq.s32.totalorder %s22, 1
      %p61 = por %p59, %p60
      %p62 = scmp.ne.s32.totalorder %s53, %s54
      %p63 = scmp.eq.s32.totalorder %s22, 0
      %p64 = por %p62, %p63
      %p65 = scmp.ne.s32.totalorder %s53, %s54
      %p66 = scmp.eq.s32.totalorder %s23, 1
      %p67 = por %p65, %p66
      %p69 = scmp.ne.s32.totalorder %s54, %s68
      %p70 = scmp.eq.s32.totalorder %s23, 0
      %p71 = por %p69, %p70
      %s73 = sadd.s32 %s72, 1
      %p76 = scmp.eq.s32.totalorder %s17, 1
      %p77 = scmp.ne.s32.totalorder %s72, %s74
      %p78 = scmp.eq.s32.totalorder %s17, 0
      %p79 = por %p77, %p78
      %p80 = scmp.ne.s32.totalorder %s72, %s74
      %p81 = scmp.eq.s32.totalorder %s22, 1
      %p82 = por %p80, %p81
      %p83 = scmp.ne.s32.totalorder %s74, %s75
      %p84 = scmp.eq.s32.totalorder %s22, 0
      %p85 = por %p83, %p84
      %p86 = scmp.ne.s32.totalorder %s74, %s75
      %p87 = scmp.eq.s32.totalorder %s23, 1
      %p88 = por %p86, %p87
      %p90 = scmp.ne.s32.totalorder %s75, %s89
      %p91 = scmp.eq.s32.totalorder %s23, 0
      %p92 = por %p90, %p91
      %s94 = sadd.s32 %s93, 1
      %p97 = scmp.eq.s32.totalorder %s17, 1
      %p98 = scmp.ne.s32.totalorder %s93, %s95
      %p99 = scmp.eq.s32.totalorder %s17, 0
      %p100 = por %p98, %p99
      %p101 = scmp.ne.s32.totalorder %s93, %s95
      %p102 = scmp.eq.s32.totalorder %s22, 1
      %p103 = por %p101, %p102
      %p104 = scmp.ne.s32.totalorder %s95, %s96
      %p105 = scmp.eq.s32.totalorder %s22, 0
      %p106 = por %p104, %p105
      %p107 = scmp.ne.s32.totalorder %s95, %s96
      %p108 = scmp.eq.s32.totalorder %s23, 1
      %p109 = por %p107, %p108
      %p111 = scmp.ne.s32.totalorder %s96, %s110
      %p112 = scmp.eq.s32.totalorder %s23, 0
      %p113 = por %p111, %p112
      %s115 = sadd.s32 %s114, 1
      %p118 = scmp.eq.s32.totalorder %s17, 1
      %p119 = scmp.ne.s32.totalorder %s114, %s116
      %p120 = scmp.eq.s32.totalorder %s17, 0
      %p121 = por %p119, %p120
      %p122 = scmp.ne.s32.totalorder %s114, %s116
      %p123 = scmp.eq.s32.totalorder %s22, 1
      %p124 = por %p122, %p123
      %p125 = scmp.ne.s32.totalorder %s116, %s117
      %p126 = scmp.eq.s32.totalorder %s22, 0
      %p127 = por %p125, %p126
      %p128 = scmp.ne.s32.totalorder %s116, %s117
      %p129 = scmp.eq.s32.totalorder %s23, 1
      %p130 = por %p128, %p129
      %p132 = scmp.ne.s32.totalorder %s117, %s131
      %p133 = scmp.eq.s32.totalorder %s23, 0
      %p134 = por %p132, %p133
      %s136 = sadd.s32 %s135, 1
      %p139 = scmp.eq.s32.totalorder %s17, 1
      %p140 = scmp.ne.s32.totalorder %s135, %s137
      %p141 = scmp.eq.s32.totalorder %s17, 0
      %p142 = por %p140, %p141
      %p143 = scmp.ne.s32.totalorder %s135, %s137
      %p144 = scmp.eq.s32.totalorder %s22, 1
      %p145 = por %p143, %p144
      %p146 = scmp.ne.s32.totalorder %s137, %s138
      %p147 = scmp.eq.s32.totalorder %s22, 0
      %p148 = por %p146, %p147
      %p149 = scmp.ne.s32.totalorder %s137, %s138
      %p150 = scmp.eq.s32.totalorder %s23, 1
      %p151 = por %p149, %p150
      %p153 = scmp.ne.s32.totalorder %s138, %s152
      %p154 = scmp.eq.s32.totalorder %s23, 0
      %p155 = por %p153, %p154
      %s157 = sadd.s32 %s156, 1
      %p160 = scmp.eq.s32.totalorder %s17, 1
      %p161 = scmp.ne.s32.totalorder %s156, %s158
      %p162 = scmp.eq.s32.totalorder %s17, 0
      %p163 = por %p161, %p162
      %p164 = scmp.ne.s32.totalorder %s156, %s158
      %p165 = scmp.eq.s32.totalorder %s22, 1
      %p166 = por %p164, %p165
      %p167 = scmp.ne.s32.totalorder %s158, %s159
      %p168 = scmp.eq.s32.totalorder %s22, 0
      %p169 = por %p167, %p168
      %p170 = scmp.ne.s32.totalorder %s158, %s159
      %p171 = scmp.eq.s32.totalorder %s23, 1
      %p172 = por %p170, %p171
      %p174 = scmp.ne.s32.totalorder %s159, %s173
      %p175 = scmp.eq.s32.totalorder %s23, 0
      %p176 = por %p174, %p175
      %s177 = ssub.s32 %s17, %s24
      %p178 = scmp.eq.s32.totalorder %s177, 0
      %s180 = sadd.s32 %s179, 1
      %s181 = scalar_select %p178, %s179, %s180
      %p184 = pneg %p178
      %p185 = scmp.eq.s32.totalorder %s17, 1
      %p186 = por %p184, %p185
      %p187 = scmp.ne.s32.totalorder %s179, %s182
      %p188 = scmp.eq.s32.totalorder %s17, 0
      %p189 = por %p187, %p188
      %p190 = scmp.ne.s32.totalorder %s179, %s182
      %p191 = scmp.eq.s32.totalorder %s22, 1
      %p192 = por %p190, %p191
      %p193 = scmp.ne.s32.totalorder %s182, %s183
      %p194 = scmp.eq.s32.totalorder %s22, 0
      %p195 = por %p193, %p194
      %p196 = scmp.ne.s32.totalorder %s182, %s183
      %p197 = scmp.eq.s32.totalorder %s23, 1
      %p198 = por %p196, %p197
      %p200 = scmp.ne.s32.totalorder %s183, %s199
      %p201 = scmp.eq.s32.totalorder %s23, 0
      %p202 = por %p200, %p201
      %p203 = scmp.le.s32.totalorder 1, %s17
      %p204 = scmp.lt.s32.totalorder %s17, 3
      %p205 = pnand %p203, %p204
      %p206 = pneg %p205
      // Predicated region
      $region9: #{vggnet_forward.2} parent=5 // pred_check
        _
      $region10: #{vggnet_forward.2} parent=5 // pred_check_branch
        %208 = sbr.rel (%p205) target = $region12
      $region11: #{vggnet_forward.2} parent=5 // pred_region
        %s209 = ssub.s32 %s17, 1
        // Predicated region
        $region13: #{vggnet_forward.2} parent=11 // pred_check
          %p210 = pneg %p64
        $region14: #{vggnet_forward.2} parent=11 // pred_check_branch
          %212 = sbr.rel (%p210) target = $region16
        $region15: #{vggnet_forward.2} parent=11 // pred_region
          %s214 = ssub.s32 128, 128
          %215 = vsyncadd [#allocation3], %s214
          %s216 = sshll.u32 [#allocation2], 4
          %s217 = int_to_ptr.vmem [resolvable:$true] %s216
          %222 = dma.hbm_to_vmem [thread:$0]  %s1, 128, %s217, [#allocation3], 64, 64, 4
        $region16: #{vggnet_forward.2} parent=11 // pred_fallthru
          _
        // Predicated region
        $region17: #{vggnet_forward.2} parent=11 // pred_check
          %p223 = pneg %p85
        $region18: #{vggnet_forward.2} parent=11 // pred_check_branch
          %225 = sbr.rel (%p223) target = $region20
        $region19: #{vggnet_forward.2} parent=11 // pred_region
          %s227 = ssub.s32 16, 16
          %228 = vsyncadd [#allocation5], %s227
          %s230 = sshll.u32 [#allocation4], 4
          %s231 = int_to_ptr.vmem [resolvable:$true] %s230
          %233 = dma.hbm_to_vmem [thread:$0]  %s2, 16, %s231, [#allocation5]
        $region20: #{vggnet_forward.2} parent=11 // pred_fallthru
          _
        // Predicated region
        $region21: #{vggnet_forward.2} parent=11 // pred_check
          %p234 = pneg %p106
        $region22: #{vggnet_forward.2} parent=11 // pred_check_branch
          %236 = sbr.rel (%p234) target = $region24
        $region23: #{vggnet_forward.2} parent=11 // pred_region
          %s238 = ssub.s32 4608, 4608
          %239 = vsyncadd [#allocation5], %s238
          %s240 = sshll.u32 [#allocation6], 4
          %s241 = int_to_ptr.vmem [resolvable:$true] %s240
          %246 = dma.hbm_to_vmem [thread:$0]  %s3, 4608, %s241, [#allocation5], 64, 64, 4
        $region24: #{vggnet_forward.2} parent=11 // pred_fallthru
          _
        // Predicated region
        $region25: #{vggnet_forward.2} parent=11 // pred_check
          %p247 = pneg %p127
        $region26: #{vggnet_forward.2} parent=11 // pred_check_branch
          %249 = sbr.rel (%p247) target = $region28
        $region27: #{vggnet_forward.2} parent=11 // pred_region
          %s251 = ssub.s32 16, 16
          %252 = vsyncadd [#allocation8], %s251
          %s254 = sshll.u32 [#allocation7], 4
          %s255 = int_to_ptr.vmem [resolvable:$true] %s254
          %257 = dma.hbm_to_vmem [thread:$0]  %s4, 16, %s255, [#allocation8]
        $region28: #{vggnet_forward.2} parent=11 // pred_fallthru
          _
        // Predicated region
        $region29: #{vggnet_forward.2} parent=11 // pred_check
          %p258 = pneg %p148
        $region30: #{vggnet_forward.2} parent=11 // pred_check_branch
          %260 = sbr.rel (%p258) target = $region32
        $region31: #{vggnet_forward.2} parent=11 // pred_region
          %s262 = ssub.s32 15232, 15232
          %263 = vsyncadd [#allocation8], %s262
          %s264 = sshll.u32 [#allocation9], 4
          %s265 = int_to_ptr.vmem [resolvable:$true] %s264
          %270 = dma.hbm_to_vmem [thread:$0]  %s5, 15232, %s265, [#allocation8], 448, 448, 28
        $region32: #{vggnet_forward.2} parent=11 // pred_fallthru
          _
        // Predicated region
        $region33: #{vggnet_forward.2} parent=11 // pred_check
          %p271 = pneg %p169
        $region34: #{vggnet_forward.2} parent=11 // pred_check_branch
          %273 = sbr.rel (%p271) target = $region36
        $region35: #{vggnet_forward.2} parent=11 // pred_region
          %s275 = ssub.s32 896, 896
          %276 = vsyncadd [#allocation11], %s275
          %s277 = sshll.u32 [#allocation10], 4
          %s278 = int_to_ptr.vmem [resolvable:$true] %s277
          %283 = dma.hbm_to_vmem [thread:$0]  %s6, 896, %s278, [#allocation11], 128, 128, 8
        $region36: #{vggnet_forward.2} parent=11 // pred_fallthru
          _
      $region12: #{vggnet_forward.2} parent=5 // pred_fallthru
        _
      %p284 = scmp.lt.s32.totalorder %s17, 2
      // Predicated region
      $region37: #{vggnet_forward.2} parent=5 // pred_check
        %p285 = pneg %p284
      $region38: #{vggnet_forward.2} parent=5 // pred_check_branch
        %287 = sbr.rel (%p285) target = $region40
      $region39: #{vggnet_forward.2} parent=5 // pred_region
        // Predicated region
        $region41: #{vggnet_forward.2} parent=39 // pred_check
          %p288 = pneg %p37
        $region42: #{vggnet_forward.2} parent=39 // pred_check_branch
          %290 = sbr.rel (%p288) target = $region44
        $region43: #{vggnet_forward.2} parent=39 // pred_region
          %p291 = scmp.lt.s32.totalorder %s17, 1
          %s292 = scalar_select %p291, %s17, 1
          %s293 = smul.addr %s292, 105
          %s294 = smul.addr %s293, 4
          %s295 = scalar_lea.vmem %s0, %s294
        $region44: #{vggnet_forward.2} parent=39 // pred_fallthru
          _
      $region40: #{vggnet_forward.2} parent=5 // pred_fallthru
        _
      %p296 = scmp.le.s32.totalorder 1, %s17
      %p297 = scmp.lt.s32.totalorder %s17, 3
      %p298 = pnand %p296, %p297
      %p299 = pneg %p298
      // Predicated region
      $region45: #{vggnet_forward.2} parent=5 // pred_check
        _
      $region46: #{vggnet_forward.2} parent=5 // pred_check_branch
        %301 = sbr.rel (%p298) target = $region48
      $region47: #{vggnet_forward.2} parent=5 // pred_region
        %s302 = ssub.s32 %s17, 1
        // Predicated region
        $region49: #{vggnet_forward.2} parent=47 // pred_check
          %p303 = pneg %p64
        $region50: #{vggnet_forward.2} parent=47 // pred_check_branch
          %305 = sbr.rel (%p303) target = $region52
        $region51: #{vggnet_forward.2} parent=47 // pred_region
          %306 = dma.done [#allocation3], 128
        $region52: #{vggnet_forward.2} parent=47 // pred_fallthru
          _
        // Predicated region
        $region53: #{vggnet_forward.2} parent=47 // pred_check
          %p307 = pneg %p85
        $region54: #{vggnet_forward.2} parent=47 // pred_check_branch
          %309 = sbr.rel (%p307) target = $region56
        $region55: #{vggnet_forward.2} parent=47 // pred_region
          %310 = dma.done [#allocation5], 16
        $region56: #{vggnet_forward.2} parent=47 // pred_fallthru
          _
        // Predicated region
        $region57: #{vggnet_forward.2} parent=47 // pred_check
          %p311 = pneg %p106
        $region58: #{vggnet_forward.2} parent=47 // pred_check_branch
          %313 = sbr.rel (%p311) target = $region60
        $region59: #{vggnet_forward.2} parent=47 // pred_region
          %314 = dma.done [#allocation5], 4608
        $region60: #{vggnet_forward.2} parent=47 // pred_fallthru
          _
        // Predicated region
        $region61: #{vggnet_forward.2} parent=47 // pred_check
          %p315 = pneg %p127
        $region62: #{vggnet_forward.2} parent=47 // pred_check_branch
          %317 = sbr.rel (%p315) target = $region64
        $region63: #{vggnet_forward.2} parent=47 // pred_region
          %318 = dma.done [#allocation8], 16
        $region64: #{vggnet_forward.2} parent=47 // pred_fallthru
          _
        // Predicated region
        $region65: #{vggnet_forward.2} parent=47 // pred_check
          %p319 = pneg %p148
        $region66: #{vggnet_forward.2} parent=47 // pred_check_branch
          %321 = sbr.rel (%p319) target = $region68
        $region67: #{vggnet_forward.2} parent=47 // pred_region
          %322 = dma.done [#allocation8], 15232
        $region68: #{vggnet_forward.2} parent=47 // pred_fallthru
          _
        // Predicated region
        $region69: #{vggnet_forward.2} parent=47 // pred_check
          %p323 = pneg %p169
        $region70: #{vggnet_forward.2} parent=47 // pred_check_branch
          %325 = sbr.rel (%p323) target = $region72
        $region71: #{vggnet_forward.2} parent=47 // pred_region
          %326 = dma.done [#allocation11], 896
        $region72: #{vggnet_forward.2} parent=47 // pred_fallthru
          _
        %p327 = scmp.lt.s32.totalorder %s22, 1
        %s328 = scalar_select %p327, %s22, 1
        %s329 = smul.addr %s328, 105
        %s330 = smul.addr %s329, 4
        %s331 = scalar_lea.vmem %s0, %s330
        %p332 = pneg %p43
        %p333 = pneg %p40
        %p334 = pneg %p64
        %p335 = pneg %p61
        %p336 = pneg %p85
        %p337 = pneg %p82
        %p338 = pneg %p106
        %p339 = pneg %p103
        %p340 = pneg %p127
        %p341 = pneg %p124
        %p342 = pneg %p148
        %p343 = pneg %p145
        %p344 = pneg %p169
        %p345 = pneg %p166
        %p346 = pneg %p195
        %p347 = pneg %p192
        %p348 = scmp.lt.s32.totalorder %s22, 1
        %s349 = scalar_select %p348, %s22, 1
        %s350 = smul.addr %s349, 7
        %s351 = smul.addr %s350, 4
        %s352 = scalar_lea.vmem %s7, %s351
        %p353 = scmp.lt.s32.totalorder %s22, 1
        %s354 = scalar_select %p353, %s22, 1
        %s355 = smul.addr %s354, 105
        %s356 = smul.addr %s355, 4
        %s357 = scalar_lea.vmem %s0, %s356
        %p358 = scmp.lt.s32.totalorder %s22, 1
        %s359 = scalar_select %p358, %s22, 1
        %s360 = smul.addr %s359, 7
        %s361 = smul.addr %s360, 4
        %s362 = scalar_lea.vmem %s7, %s361
        %v364 = vld [vmem:[%s357] sm:$0xf]
        %v365 = vld [vmem:[%s357 + $0x4] sm:$0xf]
        %v366 = vld [vmem:[%s357 + $0x8] sm:$0xf]
        %v367 = vld [vmem:[%s357 + $0xc] sm:$0xf]
        %v368 = vld [vmem:[%s357 + $0x10] sm:$0xf]
        %v369 = vld [vmem:[%s357 + $0x14] sm:$0xf]
        %v370 = vld [vmem:[%s357 + $0x18] sm:$0xf]
        %v371 = vld [vmem:[%s357 + $0x1c] sm:$0xf]
        %v372 = vld [vmem:[%s357 + $0x20] sm:$0xf]
        %v373 = vld [vmem:[%s357 + $0x24] sm:$0xf]
        %v374 = vld [vmem:[%s357 + $0x28] sm:$0xf]
        %v375 = vld [vmem:[%s357 + $0x2c] sm:$0xf]
        %v376 = vld [vmem:[%s357 + $0x30] sm:$0xf]
        %v377 = vld [vmem:[%s357 + $0x34] sm:$0xf]
        %v378 = vld [vmem:[%s357 + $0x38] sm:$0xf]
        %v379 = vld [vmem:[%s357 + $0x3c] sm:$0xf]
        %v380 = vld [vmem:[%s357 + $0x40] sm:$0xf]
        %v381 = vld [vmem:[%s357 + $0x44] sm:$0xf]
        %v382 = vld [vmem:[%s357 + $0x48] sm:$0xf]
        %v383 = vld [vmem:[%s357 + $0x4c] sm:$0xf]
        %v384 = vld [vmem:[%s357 + $0x50] sm:$0xf]
        %v385 = vld [vmem:[%s357 + $0x54] sm:$0xf]
        %v386 = vld [vmem:[%s357 + $0x58] sm:$0xf]
        %v387 = vld [vmem:[%s357 + $0x5c] sm:$0xf]
        %v388 = vld [vmem:[%s357 + $0x60] sm:$0xf]
        %v389 = vld [vmem:[%s357 + $0x64] sm:$0xf]
        %v390 = vld [vmem:[%s357 + $0x68] sm:$0xf]
        %v391 = vld [vmem:[%s357 + $0x6c] sm:$0xf]
        %v392 = vld [vmem:[%s357 + $0x70] sm:$0xf]
        %v393 = vld [vmem:[%s357 + $0x74] sm:$0xf]
        %v394 = vld [vmem:[%s357 + $0x78] sm:$0xf]
        %v395 = vld [vmem:[%s357 + $0x7c] sm:$0xf]
        %v396 = vld [vmem:[%s357 + $0x80] sm:$0xf]
        %v397 = vld [vmem:[%s357 + $0x84] sm:$0xf]
        %v398 = vld [vmem:[%s357 + $0x88] sm:$0xf]
        %v399 = vld [vmem:[%s357 + $0x8c] sm:$0xf]
        %v400 = vld [vmem:[%s357 + $0x90] sm:$0xf]
        %v401 = vld [vmem:[%s357 + $0x94] sm:$0xf]
        %v402 = vld [vmem:[%s357 + $0x98] sm:$0xf]
        %v403 = vld [vmem:[%s357 + $0x9c] sm:$0xf]
        %v404 = vld [vmem:[%s357 + $0xa0] sm:$0xf]
        %v405 = vld [vmem:[%s357 + $0xa4] sm:$0xf]
        %v406 = vld [vmem:[%s357 + $0xa8] sm:$0xf]
        %v407 = vld [vmem:[%s357 + $0xac] sm:$0xf]
        %v408 = vld [vmem:[%s357 + $0xb0] sm:$0xf]
        %v409 = vld [vmem:[%s357 + $0xb4] sm:$0xf]
        %v410 = vld [vmem:[%s357 + $0xb8] sm:$0xf]
        %v411 = vld [vmem:[%s357 + $0xbc] sm:$0xf]
        %v412 = vld [vmem:[%s357 + $0xc0] sm:$0xf]
        %v413 = vld [vmem:[%s357 + $0xc4] sm:$0xf]
        %v414 = vld [vmem:[%s357 + $0xc8] sm:$0xf]
        %v415 = vld [vmem:[%s357 + $0xcc] sm:$0xf]
        %v416 = vld [vmem:[%s357 + $0xd0] sm:$0xf]
        %v417 = vld [vmem:[%s357 + $0xd4] sm:$0xf]
        %v418 = vld [vmem:[%s357 + $0xd8] sm:$0xf]
        %v419 = vld [vmem:[%s357 + $0xdc] sm:$0xf]
        %v420 = vld [vmem:[%s357 + $0xe0] sm:$0xf]
        %v421 = vld [vmem:[%s357 + $0xe4] sm:$0xf]
        %v422 = vld [vmem:[%s357 + $0xe8] sm:$0xf]
        %v423 = vld [vmem:[%s357 + $0xec] sm:$0xf]
        %v424 = vld [vmem:[%s357 + $0xf0] sm:$0xf]
        %v425 = vld [vmem:[%s357 + $0xf4] sm:$0xf]
        %v426 = vld [vmem:[%s357 + $0xf8] sm:$0xf]
        %v427 = vld [vmem:[%s357 + $0xfc] sm:$0xf]
        %v428 = vld [vmem:[%s357 + $0x100] sm:$0xf]
        %v429 = vld [vmem:[%s357 + $0x104] sm:$0xf]
        %v430 = vld [vmem:[%s357 + $0x108] sm:$0xf]
        %v431 = vld [vmem:[%s357 + $0x10c] sm:$0xf]
        %v432 = vld [vmem:[%s357 + $0x110] sm:$0xf]
        %v433 = vld [vmem:[%s357 + $0x114] sm:$0xf]
        %v434 = vld [vmem:[%s357 + $0x118] sm:$0xf]
        %v435 = vld [vmem:[%s357 + $0x11c] sm:$0xf]
        %v436 = vld [vmem:[%s357 + $0x120] sm:$0xf]
        %v437 = vld [vmem:[%s357 + $0x124] sm:$0xf]
        %v438 = vld [vmem:[%s357 + $0x128] sm:$0xf]
        %v439 = vld [vmem:[%s357 + $0x12c] sm:$0xf]
        %v440 = vld [vmem:[%s357 + $0x130] sm:$0xf]
        %v441 = vld [vmem:[%s357 + $0x134] sm:$0xf]
        %v442 = vld [vmem:[%s357 + $0x138] sm:$0xf]
        %v443 = vld [vmem:[%s357 + $0x13c] sm:$0xf]
        %v444 = vld [vmem:[%s357 + $0x140] sm:$0xf]
        %v445 = vld [vmem:[%s357 + $0x144] sm:$0xf]
        %v446 = vld [vmem:[%s357 + $0x148] sm:$0xf]
        %v447 = vld [vmem:[%s357 + $0x14c] sm:$0xf]
        %v448 = vld [vmem:[%s357 + $0x150] sm:$0xf]
        %v449 = vld [vmem:[%s357 + $0x154] sm:$0xf]
        %v450 = vld [vmem:[%s357 + $0x158] sm:$0xf]
        %v451 = vld [vmem:[%s357 + $0x15c] sm:$0xf]
        %v452 = vld [vmem:[%s357 + $0x160] sm:$0xf]
        %v453 = vld [vmem:[%s357 + $0x164] sm:$0xf]
        %v454 = vld [vmem:[%s357 + $0x168] sm:$0xf]
        %v455 = vld [vmem:[%s357 + $0x16c] sm:$0xf]
        %v456 = vld [vmem:[%s357 + $0x170] sm:$0xf]
        %v457 = vld [vmem:[%s357 + $0x174] sm:$0xf]
        %v458 = vld [vmem:[%s357 + $0x178] sm:$0xf]
        %v459 = vld [vmem:[%s357 + $0x17c] sm:$0xf]
        %v460 = vld [vmem:[%s357 + $0x180] sm:$0xf]
        %v461 = vld [vmem:[%s357 + $0x184] sm:$0xf]
        %v462 = vld [vmem:[%s357 + $0x188] sm:$0xf]
        %v463 = vld [vmem:[%s357 + $0x18c] sm:$0xf]
        %v464 = vld [vmem:[%s357 + $0x190] sm:$0xf]
        %v465 = vld [vmem:[%s357 + $0x194] sm:$0xf]
        %v466 = vld [vmem:[%s357 + $0x198] sm:$0xf]
        %v467 = vld [vmem:[%s357 + $0x19c] sm:$0xf]
        %v468 = vld [vmem:[%s357 + $0x1a0] sm:$0xf]
        %v469 = vld [vmem:[#allocation2] sm:$0xf]
        %v470 = vld [vmem:[#allocation2 + $0x4] sm:$0x1]
        %v471 = vld [vmem:[#allocation4] sm:$0x1]
        %v473 = vlaneseq
        %v474 = vshrl.u32 %v473, 7
        %v475 = vsub.s32 0, %v474
        %v476 = vrot.slane %v471, %v475
        %v583 = vunpack.c.l.b16 %v364
        %v584 = vunpack.c.l.b16 %v365
        %v585 = vunpack.c.l.b16 %v366
        %v586 = vunpack.c.l.b16 %v367
        %v587 = vunpack.c.l.b16 %v368
        %v588 = vunpack.c.l.b16 %v369
        %v589 = vunpack.c.l.b16 %v370
        %v590 = vunpack.c.l.b16 %v371
        %v591 = vunpack.c.l.b16 %v372
        %v592 = vunpack.c.l.b16 %v373
        %v593 = vunpack.c.l.b16 %v374
        %v594 = vunpack.c.l.b16 %v375
        %v595 = vunpack.c.l.b16 %v376
        %v596 = vunpack.c.l.b16 %v377
        %v597 = vunpack.c.l.b16 %v378
        %v598 = vunpack.c.l.b16 %v379
        %v599 = vunpack.c.l.b16 %v380
        %v600 = vunpack.c.l.b16 %v381
        %v601 = vunpack.c.l.b16 %v382
        %v602 = vunpack.c.l.b16 %v383
        %v603 = vunpack.c.l.b16 %v384
        %v604 = vunpack.c.l.b16 %v385
        %v605 = vunpack.c.l.b16 %v386
        %v606 = vunpack.c.l.b16 %v387
        %v607 = vunpack.c.l.b16 %v388
        %v608 = vunpack.c.l.b16 %v389
        %v609 = vunpack.c.l.b16 %v390
        %v610 = vunpack.c.l.b16 %v391
        %v611 = vunpack.c.l.b16 %v392
        %v612 = vunpack.c.l.b16 %v393
        %v613 = vunpack.c.l.b16 %v394
        %v614 = vunpack.c.l.b16 %v395
        %v615 = vunpack.c.l.b16 %v396
        %v616 = vunpack.c.l.b16 %v397
        %v617 = vunpack.c.l.b16 %v398
        %v618 = vunpack.c.l.b16 %v399
        %v619 = vunpack.c.l.b16 %v400
        %v620 = vunpack.c.l.b16 %v401
        %v621 = vunpack.c.l.b16 %v402
        %v622 = vunpack.c.l.b16 %v403
        %v623 = vunpack.c.l.b16 %v404
        %v624 = vunpack.c.l.b16 %v405
        %v625 = vunpack.c.l.b16 %v406
        %v626 = vunpack.c.l.b16 %v407
        %v627 = vunpack.c.l.b16 %v408
        %v628 = vunpack.c.l.b16 %v409
        %v629 = vunpack.c.l.b16 %v410
        %v630 = vunpack.c.l.b16 %v411
        %v631 = vunpack.c.l.b16 %v412
        %v632 = vunpack.c.l.b16 %v413
        %v633 = vunpack.c.l.b16 %v414
        %v634 = vunpack.c.l.b16 %v415
        %v635 = vunpack.c.l.b16 %v416
        %v636 = vunpack.c.l.b16 %v417
        %v637 = vunpack.c.l.b16 %v418
        %v638 = vunpack.c.l.b16 %v419
        %v639 = vunpack.c.l.b16 %v420
        %v640 = vunpack.c.l.b16 %v421
        %v641 = vunpack.c.l.b16 %v422
        %v642 = vunpack.c.l.b16 %v423
        %v643 = vunpack.c.l.b16 %v424
        %v644 = vunpack.c.l.b16 %v425
        %v645 = vunpack.c.l.b16 %v426
        %v646 = vunpack.c.l.b16 %v427
        %v647 = vunpack.c.l.b16 %v428
        %v648 = vunpack.c.l.b16 %v429
        %v649 = vunpack.c.l.b16 %v430
        %v650 = vunpack.c.l.b16 %v431
        %v651 = vunpack.c.l.b16 %v432
        %v652 = vunpack.c.l.b16 %v433
        %v653 = vunpack.c.l.b16 %v434
        %v654 = vunpack.c.l.b16 %v435
        %v655 = vunpack.c.l.b16 %v436
        %v656 = vunpack.c.l.b16 %v437
        %v657 = vunpack.c.l.b16 %v438
        %v658 = vunpack.c.l.b16 %v439
        %v659 = vunpack.c.l.b16 %v440
        %v660 = vunpack.c.l.b16 %v441
        %v661 = vunpack.c.l.b16 %v442
        %v662 = vunpack.c.l.b16 %v443
        %v663 = vunpack.c.l.b16 %v444
        %v664 = vunpack.c.l.b16 %v445
        %v665 = vunpack.c.l.b16 %v446
        %v666 = vunpack.c.l.b16 %v447
        %v667 = vunpack.c.l.b16 %v448
        %v668 = vunpack.c.l.b16 %v449
        %v669 = vunpack.c.l.b16 %v450
        %v670 = vunpack.c.l.b16 %v451
        %v671 = vunpack.c.l.b16 %v452
        %v672 = vunpack.c.l.b16 %v453
        %v673 = vunpack.c.l.b16 %v454
        %v674 = vunpack.c.l.b16 %v455
        %v675 = vunpack.c.l.b16 %v456
        %v676 = vunpack.c.l.b16 %v457
        %v677 = vunpack.c.l.b16 %v458
        %v678 = vunpack.c.l.b16 %v459
        %v679 = vunpack.c.l.b16 %v460
        %v680 = vunpack.c.l.b16 %v461
        %v681 = vunpack.c.l.b16 %v462
        %v682 = vunpack.c.l.b16 %v463
        %v683 = vunpack.c.l.b16 %v464
        %v684 = vunpack.c.l.b16 %v465
        %v685 = vunpack.c.l.b16 %v466
        %v686 = vunpack.c.l.b16 %v467
        %v687 = vunpack.c.l.b16 %v468
        %v688 = vpack.c.b16 %v584, %v583
        %v689 = vpack.c.b16 %v586, %v585
        %v690 = vpack.c.b16 %v588, %v587
        %v691 = vpack.c.b16 %v590, %v589
        %v692 = vpack.c.b16 %v592, %v591
        %v693 = vpack.c.b16 %v594, %v593
        %v694 = vpack.c.b16 %v596, %v595
        %v695 = vpack.c.b16 %v598, %v597
        %v696 = vpack.c.b16 %v600, %v599
        %v697 = vpack.c.b16 %v602, %v601
        %v698 = vpack.c.b16 %v604, %v603
        %v699 = vpack.c.b16 %v606, %v605
        %v700 = vpack.c.b16 %v608, %v607
        %v701 = vpack.c.b16 %v610, %v609
        %v702 = vpack.c.b16 %v612, %v611
        %v703 = vpack.c.b16 %v614, %v613
        %v704 = vpack.c.b16 %v616, %v615
        %v705 = vpack.c.b16 %v618, %v617
        %v706 = vpack.c.b16 %v620, %v619
        %v707 = vpack.c.b16 %v622, %v621
        %v708 = vpack.c.b16 %v624, %v623
        %v709 = vpack.c.b16 %v626, %v625
        %v710 = vpack.c.b16 %v628, %v627
        %v711 = vpack.c.b16 %v630, %v629
        %v712 = vpack.c.b16 %v632, %v631
        %v713 = vpack.c.b16 %v634, %v633
        %v714 = vpack.c.b16 %v636, %v635
        %v715 = vpack.c.b16 %v638, %v637
        %v716 = vpack.c.b16 %v640, %v639
        %v717 = vpack.c.b16 %v642, %v641
        %v718 = vpack.c.b16 %v644, %v643
        %v719 = vpack.c.b16 %v646, %v645
        %v720 = vpack.c.b16 %v648, %v647
        %v721 = vpack.c.b16 %v650, %v649
        %v722 = vpack.c.b16 %v652, %v651
        %v723 = vpack.c.b16 %v654, %v653
        %v724 = vpack.c.b16 %v656, %v655
        %v725 = vpack.c.b16 %v658, %v657
        %v726 = vpack.c.b16 %v660, %v659
        %v727 = vpack.c.b16 %v662, %v661
        %v728 = vpack.c.b16 %v664, %v663
        %v729 = vpack.c.b16 %v666, %v665
        %v730 = vpack.c.b16 %v668, %v667
        %v731 = vpack.c.b16 %v670, %v669
        %v732 = vpack.c.b16 %v672, %v671
        %v733 = vpack.c.b16 %v674, %v673
        %v734 = vpack.c.b16 %v676, %v675
        %v735 = vpack.c.b16 %v678, %v677
        %v736 = vpack.c.b16 %v680, %v679
        %v737 = vpack.c.b16 %v682, %v681
        %v738 = vpack.c.b16 %v684, %v683
        %v739 = vpack.c.b16 %v686, %v685
        %v740 = vpack.c.b16 %v687, %v687
        %v743 = vunpack.c.l.b16 %v469
        %v744 = vunpack.c.l.b16 %v470
        %v745 = vpack.c.b16 %v744, %v743
        %vm746 = vcmask 72704
        %v748 = vsel %vm746, %v688, 0
        %v751 = vsel %vm746, %v689, 0
        %v754 = vsel %vm746, %v690, 0
        %v757 = vsel %vm746, %v691, 0
        %v760 = vsel %vm746, %v692, 0
        %v763 = vsel %vm746, %v693, 0
        %v766 = vsel %vm746, %v694, 0
        %v769 = vsel %vm746, %v695, 0
        %v772 = vsel %vm746, %v696, 0
        %v775 = vsel %vm746, %v697, 0
        %v778 = vsel %vm746, %v698, 0
        %v781 = vsel %vm746, %v699, 0
        %v784 = vsel %vm746, %v700, 0
        %v787 = vsel %vm746, %v701, 0
        %v790 = vsel %vm746, %v702, 0
        %v793 = vsel %vm746, %v703, 0
        %v796 = vsel %vm746, %v704, 0
        %v799 = vsel %vm746, %v705, 0
        %v802 = vsel %vm746, %v706, 0
        %v805 = vsel %vm746, %v707, 0
        %v808 = vsel %vm746, %v708, 0
        %v811 = vsel %vm746, %v709, 0
        %v814 = vsel %vm746, %v710, 0
        %v817 = vsel %vm746, %v711, 0
        %v820 = vsel %vm746, %v712, 0
        %v823 = vsel %vm746, %v713, 0
        %v826 = vsel %vm746, %v714, 0
        %v829 = vsel %vm746, %v715, 0
        %v832 = vsel %vm746, %v716, 0
        %v835 = vsel %vm746, %v717, 0
        %v838 = vsel %vm746, %v718, 0
        %v841 = vsel %vm746, %v719, 0
        %v844 = vsel %vm746, %v720, 0
        %v847 = vsel %vm746, %v721, 0
        %v850 = vsel %vm746, %v722, 0
        %v853 = vsel %vm746, %v723, 0
        %v856 = vsel %vm746, %v724, 0
        %v859 = vsel %vm746, %v725, 0
        %v862 = vsel %vm746, %v726, 0
        %v865 = vsel %vm746, %v727, 0
        %v868 = vsel %vm746, %v728, 0
        %v871 = vsel %vm746, %v729, 0
        %v874 = vsel %vm746, %v730, 0
        %v877 = vsel %vm746, %v731, 0
        %v880 = vsel %vm746, %v732, 0
        %v883 = vsel %vm746, %v733, 0
        %v886 = vsel %vm746, %v734, 0
        %v889 = vsel %vm746, %v735, 0
        %v892 = vsel %vm746, %v736, 0
        %v895 = vsel %vm746, %v737, 0
        %v898 = vsel %vm746, %v738, 0
        %v901 = vsel %vm746, %v739, 0
        %v904 = vsel %vm746, %v740, 0
        %vm906 = vcmask 1043456
        %vm907 = vcmask 1044480
        %v908 = vsel %vm906, 4294967295, 65535
        %v909 = vsel %vm907, %v908, 0
        %v911 = vand.u32 %v745, %v909
        %913 = vmatprep.subr.bf16.mxu0 0
        %914 = vmatpush1.bf16.msra.mxu0 %v911
        %915 = vmatprep.subr.bf16.mxu0 0
        %916 = vmatpush1.bf16.msra.mxu0 0
        %917 = vmatprep.subr.bf16.mxu0 0
        %918 = vmatpush1.bf16.msra.mxu0 0
        %919 = vmatprep.subr.bf16.mxu0 0
        %920 = vmatpush1.bf16.msra.mxu0 0
        %921 = vmatprep.subr.bf16.mxu0 0
        %922 = vmatpush1.bf16.msra.mxu0 0
        %923 = vmatprep.subr.bf16.mxu0 0
        %924 = vmatpush1.bf16.msra.mxu0 0
        %925 = vmatprep.subr.bf16.mxu0 0
        %926 = vmatpush1.bf16.msra.mxu0 0
        %927 = vmatprep.subr.bf16.mxu0 0
        %928 = vmatpush1.bf16.msra.mxu0 0
        %929 = vmatprep.subr.bf16.mxu0 0
        %930 = vmatpush1.bf16.msra.mxu0 0
        %931 = vmatprep.subr.bf16.mxu0 0
        %932 = vmatpush1.bf16.msra.mxu0 0
        %933 = vmatprep.subr.bf16.mxu0 0
        %934 = vmatpush1.bf16.msra.mxu0 0
        %935 = vmatprep.subr.bf16.mxu0 0
        %936 = vmatpush1.bf16.msra.mxu0 0
        %937 = vmatprep.subr.bf16.mxu0 0
        %938 = vmatpush1.bf16.msra.mxu0 0
        %939 = vmatprep.subr.bf16.mxu0 0
        %940 = vmatpush1.bf16.msra.mxu0 0
        %941 = vmatprep.subr.bf16.mxu0 0
        %942 = vmatpush1.bf16.msra.mxu0 0
        %943 = vmatprep.subr.bf16.mxu0 0
        %944 = vmatpush1.bf16.msra.mxu0 0
        %945 = vmatprep.mubr.bf16.mxu0 0
        %946 = vmatmul.mubr.bf16.gmra.mrb[0].mxu0 %v748
        %v947 = vpop.f32.mrb[0].mxu0
        %v948 = vadd.f32 %v476, %v947
        %v949 = vpop.f32.mrb[0].mxu0
        %v950 = vpop.f32.mrb[0].mxu0
        %v951 = vadd.f32 %v476, %v950
        %v952 = vpop.f32.mrb[0].mxu0
        %953 = vmatprep.mubr.bf16.mxu0 0
        %954 = vmatmul.mubr.bf16.gmra.mrb[0].mxu0 %v751
        %v955 = vpop.f32.mrb[0].mxu0
        %v956 = vadd.f32 %v476, %v955
        %v957 = vpop.f32.mrb[0].mxu0
        %v958 = vpop.f32.mrb[0].mxu0
        %v959 = vadd.f32 %v476, %v958
        %v960 = vpop.f32.mrb[0].mxu0
        %961 = vmatprep.mubr.bf16.mxu0 0
        %962 = vmatmul.mubr.bf16.gmra.mrb[0].mxu0 %v754
        %v963 = vpop.f32.mrb[0].mxu0
        %v964 = vadd.f32 %v476, %v963
        %v965 = vpop.f32.mrb[0].mxu0
        %v966 = vpop.f32.mrb[0].mxu0
        %v967 = vadd.f32 %v476, %v966
        %v968 = vpop.f32.mrb[0].mxu0
        %969 = vmatprep.mubr.bf16.mxu0 0
        %970 = vmatmul.mubr.bf16.gmra.mrb[0].mxu0 %v757
        %v971 = vpop.f32.mrb[0].mxu0
        %v972 = vadd.f32 %v476, %v971
        %v973 = vpop.f32.mrb[0].mxu0
        %v974 = vpop.f32.mrb[0].mxu0
        %v975 = vadd.f32 %v476, %v974
        %v976 = vpop.f32.mrb[0].mxu0
        %977 = vmatprep.mubr.bf16.mxu0 0
        %978 = vmatmul.mubr.bf16.gmra.mrb[0].mxu0 %v760
        %v979 = vpop.f32.mrb[0].mxu0
        %v980 = vadd.f32 %v476, %v979
        %v981 = vpop.f32.mrb[0].mxu0
        %v982 = vpop.f32.mrb[0].mxu0
        %v983 = vadd.f32 %v476, %v982
        %v984 = vpop.f32.mrb[0].mxu0
        %985 = vmatprep.mubr.bf16.mxu0 0
        %986 = vmatmul.mubr.bf16.gmra.mrb[0].mxu0 %v763
        %v987 = vpop.f32.mrb[0].mxu0
        %v988 = vadd.f32 %v476, %v987
        %v989 = vpop.f32.mrb[0].mxu0
        %v990 = vpop.f32.mrb[0].mxu0
        %v991 = vadd.f32 %v476, %v990
        %v992 = vpop.f32.mrb[0].mxu0
        %993 = vmatprep.mubr.bf16.mxu0 0
        %994 = vmatmul.mubr.bf16.gmra.mrb[0].mxu0 %v766
        %v995 = vpop.f32.mrb[0].mxu0
        %v996 = vadd.f32 %v476, %v995
        %v997 = vpop.f32.mrb[0].mxu0
        %v998 = vpop.f32.mrb[0].mxu0
        %v999 = vadd.f32 %v476, %v998
        %v1000 = vpop.f32.mrb[0].mxu0
        %1001 = vmatprep.mubr.bf16.mxu0 0
        %1002 = vmatmul.mubr.bf16.gmra.mrb[0].mxu0 %v769
        %v1003 = vpop.f32.mrb[0].mxu0
        %v1004 = vadd.f32 %v476, %v1003
        %v1005 = vpop.f32.mrb[0].mxu0
        %v1006 = vpop.f32.mrb[0].mxu0
        %v1007 = vadd.f32 %v476, %v1006
        %v1008 = vpop.f32.mrb[0].mxu0
        %1009 = vmatprep.mubr.bf16.mxu0 0
        %1010 = vmatmul.mubr.bf16.gmra.mrb[0].mxu0 %v772
        %v1011 = vpop.f32.mrb[0].mxu0
        %v1012 = vadd.f32 %v476, %v1011
        %v1013 = vpop.f32.mrb[0].mxu0
        %v1014 = vpop.f32.mrb[0].mxu0
        %v1015 = vadd.f32 %v476, %v1014
        %v1016 = vpop.f32.mrb[0].mxu0
        %1017 = vmatprep.mubr.bf16.mxu0 0
        %1018 = vmatmul.mubr.bf16.gmra.mrb[0].mxu0 %v775
        %v1019 = vpop.f32.mrb[0].mxu0
        %v1020 = vadd.f32 %v476, %v1019
        %v1021 = vpop.f32.mrb[0].mxu0
        %v1022 = vpop.f32.mrb[0].mxu0
        %v1023 = vadd.f32 %v476, %v1022
        %v1024 = vpop.f32.mrb[0].mxu0
        %1025 = vmatprep.mubr.bf16.mxu0 0
        %1026 = vmatmul.mubr.bf16.gmra.mrb[0].mxu0 %v778
        %v1027 = vpop.f32.mrb[0].mxu0
        %v1028 = vadd.f32 %v476, %v1027
        %v1029 = vpop.f32.mrb[0].mxu0
        %v1030 = vpop.f32.mrb[0].mxu0
        %v1031 = vadd.f32 %v476, %v1030
        %v1032 = vpop.f32.mrb[0].mxu0
        %1033 = vmatprep.mubr.bf16.mxu0 0
        %1034 = vmatmul.mubr.bf16.gmra.mrb[0].mxu0 %v781
        %v1035 = vpop.f32.mrb[0].mxu0
        %v1036 = vadd.f32 %v476, %v1035
        %v1037 = vpop.f32.mrb[0].mxu0
        %v1038 = vpop.f32.mrb[0].mxu0
        %v1039 = vadd.f32 %v476, %v1038
        %v1040 = vpop.f32.mrb[0].mxu0
        %1041 = vmatprep.mubr.bf16.mxu0 0
        %1042 = vmatmul.mubr.bf16.gmra.mrb[0].mxu0 %v784
        %v1043 = vpop.f32.mrb[0].mxu0
        %v1044 = vadd.f32 %v476, %v1043
        %v1045 = vpop.f32.mrb[0].mxu0
        %v1046 = vpop.f32.mrb[0].mxu0
        %v1047 = vadd.f32 %v476, %v1046
        %v1048 = vpop.f32.mrb[0].mxu0
        %1049 = vmatprep.mubr.bf16.mxu0 0
        %1050 = vmatmul.mubr.bf16.gmra.mrb[0].mxu0 %v787
        %v1051 = vpop.f32.mrb[0].mxu0
        %v1052 = vadd.f32 %v476, %v1051
        %v1053 = vpop.f32.mrb[0].mxu0
        %v1054 = vpop.f32.mrb[0].mxu0
        %v1055 = vadd.f32 %v476, %v1054
        %v1056 = vpop.f32.mrb[0].mxu0
        %1057 = vmatprep.mubr.bf16.mxu0 0
        %1058 = vmatmul.mubr.bf16.gmra.mrb[0].mxu0 %v790
        %v1059 = vpop.f32.mrb[0].mxu0
        %v1060 = vadd.f32 %v476, %v1059
        %v1061 = vpop.f32.mrb[0].mxu0
        %v1062 = vpop.f32.mrb[0].mxu0
        %v1063 = vadd.f32 %v476, %v1062
        %v1064 = vpop.f32.mrb[0].mxu0
        %1065 = vmatprep.mubr.bf16.mxu0 0
        %1066 = vmatmul.mubr.bf16.gmra.mrb[0].mxu0 %v793
        %v1067 = vpop.f32.mrb[0].mxu0
        %v1068 = vadd.f32 %v476, %v1067
        %v1069 = vpop.f32.mrb[0].mxu0
        %v1070 = vpop.f32.mrb[0].mxu0
        %v1071 = vadd.f32 %v476, %v1070
        %v1072 = vpop.f32.mrb[0].mxu0
        %1073 = vmatprep.mubr.bf16.mxu0 0
        %1074 = vmatmul.mubr.bf16.gmra.mrb[0].mxu0 %v796
        %v1075 = vpop.f32.mrb[0].mxu0
        %v1076 = vadd.f32 %v476, %v1075
        %v1077 = vpop.f32.mrb[0].mxu0
        %v1078 = vpop.f32.mrb[0].mxu0
        %v1079 = vadd.f32 %v476, %v1078
        %v1080 = vpop.f32.mrb[0].mxu0
        %1081 = vmatprep.mubr.bf16.mxu0 0
        %1082 = vmatmul.mubr.bf16.gmra.mrb[0].mxu0 %v799
        %v1083 = vpop.f32.mrb[0].mxu0
        %v1084 = vadd.f32 %v476, %v1083
        %v1085 = vpop.f32.mrb[0].mxu0
        %v1086 = vpop.f32.mrb[0].mxu0
        %v1087 = vadd.f32 %v476, %v1086
        %v1088 = vpop.f32.mrb[0].mxu0
        %1089 = vmatprep.mubr.bf16.mxu0 0
        %1090 = vmatmul.mubr.bf16.gmra.mrb[0].mxu0 %v802
        %v1091 = vpop.f32.mrb[0].mxu0
        %v1092 = vadd.f32 %v476, %v1091
        %v1093 = vpop.f32.mrb[0].mxu0
        %v1094 = vpop.f32.mrb[0].mxu0
        %v1095 = vadd.f32 %v476, %v1094
        %v1096 = vpop.f32.mrb[0].mxu0
        %1097 = vmatprep.mubr.bf16.mxu0 0
        %1098 = vmatmul.mubr.bf16.gmra.mrb[0].mxu0 %v805
        %v1099 = vpop.f32.mrb[0].mxu0
        %v1100 = vadd.f32 %v476, %v1099
        %v1101 = vpop.f32.mrb[0].mxu0
        %v1102 = vpop.f32.mrb[0].mxu0
        %v1103 = vadd.f32 %v476, %v1102
        %v1104 = vpop.f32.mrb[0].mxu0
        %1105 = vmatprep.mubr.bf16.mxu0 0
        %1106 = vmatmul.mubr.bf16.gmra.mrb[0].mxu0 %v808
        %v1107 = vpop.f32.mrb[0].mxu0
        %v1108 = vadd.f32 %v476, %v1107
        %v1109 = vpop.f32.mrb[0].mxu0
        %v1110 = vpop.f32.mrb[0].mxu0
        %v1111 = vadd.f32 %v476, %v1110
        %v1112 = vpop.f32.mrb[0].mxu0
        %1113 = vmatprep.mubr.bf16.mxu0 0
        %1114 = vmatmul.mubr.bf16.gmra.mrb[0].mxu0 %v811
        %v1115 = vpop.f32.mrb[0].mxu0
        %v1116 = vadd.f32 %v476, %v1115
        %v1117 = vpop.f32.mrb[0].mxu0
        %v1118 = vpop.f32.mrb[0].mxu0
        %v1119 = vadd.f32 %v476, %v1118
        %v1120 = vpop.f32.mrb[0].mxu0
        %1121 = vmatprep.mubr.bf16.mxu0 0
        %1122 = vmatmul.mubr.bf16.gmra.mrb[0].mxu0 %v814
        %v1123 = vpop.f32.mrb[0].mxu0
        %v1124 = vadd.f32 %v476, %v1123
        %v1125 = vpop.f32.mrb[0].mxu0
        %v1126 = vpop.f32.mrb[0].mxu0
        %v1127 = vadd.f32 %v476, %v1126
        %v1128 = vpop.f32.mrb[0].mxu0
        %1129 = vmatprep.mubr.bf16.mxu0 0
        %1130 = vmatmul.mubr.bf16.gmra.mrb[0].mxu0 %v817
        %v1131 = vpop.f32.mrb[0].mxu0
        %v1132 = vadd.f32 %v476, %v1131
        %v1133 = vpop.f32.mrb[0].mxu0
        %v1134 = vpop.f32.mrb[0].mxu0
        %v1135 = vadd.f32 %v476, %v1134
        %v1136 = vpop.f32.mrb[0].mxu0
        %1137 = vmatprep.mubr.bf16.mxu0 0
        %1138 = vmatmul.mubr.bf16.gmra.mrb[0].mxu0 %v820
        %v1139 = vpop.f32.mrb[0].mxu0
        %v1140 = vadd.f32 %v476, %v1139
        %v1141 = vpop.f32.mrb[0].mxu0
        %v1142 = vpop.f32.mrb[0].mxu0
        %v1143 = vadd.f32 %v476, %v1142
        %v1144 = vpop.f32.mrb[0].mxu0
        %1145 = vmatprep.mubr.bf16.mxu0 0
        %1146 = vmatmul.mubr.bf16.gmra.mrb[0].mxu0 %v823
        %v1147 = vpop.f32.mrb[0].mxu0
        %v1148 = vadd.f32 %v476, %v1147
        %v1149 = vpop.f32.mrb[0].mxu0
        %v1150 = vpop.f32.mrb[0].mxu0
        %v1151 = vadd.f32 %v476, %v1150
        %v1152 = vpop.f32.mrb[0].mxu0
        %1153 = vmatprep.mubr.bf16.mxu0 0
        %1154 = vmatmul.mubr.bf16.gmra.mrb[0].mxu0 %v826
        %v1155 = vpop.f32.mrb[0].mxu0
        %v1156 = vadd.f32 %v476, %v1155
        %v1157 = vpop.f32.mrb[0].mxu0
        %v1158 = vpop.f32.mrb[0].mxu0
        %v1159 = vadd.f32 %v476, %v1158
        %v1160 = vpop.f32.mrb[0].mxu0
        %1161 = vmatprep.mubr.bf16.mxu0 0
        %1162 = vmatmul.mubr.bf16.gmra.mrb[0].mxu0 %v829
        %v1163 = vpop.f32.mrb[0].mxu0
        %v1164 = vadd.f32 %v476, %v1163
        %v1165 = vpop.f32.mrb[0].mxu0
        %v1166 = vpop.f32.mrb[0].mxu0
        %v1167 = vadd.f32 %v476, %v1166
        %v1168 = vpop.f32.mrb[0].mxu0
        %1169 = vmatprep.mubr.bf16.mxu0 0
        %1170 = vmatmul.mubr.bf16.gmra.mrb[0].mxu0 %v832
        %v1171 = vpop.f32.mrb[0].mxu0
        %v1172 = vadd.f32 %v476, %v1171
        %v1173 = vpop.f32.mrb[0].mxu0
        %v1174 = vpop.f32.mrb[0].mxu0
        %v1175 = vadd.f32 %v476, %v1174
        %v1176 = vpop.f32.mrb[0].mxu0
        %1177 = vmatprep.mubr.bf16.mxu0 0
        %1178 = vmatmul.mubr.bf16.gmra.mrb[0].mxu0 %v835
        %v1179 = vpop.f32.mrb[0].mxu0
        %v1180 = vadd.f32 %v476, %v1179
        %v1181 = vpop.f32.mrb[0].mxu0
        %v1182 = vpop.f32.mrb[0].mxu0
        %v1183 = vadd.f32 %v476, %v1182
        %v1184 = vpop.f32.mrb[0].mxu0
        %1185 = vmatprep.mubr.bf16.mxu0 0
        %1186 = vmatmul.mubr.bf16.gmra.mrb[0].mxu0 %v838
        %v1187 = vpop.f32.mrb[0].mxu0
        %v1188 = vadd.f32 %v476, %v1187
        %v1189 = vpop.f32.mrb[0].mxu0
        %v1190 = vpop.f32.mrb[0].mxu0
        %v1191 = vadd.f32 %v476, %v1190
        %v1192 = vpop.f32.mrb[0].mxu0
        %1193 = vmatprep.mubr.bf16.mxu0 0
        %1194 = vmatmul.mubr.bf16.gmra.mrb[0].mxu0 %v841
        %v1195 = vpop.f32.mrb[0].mxu0
        %v1196 = vadd.f32 %v476, %v1195
        %v1197 = vpop.f32.mrb[0].mxu0
        %v1198 = vpop.f32.mrb[0].mxu0
        %v1199 = vadd.f32 %v476, %v1198
        %v1200 = vpop.f32.mrb[0].mxu0
        %1201 = vmatprep.mubr.bf16.mxu0 0
        %1202 = vmatmul.mubr.bf16.gmra.mrb[0].mxu0 %v844
        %v1203 = vpop.f32.mrb[0].mxu0
        %v1204 = vadd.f32 %v476, %v1203
        %v1205 = vpop.f32.mrb[0].mxu0
        %v1206 = vpop.f32.mrb[0].mxu0
        %v1207 = vadd.f32 %v476, %v1206
        %v1208 = vpop.f32.mrb[0].mxu0
        %1209 = vmatprep.mubr.bf16.mxu0 0
        %1210 = vmatmul.mubr.bf16.gmra.mrb[0].mxu0 %v847
        %v1211 = vpop.f32.mrb[0].mxu0
        %v1212 = vadd.f32 %v476, %v1211
        %v1213 = vpop.f32.mrb[0].mxu0
        %v1214 = vpop.f32.mrb[0].mxu0
        %v1215 = vadd.f32 %v476, %v1214
        %v1216 = vpop.f32.mrb[0].mxu0
        %1217 = vmatprep.mubr.bf16.mxu0 0
        %1218 = vmatmul.mubr.bf16.gmra.mrb[0].mxu0 %v850
        %v1219 = vpop.f32.mrb[0].mxu0
        %v1220 = vadd.f32 %v476, %v1219
        %v1221 = vpop.f32.mrb[0].mxu0
        %v1222 = vpop.f32.mrb[0].mxu0
        %v1223 = vadd.f32 %v476, %v1222
        %v1224 = vpop.f32.mrb[0].mxu0
        %1225 = vmatprep.mubr.bf16.mxu0 0
        %1226 = vmatmul.mubr.bf16.gmra.mrb[0].mxu0 %v853
        %v1227 = vpop.f32.mrb[0].mxu0
        %v1228 = vadd.f32 %v476, %v1227
        %v1229 = vpop.f32.mrb[0].mxu0
        %v1230 = vpop.f32.mrb[0].mxu0
        %v1231 = vadd.f32 %v476, %v1230
        %v1232 = vpop.f32.mrb[0].mxu0
        %1233 = vmatprep.mubr.bf16.mxu0 0
        %1234 = vmatmul.mubr.bf16.gmra.mrb[0].mxu0 %v856
        %v1235 = vpop.f32.mrb[0].mxu0
        %v1236 = vadd.f32 %v476, %v1235
        %v1237 = vpop.f32.mrb[0].mxu0
        %v1238 = vpop.f32.mrb[0].mxu0
        %v1239 = vadd.f32 %v476, %v1238
        %v1240 = vpop.f32.mrb[0].mxu0
        %1241 = vmatprep.mubr.bf16.mxu0 0
        %1242 = vmatmul.mubr.bf16.gmra.mrb[0].mxu0 %v859
        %v1243 = vpop.f32.mrb[0].mxu0
        %v1244 = vadd.f32 %v476, %v1243
        %v1245 = vpop.f32.mrb[0].mxu0
        %v1246 = vpop.f32.mrb[0].mxu0
        %v1247 = vadd.f32 %v476, %v1246
        %v1248 = vpop.f32.mrb[0].mxu0
        %1249 = vmatprep.mubr.bf16.mxu0 0
        %1250 = vmatmul.mubr.bf16.gmra.mrb[0].mxu0 %v862
        %v1251 = vpop.f32.mrb[0].mxu0
        %v1252 = vadd.f32 %v476, %v1251
        %v1253 = vpop.f32.mrb[0].mxu0
        %v1254 = vpop.f32.mrb[0].mxu0
        %v1255 = vadd.f32 %v476, %v1254
        %v1256 = vpop.f32.mrb[0].mxu0
        %1257 = vmatprep.mubr.bf16.mxu0 0
        %1258 = vmatmul.mubr.bf16.gmra.mrb[0].mxu0 %v865
        %v1259 = vpop.f32.mrb[0].mxu0
        %v1260 = vadd.f32 %v476, %v1259
        %v1261 = vpop.f32.mrb[0].mxu0
        %v1262 = vpop.f32.mrb[0].mxu0
        %v1263 = vadd.f32 %v476, %v1262
        %v1264 = vpop.f32.mrb[0].mxu0
        %1265 = vmatprep.mubr.bf16.mxu0 0
        %1266 = vmatmul.mubr.bf16.gmra.mrb[0].mxu0 %v868
        %v1267 = vpop.f32.mrb[0].mxu0
        %v1268 = vadd.f32 %v476, %v1267
        %v1269 = vpop.f32.mrb[0].mxu0
        %v1270 = vpop.f32.mrb[0].mxu0
        %v1271 = vadd.f32 %v476, %v1270
        %v1272 = vpop.f32.mrb[0].mxu0
        %1273 = vmatprep.mubr.bf16.mxu0 0
        %1274 = vmatmul.mubr.bf16.gmra.mrb[0].mxu0 %v871
        %v1275 = vpop.f32.mrb[0].mxu0
        %v1276 = vadd.f32 %v476, %v1275
        %v1277 = vpop.f32.mrb[0].mxu0
        %v1278 = vpop.f32.mrb[0].mxu0
        %v1279 = vadd.f32 %v476, %v1278
        %v1280 = vpop.f32.mrb[0].mxu0
        %1281 = vmatprep.mubr.bf16.mxu0 0
        %1282 = vmatmul.mubr.bf16.gmra.mrb[0].mxu0 %v874
        %v1283 = vpop.f32.mrb[0].mxu0
        %v1284 = vadd.f32 %v476, %v1283
        %v1285 = vpop.f32.mrb[0].mxu0
        %v1286 = vpop.f32.mrb[0].mxu0
        %v1287 = vadd.f32 %v476, %v1286
        %v1288 = vpop.f32.mrb[0].mxu0
        %1289 = vmatprep.mubr.bf16.mxu0 0
        %1290 = vmatmul.mubr.bf16.gmra.mrb[0].mxu0 %v877
        %v1291 = vpop.f32.mrb[0].mxu0
        %v1292 = vadd.f32 %v476, %v1291
        %v1293 = vpop.f32.mrb[0].mxu0
        %v1294 = vpop.f32.mrb[0].mxu0
        %v1295 = vadd.f32 %v476, %v1294
        %v1296 = vpop.f32.mrb[0].mxu0
        %1297 = vmatprep.mubr.bf16.mxu0 0
        %1298 = vmatmul.mubr.bf16.gmra.mrb[0].mxu0 %v880
        %v1299 = vpop.f32.mrb[0].mxu0
        %v1300 = vadd.f32 %v476, %v1299
        %v1301 = vpop.f32.mrb[0].mxu0
        %v1302 = vpop.f32.mrb[0].mxu0
        %v1303 = vadd.f32 %v476, %v1302
        %v1304 = vpop.f32.mrb[0].mxu0
        %1305 = vmatprep.mubr.bf16.mxu0 0
        %1306 = vmatmul.mubr.bf16.gmra.mrb[0].mxu0 %v883
        %v1307 = vpop.f32.mrb[0].mxu0
        %v1308 = vadd.f32 %v476, %v1307
        %v1309 = vpop.f32.mrb[0].mxu0
        %v1310 = vpop.f32.mrb[0].mxu0
        %v1311 = vadd.f32 %v476, %v1310
        %v1312 = vpop.f32.mrb[0].mxu0
        %1313 = vmatprep.mubr.bf16.mxu0 0
        %1314 = vmatmul.mubr.bf16.gmra.mrb[0].mxu0 %v886
        %v1315 = vpop.f32.mrb[0].mxu0
        %v1316 = vadd.f32 %v476, %v1315
        %v1317 = vpop.f32.mrb[0].mxu0
        %v1318 = vpop.f32.mrb[0].mxu0
        %v1319 = vadd.f32 %v476, %v1318
        %v1320 = vpop.f32.mrb[0].mxu0
        %1321 = vmatprep.mubr.bf16.mxu0 0
        %1322 = vmatmul.mubr.bf16.gmra.mrb[0].mxu0 %v889
        %v1323 = vpop.f32.mrb[0].mxu0
        %v1324 = vadd.f32 %v476, %v1323
        %v1325 = vpop.f32.mrb[0].mxu0
        %v1326 = vpop.f32.mrb[0].mxu0
        %v1327 = vadd.f32 %v476, %v1326
        %v1328 = vpop.f32.mrb[0].mxu0
        %1329 = vmatprep.mubr.bf16.mxu0 0
        %1330 = vmatmul.mubr.bf16.gmra.mrb[0].mxu0 %v892
        %v1331 = vpop.f32.mrb[0].mxu0
        %v1332 = vadd.f32 %v476, %v1331
        %v1333 = vpop.f32.mrb[0].mxu0
        %v1334 = vpop.f32.mrb[0].mxu0
        %v1335 = vadd.f32 %v476, %v1334
        %v1336 = vpop.f32.mrb[0].mxu0
        %1337 = vmatprep.mubr.bf16.mxu0 0
        %1338 = vmatmul.mubr.bf16.gmra.mrb[0].mxu0 %v895
        %v1339 = vpop.f32.mrb[0].mxu0
        %v1340 = vadd.f32 %v476, %v1339
        %v1341 = vpop.f32.mrb[0].mxu0
        %v1342 = vpop.f32.mrb[0].mxu0
        %v1343 = vadd.f32 %v476, %v1342
        %v1344 = vpop.f32.mrb[0].mxu0
        %1345 = vmatprep.mubr.bf16.mxu0 0
        %1346 = vmatmul.mubr.bf16.gmra.mrb[0].mxu0 %v898
        %v1347 = vpop.f32.mrb[0].mxu0
        %v1348 = vadd.f32 %v476, %v1347
        %v1349 = vpop.f32.mrb[0].mxu0
        %v1350 = vpop.f32.mrb[0].mxu0
        %v1351 = vadd.f32 %v476, %v1350
        %v1352 = vpop.f32.mrb[0].mxu0
        %1353 = vmatprep.mubr.bf16.mxu0 0
        %1354 = vmatmul.mubr.bf16.gmra.mrb[0].mxu0 %v901
        %v1355 = vpop.f32.mrb[0].mxu0
        %v1356 = vadd.f32 %v476, %v1355
        %v1357 = vpop.f32.mrb[0].mxu0
        %v1358 = vpop.f32.mrb[0].mxu0
        %v1359 = vadd.f32 %v476, %v1358
        %v1360 = vpop.f32.mrb[0].mxu0
        %1361 = vmatprep.mubr.bf16.mxu0 0
        %1362 = vmatmul.mubr.bf16.gmra.mrb[0].mxu0 %v904
        %v1363 = vpop.f32.mrb[0].mxu0
        %v1364 = vadd.f32 %v476, %v1363
        %v1365 = vpop.f32.mrb[0].mxu0
        %v1366 = vpop.f32.mrb[0].mxu0
        %v1367 = vpop.f32.mrb[0].mxu0
        %1368 = vdwg.mxu0
        %v1369 = vmax.f32 %v948, 0.0
        %v1370 = vmax.f32 %v951, 0.0
        %v1371 = vmax.f32 %v956, 0.0
        %v1372 = vmax.f32 %v959, 0.0
        %v1373 = vmax.f32 %v964, 0.0
        %v1374 = vmax.f32 %v967, 0.0
        %v1375 = vmax.f32 %v972, 0.0
        %v1376 = vmax.f32 %v975, 0.0
        %v1377 = vmax.f32 %v980, 0.0
        %v1378 = vmax.f32 %v983, 0.0
        %v1379 = vmax.f32 %v988, 0.0
        %v1380 = vmax.f32 %v991, 0.0
        %v1381 = vmax.f32 %v996, 0.0
        %v1382 = vmax.f32 %v999, 0.0
        %v1383 = vmax.f32 %v1004, 0.0
        %v1384 = vmax.f32 %v1007, 0.0
        %v1385 = vmax.f32 %v1012, 0.0
        %v1386 = vmax.f32 %v1015, 0.0
        %v1387 = vmax.f32 %v1020, 0.0
        %v1388 = vmax.f32 %v1023, 0.0
        %v1389 = vmax.f32 %v1028, 0.0
        %v1390 = vmax.f32 %v1031, 0.0
        %v1391 = vmax.f32 %v1036, 0.0
        %v1392 = vmax.f32 %v1039, 0.0
        %v1393 = vmax.f32 %v1044, 0.0
        %v1394 = vmax.f32 %v1047, 0.0
        %v1395 = vmax.f32 %v1052, 0.0
        %v1396 = vmax.f32 %v1055, 0.0
        %v1397 = vmax.f32 %v1060, 0.0
        %v1398 = vmax.f32 %v1063, 0.0
        %v1399 = vmax.f32 %v1068, 0.0
        %v1400 = vmax.f32 %v1071, 0.0
        %v1401 = vmax.f32 %v1076, 0.0
        %v1402 = vmax.f32 %v1079, 0.0
        %v1403 = vmax.f32 %v1084, 0.0
        %v1404 = vmax.f32 %v1087, 0.0
        %v1405 = vmax.f32 %v1092, 0.0
        %v1406 = vmax.f32 %v1095, 0.0
        %v1407 = vmax.f32 %v1100, 0.0
        %v1408 = vmax.f32 %v1103, 0.0
        %v1409 = vmax.f32 %v1108, 0.0
        %v1410 = vmax.f32 %v1111, 0.0
        %v1411 = vmax.f32 %v1116, 0.0
        %v1412 = vmax.f32 %v1119, 0.0
        %v1413 = vmax.f32 %v1124, 0.0
        %v1414 = vmax.f32 %v1127, 0.0
        %v1415 = vmax.f32 %v1132, 0.0
        %v1416 = vmax.f32 %v1135, 0.0
        %v1417 = vmax.f32 %v1140, 0.0
        %v1418 = vmax.f32 %v1143, 0.0
        %v1419 = vmax.f32 %v1148, 0.0
        %v1420 = vmax.f32 %v1151, 0.0
        %v1421 = vmax.f32 %v1156, 0.0
        %v1422 = vmax.f32 %v1159, 0.0
        %v1423 = vmax.f32 %v1164, 0.0
        %v1424 = vmax.f32 %v1167, 0.0
        %v1425 = vmax.f32 %v1172, 0.0
        %v1426 = vmax.f32 %v1175, 0.0
        %v1427 = vmax.f32 %v1180, 0.0
        %v1428 = vmax.f32 %v1183, 0.0
        %v1429 = vmax.f32 %v1188, 0.0
        %v1430 = vmax.f32 %v1191, 0.0
        %v1431 = vmax.f32 %v1196, 0.0
        %v1432 = vmax.f32 %v1199, 0.0
        %v1433 = vmax.f32 %v1204, 0.0
        %v1434 = vmax.f32 %v1207, 0.0
        %v1435 = vmax.f32 %v1212, 0.0
        %v1436 = vmax.f32 %v1215, 0.0
        %v1437 = vmax.f32 %v1220, 0.0
        %v1438 = vmax.f32 %v1223, 0.0
        %v1439 = vmax.f32 %v1228, 0.0
        %v1440 = vmax.f32 %v1231, 0.0
        %v1441 = vmax.f32 %v1236, 0.0
        %v1442 = vmax.f32 %v1239, 0.0
        %v1443 = vmax.f32 %v1244, 0.0
        %v1444 = vmax.f32 %v1247, 0.0
        %v1445 = vmax.f32 %v1252, 0.0
        %v1446 = vmax.f32 %v1255, 0.0
        %v1447 = vmax.f32 %v1260, 0.0
        %v1448 = vmax.f32 %v1263, 0.0
        %v1449 = vmax.f32 %v1268, 0.0
        %v1450 = vmax.f32 %v1271, 0.0
        %v1451 = vmax.f32 %v1276, 0.0
        %v1452 = vmax.f32 %v1279, 0.0
        %v1453 = vmax.f32 %v1284, 0.0
        %v1454 = vmax.f32 %v1287, 0.0
        %v1455 = vmax.f32 %v1292, 0.0
        %v1456 = vmax.f32 %v1295, 0.0
        %v1457 = vmax.f32 %v1300, 0.0
        %v1458 = vmax.f32 %v1303, 0.0
        %v1459 = vmax.f32 %v1308, 0.0
        %v1460 = vmax.f32 %v1311, 0.0
        %v1461 = vmax.f32 %v1316, 0.0
        %v1462 = vmax.f32 %v1319, 0.0
        %v1463 = vmax.f32 %v1324, 0.0
        %v1464 = vmax.f32 %v1327, 0.0
        %v1465 = vmax.f32 %v1332, 0.0
        %v1466 = vmax.f32 %v1335, 0.0
        %v1467 = vmax.f32 %v1340, 0.0
        %v1468 = vmax.f32 %v1343, 0.0
        %v1469 = vmax.f32 %v1348, 0.0
        %v1470 = vmax.f32 %v1351, 0.0
        %v1471 = vmax.f32 %v1356, 0.0
        %v1472 = vmax.f32 %v1359, 0.0
        %v1473 = vmax.f32 %v1364, 0.0
        %vm1575 = vcmask 1046528
        %v1576 = vrot.slane %v1369, 1
        %v1577 = vrot.slane %v1370, 1
        %v1578 = vsel %vm1575, %v1576, %v1577
        %v1579 = vrot.slane %v1371, 1
        %v1580 = vsel %vm1575, %v1577, %v1579
        %v1581 = vrot.slane %v1372, 1
        %v1582 = vsel %vm1575, %v1579, %v1581
        %v1583 = vrot.slane %v1373, 1
        %v1584 = vsel %vm1575, %v1581, %v1583
        %v1585 = vrot.slane %v1374, 1
        %v1586 = vsel %vm1575, %v1583, %v1585
        %v1587 = vrot.slane %v1375, 1
        %v1588 = vsel %vm1575, %v1585, %v1587
        %v1589 = vrot.slane %v1376, 1
        %v1590 = vsel %vm1575, %v1587, %v1589
        %v1591 = vrot.slane %v1377, 1
        %v1592 = vsel %vm1575, %v1589, %v1591
        %v1593 = vrot.slane %v1378, 1
        %v1594 = vsel %vm1575, %v1591, %v1593
        %v1595 = vrot.slane %v1379, 1
        %v1596 = vsel %vm1575, %v1593, %v1595
        %v1597 = vrot.slane %v1380, 1
        %v1598 = vsel %vm1575, %v1595, %v1597
        %v1599 = vrot.slane %v1381, 1
        %v1600 = vsel %vm1575, %v1597, %v1599
        %v1601 = vrot.slane %v1382, 1
        %v1602 = vsel %vm1575, %v1599, %v1601
        %v1603 = vrot.slane %v1383, 1
        %v1604 = vsel %vm1575, %v1601, %v1603
        %v1605 = vrot.slane %v1384, 1
        %v1606 = vsel %vm1575, %v1603, %v1605
        %v1607 = vrot.slane %v1385, 1
        %v1608 = vsel %vm1575, %v1605, %v1607
        %v1609 = vrot.slane %v1386, 1
        %v1610 = vsel %vm1575, %v1607, %v1609
        %v1611 = vrot.slane %v1387, 1
        %v1612 = vsel %vm1575, %v1609, %v1611
        %v1613 = vrot.slane %v1388, 1
        %v1614 = vsel %vm1575, %v1611, %v1613
        %v1615 = vrot.slane %v1389, 1
        %v1616 = vsel %vm1575, %v1613, %v1615
        %v1617 = vrot.slane %v1390, 1
        %v1618 = vsel %vm1575, %v1615, %v1617
        %v1619 = vrot.slane %v1391, 1
        %v1620 = vsel %vm1575, %v1617, %v1619
        %v1621 = vrot.slane %v1392, 1
        %v1622 = vsel %vm1575, %v1619, %v1621
        %v1623 = vrot.slane %v1393, 1
        %v1624 = vsel %vm1575, %v1621, %v1623
        %v1625 = vrot.slane %v1394, 1
        %v1626 = vsel %vm1575, %v1623, %v1625
        %v1627 = vrot.slane %v1395, 1
        %v1628 = vsel %vm1575, %v1625, %v1627
        %v1629 = vrot.slane %v1396, 1
        %v1630 = vsel %vm1575, %v1627, %v1629
        %v1631 = vrot.slane %v1397, 1
        %v1632 = vsel %vm1575, %v1629, %v1631
        %v1633 = vrot.slane %v1398, 1
        %v1634 = vsel %vm1575, %v1631, %v1633
        %v1635 = vrot.slane %v1399, 1
        %v1636 = vsel %vm1575, %v1633, %v1635
        %v1637 = vrot.slane %v1400, 1
        %v1638 = vsel %vm1575, %v1635, %v1637
        %v1639 = vrot.slane %v1401, 1
        %v1640 = vsel %vm1575, %v1637, %v1639
        %v1641 = vrot.slane %v1402, 1
        %v1642 = vsel %vm1575, %v1639, %v1641
        %v1643 = vrot.slane %v1403, 1
        %v1644 = vsel %vm1575, %v1641, %v1643
        %v1645 = vrot.slane %v1404, 1
        %v1646 = vsel %vm1575, %v1643, %v1645
        %v1647 = vrot.slane %v1405, 1
        %v1648 = vsel %vm1575, %v1645, %v1647
        %v1649 = vrot.slane %v1406, 1
        %v1650 = vsel %vm1575, %v1647, %v1649
        %v1651 = vrot.slane %v1407, 1
        %v1652 = vsel %vm1575, %v1649, %v1651
        %v1653 = vrot.slane %v1408, 1
        %v1654 = vsel %vm1575, %v1651, %v1653
        %v1655 = vrot.slane %v1409, 1
        %v1656 = vsel %vm1575, %v1653, %v1655
        %v1657 = vrot.slane %v1410, 1
        %v1658 = vsel %vm1575, %v1655, %v1657
        %v1659 = vrot.slane %v1411, 1
        %v1660 = vsel %vm1575, %v1657, %v1659
        %v1661 = vrot.slane %v1412, 1
        %v1662 = vsel %vm1575, %v1659, %v1661
        %v1663 = vrot.slane %v1413, 1
        %v1664 = vsel %vm1575, %v1661, %v1663
        %v1665 = vrot.slane %v1414, 1
        %v1666 = vsel %vm1575, %v1663, %v1665
        %v1667 = vrot.slane %v1415, 1
        %v1668 = vsel %vm1575, %v1665, %v1667
        %v1669 = vrot.slane %v1416, 1
        %v1670 = vsel %vm1575, %v1667, %v1669
        %v1671 = vrot.slane %v1417, 1
        %v1672 = vsel %vm1575, %v1669, %v1671
        %v1673 = vrot.slane %v1418, 1
        %v1674 = vsel %vm1575, %v1671, %v1673
        %v1675 = vrot.slane %v1419, 1
        %v1676 = vsel %vm1575, %v1673, %v1675
        %v1677 = vrot.slane %v1420, 1
        %v1678 = vsel %vm1575, %v1675, %v1677
        %v1679 = vrot.slane %v1421, 1
        %v1680 = vsel %vm1575, %v1677, %v1679
        %v1681 = vrot.slane %v1422, 1
        %v1682 = vsel %vm1575, %v1679, %v1681
        %v1683 = vrot.slane %v1423, 1
        %v1684 = vsel %vm1575, %v1681, %v1683
        %v1685 = vrot.slane %v1424, 1
        %v1686 = vsel %vm1575, %v1683, %v1685
        %v1687 = vrot.slane %v1425, 1
        %v1688 = vsel %vm1575, %v1685, %v1687
        %v1689 = vrot.slane %v1426, 1
        %v1690 = vsel %vm1575, %v1687, %v1689
        %v1691 = vrot.slane %v1427, 1
        %v1692 = vsel %vm1575, %v1689, %v1691
        %v1693 = vrot.slane %v1428, 1
        %v1694 = vsel %vm1575, %v1691, %v1693
        %v1695 = vrot.slane %v1429, 1
        %v1696 = vsel %vm1575, %v1693, %v1695
        %v1697 = vrot.slane %v1430, 1
        %v1698 = vsel %vm1575, %v1695, %v1697
        %v1699 = vrot.slane %v1431, 1
        %v1700 = vsel %vm1575, %v1697, %v1699
        %v1701 = vrot.slane %v1432, 1
        %v1702 = vsel %vm1575, %v1699, %v1701
        %v1703 = vrot.slane %v1433, 1
        %v1704 = vsel %vm1575, %v1701, %v1703
        %v1705 = vrot.slane %v1434, 1
        %v1706 = vsel %vm1575, %v1703, %v1705
        %v1707 = vrot.slane %v1435, 1
        %v1708 = vsel %vm1575, %v1705, %v1707
        %v1709 = vrot.slane %v1436, 1
        %v1710 = vsel %vm1575, %v1707, %v1709
        %v1711 = vrot.slane %v1437, 1
        %v1712 = vsel %vm1575, %v1709, %v1711
        %v1713 = vrot.slane %v1438, 1
        %v1714 = vsel %vm1575, %v1711, %v1713
        %v1715 = vrot.slane %v1439, 1
        %v1716 = vsel %vm1575, %v1713, %v1715
        %v1717 = vrot.slane %v1440, 1
        %v1718 = vsel %vm1575, %v1715, %v1717
        %v1719 = vrot.slane %v1441, 1
        %v1720 = vsel %vm1575, %v1717, %v1719
        %v1721 = vrot.slane %v1442, 1
        %v1722 = vsel %vm1575, %v1719, %v1721
        %v1723 = vrot.slane %v1443, 1
        %v1724 = vsel %vm1575, %v1721, %v1723
        %v1725 = vrot.slane %v1444, 1
        %v1726 = vsel %vm1575, %v1723, %v1725
        %v1727 = vrot.slane %v1445, 1
        %v1728 = vsel %vm1575, %v1725, %v1727
        %v1729 = vrot.slane %v1446, 1
        %v1730 = vsel %vm1575, %v1727, %v1729
        %v1731 = vrot.slane %v1447, 1
        %v1732 = vsel %vm1575, %v1729, %v1731
        %v1733 = vrot.slane %v1448, 1
        %v1734 = vsel %vm1575, %v1731, %v1733
        %v1735 = vrot.slane %v1449, 1
        %v1736 = vsel %vm1575, %v1733, %v1735
        %v1737 = vrot.slane %v1450, 1
        %v1738 = vsel %vm1575, %v1735, %v1737
        %v1739 = vrot.slane %v1451, 1
        %v1740 = vsel %vm1575, %v1737, %v1739
        %v1741 = vrot.slane %v1452, 1
        %v1742 = vsel %vm1575, %v1739, %v1741
        %v1743 = vrot.slane %v1453, 1
        %v1744 = vsel %vm1575, %v1741, %v1743
        %v1745 = vrot.slane %v1454, 1
        %v1746 = vsel %vm1575, %v1743, %v1745
        %v1747 = vrot.slane %v1455, 1
        %v1748 = vsel %vm1575, %v1745, %v1747
        %v1749 = vrot.slane %v1456, 1
        %v1750 = vsel %vm1575, %v1747, %v1749
        %v1751 = vrot.slane %v1457, 1
        %v1752 = vsel %vm1575, %v1749, %v1751
        %v1753 = vrot.slane %v1458, 1
        %v1754 = vsel %vm1575, %v1751, %v1753
        %v1755 = vrot.slane %v1459, 1
        %v1756 = vsel %vm1575, %v1753, %v1755
        %v1757 = vrot.slane %v1460, 1
        %v1758 = vsel %vm1575, %v1755, %v1757
        %v1759 = vrot.slane %v1461, 1
        %v1760 = vsel %vm1575, %v1757, %v1759
        %v1761 = vrot.slane %v1462, 1
        %v1762 = vsel %vm1575, %v1759, %v1761
        %v1763 = vrot.slane %v1463, 1
        %v1764 = vsel %vm1575, %v1761, %v1763
        %v1765 = vrot.slane %v1464, 1
        %v1766 = vsel %vm1575, %v1763, %v1765
        %v1767 = vrot.slane %v1465, 1
        %v1768 = vsel %vm1575, %v1765, %v1767
        %v1769 = vrot.slane %v1466, 1
        %v1770 = vsel %vm1575, %v1767, %v1769
        %v1771 = vrot.slane %v1467, 1
        %v1772 = vsel %vm1575, %v1769, %v1771
        %v1773 = vrot.slane %v1468, 1
        %v1774 = vsel %vm1575, %v1771, %v1773
        %v1775 = vrot.slane %v1469, 1
        %v1776 = vsel %vm1575, %v1773, %v1775
        %v1878 = vmax.f32 %v1369, %v1578
        %v1879 = vmax.f32 %v1370, %v1580
        %v1880 = vmax.f32 %v1371, %v1582
        %v1881 = vmax.f32 %v1372, %v1584
        %v1882 = vmax.f32 %v1373, %v1586
        %v1883 = vmax.f32 %v1374, %v1588
        %v1884 = vmax.f32 %v1375, %v1590
        %v1885 = vmax.f32 %v1376, %v1592
        %v1886 = vmax.f32 %v1377, %v1594
        %v1887 = vmax.f32 %v1378, %v1596
        %v1888 = vmax.f32 %v1379, %v1598
        %v1889 = vmax.f32 %v1380, %v1600
        %v1890 = vmax.f32 %v1381, %v1602
        %v1891 = vmax.f32 %v1382, %v1604
        %v1892 = vmax.f32 %v1383, %v1606
        %v1893 = vmax.f32 %v1384, %v1608
        %v1894 = vmax.f32 %v1385, %v1610
        %v1895 = vmax.f32 %v1386, %v1612
        %v1896 = vmax.f32 %v1387, %v1614
        %v1897 = vmax.f32 %v1388, %v1616
        %v1898 = vmax.f32 %v1389, %v1618
        %v1899 = vmax.f32 %v1390, %v1620
        %v1900 = vmax.f32 %v1391, %v1622
        %v1901 = vmax.f32 %v1392, %v1624
        %v1902 = vmax.f32 %v1393, %v1626
        %v1903 = vmax.f32 %v1394, %v1628
        %v1904 = vmax.f32 %v1395, %v1630
        %v1905 = vmax.f32 %v1396, %v1632
        %v1906 = vmax.f32 %v1397, %v1634
        %v1907 = vmax.f32 %v1398, %v1636
        %v1908 = vmax.f32 %v1399, %v1638
        %v1909 = vmax.f32 %v1400, %v1640
        %v1910 = vmax.f32 %v1401, %v1642
        %v1911 = vmax.f32 %v1402, %v1644
        %v1912 = vmax.f32 %v1403, %v1646
        %v1913 = vmax.f32 %v1404, %v1648
        %v1914 = vmax.f32 %v1405, %v1650
        %v1915 = vmax.f32 %v1406, %v1652
        %v1916 = vmax.f32 %v1407, %v1654
        %v1917 = vmax.f32 %v1408, %v1656
        %v1918 = vmax.f32 %v1409, %v1658
        %v1919 = vmax.f32 %v1410, %v1660
        %v1920 = vmax.f32 %v1411, %v1662
        %v1921 = vmax.f32 %v1412, %v1664
        %v1922 = vmax.f32 %v1413, %v1666
        %v1923 = vmax.f32 %v1414, %v1668
        %v1924 = vmax.f32 %v1415, %v1670
        %v1925 = vmax.f32 %v1416, %v1672
        %v1926 = vmax.f32 %v1417, %v1674
        %v1927 = vmax.f32 %v1418, %v1676
        %v1928 = vmax.f32 %v1419, %v1678
        %v1929 = vmax.f32 %v1420, %v1680
        %v1930 = vmax.f32 %v1421, %v1682
        %v1931 = vmax.f32 %v1422, %v1684
        %v1932 = vmax.f32 %v1423, %v1686
        %v1933 = vmax.f32 %v1424, %v1688
        %v1934 = vmax.f32 %v1425, %v1690
        %v1935 = vmax.f32 %v1426, %v1692
        %v1936 = vmax.f32 %v1427, %v1694
        %v1937 = vmax.f32 %v1428, %v1696
        %v1938 = vmax.f32 %v1429, %v1698
        %v1939 = vmax.f32 %v1430, %v1700
        %v1940 = vmax.f32 %v1431, %v1702
        %v1941 = vmax.f32 %v1432, %v1704
        %v1942 = vmax.f32 %v1433, %v1706
        %v1943 = vmax.f32 %v1434, %v1708
        %v1944 = vmax.f32 %v1435, %v1710
        %v1945 = vmax.f32 %v1436, %v1712
        %v1946 = vmax.f32 %v1437, %v1714
        %v1947 = vmax.f32 %v1438, %v1716
        %v1948 = vmax.f32 %v1439, %v1718
        %v1949 = vmax.f32 %v1440, %v1720
        %v1950 = vmax.f32 %v1441, %v1722
        %v1951 = vmax.f32 %v1442, %v1724
        %v1952 = vmax.f32 %v1443, %v1726
        %v1953 = vmax.f32 %v1444, %v1728
        %v1954 = vmax.f32 %v1445, %v1730
        %v1955 = vmax.f32 %v1446, %v1732
        %v1956 = vmax.f32 %v1447, %v1734
        %v1957 = vmax.f32 %v1448, %v1736
        %v1958 = vmax.f32 %v1449, %v1738
        %v1959 = vmax.f32 %v1450, %v1740
        %v1960 = vmax.f32 %v1451, %v1742
        %v1961 = vmax.f32 %v1452, %v1744
        %v1962 = vmax.f32 %v1453, %v1746
        %v1963 = vmax.f32 %v1454, %v1748
        %v1964 = vmax.f32 %v1455, %v1750
        %v1965 = vmax.f32 %v1456, %v1752
        %v1966 = vmax.f32 %v1457, %v1754
        %v1967 = vmax.f32 %v1458, %v1756
        %v1968 = vmax.f32 %v1459, %v1758
        %v1969 = vmax.f32 %v1460, %v1760
        %v1970 = vmax.f32 %v1461, %v1762
        %v1971 = vmax.f32 %v1462, %v1764
        %v1972 = vmax.f32 %v1463, %v1766
        %v1973 = vmax.f32 %v1464, %v1768
        %v1974 = vmax.f32 %v1465, %v1770
        %v1975 = vmax.f32 %v1466, %v1772
        %v1976 = vmax.f32 %v1467, %v1774
        %v1977 = vmax.f32 %v1468, %v1776
        %v1978 = vmax.f32 %v1469, %v1775
        %v1983 = vrot.slane %v1470, 1
        %v1984 = vsel %vm1575, %v1775, %v1983
        %v1985 = vrot.slane %v1471, 1
        %v1986 = vsel %vm1575, %v1983, %v1985
        %v1987 = vrot.slane %v1472, 1
        %v1988 = vsel %vm1575, %v1985, %v1987
        %v1989 = vrot.slane %v1473, 1
        %v1990 = vsel %vm1575, %v1987, %v1989
        %v1996 = vmax.f32 %v1469, %v1984
        %v1997 = vmax.f32 %v1470, %v1986
        %v1998 = vmax.f32 %v1471, %v1988
        %v1999 = vmax.f32 %v1472, %v1990
        %v2000 = vmax.f32 %v1473, %v1989
        %vm2103 = vcmask 1041408
        %v2104 = vrot.slane %v1881, 6
        %v2105 = vrot.slane %v1882, 6
        %v2106 = vsel %vm2103, %v2104, %v2105
        %v2107 = vrot.slane %v1883, 6
        %v2108 = vsel %vm2103, %v2105, %v2107
        %v2109 = vrot.slane %v1884, 6
        %v2110 = vsel %vm2103, %v2107, %v2109
        %v2111 = vrot.slane %v1885, 6
        %v2112 = vsel %vm2103, %v2109, %v2111
        %v2113 = vrot.slane %v1886, 6
        %v2114 = vsel %vm2103, %v2111, %v2113
        %v2115 = vrot.slane %v1887, 6
        %v2116 = vsel %vm2103, %v2113, %v2115
        %v2117 = vrot.slane %v1888, 6
        %v2118 = vsel %vm2103, %v2115, %v2117
        %v2119 = vrot.slane %v1889, 6
        %v2120 = vsel %vm2103, %v2117, %v2119
        %v2121 = vrot.slane %v1890, 6
        %v2122 = vsel %vm2103, %v2119, %v2121
        %v2123 = vrot.slane %v1891, 6
        %v2124 = vsel %vm2103, %v2121, %v2123
        %v2125 = vrot.slane %v1892, 6
        %v2126 = vsel %vm2103, %v2123, %v2125
        %v2127 = vrot.slane %v1893, 6
        %v2128 = vsel %vm2103, %v2125, %v2127
        %v2129 = vrot.slane %v1894, 6
        %v2130 = vsel %vm2103, %v2127, %v2129
        %v2131 = vrot.slane %v1895, 6
        %v2132 = vsel %vm2103, %v2129, %v2131
        %v2133 = vrot.slane %v1896, 6
        %v2134 = vsel %vm2103, %v2131, %v2133
        %v2135 = vrot.slane %v1897, 6
        %v2136 = vsel %vm2103, %v2133, %v2135
        %v2137 = vrot.slane %v1898, 6
        %v2138 = vsel %vm2103, %v2135, %v2137
        %v2139 = vrot.slane %v1899, 6
        %v2140 = vsel %vm2103, %v2137, %v2139
        %v2141 = vrot.slane %v1900, 6
        %v2142 = vsel %vm2103, %v2139, %v2141
        %v2143 = vrot.slane %v1901, 6
        %v2144 = vsel %vm2103, %v2141, %v2143
        %v2145 = vrot.slane %v1902, 6
        %v2146 = vsel %vm2103, %v2143, %v2145
        %v2147 = vrot.slane %v1903, 6
        %v2148 = vsel %vm2103, %v2145, %v2147
        %v2149 = vrot.slane %v1904, 6
        %v2150 = vsel %vm2103, %v2147, %v2149
        %v2151 = vrot.slane %v1905, 6
        %v2152 = vsel %vm2103, %v2149, %v2151
        %v2153 = vrot.slane %v1906, 6
        %v2154 = vsel %vm2103, %v2151, %v2153
        %v2155 = vrot.slane %v1907, 6
        %v2156 = vsel %vm2103, %v2153, %v2155
        %v2157 = vrot.slane %v1908, 6
        %v2158 = vsel %vm2103, %v2155, %v2157
        %v2159 = vrot.slane %v1909, 6
        %v2160 = vsel %vm2103, %v2157, %v2159
        %v2161 = vrot.slane %v1910, 6
        %v2162 = vsel %vm2103, %v2159, %v2161
        %v2163 = vrot.slane %v1911, 6
        %v2164 = vsel %vm2103, %v2161, %v2163
        %v2165 = vrot.slane %v1912, 6
        %v2166 = vsel %vm2103, %v2163, %v2165
        %v2167 = vrot.slane %v1913, 6
        %v2168 = vsel %vm2103, %v2165, %v2167
        %v2169 = vrot.slane %v1914, 6
        %v2170 = vsel %vm2103, %v2167, %v2169
        %v2171 = vrot.slane %v1915, 6
        %v2172 = vsel %vm2103, %v2169, %v2171
        %v2173 = vrot.slane %v1916, 6
        %v2174 = vsel %vm2103, %v2171, %v2173
        %v2175 = vrot.slane %v1917, 6
        %v2176 = vsel %vm2103, %v2173, %v2175
        %v2177 = vrot.slane %v1918, 6
        %v2178 = vsel %vm2103, %v2175, %v2177
        %v2179 = vrot.slane %v1919, 6
        %v2180 = vsel %vm2103, %v2177, %v2179
        %v2181 = vrot.slane %v1920, 6
        %v2182 = vsel %vm2103, %v2179, %v2181
        %v2183 = vrot.slane %v1921, 6
        %v2184 = vsel %vm2103, %v2181, %v2183
        %v2185 = vrot.slane %v1922, 6
        %v2186 = vsel %vm2103, %v2183, %v2185
        %v2187 = vrot.slane %v1923, 6
        %v2188 = vsel %vm2103, %v2185, %v2187
        %v2189 = vrot.slane %v1924, 6
        %v2190 = vsel %vm2103, %v2187, %v2189
        %v2191 = vrot.slane %v1925, 6
        %v2192 = vsel %vm2103, %v2189, %v2191
        %v2193 = vrot.slane %v1926, 6
        %v2194 = vsel %vm2103, %v2191, %v2193
        %v2195 = vrot.slane %v1927, 6
        %v2196 = vsel %vm2103, %v2193, %v2195
        %v2197 = vrot.slane %v1928, 6
        %v2198 = vsel %vm2103, %v2195, %v2197
        %v2199 = vrot.slane %v1929, 6
        %v2200 = vsel %vm2103, %v2197, %v2199
        %v2201 = vrot.slane %v1930, 6
        %v2202 = vsel %vm2103, %v2199, %v2201
        %v2203 = vrot.slane %v1931, 6
        %v2204 = vsel %vm2103, %v2201, %v2203
        %v2205 = vrot.slane %v1932, 6
        %v2206 = vsel %vm2103, %v2203, %v2205
        %v2207 = vrot.slane %v1933, 6
        %v2208 = vsel %vm2103, %v2205, %v2207
        %v2209 = vrot.slane %v1934, 6
        %v2210 = vsel %vm2103, %v2207, %v2209
        %v2211 = vrot.slane %v1935, 6
        %v2212 = vsel %vm2103, %v2209, %v2211
        %v2213 = vrot.slane %v1936, 6
        %v2214 = vsel %vm2103, %v2211, %v2213
        %v2215 = vrot.slane %v1937, 6
        %v2216 = vsel %vm2103, %v2213, %v2215
        %v2217 = vrot.slane %v1938, 6
        %v2218 = vsel %vm2103, %v2215, %v2217
        %v2219 = vrot.slane %v1939, 6
        %v2220 = vsel %vm2103, %v2217, %v2219
        %v2221 = vrot.slane %v1940, 6
        %v2222 = vsel %vm2103, %v2219, %v2221
        %v2223 = vrot.slane %v1941, 6
        %v2224 = vsel %vm2103, %v2221, %v2223
        %v2225 = vrot.slane %v1942, 6
        %v2226 = vsel %vm2103, %v2223, %v2225
        %v2227 = vrot.slane %v1943, 6
        %v2228 = vsel %vm2103, %v2225, %v2227
        %v2229 = vrot.slane %v1944, 6
        %v2230 = vsel %vm2103, %v2227, %v2229
        %v2231 = vrot.slane %v1945, 6
        %v2232 = vsel %vm2103, %v2229, %v2231
        %v2233 = vrot.slane %v1946, 6
        %v2234 = vsel %vm2103, %v2231, %v2233
        %v2235 = vrot.slane %v1947, 6
        %v2236 = vsel %vm2103, %v2233, %v2235
        %v2237 = vrot.slane %v1948, 6
        %v2238 = vsel %vm2103, %v2235, %v2237
        %v2239 = vrot.slane %v1949, 6
        %v2240 = vsel %vm2103, %v2237, %v2239
        %v2241 = vrot.slane %v1950, 6
        %v2242 = vsel %vm2103, %v2239, %v2241
        %v2243 = vrot.slane %v1951, 6
        %v2244 = vsel %vm2103, %v2241, %v2243
        %v2245 = vrot.slane %v1952, 6
        %v2246 = vsel %vm2103, %v2243, %v2245
        %v2247 = vrot.slane %v1953, 6
        %v2248 = vsel %vm2103, %v2245, %v2247
        %v2249 = vrot.slane %v1954, 6
        %v2250 = vsel %vm2103, %v2247, %v2249
        %v2251 = vrot.slane %v1955, 6
        %v2252 = vsel %vm2103, %v2249, %v2251
        %v2253 = vrot.slane %v1956, 6
        %v2254 = vsel %vm2103, %v2251, %v2253
        %v2255 = vrot.slane %v1957, 6
        %v2256 = vsel %vm2103, %v2253, %v2255
        %v2257 = vrot.slane %v1958, 6
        %v2258 = vsel %vm2103, %v2255, %v2257
        %v2259 = vrot.slane %v1959, 6
        %v2260 = vsel %vm2103, %v2257, %v2259
        %v2261 = vrot.slane %v1960, 6
        %v2262 = vsel %vm2103, %v2259, %v2261
        %v2263 = vrot.slane %v1961, 6
        %v2264 = vsel %vm2103, %v2261, %v2263
        %v2265 = vrot.slane %v1962, 6
        %v2266 = vsel %vm2103, %v2263, %v2265
        %v2267 = vrot.slane %v1963, 6
        %v2268 = vsel %vm2103, %v2265, %v2267
        %v2269 = vrot.slane %v1964, 6
        %v2270 = vsel %vm2103, %v2267, %v2269
        %v2271 = vrot.slane %v1965, 6
        %v2272 = vsel %vm2103, %v2269, %v2271
        %v2273 = vrot.slane %v1966, 6
        %v2274 = vsel %vm2103, %v2271, %v2273
        %v2275 = vrot.slane %v1967, 6
        %v2276 = vsel %vm2103, %v2273, %v2275
        %v2277 = vrot.slane %v1968, 6
        %v2278 = vsel %vm2103, %v2275, %v2277
        %v2279 = vrot.slane %v1969, 6
        %v2280 = vsel %vm2103, %v2277, %v2279
        %v2281 = vrot.slane %v1970, 6
        %v2282 = vsel %vm2103, %v2279, %v2281
        %v2283 = vrot.slane %v1971, 6
        %v2284 = vsel %vm2103, %v2281, %v2283
        %v2285 = vrot.slane %v1972, 6
        %v2286 = vsel %vm2103, %v2283, %v2285
        %v2287 = vrot.slane %v1973, 6
        %v2288 = vsel %vm2103, %v2285, %v2287
        %v2289 = vrot.slane %v1974, 6
        %v2290 = vsel %vm2103, %v2287, %v2289
        %v2291 = vrot.slane %v1975, 6
        %v2292 = vsel %vm2103, %v2289, %v2291
        %v2293 = vrot.slane %v1976, 6
        %v2294 = vsel %vm2103, %v2291, %v2293
        %v2295 = vrot.slane %v1977, 6
        %v2296 = vsel %vm2103, %v2293, %v2295
        %v2297 = vrot.slane %v1996, 6
        %v2298 = vsel %vm2103, %v2295, %v2297
        %v2299 = vrot.slane %v1997, 6
        %v2300 = vsel %vm2103, %v2297, %v2299
        %v2301 = vrot.slane %v1998, 6
        %v2302 = vsel %vm2103, %v2299, %v2301
        %v2303 = vrot.slane %v1999, 6
        %v2304 = vsel %vm2103, %v2301, %v2303
        %v2305 = vrot.slane %v2000, 6
        %v2306 = vsel %vm2103, %v2303, %v2305
        %v2408 = vmax.f32 %v1878, %v2106
        %v2409 = vmax.f32 %v1879, %v2108
        %v2410 = vmax.f32 %v1880, %v2110
        %v2411 = vmax.f32 %v1881, %v2112
        %v2412 = vmax.f32 %v1882, %v2114
        %v2413 = vmax.f32 %v1883, %v2116
        %v2414 = vmax.f32 %v1884, %v2118
        %v2415 = vmax.f32 %v1885, %v2120
        %v2416 = vmax.f32 %v1886, %v2122
        %v2417 = vmax.f32 %v1887, %v2124
        %v2418 = vmax.f32 %v1888, %v2126
        %v2419 = vmax.f32 %v1889, %v2128
        %v2420 = vmax.f32 %v1890, %v2130
        %v2421 = vmax.f32 %v1891, %v2132
        %v2422 = vmax.f32 %v1892, %v2134
        %v2423 = vmax.f32 %v1893, %v2136
        %v2424 = vmax.f32 %v1894, %v2138
        %v2425 = vmax.f32 %v1895, %v2140
        %v2426 = vmax.f32 %v1896, %v2142
        %v2427 = vmax.f32 %v1897, %v2144
        %v2428 = vmax.f32 %v1898, %v2146
        %v2429 = vmax.f32 %v1899, %v2148
        %v2430 = vmax.f32 %v1900, %v2150
        %v2431 = vmax.f32 %v1901, %v2152
        %v2432 = vmax.f32 %v1902, %v2154
        %v2433 = vmax.f32 %v1903, %v2156
        %v2434 = vmax.f32 %v1904, %v2158
        %v2435 = vmax.f32 %v1905, %v2160
        %v2436 = vmax.f32 %v1906, %v2162
        %v2437 = vmax.f32 %v1907, %v2164
        %v2438 = vmax.f32 %v1908, %v2166
        %v2439 = vmax.f32 %v1909, %v2168
        %v2440 = vmax.f32 %v1910, %v2170
        %v2441 = vmax.f32 %v1911, %v2172
        %v2442 = vmax.f32 %v1912, %v2174
        %v2443 = vmax.f32 %v1913, %v2176
        %v2444 = vmax.f32 %v1914, %v2178
        %v2445 = vmax.f32 %v1915, %v2180
        %v2446 = vmax.f32 %v1916, %v2182
        %v2447 = vmax.f32 %v1917, %v2184
        %v2448 = vmax.f32 %v1918, %v2186
        %v2449 = vmax.f32 %v1919, %v2188
        %v2450 = vmax.f32 %v1920, %v2190
        %v2451 = vmax.f32 %v1921, %v2192
        %v2452 = vmax.f32 %v1922, %v2194
        %v2453 = vmax.f32 %v1923, %v2196
        %v2454 = vmax.f32 %v1924, %v2198
        %v2455 = vmax.f32 %v1925, %v2200
        %v2456 = vmax.f32 %v1926, %v2202
        %v2457 = vmax.f32 %v1927, %v2204
        %v2458 = vmax.f32 %v1928, %v2206
        %v2459 = vmax.f32 %v1929, %v2208
        %v2460 = vmax.f32 %v1930, %v2210
        %v2461 = vmax.f32 %v1931, %v2212
        %v2462 = vmax.f32 %v1932, %v2214
        %v2463 = vmax.f32 %v1933, %v2216
        %v2464 = vmax.f32 %v1934, %v2218
        %v2465 = vmax.f32 %v1935, %v2220
        %v2466 = vmax.f32 %v1936, %v2222
        %v2467 = vmax.f32 %v1937, %v2224
        %v2468 = vmax.f32 %v1938, %v2226
        %v2469 = vmax.f32 %v1939, %v2228
        %v2470 = vmax.f32 %v1940, %v2230
        %v2471 = vmax.f32 %v1941, %v2232
        %v2472 = vmax.f32 %v1942, %v2234
        %v2473 = vmax.f32 %v1943, %v2236
        %v2474 = vmax.f32 %v1944, %v2238
        %v2475 = vmax.f32 %v1945, %v2240
        %v2476 = vmax.f32 %v1946, %v2242
        %v2477 = vmax.f32 %v1947, %v2244
        %v2478 = vmax.f32 %v1948, %v2246
        %v2479 = vmax.f32 %v1949, %v2248
        %v2480 = vmax.f32 %v1950, %v2250
        %v2481 = vmax.f32 %v1951, %v2252
        %v2482 = vmax.f32 %v1952, %v2254
        %v2483 = vmax.f32 %v1953, %v2256
        %v2484 = vmax.f32 %v1954, %v2258
        %v2485 = vmax.f32 %v1955, %v2260
        %v2486 = vmax.f32 %v1956, %v2262
        %v2487 = vmax.f32 %v1957, %v2264
        %v2488 = vmax.f32 %v1958, %v2266
        %v2489 = vmax.f32 %v1959, %v2268
        %v2490 = vmax.f32 %v1960, %v2270
        %v2491 = vmax.f32 %v1961, %v2272
        %v2492 = vmax.f32 %v1962, %v2274
        %v2493 = vmax.f32 %v1963, %v2276
        %v2494 = vmax.f32 %v1964, %v2278
        %v2495 = vmax.f32 %v1965, %v2280
        %v2496 = vmax.f32 %v1966, %v2282
        %v2497 = vmax.f32 %v1967, %v2284
        %v2498 = vmax.f32 %v1968, %v2286
        %v2499 = vmax.f32 %v1969, %v2288
        %v2500 = vmax.f32 %v1970, %v2290
        %v2501 = vmax.f32 %v1971, %v2292
        %v2502 = vmax.f32 %v1972, %v2294
        %v2503 = vmax.f32 %v1973, %v2296
        %v2504 = vmax.f32 %v1974, %v2298
        %v2505 = vmax.f32 %v1975, %v2300
        %v2506 = vmax.f32 %v1976, %v2302
        %v2507 = vmax.f32 %v1977, %v2304
        %v2508 = vmax.f32 %v1978, %v2306
        %v2509 = vld [vmem:[#allocation9] sm:$0xff]
        %v2510 = vld [vmem:[#allocation9 + $0x8] sm:$0xff]
        %v2511 = vld [vmem:[#allocation9 + $0x10] sm:$0xff]
        %v2512 = vld [vmem:[#allocation9 + $0x18] sm:$0xf]
        %v2513 = vld [vmem:[#allocation9 + $0x1c] sm:$0xff]
        %v2514 = vld [vmem:[#allocation9 + $0x24] sm:$0xff]
        %v2515 = vld [vmem:[#allocation9 + $0x2c] sm:$0xff]
        %v2516 = vld [vmem:[#allocation9 + $0x34] sm:$0xf]
        %v2517 = vld [vmem:[#allocation9 + $0x38] sm:$0xff]
        %v2518 = vld [vmem:[#allocation9 + $0x40] sm:$0xff]
        %v2519 = vld [vmem:[#allocation9 + $0x48] sm:$0xff]
        %v2520 = vld [vmem:[#allocation9 + $0x50] sm:$0xf]
        %v2521 = vld [vmem:[#allocation9 + $0x54] sm:$0xff]
        %v2522 = vld [vmem:[#allocation9 + $0x5c] sm:$0xff]
        %v2523 = vld [vmem:[#allocation9 + $0x64] sm:$0xff]
        %v2524 = vld [vmem:[#allocation9 + $0x6c] sm:$0xf]
        %v2525 = vld [vmem:[#allocation9 + $0x70] sm:$0xff]
        %v2526 = vld [vmem:[#allocation9 + $0x78] sm:$0xff]
        %v2527 = vld [vmem:[#allocation9 + $0x80] sm:$0xff]
        %v2528 = vld [vmem:[#allocation9 + $0x88] sm:$0xf]
        %v2529 = vld [vmem:[#allocation9 + $0x8c] sm:$0xff]
        %v2530 = vld [vmem:[#allocation9 + $0x94] sm:$0xff]
        %v2531 = vld [vmem:[#allocation9 + $0x9c] sm:$0xff]
        %v2532 = vld [vmem:[#allocation9 + $0xa4] sm:$0xf]
        %v2533 = vld [vmem:[#allocation9 + $0xa8] sm:$0xff]
        %v2534 = vld [vmem:[#allocation9 + $0xb0] sm:$0xff]
        %v2535 = vld [vmem:[#allocation9 + $0xb8] sm:$0xff]
        %v2536 = vld [vmem:[#allocation9 + $0xc0] sm:$0xf]
        %v2537 = vld [vmem:[#allocation9 + $0xc4] sm:$0xff]
        %v2538 = vld [vmem:[#allocation9 + $0xcc] sm:$0xff]
        %v2539 = vld [vmem:[#allocation9 + $0xd4] sm:$0xff]
        %v2540 = vld [vmem:[#allocation9 + $0xdc] sm:$0xf]
        %v2541 = vld [vmem:[#allocation9 + $0xe0] sm:$0xff]
        %v2542 = vld [vmem:[#allocation9 + $0xe8] sm:$0xff]
        %v2543 = vld [vmem:[#allocation9 + $0xf0] sm:$0xff]
        %v2544 = vld [vmem:[#allocation9 + $0xf8] sm:$0xf]
        %v2545 = vld [vmem:[#allocation9 + $0xfc] sm:$0xff]
        %v2546 = vld [vmem:[#allocation9 + $0x104] sm:$0xff]
        %v2547 = vld [vmem:[#allocation9 + $0x10c] sm:$0xff]
        %v2548 = vld [vmem:[#allocation9 + $0x114] sm:$0xf]
        %v2549 = vld [vmem:[#allocation9 + $0x118] sm:$0xff]
        %v2550 = vld [vmem:[#allocation9 + $0x120] sm:$0xff]
        %v2551 = vld [vmem:[#allocation9 + $0x128] sm:$0xff]
        %v2552 = vld [vmem:[#allocation9 + $0x130] sm:$0xf]
        %v2553 = vld [vmem:[#allocation9 + $0x134] sm:$0xff]
        %v2554 = vld [vmem:[#allocation9 + $0x13c] sm:$0xff]
        %v2555 = vld [vmem:[#allocation9 + $0x144] sm:$0xff]
        %v2556 = vld [vmem:[#allocation9 + $0x14c] sm:$0xf]
        %v2557 = vld [vmem:[#allocation9 + $0x150] sm:$0xff]
        %v2558 = vld [vmem:[#allocation9 + $0x158] sm:$0xff]
        %v2559 = vld [vmem:[#allocation9 + $0x160] sm:$0xff]
        %v2560 = vld [vmem:[#allocation9 + $0x168] sm:$0xf]
        %v2561 = vld [vmem:[#allocation9 + $0x16c] sm:$0xff]
        %v2562 = vld [vmem:[#allocation9 + $0x174] sm:$0xff]
        %v2563 = vld [vmem:[#allocation9 + $0x17c] sm:$0xff]
        %v2564 = vld [vmem:[#allocation9 + $0x184] sm:$0xf]
        %v2565 = vld [vmem:[#allocation9 + $0x188] sm:$0xff]
        %v2566 = vld [vmem:[#allocation9 + $0x190] sm:$0xff]
        %v2567 = vld [vmem:[#allocation9 + $0x198] sm:$0xff]
        %v2568 = vld [vmem:[#allocation9 + $0x1a0] sm:$0xf]
        %v2569 = vld [vmem:[#allocation9 + $0x1a4] sm:$0xff]
        %v2570 = vld [vmem:[#allocation9 + $0x1ac] sm:$0xff]
        %v2571 = vld [vmem:[#allocation9 + $0x1b4] sm:$0xff]
        %v2572 = vld [vmem:[#allocation9 + $0x1bc] sm:$0xf]
        %v2573 = vld [vmem:[#allocation9 + $0x1c0] sm:$0xff]
        %v2574 = vld [vmem:[#allocation9 + $0x1c8] sm:$0xff]
        %v2575 = vld [vmem:[#allocation9 + $0x1d0] sm:$0xff]
        %v2576 = vld [vmem:[#allocation9 + $0x1d8] sm:$0xf]
        %v2577 = vld [vmem:[#allocation9 + $0x1dc] sm:$0xff]
        %v2578 = vld [vmem:[#allocation9 + $0x1e4] sm:$0xff]
        %v2579 = vld [vmem:[#allocation9 + $0x1ec] sm:$0xff]
        %v2580 = vld [vmem:[#allocation9 + $0x1f4] sm:$0xf]
        %v2581 = vld [vmem:[#allocation9 + $0x1f8] sm:$0xff]
        %v2582 = vld [vmem:[#allocation9 + $0x200] sm:$0xff]
        %v2583 = vld [vmem:[#allocation9 + $0x208] sm:$0xff]
        %v2584 = vld [vmem:[#allocation9 + $0x210] sm:$0xf]
        %v2585 = vld [vmem:[#allocation9 + $0x214] sm:$0xff]
        %v2586 = vld [vmem:[#allocation9 + $0x21c] sm:$0xff]
        %v2587 = vld [vmem:[#allocation9 + $0x224] sm:$0xff]
        %v2588 = vld [vmem:[#allocation9 + $0x22c] sm:$0xf]
        %v2589 = vld [vmem:[#allocation9 + $0x230] sm:$0xff]
        %v2590 = vld [vmem:[#allocation9 + $0x238] sm:$0xff]
        %v2591 = vld [vmem:[#allocation9 + $0x240] sm:$0xff]
        %v2592 = vld [vmem:[#allocation9 + $0x248] sm:$0xf]
        %v2593 = vld [vmem:[#allocation9 + $0x24c] sm:$0xff]
        %v2594 = vld [vmem:[#allocation9 + $0x254] sm:$0xff]
        %v2595 = vld [vmem:[#allocation9 + $0x25c] sm:$0xff]
        %v2596 = vld [vmem:[#allocation9 + $0x264] sm:$0xf]
        %v2597 = vld [vmem:[#allocation9 + $0x268] sm:$0xff]
        %v2598 = vld [vmem:[#allocation9 + $0x270] sm:$0xff]
        %v2599 = vld [vmem:[#allocation9 + $0x278] sm:$0xff]
        %v2600 = vld [vmem:[#allocation9 + $0x280] sm:$0xf]
        %v2601 = vld [vmem:[#allocation9 + $0x284] sm:$0xff]
        %v2602 = vld [vmem:[#allocation9 + $0x28c] sm:$0xff]
        %v2603 = vld [vmem:[#allocation9 + $0x294] sm:$0xff]
        %v2604 = vld [vmem:[#allocation9 + $0x29c] sm:$0xf]
        %v2605 = vld [vmem:[#allocation9 + $0x2a0] sm:$0xff]
        %v2606 = vld [vmem:[#allocation9 + $0x2a8] sm:$0xff]
        %v2607 = vld [vmem:[#allocation9 + $0x2b0] sm:$0xff]
        %v2608 = vld [vmem:[#allocation9 + $0x2b8] sm:$0xf]
        %v2609 = vld [vmem:[#allocation9 + $0x2bc] sm:$0xff]
        %v2610 = vld [vmem:[#allocation9 + $0x2c4] sm:$0xff]
        %v2611 = vld [vmem:[#allocation9 + $0x2cc] sm:$0xff]
        %v2612 = vld [vmem:[#allocation9 + $0x2d4] sm:$0xf]
        %v2613 = vld [vmem:[#allocation9 + $0x2d8] sm:$0xff]
        %v2614 = vld [vmem:[#allocation9 + $0x2e0] sm:$0xff]
        %v2615 = vld [vmem:[#allocation9 + $0x2e8] sm:$0xff]
        %v2616 = vld [vmem:[#allocation9 + $0x2f0] sm:$0xf]
        %v2617 = vld [vmem:[#allocation9 + $0x2f4] sm:$0xff]
        %v2618 = vld [vmem:[#allocation9 + $0x2fc] sm:$0xff]
        %v2619 = vld [vmem:[#allocation9 + $0x304] sm:$0xff]
        %v2620 = vld [vmem:[#allocation9 + $0x30c] sm:$0xf]
        %v2621 = vld [vmem:[#allocation9 + $0x310] sm:$0xff]
        %v2622 = vld [vmem:[#allocation9 + $0x318] sm:$0xff]
        %v2623 = vld [vmem:[#allocation9 + $0x320] sm:$0xff]
        %v2624 = vld [vmem:[#allocation9 + $0x328] sm:$0xf]
        %v2625 = vld [vmem:[#allocation9 + $0x32c] sm:$0xff]
        %v2626 = vld [vmem:[#allocation9 + $0x334] sm:$0xff]
        %v2627 = vld [vmem:[#allocation9 + $0x33c] sm:$0xff]
        %v2628 = vld [vmem:[#allocation9 + $0x344] sm:$0xf]
        %v2629 = vld [vmem:[#allocation9 + $0x348] sm:$0xff]
        %v2630 = vld [vmem:[#allocation9 + $0x350] sm:$0xff]
        %v2631 = vld [vmem:[#allocation9 + $0x358] sm:$0xff]
        %v2632 = vld [vmem:[#allocation9 + $0x360] sm:$0xf]
        %v2633 = vld [vmem:[#allocation9 + $0x364] sm:$0xff]
        %v2634 = vld [vmem:[#allocation9 + $0x36c] sm:$0xff]
        %v2635 = vld [vmem:[#allocation9 + $0x374] sm:$0xff]
        %v2636 = vld [vmem:[#allocation9 + $0x37c] sm:$0xf]
        %v2637 = vld [vmem:[#allocation9 + $0x380] sm:$0xff]
        %v2638 = vld [vmem:[#allocation9 + $0x388] sm:$0xff]
        %v2639 = vld [vmem:[#allocation9 + $0x390] sm:$0xff]
        %v2640 = vld [vmem:[#allocation9 + $0x398] sm:$0xf]
        %v2641 = vld [vmem:[#allocation9 + $0x39c] sm:$0xff]
        %v2642 = vld [vmem:[#allocation9 + $0x3a4] sm:$0xff]
        %v2643 = vld [vmem:[#allocation9 + $0x3ac] sm:$0xff]
        %v2644 = vld [vmem:[#allocation9 + $0x3b4] sm:$0xf]
        %v2645 = vpack.c.bf16 %v2409, %v2408
        %v2646 = vpack.c.bf16 %v2411, %v2410
        %v2647 = vpack.c.bf16 %v2413, %v2412
        %v2648 = vpack.c.bf16 %v2415, %v2414
        %v2649 = vpack.c.bf16 %v2417, %v2416
        %v2650 = vpack.c.bf16 %v2419, %v2418
        %v2651 = vpack.c.bf16 %v2421, %v2420
        %v2652 = vpack.c.bf16 %v2423, %v2422
        %v2653 = vpack.c.bf16 %v2425, %v2424
        %v2654 = vpack.c.bf16 %v2427, %v2426
        %v2655 = vpack.c.bf16 %v2429, %v2428
        %v2656 = vpack.c.bf16 %v2431, %v2430
        %v2657 = vpack.c.bf16 %v2433, %v2432
        %v2658 = vpack.c.bf16 %v2435, %v2434
        %v2659 = vpack.c.bf16 %v2437, %v2436
        %v2660 = vpack.c.bf16 %v2439, %v2438
        %v2661 = vpack.c.bf16 %v2441, %v2440
        %v2662 = vpack.c.bf16 %v2443, %v2442
        %v2663 = vpack.c.bf16 %v2445, %v2444
        %v2664 = vpack.c.bf16 %v2447, %v2446
        %v2665 = vpack.c.bf16 %v2449, %v2448
        %v2666 = vpack.c.bf16 %v2451, %v2450
        %v2667 = vpack.c.bf16 %v2453, %v2452
        %v2668 = vpack.c.bf16 %v2455, %v2454
        %v2669 = vpack.c.bf16 %v2457, %v2456
        %v2670 = vpack.c.bf16 %v2459, %v2458
        %v2671 = vpack.c.bf16 %v2461, %v2460
        %v2672 = vpack.c.bf16 %v2463, %v2462
        %v2673 = vpack.c.bf16 %v2465, %v2464
        %v2674 = vpack.c.bf16 %v2467, %v2466
        %v2675 = vpack.c.bf16 %v2469, %v2468
        %v2676 = vpack.c.bf16 %v2471, %v2470
        %v2677 = vpack.c.bf16 %v2473, %v2472
        %v2678 = vpack.c.bf16 %v2475, %v2474
        %v2679 = vpack.c.bf16 %v2477, %v2476
        %v2680 = vpack.c.bf16 %v2479, %v2478
        %v2681 = vpack.c.bf16 %v2481, %v2480
        %v2682 = vpack.c.bf16 %v2483, %v2482
        %v2683 = vpack.c.bf16 %v2485, %v2484
        %v2684 = vpack.c.bf16 %v2487, %v2486
        %v2685 = vpack.c.bf16 %v2489, %v2488
        %v2686 = vpack.c.bf16 %v2491, %v2490
        %v2687 = vpack.c.bf16 %v2493, %v2492
        %v2688 = vpack.c.bf16 %v2495, %v2494
        %v2689 = vpack.c.bf16 %v2497, %v2496
        %v2690 = vpack.c.bf16 %v2499, %v2498
        %v2691 = vpack.c.bf16 %v2501, %v2500
        %v2692 = vpack.c.bf16 %v2503, %v2502
        %v2693 = vpack.c.bf16 %v2505, %v2504
        %v2694 = vpack.c.bf16 %v2507, %v2506
        %v2695 = vpack.c.bf16 %v2508, %v2508
        %v2832 = vunpack.c.l.b16 %v2509
        %v2833 = vunpack.c.h.b16 %v2509
        %v2834 = vunpack.c.l.b16 %v2510
        %v2835 = vunpack.c.h.b16 %v2510
        %v2836 = vunpack.c.l.b16 %v2511
        %v2837 = vunpack.c.h.b16 %v2511
        %v2838 = vunpack.c.l.b16 %v2512
        %v2839 = vunpack.c.l.b16 %v2513
        %v2840 = vunpack.c.h.b16 %v2513
        %v2841 = vunpack.c.l.b16 %v2514
        %v2842 = vunpack.c.h.b16 %v2514
        %v2843 = vunpack.c.l.b16 %v2515
        %v2844 = vunpack.c.h.b16 %v2515
        %v2845 = vunpack.c.l.b16 %v2516
        %v2846 = vunpack.c.l.b16 %v2517
        %v2847 = vunpack.c.h.b16 %v2517
        %v2848 = vunpack.c.l.b16 %v2518
        %v2849 = vunpack.c.h.b16 %v2518
        %v2850 = vunpack.c.l.b16 %v2519
        %v2851 = vunpack.c.h.b16 %v2519
        %v2852 = vunpack.c.l.b16 %v2520
        %v2853 = vunpack.c.l.b16 %v2521
        %v2854 = vunpack.c.h.b16 %v2521
        %v2855 = vunpack.c.l.b16 %v2522
        %v2856 = vunpack.c.h.b16 %v2522
        %v2857 = vunpack.c.l.b16 %v2523
        %v2858 = vunpack.c.h.b16 %v2523
        %v2859 = vunpack.c.l.b16 %v2524
        %v2860 = vunpack.c.l.b16 %v2525
        %v2861 = vunpack.c.h.b16 %v2525
        %v2862 = vunpack.c.l.b16 %v2526
        %v2863 = vunpack.c.h.b16 %v2526
        %v2864 = vunpack.c.l.b16 %v2527
        %v2865 = vunpack.c.h.b16 %v2527
        %v2866 = vunpack.c.l.b16 %v2528
        %v2867 = vunpack.c.l.b16 %v2529
        %v2868 = vunpack.c.h.b16 %v2529
        %v2869 = vunpack.c.l.b16 %v2530
        %v2870 = vunpack.c.h.b16 %v2530
        %v2871 = vunpack.c.l.b16 %v2531
        %v2872 = vunpack.c.h.b16 %v2531
        %v2873 = vunpack.c.l.b16 %v2532
        %v2874 = vunpack.c.l.b16 %v2533
        %v2875 = vunpack.c.h.b16 %v2533
        %v2876 = vunpack.c.l.b16 %v2534
        %v2877 = vunpack.c.h.b16 %v2534
        %v2878 = vunpack.c.l.b16 %v2535
        %v2879 = vunpack.c.h.b16 %v2535
        %v2880 = vunpack.c.l.b16 %v2536
        %v2881 = vunpack.c.l.b16 %v2537
        %v2882 = vunpack.c.h.b16 %v2537
        %v2883 = vunpack.c.l.b16 %v2538
        %v2884 = vunpack.c.h.b16 %v2538
        %v2885 = vunpack.c.l.b16 %v2539
        %v2886 = vunpack.c.h.b16 %v2539
        %v2887 = vunpack.c.l.b16 %v2540
        %v2888 = vunpack.c.l.b16 %v2541
        %v2889 = vunpack.c.h.b16 %v2541
        %v2890 = vunpack.c.l.b16 %v2542
        %v2891 = vunpack.c.h.b16 %v2542
        %v2892 = vunpack.c.l.b16 %v2543
        %v2893 = vunpack.c.h.b16 %v2543
        %v2894 = vunpack.c.l.b16 %v2544
        %v2895 = vunpack.c.l.b16 %v2545
        %v2896 = vunpack.c.h.b16 %v2545
        %v2897 = vunpack.c.l.b16 %v2546
        %v2898 = vunpack.c.h.b16 %v2546
        %v2899 = vunpack.c.l.b16 %v2547
        %v2900 = vunpack.c.h.b16 %v2547
        %v2901 = vunpack.c.l.b16 %v2548
        %v2902 = vunpack.c.l.b16 %v2549
        %v2903 = vunpack.c.h.b16 %v2549
        %v2904 = vunpack.c.l.b16 %v2550
        %v2905 = vunpack.c.h.b16 %v2550
        %v2906 = vunpack.c.l.b16 %v2551
        %v2907 = vunpack.c.h.b16 %v2551
        %v2908 = vunpack.c.l.b16 %v2552
        %v2909 = vunpack.c.l.b16 %v2553
        %v2910 = vunpack.c.h.b16 %v2553
        %v2911 = vunpack.c.l.b16 %v2554
        %v2912 = vunpack.c.h.b16 %v2554
        %v2913 = vunpack.c.l.b16 %v2555
        %v2914 = vunpack.c.h.b16 %v2555
        %v2915 = vunpack.c.l.b16 %v2556
        %v2916 = vunpack.c.l.b16 %v2557
        %v2917 = vunpack.c.h.b16 %v2557
        %v2918 = vunpack.c.l.b16 %v2558
        %v2919 = vunpack.c.h.b16 %v2558
        %v2920 = vunpack.c.l.b16 %v2559
        %v2921 = vunpack.c.h.b16 %v2559
        %v2922 = vunpack.c.l.b16 %v2560
        %v2923 = vunpack.c.l.b16 %v2561
        %v2924 = vunpack.c.h.b16 %v2561
        %v2925 = vunpack.c.l.b16 %v2562
        %v2926 = vunpack.c.h.b16 %v2562
        %v2927 = vunpack.c.l.b16 %v2563
        %v2928 = vunpack.c.h.b16 %v2563
        %v2929 = vunpack.c.l.b16 %v2564
        %v2930 = vunpack.c.l.b16 %v2565
        %v2931 = vunpack.c.h.b16 %v2565
        %v2932 = vunpack.c.l.b16 %v2566
        %v2933 = vunpack.c.h.b16 %v2566
        %v2934 = vunpack.c.l.b16 %v2567
        %v2935 = vunpack.c.h.b16 %v2567
        %v2936 = vunpack.c.l.b16 %v2568
        %v2937 = vunpack.c.l.b16 %v2569
        %v2938 = vunpack.c.h.b16 %v2569
        %v2939 = vunpack.c.l.b16 %v2570
        %v2940 = vunpack.c.h.b16 %v2570
        %v2941 = vunpack.c.l.b16 %v2571
        %v2942 = vunpack.c.h.b16 %v2571
        %v2943 = vunpack.c.l.b16 %v2572
        %v2944 = vunpack.c.l.b16 %v2573
        %v2945 = vunpack.c.h.b16 %v2573
        %v2946 = vunpack.c.l.b16 %v2574
        %v2947 = vunpack.c.h.b16 %v2574
        %v2948 = vunpack.c.l.b16 %v2575
        %v2949 = vunpack.c.h.b16 %v2575
        %v2950 = vunpack.c.l.b16 %v2576
        %v2951 = vunpack.c.l.b16 %v2577
        %v2952 = vunpack.c.h.b16 %v2577
        %v2953 = vunpack.c.l.b16 %v2578
        %v2954 = vunpack.c.h.b16 %v2578
        %v2955 = vunpack.c.l.b16 %v2579
        %v2956 = vunpack.c.h.b16 %v2579
        %v2957 = vunpack.c.l.b16 %v2580
        %v2958 = vunpack.c.l.b16 %v2581
        %v2959 = vunpack.c.h.b16 %v2581
        %v2960 = vunpack.c.l.b16 %v2582
        %v2961 = vunpack.c.h.b16 %v2582
        %v2962 = vunpack.c.l.b16 %v2583
        %v2963 = vunpack.c.h.b16 %v2583
        %v2964 = vunpack.c.l.b16 %v2584
        %v2965 = vunpack.c.l.b16 %v2585
        %v2966 = vunpack.c.h.b16 %v2585
        %v2967 = vunpack.c.l.b16 %v2586
        %v2968 = vunpack.c.h.b16 %v2586
        %v2969 = vunpack.c.l.b16 %v2587
        %v2970 = vunpack.c.h.b16 %v2587
        %v2971 = vunpack.c.l.b16 %v2588
        %v2972 = vunpack.c.l.b16 %v2589
        %v2973 = vunpack.c.h.b16 %v2589
        %v2974 = vunpack.c.l.b16 %v2590
        %v2975 = vunpack.c.h.b16 %v2590
        %v2976 = vunpack.c.l.b16 %v2591
        %v2977 = vunpack.c.h.b16 %v2591
        %v2978 = vunpack.c.l.b16 %v2592
        %v2979 = vunpack.c.l.b16 %v2593
        %v2980 = vunpack.c.h.b16 %v2593
        %v2981 = vunpack.c.l.b16 %v2594
        %v2982 = vunpack.c.h.b16 %v2594
        %v2983 = vunpack.c.l.b16 %v2595
        %v2984 = vunpack.c.h.b16 %v2595
        %v2985 = vunpack.c.l.b16 %v2596
        %v2986 = vunpack.c.l.b16 %v2597
        %v2987 = vunpack.c.h.b16 %v2597
        %v2988 = vunpack.c.l.b16 %v2598
        %v2989 = vunpack.c.h.b16 %v2598
        %v2990 = vunpack.c.l.b16 %v2599
        %v2991 = vunpack.c.h.b16 %v2599
        %v2992 = vunpack.c.l.b16 %v2600
        %v2993 = vunpack.c.l.b16 %v2601
        %v2994 = vunpack.c.h.b16 %v2601
        %v2995 = vunpack.c.l.b16 %v2602
        %v2996 = vunpack.c.h.b16 %v2602
        %v2997 = vunpack.c.l.b16 %v2603
        %v2998 = vunpack.c.h.b16 %v2603
        %v2999 = vunpack.c.l.b16 %v2604
        %v3000 = vunpack.c.l.b16 %v2605
        %v3001 = vunpack.c.h.b16 %v2605
        %v3002 = vunpack.c.l.b16 %v2606
        %v3003 = vunpack.c.h.b16 %v2606
        %v3004 = vunpack.c.l.b16 %v2607
        %v3005 = vunpack.c.h.b16 %v2607
        %v3006 = vunpack.c.l.b16 %v2608
        %v3007 = vunpack.c.l.b16 %v2609
        %v3008 = vunpack.c.h.b16 %v2609
        %v3009 = vunpack.c.l.b16 %v2610
        %v3010 = vunpack.c.h.b16 %v2610
        %v3011 = vunpack.c.l.b16 %v2611
        %v3012 = vunpack.c.h.b16 %v2611
        %v3013 = vunpack.c.l.b16 %v2612
        %v3014 = vunpack.c.l.b16 %v2613
        %v3015 = vunpack.c.h.b16 %v2613
        %v3016 = vunpack.c.l.b16 %v2614
        %v3017 = vunpack.c.h.b16 %v2614
        %v3018 = vunpack.c.l.b16 %v2615
        %v3019 = vunpack.c.h.b16 %v2615
        %v3020 = vunpack.c.l.b16 %v2616
        %v3021 = vunpack.c.l.b16 %v2617
        %v3022 = vunpack.c.h.b16 %v2617
        %v3023 = vunpack.c.l.b16 %v2618
        %v3024 = vunpack.c.h.b16 %v2618
        %v3025 = vunpack.c.l.b16 %v2619
        %v3026 = vunpack.c.h.b16 %v2619
        %v3027 = vunpack.c.l.b16 %v2620
        %v3028 = vunpack.c.l.b16 %v2621
        %v3029 = vunpack.c.h.b16 %v2621
        %v3030 = vunpack.c.l.b16 %v2622
        %v3031 = vunpack.c.h.b16 %v2622
        %v3032 = vunpack.c.l.b16 %v2623
        %v3033 = vunpack.c.h.b16 %v2623
        %v3034 = vunpack.c.l.b16 %v2624
        %v3035 = vunpack.c.l.b16 %v2625
        %v3036 = vunpack.c.h.b16 %v2625
        %v3037 = vunpack.c.l.b16 %v2626
        %v3038 = vunpack.c.h.b16 %v2626
        %v3039 = vunpack.c.l.b16 %v2627
        %v3040 = vunpack.c.h.b16 %v2627
        %v3041 = vunpack.c.l.b16 %v2628
        %v3042 = vunpack.c.l.b16 %v2629
        %v3043 = vunpack.c.h.b16 %v2629
        %v3044 = vunpack.c.l.b16 %v2630
        %v3045 = vunpack.c.h.b16 %v2630
        %v3046 = vunpack.c.l.b16 %v2631
        %v3047 = vunpack.c.h.b16 %v2631
        %v3048 = vunpack.c.l.b16 %v2632
        %v3049 = vunpack.c.l.b16 %v2633
        %v3050 = vunpack.c.h.b16 %v2633
        %v3051 = vunpack.c.l.b16 %v2634
        %v3052 = vunpack.c.h.b16 %v2634
        %v3053 = vunpack.c.l.b16 %v2635
        %v3054 = vunpack.c.h.b16 %v2635
        %v3055 = vunpack.c.l.b16 %v2636
        %v3056 = vunpack.c.l.b16 %v2637
        %v3057 = vunpack.c.h.b16 %v2637
        %v3058 = vunpack.c.l.b16 %v2638
        %v3059 = vunpack.c.h.b16 %v2638
        %v3060 = vunpack.c.l.b16 %v2639
        %v3061 = vunpack.c.h.b16 %v2639
        %v3062 = vunpack.c.l.b16 %v2640
        %v3063 = vunpack.c.l.b16 %v2641
        %v3064 = vunpack.c.h.b16 %v2641
        %v3065 = vunpack.c.l.b16 %v2642
        %v3066 = vunpack.c.h.b16 %v2642
        %v3067 = vunpack.c.l.b16 %v2643
        %v3068 = vunpack.c.h.b16 %v2643
        %v3069 = vunpack.c.l.b16 %v2644
        %v3070 = vpack.c.b16 %v2839, %v2832
        %v3071 = vpack.c.b16 %v2840, %v2833
        %v3072 = vpack.c.b16 %v2841, %v2834
        %v3073 = vpack.c.b16 %v2842, %v2835
        %v3074 = vpack.c.b16 %v2843, %v2836
        %v3075 = vpack.c.b16 %v2844, %v2837
        %v3076 = vpack.c.b16 %v2845, %v2838
        %v3077 = vpack.c.b16 %v2853, %v2846
        %v3078 = vpack.c.b16 %v2854, %v2847
        %v3079 = vpack.c.b16 %v2855, %v2848
        %v3080 = vpack.c.b16 %v2856, %v2849
        %v3081 = vpack.c.b16 %v2857, %v2850
        %v3082 = vpack.c.b16 %v2858, %v2851
        %v3083 = vpack.c.b16 %v2859, %v2852
        %v3084 = vpack.c.b16 %v2867, %v2860
        %v3085 = vpack.c.b16 %v2868, %v2861
        %v3086 = vpack.c.b16 %v2869, %v2862
        %v3087 = vpack.c.b16 %v2870, %v2863
        %v3088 = vpack.c.b16 %v2871, %v2864
        %v3089 = vpack.c.b16 %v2872, %v2865
        %v3090 = vpack.c.b16 %v2873, %v2866
        %v3091 = vpack.c.b16 %v2881, %v2874
        %v3092 = vpack.c.b16 %v2882, %v2875
        %v3093 = vpack.c.b16 %v2883, %v2876
        %v3094 = vpack.c.b16 %v2884, %v2877
        %v3095 = vpack.c.b16 %v2885, %v2878
        %v3096 = vpack.c.b16 %v2886, %v2879
        %v3097 = vpack.c.b16 %v2887, %v2880
        %v3098 = vpack.c.b16 %v2895, %v2888
        %v3099 = vpack.c.b16 %v2896, %v2889
        %v3100 = vpack.c.b16 %v2897, %v2890
        %v3101 = vpack.c.b16 %v2898, %v2891
        %v3102 = vpack.c.b16 %v2899, %v2892
        %v3103 = vpack.c.b16 %v2900, %v2893
        %v3104 = vpack.c.b16 %v2901, %v2894
        %v3105 = vpack.c.b16 %v2909, %v2902
        %v3106 = vpack.c.b16 %v2910, %v2903
        %v3107 = vpack.c.b16 %v2911, %v2904
        %v3108 = vpack.c.b16 %v2912, %v2905
        %v3109 = vpack.c.b16 %v2913, %v2906
        %v3110 = vpack.c.b16 %v2914, %v2907
        %v3111 = vpack.c.b16 %v2915, %v2908
        %v3112 = vpack.c.b16 %v2923, %v2916
        %v3113 = vpack.c.b16 %v2924, %v2917
        %v3114 = vpack.c.b16 %v2925, %v2918
        %v3115 = vpack.c.b16 %v2926, %v2919
        %v3116 = vpack.c.b16 %v2927, %v2920
        %v3117 = vpack.c.b16 %v2928, %v2921
        %v3118 = vpack.c.b16 %v2929, %v2922
        %v3119 = vpack.c.b16 %v2937, %v2930
        %v3120 = vpack.c.b16 %v2938, %v2931
        %v3121 = vpack.c.b16 %v2939, %v2932
        %v3122 = vpack.c.b16 %v2940, %v2933
        %v3123 = vpack.c.b16 %v2941, %v2934
        %v3124 = vpack.c.b16 %v2942, %v2935
        %v3125 = vpack.c.b16 %v2943, %v2936
        %v3126 = vpack.c.b16 %v2951, %v2944
        %v3127 = vpack.c.b16 %v2952, %v2945
        %v3128 = vpack.c.b16 %v2953, %v2946
        %v3129 = vpack.c.b16 %v2954, %v2947
        %v3130 = vpack.c.b16 %v2955, %v2948
        %v3131 = vpack.c.b16 %v2956, %v2949
        %v3132 = vpack.c.b16 %v2957, %v2950
        %v3133 = vpack.c.b16 %v2965, %v2958
        %v3134 = vpack.c.b16 %v2966, %v2959
        %v3135 = vpack.c.b16 %v2967, %v2960
        %v3136 = vpack.c.b16 %v2968, %v2961
        %v3137 = vpack.c.b16 %v2969, %v2962
        %v3138 = vpack.c.b16 %v2970, %v2963
        %v3139 = vpack.c.b16 %v2971, %v2964
        %v3140 = vpack.c.b16 %v2979, %v2972
        %v3141 = vpack.c.b16 %v2980, %v2973
        %v3142 = vpack.c.b16 %v2981, %v2974
        %v3143 = vpack.c.b16 %v2982, %v2975
        %v3144 = vpack.c.b16 %v2983, %v2976
        %v3145 = vpack.c.b16 %v2984, %v2977
        %v3146 = vpack.c.b16 %v2985, %v2978
        %v3147 = vpack.c.b16 %v2993, %v2986
        %v3148 = vpack.c.b16 %v2994, %v2987
        %v3149 = vpack.c.b16 %v2995, %v2988
        %v3150 = vpack.c.b16 %v2996, %v2989
        %v3151 = vpack.c.b16 %v2997, %v2990
        %v3152 = vpack.c.b16 %v2998, %v2991
        %v3153 = vpack.c.b16 %v2999, %v2992
        %v3154 = vpack.c.b16 %v3007, %v3000
        %v3155 = vpack.c.b16 %v3008, %v3001
        %v3156 = vpack.c.b16 %v3009, %v3002
        %v3157 = vpack.c.b16 %v3010, %v3003
        %v3158 = vpack.c.b16 %v3011, %v3004
        %v3159 = vpack.c.b16 %v3012, %v3005
        %v3160 = vpack.c.b16 %v3013, %v3006
        %v3161 = vpack.c.b16 %v3021, %v3014
        %v3162 = vpack.c.b16 %v3022, %v3015
        %v3163 = vpack.c.b16 %v3023, %v3016
        %v3164 = vpack.c.b16 %v3024, %v3017
        %v3165 = vpack.c.b16 %v3025, %v3018
        %v3166 = vpack.c.b16 %v3026, %v3019
        %v3167 = vpack.c.b16 %v3027, %v3020
        %v3168 = vpack.c.b16 %v3035, %v3028
        %v3169 = vpack.c.b16 %v3036, %v3029
        %v3170 = vpack.c.b16 %v3037, %v3030
        %v3171 = vpack.c.b16 %v3038, %v3031
        %v3172 = vpack.c.b16 %v3039, %v3032
        %v3173 = vpack.c.b16 %v3040, %v3033
        %v3174 = vpack.c.b16 %v3041, %v3034
        %v3175 = vpack.c.b16 %v3049, %v3042
        %v3176 = vpack.c.b16 %v3050, %v3043
        %v3177 = vpack.c.b16 %v3051, %v3044
        %v3178 = vpack.c.b16 %v3052, %v3045
        %v3179 = vpack.c.b16 %v3053, %v3046
        %v3180 = vpack.c.b16 %v3054, %v3047
        %v3181 = vpack.c.b16 %v3055, %v3048
        %v3182 = vpack.c.b16 %v3063, %v3056
        %v3183 = vpack.c.b16 %v3064, %v3057
        %v3184 = vpack.c.b16 %v3065, %v3058
        %v3185 = vpack.c.b16 %v3066, %v3059
        %v3186 = vpack.c.b16 %v3067, %v3060
        %v3187 = vpack.c.b16 %v3068, %v3061
        %v3188 = vpack.c.b16 %v3069, %v3062
        %vm3291 = vcmask 318464
        %v3293 = vsel %vm3291, %v3076, 0
        %v3296 = vsel %vm3291, %v3083, 0
        %v3299 = vsel %vm3291, %v3090, 0
        %v3302 = vsel %vm3291, %v3097, 0
        %v3305 = vsel %vm3291, %v3104, 0
        %v3308 = vsel %vm3291, %v3111, 0
        %v3311 = vsel %vm3291, %v3118, 0
        %v3314 = vsel %vm3291, %v3125, 0
        %v3317 = vsel %vm3291, %v3132, 0
        %v3320 = vsel %vm3291, %v3139, 0
        %v3323 = vsel %vm3291, %v3146, 0
        %v3326 = vsel %vm3291, %v3153, 0
        %v3329 = vsel %vm3291, %v3160, 0
        %v3332 = vsel %vm3291, %v3167, 0
        %v3335 = vsel %vm3291, %v3174, 0
        %v3338 = vsel %vm3291, %v3181, 0
        %v3341 = vsel %vm3291, %v3188, 0
        %vm3343 = vcmask 1042432
        %v3344 = vsel %vm3343, 4294967295, 65535
        %v3345 = vsel %vm906, %v3344, 0
        %v3347 = vand.u32 %v2695, %v3345
        %3349 = vmatprep.subr.bf16.mxu0 0
        %3350 = vmatpush1.bf16.msra.mxu0 %v2645
        %3351 = vmatprep.subr.bf16.mxu0 0
        %3352 = vmatpush1.bf16.msra.mxu0 %v2646
        %3353 = vmatprep.subr.bf16.mxu0 0
        %3354 = vmatpush1.bf16.msra.mxu0 %v2647
        %3355 = vmatprep.subr.bf16.mxu0 0
        %3356 = vmatpush1.bf16.msra.mxu0 %v2648
        %3357 = vmatprep.subr.bf16.mxu0 0
        %3358 = vmatpush1.bf16.msra.mxu0 %v2649
        %3359 = vmatprep.subr.bf16.mxu0 0
        %3360 = vmatpush1.bf16.msra.mxu0 %v2650
        %3361 = vmatprep.subr.bf16.mxu0 0
        %3362 = vmatpush1.bf16.msra.mxu0 %v2651
        %3363 = vmatprep.subr.bf16.mxu0 0
        %3364 = vmatpush1.bf16.msra.mxu0 %v2652
        %3365 = vmatprep.subr.bf16.mxu0 0
        %3366 = vmatpush1.bf16.msra.mxu0 %v2653
        %3367 = vmatprep.subr.bf16.mxu0 0
        %3368 = vmatpush1.bf16.msra.mxu0 %v2654
        %3369 = vmatprep.subr.bf16.mxu0 0
        %3370 = vmatpush1.bf16.msra.mxu0 %v2655
        %3371 = vmatprep.subr.bf16.mxu0 0
        %3372 = vmatpush1.bf16.msra.mxu0 %v2656
        %3373 = vmatprep.subr.bf16.mxu0 0
        %3374 = vmatpush1.bf16.msra.mxu0 %v2657
        %3375 = vmatprep.subr.bf16.mxu0 0
        %3376 = vmatpush1.bf16.msra.mxu0 %v2658
        %3377 = vmatprep.subr.bf16.mxu0 0
        %3378 = vmatpush1.bf16.msra.mxu0 %v2659
        %3379 = vmatprep.subr.bf16.mxu0 0
        %3380 = vmatpush1.bf16.msra.mxu0 %v2660
        %3381 = vmatprep.mubr.bf16.mxu0 %v3071
        %3382 = vmatmul.mubr.bf16.gmra.mrb[0].mxu0 %v3070
        %v3383 = vpop.f32.mrb[0].mxu0
        %v3384 = vadd.f32 0.0, %v3383
        %v3385 = vpop.f32.mrb[0].mxu0
        %v3386 = vpop.f32.mrb[0].mxu0
        %v3387 = vadd.f32 0.0, %v3386
        %v3388 = vpop.f32.mrb[0].mxu0
        %3389 = vmatprep.mubr.bf16.mxu0 %v3078
        %3390 = vmatmul.mubr.bf16.gmra.mrb[0].mxu0 %v3077
        %v3391 = vpop.f32.mrb[0].mxu0
        %v3392 = vadd.f32 0.0, %v3391
        %v3393 = vpop.f32.mrb[0].mxu0
        %v3394 = vpop.f32.mrb[0].mxu0
        %v3395 = vadd.f32 0.0, %v3394
        %v3396 = vpop.f32.mrb[0].mxu0
        %3397 = vmatprep.mubr.bf16.mxu0 %v3085
        %3398 = vmatmul.mubr.bf16.gmra.mrb[0].mxu0 %v3084
        %v3399 = vpop.f32.mrb[0].mxu0
        %v3400 = vadd.f32 0.0, %v3399
        %v3401 = vpop.f32.mrb[0].mxu0
        %v3402 = vpop.f32.mrb[0].mxu0
        %v3403 = vadd.f32 0.0, %v3402
        %v3404 = vpop.f32.mrb[0].mxu0
        %3405 = vmatprep.mubr.bf16.mxu0 %v3092
        %3406 = vmatmul.mubr.bf16.gmra.mrb[0].mxu0 %v3091
        %v3407 = vpop.f32.mrb[0].mxu0
        %v3408 = vadd.f32 0.0, %v3407
        %v3409 = vpop.f32.mrb[0].mxu0
        %v3410 = vpop.f32.mrb[0].mxu0
        %v3411 = vadd.f32 0.0, %v3410
        %v3412 = vpop.f32.mrb[0].mxu0
        %3413 = vmatprep.mubr.bf16.mxu0 %v3099
        %3414 = vmatmul.mubr.bf16.gmra.mrb[0].mxu0 %v3098
        %v3415 = vpop.f32.mrb[0].mxu0
        %v3416 = vadd.f32 0.0, %v3415
        %v3417 = vpop.f32.mrb[0].mxu0
        %v3418 = vpop.f32.mrb[0].mxu0
        %v3419 = vadd.f32 0.0, %v3418
        %v3420 = vpop.f32.mrb[0].mxu0
        %3421 = vmatprep.mubr.bf16.mxu0 %v3106
        %3422 = vmatmul.mubr.bf16.gmra.mrb[0].mxu0 %v3105
        %v3423 = vpop.f32.mrb[0].mxu0
        %v3424 = vadd.f32 0.0, %v3423
        %v3425 = vpop.f32.mrb[0].mxu0
        %v3426 = vpop.f32.mrb[0].mxu0
        %v3427 = vadd.f32 0.0, %v3426
        %v3428 = vpop.f32.mrb[0].mxu0
        %3429 = vmatprep.mubr.bf16.mxu0 %v3113
        %3430 = vmatmul.mubr.bf16.gmra.mrb[0].mxu0 %v3112
        %v3431 = vpop.f32.mrb[0].mxu0
        %v3432 = vadd.f32 0.0, %v3431
        %v3433 = vpop.f32.mrb[0].mxu0
        %v3434 = vpop.f32.mrb[0].mxu0
        %v3435 = vadd.f32 0.0, %v3434
        %v3436 = vpop.f32.mrb[0].mxu0
        %3437 = vmatprep.mubr.bf16.mxu0 %v3120
        %3438 = vmatmul.mubr.bf16.gmra.mrb[0].mxu0 %v3119
        %v3439 = vpop.f32.mrb[0].mxu0
        %v3440 = vadd.f32 0.0, %v3439
        %v3441 = vpop.f32.mrb[0].mxu0
        %v3442 = vpop.f32.mrb[0].mxu0
        %v3443 = vadd.f32 0.0, %v3442
        %v3444 = vpop.f32.mrb[0].mxu0
        %3445 = vmatprep.mubr.bf16.mxu0 %v3127
        %3446 = vmatmul.mubr.bf16.gmra.mrb[0].mxu0 %v3126
        %v3447 = vpop.f32.mrb[0].mxu0
        %v3448 = vadd.f32 0.0, %v3447
        %v3449 = vpop.f32.mrb[0].mxu0
        %v3450 = vpop.f32.mrb[0].mxu0
        %v3451 = vadd.f32 0.0, %v3450
        %v3452 = vpop.f32.mrb[0].mxu0
        %3453 = vmatprep.mubr.bf16.mxu0 %v3134
        %3454 = vmatmul.mubr.bf16.gmra.mrb[0].mxu0 %v3133
        %v3455 = vpop.f32.mrb[0].mxu0
        %v3456 = vadd.f32 0.0, %v3455
        %v3457 = vpop.f32.mrb[0].mxu0
        %v3458 = vpop.f32.mrb[0].mxu0
        %v3459 = vadd.f32 0.0, %v3458
        %v3460 = vpop.f32.mrb[0].mxu0
        %3461 = vmatprep.mubr.bf16.mxu0 %v3141
        %3462 = vmatmul.mubr.bf16.gmra.mrb[0].mxu0 %v3140
        %v3463 = vpop.f32.mrb[0].mxu0
        %v3464 = vadd.f32 0.0, %v3463
        %v3465 = vpop.f32.mrb[0].mxu0
        %v3466 = vpop.f32.mrb[0].mxu0
        %v3467 = vadd.f32 0.0, %v3466
        %v3468 = vpop.f32.mrb[0].mxu0
        %3469 = vmatprep.mubr.bf16.mxu0 %v3148
        %3470 = vmatmul.mubr.bf16.gmra.mrb[0].mxu0 %v3147
        %v3471 = vpop.f32.mrb[0].mxu0
        %v3472 = vadd.f32 0.0, %v3471
        %v3473 = vpop.f32.mrb[0].mxu0
        %v3474 = vpop.f32.mrb[0].mxu0
        %v3475 = vadd.f32 0.0, %v3474
        %v3476 = vpop.f32.mrb[0].mxu0
        %3477 = vmatprep.mubr.bf16.mxu0 %v3155
        %3478 = vmatmul.mubr.bf16.gmra.mrb[0].mxu0 %v3154
        %v3479 = vpop.f32.mrb[0].mxu0
        %v3480 = vadd.f32 0.0, %v3479
        %v3481 = vpop.f32.mrb[0].mxu0
        %v3482 = vpop.f32.mrb[0].mxu0
        %v3483 = vadd.f32 0.0, %v3482
        %v3484 = vpop.f32.mrb[0].mxu0
        %3485 = vmatprep.mubr.bf16.mxu0 %v3162
        %3486 = vmatmul.mubr.bf16.gmra.mrb[0].mxu0 %v3161
        %v3487 = vpop.f32.mrb[0].mxu0
        %v3488 = vadd.f32 0.0, %v3487
        %v3489 = vpop.f32.mrb[0].mxu0
        %v3490 = vpop.f32.mrb[0].mxu0
        %v3491 = vadd.f32 0.0, %v3490
        %v3492 = vpop.f32.mrb[0].mxu0
        %3493 = vmatprep.mubr.bf16.mxu0 %v3169
        %3494 = vmatmul.mubr.bf16.gmra.mrb[0].mxu0 %v3168
        %v3495 = vpop.f32.mrb[0].mxu0
        %v3496 = vadd.f32 0.0, %v3495
        %v3497 = vpop.f32.mrb[0].mxu0
        %v3498 = vpop.f32.mrb[0].mxu0
        %v3499 = vadd.f32 0.0, %v3498
        %v3500 = vpop.f32.mrb[0].mxu0
        %3501 = vmatprep.mubr.bf16.mxu0 %v3176
        %3502 = vmatmul.mubr.bf16.gmra.mrb[0].mxu0 %v3175
        %v3503 = vpop.f32.mrb[0].mxu0
        %v3504 = vadd.f32 0.0, %v3503
        %v3505 = vpop.f32.mrb[0].mxu0
        %v3506 = vpop.f32.mrb[0].mxu0
        %v3507 = vadd.f32 0.0, %v3506
        %v3508 = vpop.f32.mrb[0].mxu0
        %3509 = vmatprep.mubr.bf16.mxu0 %v3183
        %3510 = vmatmul.mubr.bf16.gmra.mrb[0].mxu0 %v3182
        %v3511 = vpop.f32.mrb[0].mxu0
        %v3512 = vadd.f32 0.0, %v3511
        %v3513 = vpop.f32.mrb[0].mxu0
        %v3514 = vpop.f32.mrb[0].mxu0
        %v3515 = vadd.f32 0.0, %v3514
        %v3516 = vpop.f32.mrb[0].mxu0
        %3517 = vdwg.mxu0
        %3518 = vmatprep.subr.bf16.mxu0 0
        %3519 = vmatpush1.bf16.msra.mxu0 %v2661
        %3520 = vmatprep.subr.bf16.mxu0 0
        %3521 = vmatpush1.bf16.msra.mxu0 %v2662
        %3522 = vmatprep.subr.bf16.mxu0 0
        %3523 = vmatpush1.bf16.msra.mxu0 %v2663
        %3524 = vmatprep.subr.bf16.mxu0 0
        %3525 = vmatpush1.bf16.msra.mxu0 %v2664
        %3526 = vmatprep.subr.bf16.mxu0 0
        %3527 = vmatpush1.bf16.msra.mxu0 %v2665
        %3528 = vmatprep.subr.bf16.mxu0 0
        %3529 = vmatpush1.bf16.msra.mxu0 %v2666
        %3530 = vmatprep.subr.bf16.mxu0 0
        %3531 = vmatpush1.bf16.msra.mxu0 %v2667
        %3532 = vmatprep.subr.bf16.mxu0 0
        %3533 = vmatpush1.bf16.msra.mxu0 %v2668
        %3534 = vmatprep.subr.bf16.mxu0 0
        %3535 = vmatpush1.bf16.msra.mxu0 %v2669
        %3536 = vmatprep.subr.bf16.mxu0 0
        %3537 = vmatpush1.bf16.msra.mxu0 %v2670
        %3538 = vmatprep.subr.bf16.mxu0 0
        %3539 = vmatpush1.bf16.msra.mxu0 %v2671
        %3540 = vmatprep.subr.bf16.mxu0 0
        %3541 = vmatpush1.bf16.msra.mxu0 %v2672
        %3542 = vmatprep.subr.bf16.mxu0 0
        %3543 = vmatpush1.bf16.msra.mxu0 %v2673
        %3544 = vmatprep.subr.bf16.mxu0 0
        %3545 = vmatpush1.bf16.msra.mxu0 %v2674
        %3546 = vmatprep.subr.bf16.mxu0 0
        %3547 = vmatpush1.bf16.msra.mxu0 %v2675
        %3548 = vmatprep.subr.bf16.mxu0 0
        %3549 = vmatpush1.bf16.msra.mxu0 %v2676
        %3550 = vmatprep.mubr.bf16.mxu0 %v3073
        %3551 = vmatmul.mubr.bf16.gmra.mrb[0].mxu0 %v3072
        %v3552 = vpop.f32.mrb[0].mxu0
        %v3553 = vadd.f32 %v3384, %v3552
        %v3554 = vpop.f32.mrb[0].mxu0
        %v3555 = vpop.f32.mrb[0].mxu0
        %v3556 = vadd.f32 %v3387, %v3555
        %v3557 = vpop.f32.mrb[0].mxu0
        %3558 = vmatprep.mubr.bf16.mxu0 %v3080
        %3559 = vmatmul.mubr.bf16.gmra.mrb[0].mxu0 %v3079
        %v3560 = vpop.f32.mrb[0].mxu0
        %v3561 = vadd.f32 %v3392, %v3560
        %v3562 = vpop.f32.mrb[0].mxu0
        %v3563 = vpop.f32.mrb[0].mxu0
        %v3564 = vadd.f32 %v3395, %v3563
        %v3565 = vpop.f32.mrb[0].mxu0
        %3566 = vmatprep.mubr.bf16.mxu0 %v3087
        %3567 = vmatmul.mubr.bf16.gmra.mrb[0].mxu0 %v3086
        %v3568 = vpop.f32.mrb[0].mxu0
        %v3569 = vadd.f32 %v3400, %v3568
        %v3570 = vpop.f32.mrb[0].mxu0
        %v3571 = vpop.f32.mrb[0].mxu0
        %v3572 = vadd.f32 %v3403, %v3571
        %v3573 = vpop.f32.mrb[0].mxu0
        %3574 = vmatprep.mubr.bf16.mxu0 %v3094
        %3575 = vmatmul.mubr.bf16.gmra.mrb[0].mxu0 %v3093
        %v3576 = vpop.f32.mrb[0].mxu0
        %v3577 = vadd.f32 %v3408, %v3576
        %v3578 = vpop.f32.mrb[0].mxu0
        %v3579 = vpop.f32.mrb[0].mxu0
        %v3580 = vadd.f32 %v3411, %v3579
        %v3581 = vpop.f32.mrb[0].mxu0
        %3582 = vmatprep.mubr.bf16.mxu0 %v3101
        %3583 = vmatmul.mubr.bf16.gmra.mrb[0].mxu0 %v3100
        %v3584 = vpop.f32.mrb[0].mxu0
        %v3585 = vadd.f32 %v3416, %v3584
        %v3586 = vpop.f32.mrb[0].mxu0
        %v3587 = vpop.f32.mrb[0].mxu0
        %v3588 = vadd.f32 %v3419, %v3587
        %v3589 = vpop.f32.mrb[0].mxu0
        %3590 = vmatprep.mubr.bf16.mxu0 %v3108
        %3591 = vmatmul.mubr.bf16.gmra.mrb[0].mxu0 %v3107
        %v3592 = vpop.f32.mrb[0].mxu0
        %v3593 = vadd.f32 %v3424, %v3592
        %v3594 = vpop.f32.mrb[0].mxu0
        %v3595 = vpop.f32.mrb[0].mxu0
        %v3596 = vadd.f32 %v3427, %v3595
        %v3597 = vpop.f32.mrb[0].mxu0
        %3598 = vmatprep.mubr.bf16.mxu0 %v3115
        %3599 = vmatmul.mubr.bf16.gmra.mrb[0].mxu0 %v3114
        %v3600 = vpop.f32.mrb[0].mxu0
        %v3601 = vadd.f32 %v3432, %v3600
        %v3602 = vpop.f32.mrb[0].mxu0
        %v3603 = vpop.f32.mrb[0].mxu0
        %v3604 = vadd.f32 %v3435, %v3603
        %v3605 = vpop.f32.mrb[0].mxu0
        %3606 = vmatprep.mubr.bf16.mxu0 %v3122
        %3607 = vmatmul.mubr.bf16.gmra.mrb[0].mxu0 %v3121
        %v3608 = vpop.f32.mrb[0].mxu0
        %v3609 = vadd.f32 %v3440, %v3608
        %v3610 = vpop.f32.mrb[0].mxu0
        %v3611 = vpop.f32.mrb[0].mxu0
        %v3612 = vadd.f32 %v3443, %v3611
        %v3613 = vpop.f32.mrb[0].mxu0
        %3614 = vmatprep.mubr.bf16.mxu0 %v3129
        %3615 = vmatmul.mubr.bf16.gmra.mrb[0].mxu0 %v3128
        %v3616 = vpop.f32.mrb[0].mxu0
        %v3617 = vadd.f32 %v3448, %v3616
        %v3618 = vpop.f32.mrb[0].mxu0
        %v3619 = vpop.f32.mrb[0].mxu0
        %v3620 = vadd.f32 %v3451, %v3619
        %v3621 = vpop.f32.mrb[0].mxu0
        %3622 = vmatprep.mubr.bf16.mxu0 %v3136
        %3623 = vmatmul.mubr.bf16.gmra.mrb[0].mxu0 %v3135
        %v3624 = vpop.f32.mrb[0].mxu0
        %v3625 = vadd.f32 %v3456, %v3624
        %v3626 = vpop.f32.mrb[0].mxu0
        %v3627 = vpop.f32.mrb[0].mxu0
        %v3628 = vadd.f32 %v3459, %v3627
        %v3629 = vpop.f32.mrb[0].mxu0
        %3630 = vmatprep.mubr.bf16.mxu0 %v3143
        %3631 = vmatmul.mubr.bf16.gmra.mrb[0].mxu0 %v3142
        %v3632 = vpop.f32.mrb[0].mxu0
        %v3633 = vadd.f32 %v3464, %v3632
        %v3634 = vpop.f32.mrb[0].mxu0
        %v3635 = vpop.f32.mrb[0].mxu0
        %v3636 = vadd.f32 %v3467, %v3635
        %v3637 = vpop.f32.mrb[0].mxu0
        %3638 = vmatprep.mubr.bf16.mxu0 %v3150
        %3639 = vmatmul.mubr.bf16.gmra.mrb[0].mxu0 %v3149
        %v3640 = vpop.f32.mrb[0].mxu0
        %v3641 = vadd.f32 %v3472, %v3640
        %v3642 = vpop.f32.mrb[0].mxu0
        %v3643 = vpop.f32.mrb[0].mxu0
        %v3644 = vadd.f32 %v3475, %v3643
        %v3645 = vpop.f32.mrb[0].mxu0
        %3646 = vmatprep.mubr.bf16.mxu0 %v3157
        %3647 = vmatmul.mubr.bf16.gmra.mrb[0].mxu0 %v3156
        %v3648 = vpop.f32.mrb[0].mxu0
        %v3649 = vadd.f32 %v3480, %v3648
        %v3650 = vpop.f32.mrb[0].mxu0
        %v3651 = vpop.f32.mrb[0].mxu0
        %v3652 = vadd.f32 %v3483, %v3651
        %v3653 = vpop.f32.mrb[0].mxu0
        %3654 = vmatprep.mubr.bf16.mxu0 %v3164
        %3655 = vmatmul.mubr.bf16.gmra.mrb[0].mxu0 %v3163
        %v3656 = vpop.f32.mrb[0].mxu0
        %v3657 = vadd.f32 %v3488, %v3656
        %v3658 = vpop.f32.mrb[0].mxu0
        %v3659 = vpop.f32.mrb[0].mxu0
        %v3660 = vadd.f32 %v3491, %v3659
        %v3661 = vpop.f32.mrb[0].mxu0
        %3662 = vmatprep.mubr.bf16.mxu0 %v3171
        %3663 = vmatmul.mubr.bf16.gmra.mrb[0].mxu0 %v3170
        %v3664 = vpop.f32.mrb[0].mxu0
        %v3665 = vadd.f32 %v3496, %v3664
        %v3666 = vpop.f32.mrb[0].mxu0
        %v3667 = vpop.f32.mrb[0].mxu0
        %v3668 = vadd.f32 %v3499, %v3667
        %v3669 = vpop.f32.mrb[0].mxu0
        %3670 = vmatprep.mubr.bf16.mxu0 %v3178
        %3671 = vmatmul.mubr.bf16.gmra.mrb[0].mxu0 %v3177
        %v3672 = vpop.f32.mrb[0].mxu0
        %v3673 = vadd.f32 %v3504, %v3672
        %v3674 = vpop.f32.mrb[0].mxu0
        %v3675 = vpop.f32.mrb[0].mxu0
        %v3676 = vadd.f32 %v3507, %v3675
        %v3677 = vpop.f32.mrb[0].mxu0
        %3678 = vmatprep.mubr.bf16.mxu0 %v3185
        %3679 = vmatmul.mubr.bf16.gmra.mrb[0].mxu0 %v3184
        %v3680 = vpop.f32.mrb[0].mxu0
        %v3681 = vadd.f32 %v3512, %v3680
        %v3682 = vpop.f32.mrb[0].mxu0
        %v3683 = vpop.f32.mrb[0].mxu0
        %v3684 = vadd.f32 %v3515, %v3683
        %v3685 = vpop.f32.mrb[0].mxu0
        %3686 = vdwg.mxu0
        %3687 = vmatprep.subr.bf16.mxu0 0
        %3688 = vmatpush1.bf16.msra.mxu0 %v2677
        %3689 = vmatprep.subr.bf16.mxu0 0
        %3690 = vmatpush1.bf16.msra.mxu0 %v2678
        %3691 = vmatprep.subr.bf16.mxu0 0
        %3692 = vmatpush1.bf16.msra.mxu0 %v2679
        %3693 = vmatprep.subr.bf16.mxu0 0
        %3694 = vmatpush1.bf16.msra.mxu0 %v2680
        %3695 = vmatprep.subr.bf16.mxu0 0
        %3696 = vmatpush1.bf16.msra.mxu0 %v2681
        %3697 = vmatprep.subr.bf16.mxu0 0
        %3698 = vmatpush1.bf16.msra.mxu0 %v2682
        %3699 = vmatprep.subr.bf16.mxu0 0
        %3700 = vmatpush1.bf16.msra.mxu0 %v2683
        %3701 = vmatprep.subr.bf16.mxu0 0
        %3702 = vmatpush1.bf16.msra.mxu0 %v2684
        %3703 = vmatprep.subr.bf16.mxu0 0
        %3704 = vmatpush1.bf16.msra.mxu0 %v2685
        %3705 = vmatprep.subr.bf16.mxu0 0
        %3706 = vmatpush1.bf16.msra.mxu0 %v2686
        %3707 = vmatprep.subr.bf16.mxu0 0
        %3708 = vmatpush1.bf16.msra.mxu0 %v2687
        %3709 = vmatprep.subr.bf16.mxu0 0
        %3710 = vmatpush1.bf16.msra.mxu0 %v2688
        %3711 = vmatprep.subr.bf16.mxu0 0
        %3712 = vmatpush1.bf16.msra.mxu0 %v2689
        %3713 = vmatprep.subr.bf16.mxu0 0
        %3714 = vmatpush1.bf16.msra.mxu0 %v2690
        %3715 = vmatprep.subr.bf16.mxu0 0
        %3716 = vmatpush1.bf16.msra.mxu0 %v2691
        %3717 = vmatprep.subr.bf16.mxu0 0
        %3718 = vmatpush1.bf16.msra.mxu0 %v2692
        %3719 = vmatprep.mubr.bf16.mxu0 %v3075
        %3720 = vmatmul.mubr.bf16.gmra.mrb[0].mxu0 %v3074
        %v3721 = vpop.f32.mrb[0].mxu0
        %v3722 = vadd.f32 %v3553, %v3721
        %v3723 = vpop.f32.mrb[0].mxu0
        %v3724 = vpop.f32.mrb[0].mxu0
        %v3725 = vadd.f32 %v3556, %v3724
        %v3726 = vpop.f32.mrb[0].mxu0
        %3727 = vmatprep.mubr.bf16.mxu0 %v3082
        %3728 = vmatmul.mubr.bf16.gmra.mrb[0].mxu0 %v3081
        %v3729 = vpop.f32.mrb[0].mxu0
        %v3730 = vadd.f32 %v3561, %v3729
        %v3731 = vpop.f32.mrb[0].mxu0
        %v3732 = vpop.f32.mrb[0].mxu0
        %v3733 = vadd.f32 %v3564, %v3732
        %v3734 = vpop.f32.mrb[0].mxu0
        %3735 = vmatprep.mubr.bf16.mxu0 %v3089
        %3736 = vmatmul.mubr.bf16.gmra.mrb[0].mxu0 %v3088
        %v3737 = vpop.f32.mrb[0].mxu0
        %v3738 = vadd.f32 %v3569, %v3737
        %v3739 = vpop.f32.mrb[0].mxu0
        %v3740 = vpop.f32.mrb[0].mxu0
        %v3741 = vadd.f32 %v3572, %v3740
        %v3742 = vpop.f32.mrb[0].mxu0
        %3743 = vmatprep.mubr.bf16.mxu0 %v3096
        %3744 = vmatmul.mubr.bf16.gmra.mrb[0].mxu0 %v3095
        %v3745 = vpop.f32.mrb[0].mxu0
        %v3746 = vadd.f32 %v3577, %v3745
        %v3747 = vpop.f32.mrb[0].mxu0
        %v3748 = vpop.f32.mrb[0].mxu0
        %v3749 = vadd.f32 %v3580, %v3748
        %v3750 = vpop.f32.mrb[0].mxu0
        %3751 = vmatprep.mubr.bf16.mxu0 %v3103
        %3752 = vmatmul.mubr.bf16.gmra.mrb[0].mxu0 %v3102
        %v3753 = vpop.f32.mrb[0].mxu0
        %v3754 = vadd.f32 %v3585, %v3753
        %v3755 = vpop.f32.mrb[0].mxu0
        %v3756 = vpop.f32.mrb[0].mxu0
        %v3757 = vadd.f32 %v3588, %v3756
        %v3758 = vpop.f32.mrb[0].mxu0
        %3759 = vmatprep.mubr.bf16.mxu0 %v3110
        %3760 = vmatmul.mubr.bf16.gmra.mrb[0].mxu0 %v3109
        %v3761 = vpop.f32.mrb[0].mxu0
        %v3762 = vadd.f32 %v3593, %v3761
        %v3763 = vpop.f32.mrb[0].mxu0
        %v3764 = vpop.f32.mrb[0].mxu0
        %v3765 = vadd.f32 %v3596, %v3764
        %v3766 = vpop.f32.mrb[0].mxu0
        %3767 = vmatprep.mubr.bf16.mxu0 %v3117
        %3768 = vmatmul.mubr.bf16.gmra.mrb[0].mxu0 %v3116
        %v3769 = vpop.f32.mrb[0].mxu0
        %v3770 = vadd.f32 %v3601, %v3769
        %v3771 = vpop.f32.mrb[0].mxu0
        %v3772 = vpop.f32.mrb[0].mxu0
        %v3773 = vadd.f32 %v3604, %v3772
        %v3774 = vpop.f32.mrb[0].mxu0
        %3775 = vmatprep.mubr.bf16.mxu0 %v3124
        %3776 = vmatmul.mubr.bf16.gmra.mrb[0].mxu0 %v3123
        %v3777 = vpop.f32.mrb[0].mxu0
        %v3778 = vadd.f32 %v3609, %v3777
        %v3779 = vpop.f32.mrb[0].mxu0
        %v3780 = vpop.f32.mrb[0].mxu0
        %v3781 = vadd.f32 %v3612, %v3780
        %v3782 = vpop.f32.mrb[0].mxu0
        %3783 = vmatprep.mubr.bf16.mxu0 %v3131
        %3784 = vmatmul.mubr.bf16.gmra.mrb[0].mxu0 %v3130
        %v3785 = vpop.f32.mrb[0].mxu0
        %v3786 = vadd.f32 %v3617, %v3785
        %v3787 = vpop.f32.mrb[0].mxu0
        %v3788 = vpop.f32.mrb[0].mxu0
        %v3789 = vadd.f32 %v3620, %v3788
        %v3790 = vpop.f32.mrb[0].mxu0
        %3791 = vmatprep.mubr.bf16.mxu0 %v3138
        %3792 = vmatmul.mubr.bf16.gmra.mrb[0].mxu0 %v3137
        %v3793 = vpop.f32.mrb[0].mxu0
        %v3794 = vadd.f32 %v3625, %v3793
        %v3795 = vpop.f32.mrb[0].mxu0
        %v3796 = vpop.f32.mrb[0].mxu0
        %v3797 = vadd.f32 %v3628, %v3796
        %v3798 = vpop.f32.mrb[0].mxu0
        %3799 = vmatprep.mubr.bf16.mxu0 %v3145
        %3800 = vmatmul.mubr.bf16.gmra.mrb[0].mxu0 %v3144
        %v3801 = vpop.f32.mrb[0].mxu0
        %v3802 = vadd.f32 %v3633, %v3801
        %v3803 = vpop.f32.mrb[0].mxu0
        %v3804 = vpop.f32.mrb[0].mxu0
        %v3805 = vadd.f32 %v3636, %v3804
        %v3806 = vpop.f32.mrb[0].mxu0
        %3807 = vmatprep.mubr.bf16.mxu0 %v3152
        %3808 = vmatmul.mubr.bf16.gmra.mrb[0].mxu0 %v3151
        %v3809 = vpop.f32.mrb[0].mxu0
        %v3810 = vadd.f32 %v3641, %v3809
        %v3811 = vpop.f32.mrb[0].mxu0
        %v3812 = vpop.f32.mrb[0].mxu0
        %v3813 = vadd.f32 %v3644, %v3812
        %v3814 = vpop.f32.mrb[0].mxu0
        %3815 = vmatprep.mubr.bf16.mxu0 %v3159
        %3816 = vmatmul.mubr.bf16.gmra.mrb[0].mxu0 %v3158
        %v3817 = vpop.f32.mrb[0].mxu0
        %v3818 = vadd.f32 %v3649, %v3817
        %v3819 = vpop.f32.mrb[0].mxu0
        %v3820 = vpop.f32.mrb[0].mxu0
        %v3821 = vadd.f32 %v3652, %v3820
        %v3822 = vpop.f32.mrb[0].mxu0
        %3823 = vmatprep.mubr.bf16.mxu0 %v3166
        %3824 = vmatmul.mubr.bf16.gmra.mrb[0].mxu0 %v3165
        %v3825 = vpop.f32.mrb[0].mxu0
        %v3826 = vadd.f32 %v3657, %v3825
        %v3827 = vpop.f32.mrb[0].mxu0
        %v3828 = vpop.f32.mrb[0].mxu0
        %v3829 = vadd.f32 %v3660, %v3828
        %v3830 = vpop.f32.mrb[0].mxu0
        %3831 = vmatprep.mubr.bf16.mxu0 %v3173
        %3832 = vmatmul.mubr.bf16.gmra.mrb[0].mxu0 %v3172
        %v3833 = vpop.f32.mrb[0].mxu0
        %v3834 = vadd.f32 %v3665, %v3833
        %v3835 = vpop.f32.mrb[0].mxu0
        %v3836 = vpop.f32.mrb[0].mxu0
        %v3837 = vadd.f32 %v3668, %v3836
        %v3838 = vpop.f32.mrb[0].mxu0
        %3839 = vmatprep.mubr.bf16.mxu0 %v3180
        %3840 = vmatmul.mubr.bf16.gmra.mrb[0].mxu0 %v3179
        %v3841 = vpop.f32.mrb[0].mxu0
        %v3842 = vadd.f32 %v3673, %v3841
        %v3843 = vpop.f32.mrb[0].mxu0
        %v3844 = vpop.f32.mrb[0].mxu0
        %v3845 = vadd.f32 %v3676, %v3844
        %v3846 = vpop.f32.mrb[0].mxu0
        %3847 = vmatprep.mubr.bf16.mxu0 %v3187
        %3848 = vmatmul.mubr.bf16.gmra.mrb[0].mxu0 %v3186
        %v3849 = vpop.f32.mrb[0].mxu0
        %v3850 = vadd.f32 %v3681, %v3849
        %v3851 = vpop.f32.mrb[0].mxu0
        %v3852 = vpop.f32.mrb[0].mxu0
        %v3853 = vadd.f32 %v3684, %v3852
        %v3854 = vpop.f32.mrb[0].mxu0
        %3855 = vdwg.mxu0
        %3856 = vmatprep.subr.bf16.mxu0 0
        %3857 = vmatpush1.bf16.msra.mxu0 %v2693
        %3858 = vmatprep.subr.bf16.mxu0 0
        %3859 = vmatpush1.bf16.msra.mxu0 %v2694
        %3860 = vmatprep.subr.bf16.mxu0 0
        %3861 = vmatpush1.bf16.msra.mxu0 %v3347
        %3862 = vmatprep.subr.bf16.mxu0 0
        %3863 = vmatpush1.bf16.msra.mxu0 0
        %3864 = vmatprep.subr.bf16.mxu0 0
        %3865 = vmatpush1.bf16.msra.mxu0 0
        %3866 = vmatprep.subr.bf16.mxu0 0
        %3867 = vmatpush1.bf16.msra.mxu0 0
        %3868 = vmatprep.subr.bf16.mxu0 0
        %3869 = vmatpush1.bf16.msra.mxu0 0
        %3870 = vmatprep.subr.bf16.mxu0 0
        %3871 = vmatpush1.bf16.msra.mxu0 0
        %3872 = vmatprep.subr.bf16.mxu0 0
        %3873 = vmatpush1.bf16.msra.mxu0 0
        %3874 = vmatprep.subr.bf16.mxu0 0
        %3875 = vmatpush1.bf16.msra.mxu0 0
        %3876 = vmatprep.subr.bf16.mxu0 0
        %3877 = vmatpush1.bf16.msra.mxu0 0
        %3878 = vmatprep.subr.bf16.mxu0 0
        %3879 = vmatpush1.bf16.msra.mxu0 0
        %3880 = vmatprep.subr.bf16.mxu0 0
        %3881 = vmatpush1.bf16.msra.mxu0 0
        %3882 = vmatprep.subr.bf16.mxu0 0
        %3883 = vmatpush1.bf16.msra.mxu0 0
        %3884 = vmatprep.subr.bf16.mxu0 0
        %3885 = vmatpush1.bf16.msra.mxu0 0
        %3886 = vmatprep.subr.bf16.mxu0 0
        %3887 = vmatpush1.bf16.msra.mxu0 0
        %3888 = vmatprep.mubr.bf16.mxu0 0
        %3889 = vmatmul.mubr.bf16.gmra.mrb[0].mxu0 %v3293
        %v3890 = vpop.f32.mrb[0].mxu0
        %v3891 = vadd.f32 %v3722, %v3890
        %v3892 = vpop.f32.mrb[0].mxu0
        %v3893 = vpop.f32.mrb[0].mxu0
        %v3894 = vadd.f32 %v3725, %v3893
        %v3895 = vpop.f32.mrb[0].mxu0
        %3896 = vmatprep.mubr.bf16.mxu0 0
        %3897 = vmatmul.mubr.bf16.gmra.mrb[0].mxu0 %v3296
        %v3898 = vpop.f32.mrb[0].mxu0
        %v3899 = vadd.f32 %v3730, %v3898
        %v3900 = vpop.f32.mrb[0].mxu0
        %v3901 = vpop.f32.mrb[0].mxu0
        %v3902 = vadd.f32 %v3733, %v3901
        %v3903 = vpop.f32.mrb[0].mxu0
        %3904 = vmatprep.mubr.bf16.mxu0 0
        %3905 = vmatmul.mubr.bf16.gmra.mrb[0].mxu0 %v3299
        %v3906 = vpop.f32.mrb[0].mxu0
        %v3907 = vadd.f32 %v3738, %v3906
        %v3908 = vpop.f32.mrb[0].mxu0
        %v3909 = vpop.f32.mrb[0].mxu0
        %v3910 = vadd.f32 %v3741, %v3909
        %v3911 = vpop.f32.mrb[0].mxu0
        %3912 = vmatprep.mubr.bf16.mxu0 0
        %3913 = vmatmul.mubr.bf16.gmra.mrb[0].mxu0 %v3302
        %v3914 = vpop.f32.mrb[0].mxu0
        %v3915 = vadd.f32 %v3746, %v3914
        %v3916 = vpop.f32.mrb[0].mxu0
        %v3917 = vpop.f32.mrb[0].mxu0
        %v3918 = vadd.f32 %v3749, %v3917
        %v3919 = vpop.f32.mrb[0].mxu0
        %3920 = vmatprep.mubr.bf16.mxu0 0
        %3921 = vmatmul.mubr.bf16.gmra.mrb[0].mxu0 %v3305
        %v3922 = vpop.f32.mrb[0].mxu0
        %v3923 = vadd.f32 %v3754, %v3922
        %v3924 = vpop.f32.mrb[0].mxu0
        %v3925 = vpop.f32.mrb[0].mxu0
        %v3926 = vadd.f32 %v3757, %v3925
        %v3927 = vpop.f32.mrb[0].mxu0
        %3928 = vmatprep.mubr.bf16.mxu0 0
        %3929 = vmatmul.mubr.bf16.gmra.mrb[0].mxu0 %v3308
        %v3930 = vpop.f32.mrb[0].mxu0
        %v3931 = vadd.f32 %v3762, %v3930
        %v3932 = vpop.f32.mrb[0].mxu0
        %v3933 = vpop.f32.mrb[0].mxu0
        %v3934 = vadd.f32 %v3765, %v3933
        %v3935 = vpop.f32.mrb[0].mxu0
        %3936 = vmatprep.mubr.bf16.mxu0 0
        %3937 = vmatmul.mubr.bf16.gmra.mrb[0].mxu0 %v3311
        %v3938 = vpop.f32.mrb[0].mxu0
        %v3939 = vadd.f32 %v3770, %v3938
        %v3940 = vpop.f32.mrb[0].mxu0
        %v3941 = vpop.f32.mrb[0].mxu0
        %v3942 = vadd.f32 %v3773, %v3941
        %v3943 = vpop.f32.mrb[0].mxu0
        %3944 = vmatprep.mubr.bf16.mxu0 0
        %3945 = vmatmul.mubr.bf16.gmra.mrb[0].mxu0 %v3314
        %v3946 = vpop.f32.mrb[0].mxu0
        %v3947 = vadd.f32 %v3778, %v3946
        %v3948 = vpop.f32.mrb[0].mxu0
        %v3949 = vpop.f32.mrb[0].mxu0
        %v3950 = vadd.f32 %v3781, %v3949
        %v3951 = vpop.f32.mrb[0].mxu0
        %3952 = vmatprep.mubr.bf16.mxu0 0
        %3953 = vmatmul.mubr.bf16.gmra.mrb[0].mxu0 %v3317
        %v3954 = vpop.f32.mrb[0].mxu0
        %v3955 = vadd.f32 %v3786, %v3954
        %v3956 = vpop.f32.mrb[0].mxu0
        %v3957 = vpop.f32.mrb[0].mxu0
        %v3958 = vadd.f32 %v3789, %v3957
        %v3959 = vpop.f32.mrb[0].mxu0
        %3960 = vmatprep.mubr.bf16.mxu0 0
        %3961 = vmatmul.mubr.bf16.gmra.mrb[0].mxu0 %v3320
        %v3962 = vpop.f32.mrb[0].mxu0
        %v3963 = vadd.f32 %v3794, %v3962
        %v3964 = vpop.f32.mrb[0].mxu0
        %v3965 = vpop.f32.mrb[0].mxu0
        %v3966 = vadd.f32 %v3797, %v3965
        %v3967 = vpop.f32.mrb[0].mxu0
        %3968 = vmatprep.mubr.bf16.mxu0 0
        %3969 = vmatmul.mubr.bf16.gmra.mrb[0].mxu0 %v3323
        %v3970 = vpop.f32.mrb[0].mxu0
        %v3971 = vadd.f32 %v3802, %v3970
        %v3972 = vpop.f32.mrb[0].mxu0
        %v3973 = vpop.f32.mrb[0].mxu0
        %v3974 = vadd.f32 %v3805, %v3973
        %v3975 = vpop.f32.mrb[0].mxu0
        %3976 = vmatprep.mubr.bf16.mxu0 0
        %3977 = vmatmul.mubr.bf16.gmra.mrb[0].mxu0 %v3326
        %v3978 = vpop.f32.mrb[0].mxu0
        %v3979 = vadd.f32 %v3810, %v3978
        %v3980 = vpop.f32.mrb[0].mxu0
        %v3981 = vpop.f32.mrb[0].mxu0
        %v3982 = vadd.f32 %v3813, %v3981
        %v3983 = vpop.f32.mrb[0].mxu0
        %3984 = vmatprep.mubr.bf16.mxu0 0
        %3985 = vmatmul.mubr.bf16.gmra.mrb[0].mxu0 %v3329
        %v3986 = vpop.f32.mrb[0].mxu0
        %v3987 = vadd.f32 %v3818, %v3986
        %v3988 = vpop.f32.mrb[0].mxu0
        %v3989 = vpop.f32.mrb[0].mxu0
        %v3990 = vadd.f32 %v3821, %v3989
        %v3991 = vpop.f32.mrb[0].mxu0
        %3992 = vmatprep.mubr.bf16.mxu0 0
        %3993 = vmatmul.mubr.bf16.gmra.mrb[0].mxu0 %v3332
        %v3994 = vpop.f32.mrb[0].mxu0
        %v3995 = vadd.f32 %v3826, %v3994
        %v3996 = vpop.f32.mrb[0].mxu0
        %v3997 = vpop.f32.mrb[0].mxu0
        %v3998 = vadd.f32 %v3829, %v3997
        %v3999 = vpop.f32.mrb[0].mxu0
        %4000 = vmatprep.mubr.bf16.mxu0 0
        %4001 = vmatmul.mubr.bf16.gmra.mrb[0].mxu0 %v3335
        %v4002 = vpop.f32.mrb[0].mxu0
        %v4003 = vadd.f32 %v3834, %v4002
        %v4004 = vpop.f32.mrb[0].mxu0
        %v4005 = vpop.f32.mrb[0].mxu0
        %v4006 = vadd.f32 %v3837, %v4005
        %v4007 = vpop.f32.mrb[0].mxu0
        %4008 = vmatprep.mubr.bf16.mxu0 0
        %4009 = vmatmul.mubr.bf16.gmra.mrb[0].mxu0 %v3338
        %v4010 = vpop.f32.mrb[0].mxu0
        %v4011 = vadd.f32 %v3842, %v4010
        %v4012 = vpop.f32.mrb[0].mxu0
        %v4013 = vpop.f32.mrb[0].mxu0
        %v4014 = vadd.f32 %v3845, %v4013
        %v4015 = vpop.f32.mrb[0].mxu0
        %4016 = vmatprep.mubr.bf16.mxu0 0
        %4017 = vmatmul.mubr.bf16.gmra.mrb[0].mxu0 %v3341
        %v4018 = vpop.f32.mrb[0].mxu0
        %v4019 = vadd.f32 %v3850, %v4018
        %v4020 = vpop.f32.mrb[0].mxu0
        %v4021 = vpop.f32.mrb[0].mxu0
        %v4022 = vadd.f32 %v3853, %v4021
        %v4023 = vpop.f32.mrb[0].mxu0
        %4024 = vdwg.mxu0
        %v4025 = vpack.c.bf16 %v3894, %v3891
        %v4026 = vpack.c.bf16 %v3902, %v3899
        %v4027 = vpack.c.bf16 %v3910, %v3907
        %v4028 = vpack.c.bf16 %v3918, %v3915
        %v4029 = vpack.c.bf16 %v3926, %v3923
        %v4030 = vpack.c.bf16 %v3934, %v3931
        %v4031 = vpack.c.bf16 %v3942, %v3939
        %v4032 = vpack.c.bf16 %v3950, %v3947
        %v4033 = vpack.c.bf16 %v3958, %v3955
        %v4034 = vpack.c.bf16 %v3966, %v3963
        %v4035 = vpack.c.bf16 %v3974, %v3971
        %v4036 = vpack.c.bf16 %v3982, %v3979
        %v4037 = vpack.c.bf16 %v3990, %v3987
        %v4038 = vpack.c.bf16 %v3998, %v3995
        %v4039 = vpack.c.bf16 %v4006, %v4003
        %v4040 = vpack.c.bf16 %v4014, %v4011
        %v4041 = vpack.c.bf16 %v4022, %v4019
        %v4042 = vld [vmem:[#allocation6] sm:$0xf]
        %v4043 = vld [vmem:[#allocation6 + $0x4] sm:$0xf]
        %v4044 = vld [vmem:[#allocation6 + $0x8] sm:$0xf]
        %v4045 = vld [vmem:[#allocation6 + $0xc] sm:$0xf]
        %v4046 = vld [vmem:[#allocation6 + $0x10] sm:$0xf]
        %v4047 = vld [vmem:[#allocation6 + $0x14] sm:$0xf]
        %v4048 = vld [vmem:[#allocation6 + $0x18] sm:$0xf]
        %v4049 = vld [vmem:[#allocation6 + $0x1c] sm:$0xf]
        %v4050 = vld [vmem:[#allocation6 + $0x20] sm:$0xf]
        %v4051 = vld [vmem:[#allocation6 + $0x24] sm:$0xf]
        %v4052 = vld [vmem:[#allocation6 + $0x28] sm:$0xf]
        %v4053 = vld [vmem:[#allocation6 + $0x2c] sm:$0xf]
        %v4054 = vld [vmem:[#allocation6 + $0x30] sm:$0xf]
        %v4055 = vld [vmem:[#allocation6 + $0x34] sm:$0xf]
        %v4056 = vld [vmem:[#allocation6 + $0x38] sm:$0xf]
        %v4057 = vld [vmem:[#allocation6 + $0x3c] sm:$0xf]
        %v4058 = vld [vmem:[#allocation6 + $0x40] sm:$0xf]
        %v4059 = vld [vmem:[#allocation6 + $0x44] sm:$0xf]
        %v4060 = vld [vmem:[#allocation6 + $0x48] sm:$0xf]
        %v4061 = vld [vmem:[#allocation6 + $0x4c] sm:$0xf]
        %v4062 = vld [vmem:[#allocation6 + $0x50] sm:$0xf]
        %v4063 = vld [vmem:[#allocation6 + $0x54] sm:$0xf]
        %v4064 = vld [vmem:[#allocation6 + $0x58] sm:$0xf]
        %v4065 = vld [vmem:[#allocation6 + $0x5c] sm:$0xf]
        %v4066 = vld [vmem:[#allocation6 + $0x60] sm:$0xf]
        %v4067 = vld [vmem:[#allocation6 + $0x64] sm:$0xf]
        %v4068 = vld [vmem:[#allocation6 + $0x68] sm:$0xf]
        %v4069 = vld [vmem:[#allocation6 + $0x6c] sm:$0xf]
        %v4070 = vld [vmem:[#allocation6 + $0x70] sm:$0xf]
        %v4071 = vld [vmem:[#allocation6 + $0x74] sm:$0xf]
        %v4072 = vld [vmem:[#allocation6 + $0x78] sm:$0xf]
        %v4073 = vld [vmem:[#allocation6 + $0x7c] sm:$0xf]
        %v4074 = vld [vmem:[#allocation6 + $0x80] sm:$0xf]
        %v4075 = vld [vmem:[#allocation6 + $0x84] sm:$0xf]
        %v4076 = vld [vmem:[#allocation6 + $0x88] sm:$0xf]
        %v4077 = vld [vmem:[#allocation6 + $0x8c] sm:$0xf]
        %v4078 = vld [vmem:[#allocation6 + $0x90] sm:$0xf]
        %v4079 = vld [vmem:[#allocation6 + $0x94] sm:$0xf]
        %v4080 = vld [vmem:[#allocation6 + $0x98] sm:$0xf]
        %v4081 = vld [vmem:[#allocation6 + $0x9c] sm:$0xf]
        %v4082 = vld [vmem:[#allocation6 + $0xa0] sm:$0xf]
        %v4083 = vld [vmem:[#allocation6 + $0xa4] sm:$0xf]
        %v4084 = vld [vmem:[#allocation6 + $0xa8] sm:$0xf]
        %v4085 = vld [vmem:[#allocation6 + $0xac] sm:$0xf]
        %v4086 = vld [vmem:[#allocation6 + $0xb0] sm:$0xf]
        %v4087 = vld [vmem:[#allocation6 + $0xb4] sm:$0xf]
        %v4088 = vld [vmem:[#allocation6 + $0xb8] sm:$0xf]
        %v4089 = vld [vmem:[#allocation6 + $0xbc] sm:$0xf]
        %v4090 = vld [vmem:[#allocation6 + $0xc0] sm:$0xf]
        %v4091 = vld [vmem:[#allocation6 + $0xc4] sm:$0xf]
        %v4092 = vld [vmem:[#allocation6 + $0xc8] sm:$0xf]
        %v4093 = vld [vmem:[#allocation6 + $0xcc] sm:$0xf]
        %v4094 = vld [vmem:[#allocation6 + $0xd0] sm:$0xf]
        %v4095 = vld [vmem:[#allocation6 + $0xd4] sm:$0xf]
        %v4096 = vld [vmem:[#allocation6 + $0xd8] sm:$0xf]
        %v4097 = vld [vmem:[#allocation6 + $0xdc] sm:$0xf]
        %v4098 = vld [vmem:[#allocation6 + $0xe0] sm:$0xf]
        %v4099 = vld [vmem:[#allocation6 + $0xe4] sm:$0xf]
        %v4100 = vld [vmem:[#allocation6 + $0xe8] sm:$0xf]
        %v4101 = vld [vmem:[#allocation6 + $0xec] sm:$0xf]
        %v4102 = vld [vmem:[#allocation6 + $0xf0] sm:$0xf]
        %v4103 = vld [vmem:[#allocation6 + $0xf4] sm:$0xf]
        %v4104 = vld [vmem:[#allocation6 + $0xf8] sm:$0xf]
        %v4105 = vld [vmem:[#allocation6 + $0xfc] sm:$0xf]
        %v4106 = vld [vmem:[#allocation6 + $0x100] sm:$0xf]
        %v4107 = vld [vmem:[#allocation6 + $0x104] sm:$0xf]
        %v4108 = vld [vmem:[#allocation6 + $0x108] sm:$0xf]
        %v4109 = vld [vmem:[#allocation6 + $0x10c] sm:$0xf]
        %v4110 = vld [vmem:[#allocation6 + $0x110] sm:$0xf]
        %v4111 = vld [vmem:[#allocation6 + $0x114] sm:$0xf]
        %v4112 = vld [vmem:[#allocation6 + $0x118] sm:$0xf]
        %v4113 = vld [vmem:[#allocation6 + $0x11c] sm:$0xf]
        %vm4114 = vsmask.f32 7424
        %v4116 = vshrl.u32 %v4025, 16
        %v4118 = vshll.u32 %v4025, 16
        %v4120 = vrot.slane %v4118, 1
        %v4121 = vor.u32 %v4116, %v4120
        %v4123 = vshll.u32 %v4026, 16
        %v4125 = vrot.slane %v4123, 1
        %v4126 = vsel %vm4114, %v4121, %v4125
        %v4127 = vshrl.u32 %v4026, 16
        %v4129 = vor.u32 %v4127, %v4125
        %v4131 = vshll.u32 %v4027, 16
        %v4133 = vrot.slane %v4131, 1
        %v4134 = vsel %vm4114, %v4129, %v4133
        %v4135 = vshrl.u32 %v4027, 16
        %v4137 = vor.u32 %v4135, %v4133
        %v4139 = vshll.u32 %v4028, 16
        %v4141 = vrot.slane %v4139, 1
        %v4142 = vsel %vm4114, %v4137, %v4141
        %v4143 = vshrl.u32 %v4028, 16
        %v4145 = vor.u32 %v4143, %v4141
        %v4147 = vshll.u32 %v4029, 16
        %v4149 = vrot.slane %v4147, 1
        %v4150 = vsel %vm4114, %v4145, %v4149
        %v4151 = vshrl.u32 %v4029, 16
        %v4153 = vor.u32 %v4151, %v4149
        %v4155 = vshll.u32 %v4030, 16
        %v4157 = vrot.slane %v4155, 1
        %v4158 = vsel %vm4114, %v4153, %v4157
        %v4159 = vshrl.u32 %v4030, 16
        %v4161 = vor.u32 %v4159, %v4157
        %v4163 = vshll.u32 %v4031, 16
        %v4165 = vrot.slane %v4163, 1
        %v4166 = vsel %vm4114, %v4161, %v4165
        %v4167 = vshrl.u32 %v4031, 16
        %v4169 = vor.u32 %v4167, %v4165
        %v4171 = vshll.u32 %v4032, 16
        %v4173 = vrot.slane %v4171, 1
        %v4174 = vsel %vm4114, %v4169, %v4173
        %v4175 = vshrl.u32 %v4032, 16
        %v4177 = vor.u32 %v4175, %v4173
        %v4179 = vshll.u32 %v4033, 16
        %v4181 = vrot.slane %v4179, 1
        %v4182 = vsel %vm4114, %v4177, %v4181
        %v4183 = vshrl.u32 %v4033, 16
        %v4185 = vor.u32 %v4183, %v4181
        %v4187 = vshll.u32 %v4034, 16
        %v4189 = vrot.slane %v4187, 1
        %v4190 = vsel %vm4114, %v4185, %v4189
        %v4191 = vshrl.u32 %v4034, 16
        %v4193 = vor.u32 %v4191, %v4189
        %v4195 = vshll.u32 %v4035, 16
        %v4197 = vrot.slane %v4195, 1
        %v4198 = vsel %vm4114, %v4193, %v4197
        %v4199 = vshrl.u32 %v4035, 16
        %v4201 = vor.u32 %v4199, %v4197
        %v4203 = vshll.u32 %v4036, 16
        %v4205 = vrot.slane %v4203, 1
        %v4206 = vsel %vm4114, %v4201, %v4205
        %v4207 = vshrl.u32 %v4036, 16
        %v4209 = vor.u32 %v4207, %v4205
        %v4211 = vshll.u32 %v4037, 16
        %v4213 = vrot.slane %v4211, 1
        %v4214 = vsel %vm4114, %v4209, %v4213
        %v4215 = vshrl.u32 %v4037, 16
        %v4217 = vor.u32 %v4215, %v4213
        %v4219 = vshll.u32 %v4038, 16
        %v4221 = vrot.slane %v4219, 1
        %v4222 = vsel %vm4114, %v4217, %v4221
        %v4223 = vshrl.u32 %v4038, 16
        %v4225 = vor.u32 %v4223, %v4221
        %v4227 = vshll.u32 %v4039, 16
        %v4229 = vrot.slane %v4227, 1
        %v4230 = vsel %vm4114, %v4225, %v4229
        %v4239 = vunpack.c.l.b16 %v4050
        %v4240 = vunpack.c.l.b16 %v4051
        %v4241 = vunpack.c.l.b16 %v4052
        %v4242 = vunpack.c.l.b16 %v4053
        %v4243 = vunpack.c.l.b16 %v4054
        %v4244 = vunpack.c.l.b16 %v4055
        %v4245 = vunpack.c.l.b16 %v4056
        %v4246 = vunpack.c.l.b16 %v4057
        %v4247 = vpack.c.b16 %v4240, %v4239
        %v4248 = vpack.c.b16 %v4242, %v4241
        %v4249 = vpack.c.b16 %v4244, %v4243
        %v4250 = vpack.c.b16 %v4246, %v4245
        %vm4255 = vcmask 523264
        %v4257 = vsel %vm4255, %v4126, 0
        %v4260 = vsel %vm4255, %v4134, 0
        %v4263 = vsel %vm4255, %v4142, 0
        %v4266 = vsel %vm4255, %v4150, 0
        %v4269 = vsel %vm4255, %v4158, 0
        %v4272 = vsel %vm4255, %v4166, 0
        %v4275 = vsel %vm4255, %v4174, 0
        %v4278 = vsel %vm4255, %v4182, 0
        %v4281 = vsel %vm4255, %v4190, 0
        %v4284 = vsel %vm4255, %v4198, 0
        %v4287 = vsel %vm4255, %v4206, 0
        %v4290 = vsel %vm4255, %v4214, 0
        %v4293 = vsel %vm4255, %v4222, 0
        %v4296 = vsel %vm4255, %v4230, 0
        %4298 = vmatprep.subr.bf16.mxu0 0
        %4299 = vmatpush1.bf16.msra.mxu0 %v4247
        %4300 = vmatprep.subr.bf16.mxu0 0
        %4301 = vmatpush1.bf16.msra.mxu0 %v4248
        %4302 = vmatprep.subr.bf16.mxu0 0
        %4303 = vmatpush1.bf16.msra.mxu0 %v4249
        %4304 = vmatprep.subr.bf16.mxu0 0
        %4305 = vmatpush1.bf16.msra.mxu0 %v4250
        %4306 = vmatprep.subr.bf16.mxu0 0
        %4307 = vmatpush1.bf16.msra.mxu0 0
        %4308 = vmatprep.subr.bf16.mxu0 0
        %4309 = vmatpush1.bf16.msra.mxu0 0
        %4310 = vmatprep.subr.bf16.mxu0 0
        %4311 = vmatpush1.bf16.msra.mxu0 0
        %4312 = vmatprep.subr.bf16.mxu0 0
        %4313 = vmatpush1.bf16.msra.mxu0 0
        %4314 = vmatprep.subr.bf16.mxu0 0
        %4315 = vmatpush1.bf16.msra.mxu0 0
        %4316 = vmatprep.subr.bf16.mxu0 0
        %4317 = vmatpush1.bf16.msra.mxu0 0
        %4318 = vmatprep.subr.bf16.mxu0 0
        %4319 = vmatpush1.bf16.msra.mxu0 0
        %4320 = vmatprep.subr.bf16.mxu0 0
        %4321 = vmatpush1.bf16.msra.mxu0 0
        %4322 = vmatprep.subr.bf16.mxu0 0
        %4323 = vmatpush1.bf16.msra.mxu0 0
        %4324 = vmatprep.subr.bf16.mxu0 0
        %4325 = vmatpush1.bf16.msra.mxu0 0
        %4326 = vmatprep.subr.bf16.mxu0 0
        %4327 = vmatpush1.bf16.msra.mxu0 0
        %4328 = vmatprep.subr.bf16.mxu0 0
        %4329 = vmatpush1.bf16.msra.mxu0 0
        %4330 = vmatprep.mubr.bf16.mxu0 0
        %4331 = vmatmul.mubr.bf16.gmra.mrb[0].mxu0 %v4257
        %v4332 = vpop.f32.mrb[0].mxu0
        %v4333 = vadd.f32 0.0, %v4332
        %v4334 = vpop.f32.mrb[0].mxu0
        %v4335 = vpop.f32.mrb[0].mxu0
        %v4336 = vadd.f32 0.0, %v4335
        %v4337 = vpop.f32.mrb[0].mxu0
        %4338 = vmatprep.mubr.bf16.mxu0 0
        %4339 = vmatmul.mubr.bf16.gmra.mrb[0].mxu0 %v4260
        %v4340 = vpop.f32.mrb[0].mxu0
        %v4341 = vadd.f32 0.0, %v4340
        %v4342 = vpop.f32.mrb[0].mxu0
        %v4343 = vpop.f32.mrb[0].mxu0
        %v4344 = vadd.f32 0.0, %v4343
        %v4345 = vpop.f32.mrb[0].mxu0
        %4346 = vmatprep.mubr.bf16.mxu0 0
        %4347 = vmatmul.mubr.bf16.gmra.mrb[0].mxu0 %v4263
        %v4348 = vpop.f32.mrb[0].mxu0
        %v4349 = vadd.f32 0.0, %v4348
        %v4350 = vpop.f32.mrb[0].mxu0
        %v4351 = vpop.f32.mrb[0].mxu0
        %v4352 = vadd.f32 0.0, %v4351
        %v4353 = vpop.f32.mrb[0].mxu0
        %4354 = vmatprep.mubr.bf16.mxu0 0
        %4355 = vmatmul.mubr.bf16.gmra.mrb[0].mxu0 %v4266
        %v4356 = vpop.f32.mrb[0].mxu0
        %v4357 = vadd.f32 0.0, %v4356
        %v4358 = vpop.f32.mrb[0].mxu0
        %v4359 = vpop.f32.mrb[0].mxu0
        %v4360 = vadd.f32 0.0, %v4359
        %v4361 = vpop.f32.mrb[0].mxu0
        %4362 = vmatprep.mubr.bf16.mxu0 0
        %4363 = vmatmul.mubr.bf16.gmra.mrb[0].mxu0 %v4269
        %v4364 = vpop.f32.mrb[0].mxu0
        %v4365 = vadd.f32 0.0, %v4364
        %v4366 = vpop.f32.mrb[0].mxu0
        %v4367 = vpop.f32.mrb[0].mxu0
        %v4368 = vadd.f32 0.0, %v4367
        %v4369 = vpop.f32.mrb[0].mxu0
        %4370 = vmatprep.mubr.bf16.mxu0 0
        %4371 = vmatmul.mubr.bf16.gmra.mrb[0].mxu0 %v4272
        %v4372 = vpop.f32.mrb[0].mxu0
        %v4373 = vadd.f32 0.0, %v4372
        %v4374 = vpop.f32.mrb[0].mxu0
        %v4375 = vpop.f32.mrb[0].mxu0
        %v4376 = vadd.f32 0.0, %v4375
        %v4377 = vpop.f32.mrb[0].mxu0
        %4378 = vmatprep.mubr.bf16.mxu0 0
        %4379 = vmatmul.mubr.bf16.gmra.mrb[0].mxu0 %v4275
        %v4380 = vpop.f32.mrb[0].mxu0
        %v4381 = vadd.f32 0.0, %v4380
        %v4382 = vpop.f32.mrb[0].mxu0
        %v4383 = vpop.f32.mrb[0].mxu0
        %v4384 = vadd.f32 0.0, %v4383
        %v4385 = vpop.f32.mrb[0].mxu0
        %4386 = vmatprep.mubr.bf16.mxu0 0
        %4387 = vmatmul.mubr.bf16.gmra.mrb[0].mxu0 %v4278
        %v4388 = vpop.f32.mrb[0].mxu0
        %v4389 = vadd.f32 0.0, %v4388
        %v4390 = vpop.f32.mrb[0].mxu0
        %v4391 = vpop.f32.mrb[0].mxu0
        %v4392 = vadd.f32 0.0, %v4391
        %v4393 = vpop.f32.mrb[0].mxu0
        %4394 = vmatprep.mubr.bf16.mxu0 0
        %4395 = vmatmul.mubr.bf16.gmra.mrb[0].mxu0 %v4281
        %v4396 = vpop.f32.mrb[0].mxu0
        %v4397 = vadd.f32 0.0, %v4396
        %v4398 = vpop.f32.mrb[0].mxu0
        %v4399 = vpop.f32.mrb[0].mxu0
        %v4400 = vadd.f32 0.0, %v4399
        %v4401 = vpop.f32.mrb[0].mxu0
        %4402 = vmatprep.mubr.bf16.mxu0 0
        %4403 = vmatmul.mubr.bf16.gmra.mrb[0].mxu0 %v4284
        %v4404 = vpop.f32.mrb[0].mxu0
        %v4405 = vadd.f32 0.0, %v4404
        %v4406 = vpop.f32.mrb[0].mxu0
        %v4407 = vpop.f32.mrb[0].mxu0
        %v4408 = vadd.f32 0.0, %v4407
        %v4409 = vpop.f32.mrb[0].mxu0
        %4410 = vmatprep.mubr.bf16.mxu0 0
        %4411 = vmatmul.mubr.bf16.gmra.mrb[0].mxu0 %v4287
        %v4412 = vpop.f32.mrb[0].mxu0
        %v4413 = vadd.f32 0.0, %v4412
        %v4414 = vpop.f32.mrb[0].mxu0
        %v4415 = vpop.f32.mrb[0].mxu0
        %v4416 = vadd.f32 0.0, %v4415
        %v4417 = vpop.f32.mrb[0].mxu0
        %4418 = vmatprep.mubr.bf16.mxu0 0
        %4419 = vmatmul.mubr.bf16.gmra.mrb[0].mxu0 %v4290
        %v4420 = vpop.f32.mrb[0].mxu0
        %v4421 = vadd.f32 0.0, %v4420
        %v4422 = vpop.f32.mrb[0].mxu0
        %v4423 = vpop.f32.mrb[0].mxu0
        %v4424 = vadd.f32 0.0, %v4423
        %v4425 = vpop.f32.mrb[0].mxu0
        %4426 = vmatprep.mubr.bf16.mxu0 0
        %4427 = vmatmul.mubr.bf16.gmra.mrb[0].mxu0 %v4293
        %v4428 = vpop.f32.mrb[0].mxu0
        %v4429 = vadd.f32 0.0, %v4428
        %v4430 = vpop.f32.mrb[0].mxu0
        %v4431 = vpop.f32.mrb[0].mxu0
        %v4432 = vadd.f32 0.0, %v4431
        %v4433 = vpop.f32.mrb[0].mxu0
        %4434 = vmatprep.mubr.bf16.mxu0 0
        %4435 = vmatmul.mubr.bf16.gmra.mrb[0].mxu0 %v4296
        %v4436 = vpop.f32.mrb[0].mxu0
        %v4437 = vadd.f32 0.0, %v4436
        %v4438 = vpop.f32.mrb[0].mxu0
        %v4439 = vpop.f32.mrb[0].mxu0
        %v4440 = vadd.f32 0.0, %v4439
        %v4441 = vpop.f32.mrb[0].mxu0
        %4442 = vdwg.mxu0
        %v4451 = vunpack.c.l.b16 %v4042
        %v4452 = vunpack.c.l.b16 %v4043
        %v4453 = vunpack.c.l.b16 %v4044
        %v4454 = vunpack.c.l.b16 %v4045
        %v4455 = vunpack.c.l.b16 %v4046
        %v4456 = vunpack.c.l.b16 %v4047
        %v4457 = vunpack.c.l.b16 %v4048
        %v4458 = vunpack.c.l.b16 %v4049
        %v4459 = vpack.c.b16 %v4452, %v4451
        %v4460 = vpack.c.b16 %v4454, %v4453
        %v4461 = vpack.c.b16 %v4456, %v4455
        %v4462 = vpack.c.b16 %v4458, %v4457
        %v4467 = vsel %vm4255, %v4025, 0
        %v4469 = vsel %vm4255, %v4026, 0
        %v4471 = vsel %vm4255, %v4027, 0
        %v4473 = vsel %vm4255, %v4028, 0
        %v4475 = vsel %vm4255, %v4029, 0
        %v4477 = vsel %vm4255, %v4030, 0
        %v4479 = vsel %vm4255, %v4031, 0
        %v4481 = vsel %vm4255, %v4032, 0
        %v4483 = vsel %vm4255, %v4033, 0
        %v4485 = vsel %vm4255, %v4034, 0
        %v4487 = vsel %vm4255, %v4035, 0
        %v4489 = vsel %vm4255, %v4036, 0
        %v4491 = vsel %vm4255, %v4037, 0
        %v4493 = vsel %vm4255, %v4038, 0
        %4495 = vmatprep.subr.bf16.mxu0 0
        %4496 = vmatpush1.bf16.msra.mxu0 %v4459
        %4497 = vmatprep.subr.bf16.mxu0 0
        %4498 = vmatpush1.bf16.msra.mxu0 %v4460
        %4499 = vmatprep.subr.bf16.mxu0 0
        %4500 = vmatpush1.bf16.msra.mxu0 %v4461
        %4501 = vmatprep.subr.bf16.mxu0 0
        %4502 = vmatpush1.bf16.msra.mxu0 %v4462
        %4503 = vmatprep.subr.bf16.mxu0 0
        %4504 = vmatpush1.bf16.msra.mxu0 0
        %4505 = vmatprep.subr.bf16.mxu0 0
        %4506 = vmatpush1.bf16.msra.mxu0 0
        %4507 = vmatprep.subr.bf16.mxu0 0
        %4508 = vmatpush1.bf16.msra.mxu0 0
        %4509 = vmatprep.subr.bf16.mxu0 0
        %4510 = vmatpush1.bf16.msra.mxu0 0
        %4511 = vmatprep.subr.bf16.mxu0 0
        %4512 = vmatpush1.bf16.msra.mxu0 0
        %4513 = vmatprep.subr.bf16.mxu0 0
        %4514 = vmatpush1.bf16.msra.mxu0 0
        %4515 = vmatprep.subr.bf16.mxu0 0
        %4516 = vmatpush1.bf16.msra.mxu0 0
        %4517 = vmatprep.subr.bf16.mxu0 0
        %4518 = vmatpush1.bf16.msra.mxu0 0
        %4519 = vmatprep.subr.bf16.mxu0 0
        %4520 = vmatpush1.bf16.msra.mxu0 0
        %4521 = vmatprep.subr.bf16.mxu0 0
        %4522 = vmatpush1.bf16.msra.mxu0 0
        %4523 = vmatprep.subr.bf16.mxu0 0
        %4524 = vmatpush1.bf16.msra.mxu0 0
        %4525 = vmatprep.subr.bf16.mxu0 0
        %4526 = vmatpush1.bf16.msra.mxu0 0
        %4527 = vmatprep.mubr.bf16.mxu0 0
        %4528 = vmatmul.mubr.bf16.gmra.mrb[0].mxu0 %v4467
        %v4529 = vpop.f32.mrb[0].mxu0
        %v4530 = vadd.f32 %v4333, %v4529
        %v4531 = vpop.f32.mrb[0].mxu0
        %v4532 = vpop.f32.mrb[0].mxu0
        %v4533 = vadd.f32 %v4336, %v4532
        %v4534 = vpop.f32.mrb[0].mxu0
        %4535 = vmatprep.mubr.bf16.mxu0 0
        %4536 = vmatmul.mubr.bf16.gmra.mrb[0].mxu0 %v4469
        %v4537 = vpop.f32.mrb[0].mxu0
        %v4538 = vadd.f32 %v4341, %v4537
        %v4539 = vpop.f32.mrb[0].mxu0
        %v4540 = vpop.f32.mrb[0].mxu0
        %v4541 = vadd.f32 %v4344, %v4540
        %v4542 = vpop.f32.mrb[0].mxu0
        %4543 = vmatprep.mubr.bf16.mxu0 0
        %4544 = vmatmul.mubr.bf16.gmra.mrb[0].mxu0 %v4471
        %v4545 = vpop.f32.mrb[0].mxu0
        %v4546 = vadd.f32 %v4349, %v4545
        %v4547 = vpop.f32.mrb[0].mxu0
        %v4548 = vpop.f32.mrb[0].mxu0
        %v4549 = vadd.f32 %v4352, %v4548
        %v4550 = vpop.f32.mrb[0].mxu0
        %4551 = vmatprep.mubr.bf16.mxu0 0
        %4552 = vmatmul.mubr.bf16.gmra.mrb[0].mxu0 %v4473
        %v4553 = vpop.f32.mrb[0].mxu0
        %v4554 = vadd.f32 %v4357, %v4553
        %v4555 = vpop.f32.mrb[0].mxu0
        %v4556 = vpop.f32.mrb[0].mxu0
        %v4557 = vadd.f32 %v4360, %v4556
        %v4558 = vpop.f32.mrb[0].mxu0
        %4559 = vmatprep.mubr.bf16.mxu0 0
        %4560 = vmatmul.mubr.bf16.gmra.mrb[0].mxu0 %v4475
        %v4561 = vpop.f32.mrb[0].mxu0
        %v4562 = vadd.f32 %v4365, %v4561
        %v4563 = vpop.f32.mrb[0].mxu0
        %v4564 = vpop.f32.mrb[0].mxu0
        %v4565 = vadd.f32 %v4368, %v4564
        %v4566 = vpop.f32.mrb[0].mxu0
        %4567 = vmatprep.mubr.bf16.mxu0 0
        %4568 = vmatmul.mubr.bf16.gmra.mrb[0].mxu0 %v4477
        %v4569 = vpop.f32.mrb[0].mxu0
        %v4570 = vadd.f32 %v4373, %v4569
        %v4571 = vpop.f32.mrb[0].mxu0
        %v4572 = vpop.f32.mrb[0].mxu0
        %v4573 = vadd.f32 %v4376, %v4572
        %v4574 = vpop.f32.mrb[0].mxu0
        %4575 = vmatprep.mubr.bf16.mxu0 0
        %4576 = vmatmul.mubr.bf16.gmra.mrb[0].mxu0 %v4479
        %v4577 = vpop.f32.mrb[0].mxu0
        %v4578 = vadd.f32 %v4381, %v4577
        %v4579 = vpop.f32.mrb[0].mxu0
        %v4580 = vpop.f32.mrb[0].mxu0
        %v4581 = vadd.f32 %v4384, %v4580
        %v4582 = vpop.f32.mrb[0].mxu0
        %4583 = vmatprep.mubr.bf16.mxu0 0
        %4584 = vmatmul.mubr.bf16.gmra.mrb[0].mxu0 %v4481
        %v4585 = vpop.f32.mrb[0].mxu0
        %v4586 = vadd.f32 %v4389, %v4585
        %v4587 = vpop.f32.mrb[0].mxu0
        %v4588 = vpop.f32.mrb[0].mxu0
        %v4589 = vadd.f32 %v4392, %v4588
        %v4590 = vpop.f32.mrb[0].mxu0
        %4591 = vmatprep.mubr.bf16.mxu0 0
        %4592 = vmatmul.mubr.bf16.gmra.mrb[0].mxu0 %v4483
        %v4593 = vpop.f32.mrb[0].mxu0
        %v4594 = vadd.f32 %v4397, %v4593
        %v4595 = vpop.f32.mrb[0].mxu0
        %v4596 = vpop.f32.mrb[0].mxu0
        %v4597 = vadd.f32 %v4400, %v4596
        %v4598 = vpop.f32.mrb[0].mxu0
        %4599 = vmatprep.mubr.bf16.mxu0 0
        %4600 = vmatmul.mubr.bf16.gmra.mrb[0].mxu0 %v4485
        %v4601 = vpop.f32.mrb[0].mxu0
        %v4602 = vadd.f32 %v4405, %v4601
        %v4603 = vpop.f32.mrb[0].mxu0
        %v4604 = vpop.f32.mrb[0].mxu0
        %v4605 = vadd.f32 %v4408, %v4604
        %v4606 = vpop.f32.mrb[0].mxu0
        %4607 = vmatprep.mubr.bf16.mxu0 0
        %4608 = vmatmul.mubr.bf16.gmra.mrb[0].mxu0 %v4487
        %v4609 = vpop.f32.mrb[0].mxu0
        %v4610 = vadd.f32 %v4413, %v4609
        %v4611 = vpop.f32.mrb[0].mxu0
        %v4612 = vpop.f32.mrb[0].mxu0
        %v4613 = vadd.f32 %v4416, %v4612
        %v4614 = vpop.f32.mrb[0].mxu0
        %4615 = vmatprep.mubr.bf16.mxu0 0
        %4616 = vmatmul.mubr.bf16.gmra.mrb[0].mxu0 %v4489
        %v4617 = vpop.f32.mrb[0].mxu0
        %v4618 = vadd.f32 %v4421, %v4617
        %v4619 = vpop.f32.mrb[0].mxu0
        %v4620 = vpop.f32.mrb[0].mxu0
        %v4621 = vadd.f32 %v4424, %v4620
        %v4622 = vpop.f32.mrb[0].mxu0
        %4623 = vmatprep.mubr.bf16.mxu0 0
        %4624 = vmatmul.mubr.bf16.gmra.mrb[0].mxu0 %v4491
        %v4625 = vpop.f32.mrb[0].mxu0
        %v4626 = vadd.f32 %v4429, %v4625
        %v4627 = vpop.f32.mrb[0].mxu0
        %v4628 = vpop.f32.mrb[0].mxu0
        %v4629 = vadd.f32 %v4432, %v4628
        %v4630 = vpop.f32.mrb[0].mxu0
        %4631 = vmatprep.mubr.bf16.mxu0 0
        %4632 = vmatmul.mubr.bf16.gmra.mrb[0].mxu0 %v4493
        %v4633 = vpop.f32.mrb[0].mxu0
        %v4634 = vadd.f32 %v4437, %v4633
        %v4635 = vpop.f32.mrb[0].mxu0
        %v4636 = vpop.f32.mrb[0].mxu0
        %v4637 = vadd.f32 %v4440, %v4636
        %v4638 = vpop.f32.mrb[0].mxu0
        %4639 = vdwg.mxu0
        %vm4655 = vcmask 1046528
        %v4656 = vrot.slane %v4025, 1
        %v4657 = vrot.slane %v4026, 1
        %v4658 = vsel %vm4655, %v4656, %v4657
        %v4659 = vrot.slane %v4027, 1
        %v4660 = vsel %vm4655, %v4657, %v4659
        %v4661 = vrot.slane %v4028, 1
        %v4662 = vsel %vm4655, %v4659, %v4661
        %v4663 = vrot.slane %v4029, 1
        %v4664 = vsel %vm4655, %v4661, %v4663
        %v4665 = vrot.slane %v4030, 1
        %v4666 = vsel %vm4655, %v4663, %v4665
        %v4667 = vrot.slane %v4031, 1
        %v4668 = vsel %vm4655, %v4665, %v4667
        %v4669 = vrot.slane %v4032, 1
        %v4670 = vsel %vm4655, %v4667, %v4669
        %v4671 = vrot.slane %v4033, 1
        %v4672 = vsel %vm4655, %v4669, %v4671
        %v4673 = vrot.slane %v4034, 1
        %v4674 = vsel %vm4655, %v4671, %v4673
        %v4675 = vrot.slane %v4035, 1
        %v4676 = vsel %vm4655, %v4673, %v4675
        %v4677 = vrot.slane %v4036, 1
        %v4678 = vsel %vm4655, %v4675, %v4677
        %v4679 = vrot.slane %v4037, 1
        %v4680 = vsel %vm4655, %v4677, %v4679
        %v4681 = vrot.slane %v4038, 1
        %v4682 = vsel %vm4655, %v4679, %v4681
        %v4683 = vrot.slane %v4039, 1
        %v4684 = vsel %vm4655, %v4681, %v4683
        %v4693 = vunpack.c.l.b16 %v4058
        %v4694 = vunpack.c.l.b16 %v4059
        %v4695 = vunpack.c.l.b16 %v4060
        %v4696 = vunpack.c.l.b16 %v4061
        %v4697 = vunpack.c.l.b16 %v4062
        %v4698 = vunpack.c.l.b16 %v4063
        %v4699 = vunpack.c.l.b16 %v4064
        %v4700 = vunpack.c.l.b16 %v4065
        %v4701 = vpack.c.b16 %v4694, %v4693
        %v4702 = vpack.c.b16 %v4696, %v4695
        %v4703 = vpack.c.b16 %v4698, %v4697
        %v4704 = vpack.c.b16 %v4700, %v4699
        %v4710 = vsel %vm4255, %v4658, 0
        %v4713 = vsel %vm4255, %v4660, 0
        %v4716 = vsel %vm4255, %v4662, 0
        %v4719 = vsel %vm4255, %v4664, 0
        %v4722 = vsel %vm4255, %v4666, 0
        %v4725 = vsel %vm4255, %v4668, 0
        %v4728 = vsel %vm4255, %v4670, 0
        %v4731 = vsel %vm4255, %v4672, 0
        %v4734 = vsel %vm4255, %v4674, 0
        %v4737 = vsel %vm4255, %v4676, 0
        %v4740 = vsel %vm4255, %v4678, 0
        %v4743 = vsel %vm4255, %v4680, 0
        %v4746 = vsel %vm4255, %v4682, 0
        %v4749 = vsel %vm4255, %v4684, 0
        %4751 = vmatprep.subr.bf16.mxu0 0
        %4752 = vmatpush1.bf16.msra.mxu0 %v4701
        %4753 = vmatprep.subr.bf16.mxu0 0
        %4754 = vmatpush1.bf16.msra.mxu0 %v4702
        %4755 = vmatprep.subr.bf16.mxu0 0
        %4756 = vmatpush1.bf16.msra.mxu0 %v4703
        %4757 = vmatprep.subr.bf16.mxu0 0
        %4758 = vmatpush1.bf16.msra.mxu0 %v4704
        %4759 = vmatprep.subr.bf16.mxu0 0
        %4760 = vmatpush1.bf16.msra.mxu0 0
        %4761 = vmatprep.subr.bf16.mxu0 0
        %4762 = vmatpush1.bf16.msra.mxu0 0
        %4763 = vmatprep.subr.bf16.mxu0 0
        %4764 = vmatpush1.bf16.msra.mxu0 0
        %4765 = vmatprep.subr.bf16.mxu0 0
        %4766 = vmatpush1.bf16.msra.mxu0 0
        %4767 = vmatprep.subr.bf16.mxu0 0
        %4768 = vmatpush1.bf16.msra.mxu0 0
        %4769 = vmatprep.subr.bf16.mxu0 0
        %4770 = vmatpush1.bf16.msra.mxu0 0
        %4771 = vmatprep.subr.bf16.mxu0 0
        %4772 = vmatpush1.bf16.msra.mxu0 0
        %4773 = vmatprep.subr.bf16.mxu0 0
        %4774 = vmatpush1.bf16.msra.mxu0 0
        %4775 = vmatprep.subr.bf16.mxu0 0
        %4776 = vmatpush1.bf16.msra.mxu0 0
        %4777 = vmatprep.subr.bf16.mxu0 0
        %4778 = vmatpush1.bf16.msra.mxu0 0
        %4779 = vmatprep.subr.bf16.mxu0 0
        %4780 = vmatpush1.bf16.msra.mxu0 0
        %4781 = vmatprep.subr.bf16.mxu0 0
        %4782 = vmatpush1.bf16.msra.mxu0 0
        %4783 = vmatprep.mubr.bf16.mxu0 0
        %4784 = vmatmul.mubr.bf16.gmra.mrb[0].mxu0 %v4710
        %v4785 = vpop.f32.mrb[0].mxu0
        %v4786 = vadd.f32 0.0, %v4785
        %v4787 = vpop.f32.mrb[0].mxu0
        %v4788 = vpop.f32.mrb[0].mxu0
        %v4789 = vadd.f32 0.0, %v4788
        %v4790 = vpop.f32.mrb[0].mxu0
        %4791 = vmatprep.mubr.bf16.mxu0 0
        %4792 = vmatmul.mubr.bf16.gmra.mrb[0].mxu0 %v4713
        %v4793 = vpop.f32.mrb[0].mxu0
        %v4794 = vadd.f32 0.0, %v4793
        %v4795 = vpop.f32.mrb[0].mxu0
        %v4796 = vpop.f32.mrb[0].mxu0
        %v4797 = vadd.f32 0.0, %v4796
        %v4798 = vpop.f32.mrb[0].mxu0
        %4799 = vmatprep.mubr.bf16.mxu0 0
        %4800 = vmatmul.mubr.bf16.gmra.mrb[0].mxu0 %v4716
        %v4801 = vpop.f32.mrb[0].mxu0
        %v4802 = vadd.f32 0.0, %v4801
        %v4803 = vpop.f32.mrb[0].mxu0
        %v4804 = vpop.f32.mrb[0].mxu0
        %v4805 = vadd.f32 0.0, %v4804
        %v4806 = vpop.f32.mrb[0].mxu0
        %4807 = vmatprep.mubr.bf16.mxu0 0
        %4808 = vmatmul.mubr.bf16.gmra.mrb[0].mxu0 %v4719
        %v4809 = vpop.f32.mrb[0].mxu0
        %v4810 = vadd.f32 0.0, %v4809
        %v4811 = vpop.f32.mrb[0].mxu0
        %v4812 = vpop.f32.mrb[0].mxu0
        %v4813 = vadd.f32 0.0, %v4812
        %v4814 = vpop.f32.mrb[0].mxu0
        %4815 = vmatprep.mubr.bf16.mxu0 0
        %4816 = vmatmul.mubr.bf16.gmra.mrb[0].mxu0 %v4722
        %v4817 = vpop.f32.mrb[0].mxu0
        %v4818 = vadd.f32 0.0, %v4817
        %v4819 = vpop.f32.mrb[0].mxu0
        %v4820 = vpop.f32.mrb[0].mxu0
        %v4821 = vadd.f32 0.0, %v4820
        %v4822 = vpop.f32.mrb[0].mxu0
        %4823 = vmatprep.mubr.bf16.mxu0 0
        %4824 = vmatmul.mubr.bf16.gmra.mrb[0].mxu0 %v4725
        %v4825 = vpop.f32.mrb[0].mxu0
        %v4826 = vadd.f32 0.0, %v4825
        %v4827 = vpop.f32.mrb[0].mxu0
        %v4828 = vpop.f32.mrb[0].mxu0
        %v4829 = vadd.f32 0.0, %v4828
        %v4830 = vpop.f32.mrb[0].mxu0
        %4831 = vmatprep.mubr.bf16.mxu0 0
        %4832 = vmatmul.mubr.bf16.gmra.mrb[0].mxu0 %v4728
        %v4833 = vpop.f32.mrb[0].mxu0
        %v4834 = vadd.f32 0.0, %v4833
        %v4835 = vpop.f32.mrb[0].mxu0
        %v4836 = vpop.f32.mrb[0].mxu0
        %v4837 = vadd.f32 0.0, %v4836
        %v4838 = vpop.f32.mrb[0].mxu0
        %4839 = vmatprep.mubr.bf16.mxu0 0
        %4840 = vmatmul.mubr.bf16.gmra.mrb[0].mxu0 %v4731
        %v4841 = vpop.f32.mrb[0].mxu0
        %v4842 = vadd.f32 0.0, %v4841
        %v4843 = vpop.f32.mrb[0].mxu0
        %v4844 = vpop.f32.mrb[0].mxu0
        %v4845 = vadd.f32 0.0, %v4844
        %v4846 = vpop.f32.mrb[0].mxu0
        %4847 = vmatprep.mubr.bf16.mxu0 0
        %4848 = vmatmul.mubr.bf16.gmra.mrb[0].mxu0 %v4734
        %v4849 = vpop.f32.mrb[0].mxu0
        %v4850 = vadd.f32 0.0, %v4849
        %v4851 = vpop.f32.mrb[0].mxu0
        %v4852 = vpop.f32.mrb[0].mxu0
        %v4853 = vadd.f32 0.0, %v4852
        %v4854 = vpop.f32.mrb[0].mxu0
        %4855 = vmatprep.mubr.bf16.mxu0 0
        %4856 = vmatmul.mubr.bf16.gmra.mrb[0].mxu0 %v4737
        %v4857 = vpop.f32.mrb[0].mxu0
        %v4858 = vadd.f32 0.0, %v4857
        %v4859 = vpop.f32.mrb[0].mxu0
        %v4860 = vpop.f32.mrb[0].mxu0
        %v4861 = vadd.f32 0.0, %v4860
        %v4862 = vpop.f32.mrb[0].mxu0
        %4863 = vmatprep.mubr.bf16.mxu0 0
        %4864 = vmatmul.mubr.bf16.gmra.mrb[0].mxu0 %v4740
        %v4865 = vpop.f32.mrb[0].mxu0
        %v4866 = vadd.f32 0.0, %v4865
        %v4867 = vpop.f32.mrb[0].mxu0
        %v4868 = vpop.f32.mrb[0].mxu0
        %v4869 = vadd.f32 0.0, %v4868
        %v4870 = vpop.f32.mrb[0].mxu0
        %4871 = vmatprep.mubr.bf16.mxu0 0
        %4872 = vmatmul.mubr.bf16.gmra.mrb[0].mxu0 %v4743
        %v4873 = vpop.f32.mrb[0].mxu0
        %v4874 = vadd.f32 0.0, %v4873
        %v4875 = vpop.f32.mrb[0].mxu0
        %v4876 = vpop.f32.mrb[0].mxu0
        %v4877 = vadd.f32 0.0, %v4876
        %v4878 = vpop.f32.mrb[0].mxu0
        %4879 = vmatprep.mubr.bf16.mxu0 0
        %4880 = vmatmul.mubr.bf16.gmra.mrb[0].mxu0 %v4746
        %v4881 = vpop.f32.mrb[0].mxu0
        %v4882 = vadd.f32 0.0, %v4881
        %v4883 = vpop.f32.mrb[0].mxu0
        %v4884 = vpop.f32.mrb[0].mxu0
        %v4885 = vadd.f32 0.0, %v4884
        %v4886 = vpop.f32.mrb[0].mxu0
        %4887 = vmatprep.mubr.bf16.mxu0 0
        %4888 = vmatmul.mubr.bf16.gmra.mrb[0].mxu0 %v4749
        %v4889 = vpop.f32.mrb[0].mxu0
        %v4890 = vadd.f32 0.0, %v4889
        %v4891 = vpop.f32.mrb[0].mxu0
        %v4892 = vpop.f32.mrb[0].mxu0
        %v4893 = vadd.f32 0.0, %v4892
        %v4894 = vpop.f32.mrb[0].mxu0
        %4895 = vdwg.mxu0
        %v4896 = vadd.f32 %v4530, %v4786
        %v4897 = vadd.f32 %v4533, %v4789
        %v4898 = vadd.f32 %v4538, %v4794
        %v4899 = vadd.f32 %v4541, %v4797
        %v4900 = vadd.f32 %v4546, %v4802
        %v4901 = vadd.f32 %v4549, %v4805
        %v4902 = vadd.f32 %v4554, %v4810
        %v4903 = vadd.f32 %v4557, %v4813
        %v4904 = vadd.f32 %v4562, %v4818
        %v4905 = vadd.f32 %v4565, %v4821
        %v4906 = vadd.f32 %v4570, %v4826
        %v4907 = vadd.f32 %v4573, %v4829
        %v4908 = vadd.f32 %v4578, %v4834
        %v4909 = vadd.f32 %v4581, %v4837
        %v4910 = vadd.f32 %v4586, %v4842
        %v4911 = vadd.f32 %v4589, %v4845
        %v4912 = vadd.f32 %v4594, %v4850
        %v4913 = vadd.f32 %v4597, %v4853
        %v4914 = vadd.f32 %v4602, %v4858
        %v4915 = vadd.f32 %v4605, %v4861
        %v4916 = vadd.f32 %v4610, %v4866
        %v4917 = vadd.f32 %v4613, %v4869
        %v4918 = vadd.f32 %v4618, %v4874
        %v4919 = vadd.f32 %v4621, %v4877
        %v4920 = vadd.f32 %v4626, %v4882
        %v4921 = vadd.f32 %v4629, %v4885
        %v4922 = vadd.f32 %v4634, %v4890
        %v4923 = vadd.f32 %v4637, %v4893
        %v4932 = vunpack.c.l.b16 %v4066
        %v4933 = vunpack.c.l.b16 %v4067
        %v4934 = vunpack.c.l.b16 %v4068
        %v4935 = vunpack.c.l.b16 %v4069
        %v4936 = vunpack.c.l.b16 %v4070
        %v4937 = vunpack.c.l.b16 %v4071
        %v4938 = vunpack.c.l.b16 %v4072
        %v4939 = vunpack.c.l.b16 %v4073
        %v4940 = vpack.c.b16 %v4933, %v4932
        %v4941 = vpack.c.b16 %v4935, %v4934
        %v4942 = vpack.c.b16 %v4937, %v4936
        %v4943 = vpack.c.b16 %v4939, %v4938
        %v4948 = vsel %vm4255, %v4039, 0
        %4950 = vmatprep.subr.bf16.mxu0 0
        %4951 = vmatpush1.bf16.msra.mxu0 %v4940
        %4952 = vmatprep.subr.bf16.mxu0 0
        %4953 = vmatpush1.bf16.msra.mxu0 %v4941
        %4954 = vmatprep.subr.bf16.mxu0 0
        %4955 = vmatpush1.bf16.msra.mxu0 %v4942
        %4956 = vmatprep.subr.bf16.mxu0 0
        %4957 = vmatpush1.bf16.msra.mxu0 %v4943
        %4958 = vmatprep.subr.bf16.mxu0 0
        %4959 = vmatpush1.bf16.msra.mxu0 0
        %4960 = vmatprep.subr.bf16.mxu0 0
        %4961 = vmatpush1.bf16.msra.mxu0 0
        %4962 = vmatprep.subr.bf16.mxu0 0
        %4963 = vmatpush1.bf16.msra.mxu0 0
        %4964 = vmatprep.subr.bf16.mxu0 0
        %4965 = vmatpush1.bf16.msra.mxu0 0
        %4966 = vmatprep.subr.bf16.mxu0 0
        %4967 = vmatpush1.bf16.msra.mxu0 0
        %4968 = vmatprep.subr.bf16.mxu0 0
        %4969 = vmatpush1.bf16.msra.mxu0 0
        %4970 = vmatprep.subr.bf16.mxu0 0
        %4971 = vmatpush1.bf16.msra.mxu0 0
        %4972 = vmatprep.subr.bf16.mxu0 0
        %4973 = vmatpush1.bf16.msra.mxu0 0
        %4974 = vmatprep.subr.bf16.mxu0 0
        %4975 = vmatpush1.bf16.msra.mxu0 0
        %4976 = vmatprep.subr.bf16.mxu0 0
        %4977 = vmatpush1.bf16.msra.mxu0 0
        %4978 = vmatprep.subr.bf16.mxu0 0
        %4979 = vmatpush1.bf16.msra.mxu0 0
        %4980 = vmatprep.subr.bf16.mxu0 0
        %4981 = vmatpush1.bf16.msra.mxu0 0
        %4982 = vmatprep.mubr.bf16.mxu0 0
        %4983 = vmatmul.mubr.bf16.gmra.mrb[0].mxu0 %v4469
        %v4984 = vpop.f32.mrb[0].mxu0
        %v4985 = vadd.f32 0.0, %v4984
        %v4986 = vpop.f32.mrb[0].mxu0
        %v4987 = vpop.f32.mrb[0].mxu0
        %v4988 = vadd.f32 0.0, %v4987
        %v4989 = vpop.f32.mrb[0].mxu0
        %4990 = vmatprep.mubr.bf16.mxu0 0
        %4991 = vmatmul.mubr.bf16.gmra.mrb[0].mxu0 %v4471
        %v4992 = vpop.f32.mrb[0].mxu0
        %v4993 = vadd.f32 0.0, %v4992
        %v4994 = vpop.f32.mrb[0].mxu0
        %v4995 = vpop.f32.mrb[0].mxu0
        %v4996 = vadd.f32 0.0, %v4995
        %v4997 = vpop.f32.mrb[0].mxu0
        %4998 = vmatprep.mubr.bf16.mxu0 0
        %4999 = vmatmul.mubr.bf16.gmra.mrb[0].mxu0 %v4473
        %v5000 = vpop.f32.mrb[0].mxu0
        %v5001 = vadd.f32 0.0, %v5000
        %v5002 = vpop.f32.mrb[0].mxu0
        %v5003 = vpop.f32.mrb[0].mxu0
        %v5004 = vadd.f32 0.0, %v5003
        %v5005 = vpop.f32.mrb[0].mxu0
        %5006 = vmatprep.mubr.bf16.mxu0 0
        %5007 = vmatmul.mubr.bf16.gmra.mrb[0].mxu0 %v4475
        %v5008 = vpop.f32.mrb[0].mxu0
        %v5009 = vadd.f32 0.0, %v5008
        %v5010 = vpop.f32.mrb[0].mxu0
        %v5011 = vpop.f32.mrb[0].mxu0
        %v5012 = vadd.f32 0.0, %v5011
        %v5013 = vpop.f32.mrb[0].mxu0
        %5014 = vmatprep.mubr.bf16.mxu0 0
        %5015 = vmatmul.mubr.bf16.gmra.mrb[0].mxu0 %v4477
        %v5016 = vpop.f32.mrb[0].mxu0
        %v5017 = vadd.f32 0.0, %v5016
        %v5018 = vpop.f32.mrb[0].mxu0
        %v5019 = vpop.f32.mrb[0].mxu0
        %v5020 = vadd.f32 0.0, %v5019
        %v5021 = vpop.f32.mrb[0].mxu0
        %5022 = vmatprep.mubr.bf16.mxu0 0
        %5023 = vmatmul.mubr.bf16.gmra.mrb[0].mxu0 %v4479
        %v5024 = vpop.f32.mrb[0].mxu0
        %v5025 = vadd.f32 0.0, %v5024
        %v5026 = vpop.f32.mrb[0].mxu0
        %v5027 = vpop.f32.mrb[0].mxu0
        %v5028 = vadd.f32 0.0, %v5027
        %v5029 = vpop.f32.mrb[0].mxu0
        %5030 = vmatprep.mubr.bf16.mxu0 0
        %5031 = vmatmul.mubr.bf16.gmra.mrb[0].mxu0 %v4481
        %v5032 = vpop.f32.mrb[0].mxu0
        %v5033 = vadd.f32 0.0, %v5032
        %v5034 = vpop.f32.mrb[0].mxu0
        %v5035 = vpop.f32.mrb[0].mxu0
        %v5036 = vadd.f32 0.0, %v5035
        %v5037 = vpop.f32.mrb[0].mxu0
        %5038 = vmatprep.mubr.bf16.mxu0 0
        %5039 = vmatmul.mubr.bf16.gmra.mrb[0].mxu0 %v4483
        %v5040 = vpop.f32.mrb[0].mxu0
        %v5041 = vadd.f32 0.0, %v5040
        %v5042 = vpop.f32.mrb[0].mxu0
        %v5043 = vpop.f32.mrb[0].mxu0
        %v5044 = vadd.f32 0.0, %v5043
        %v5045 = vpop.f32.mrb[0].mxu0
        %5046 = vmatprep.mubr.bf16.mxu0 0
        %5047 = vmatmul.mubr.bf16.gmra.mrb[0].mxu0 %v4485
        %v5048 = vpop.f32.mrb[0].mxu0
        %v5049 = vadd.f32 0.0, %v5048
        %v5050 = vpop.f32.mrb[0].mxu0
        %v5051 = vpop.f32.mrb[0].mxu0
        %v5052 = vadd.f32 0.0, %v5051
        %v5053 = vpop.f32.mrb[0].mxu0
        %5054 = vmatprep.mubr.bf16.mxu0 0
        %5055 = vmatmul.mubr.bf16.gmra.mrb[0].mxu0 %v4487
        %v5056 = vpop.f32.mrb[0].mxu0
        %v5057 = vadd.f32 0.0, %v5056
        %v5058 = vpop.f32.mrb[0].mxu0
        %v5059 = vpop.f32.mrb[0].mxu0
        %v5060 = vadd.f32 0.0, %v5059
        %v5061 = vpop.f32.mrb[0].mxu0
        %5062 = vmatprep.mubr.bf16.mxu0 0
        %5063 = vmatmul.mubr.bf16.gmra.mrb[0].mxu0 %v4489
        %v5064 = vpop.f32.mrb[0].mxu0
        %v5065 = vadd.f32 0.0, %v5064
        %v5066 = vpop.f32.mrb[0].mxu0
        %v5067 = vpop.f32.mrb[0].mxu0
        %v5068 = vadd.f32 0.0, %v5067
        %v5069 = vpop.f32.mrb[0].mxu0
        %5070 = vmatprep.mubr.bf16.mxu0 0
        %5071 = vmatmul.mubr.bf16.gmra.mrb[0].mxu0 %v4491
        %v5072 = vpop.f32.mrb[0].mxu0
        %v5073 = vadd.f32 0.0, %v5072
        %v5074 = vpop.f32.mrb[0].mxu0
        %v5075 = vpop.f32.mrb[0].mxu0
        %v5076 = vadd.f32 0.0, %v5075
        %v5077 = vpop.f32.mrb[0].mxu0
        %5078 = vmatprep.mubr.bf16.mxu0 0
        %5079 = vmatmul.mubr.bf16.gmra.mrb[0].mxu0 %v4493
        %v5080 = vpop.f32.mrb[0].mxu0
        %v5081 = vadd.f32 0.0, %v5080
        %v5082 = vpop.f32.mrb[0].mxu0
        %v5083 = vpop.f32.mrb[0].mxu0
        %v5084 = vadd.f32 0.0, %v5083
        %v5085 = vpop.f32.mrb[0].mxu0
        %5086 = vmatprep.mubr.bf16.mxu0 0
        %5087 = vmatmul.mubr.bf16.gmra.mrb[0].mxu0 %v4948
        %v5088 = vpop.f32.mrb[0].mxu0
        %v5089 = vadd.f32 0.0, %v5088
        %v5090 = vpop.f32.mrb[0].mxu0
        %v5091 = vpop.f32.mrb[0].mxu0
        %v5092 = vadd.f32 0.0, %v5091
        %v5093 = vpop.f32.mrb[0].mxu0
        %5094 = vdwg.mxu0
        %v5095 = vadd.f32 %v4896, %v4985
        %v5096 = vadd.f32 %v4897, %v4988
        %v5097 = vadd.f32 %v4898, %v4993
        %v5098 = vadd.f32 %v4899, %v4996
        %v5099 = vadd.f32 %v4900, %v5001
        %v5100 = vadd.f32 %v4901, %v5004
        %v5101 = vadd.f32 %v4902, %v5009
        %v5102 = vadd.f32 %v4903, %v5012
        %v5103 = vadd.f32 %v4904, %v5017
        %v5104 = vadd.f32 %v4905, %v5020
        %v5105 = vadd.f32 %v4906, %v5025
        %v5106 = vadd.f32 %v4907, %v5028
        %v5107 = vadd.f32 %v4908, %v5033
        %v5108 = vadd.f32 %v4909, %v5036
        %v5109 = vadd.f32 %v4910, %v5041
        %v5110 = vadd.f32 %v4911, %v5044
        %v5111 = vadd.f32 %v4912, %v5049
        %v5112 = vadd.f32 %v4913, %v5052
        %v5113 = vadd.f32 %v4914, %v5057
        %v5114 = vadd.f32 %v4915, %v5060
        %v5115 = vadd.f32 %v4916, %v5065
        %v5116 = vadd.f32 %v4917, %v5068
        %v5117 = vadd.f32 %v4918, %v5073
        %v5118 = vadd.f32 %v4919, %v5076
        %v5119 = vadd.f32 %v4920, %v5081
        %v5120 = vadd.f32 %v4921, %v5084
        %v5121 = vadd.f32 %v4922, %v5089
        %v5122 = vadd.f32 %v4923, %v5092
        %v5123 = vshrl.u32 %v4039, 16
        %v5125 = vor.u32 %v5123, %v4229
        %v5127 = vshll.u32 %v4040, 16
        %v5129 = vrot.slane %v5127, 1
        %v5130 = vsel %vm4114, %v5125, %v5129
        %v5139 = vunpack.c.l.b16 %v4074
        %v5140 = vunpack.c.l.b16 %v4075
        %v5141 = vunpack.c.l.b16 %v4076
        %v5142 = vunpack.c.l.b16 %v4077
        %v5143 = vunpack.c.l.b16 %v4078
        %v5144 = vunpack.c.l.b16 %v4079
        %v5145 = vunpack.c.l.b16 %v4080
        %v5146 = vunpack.c.l.b16 %v4081
        %v5147 = vpack.c.b16 %v5140, %v5139
        %v5148 = vpack.c.b16 %v5142, %v5141
        %v5149 = vpack.c.b16 %v5144, %v5143
        %v5150 = vpack.c.b16 %v5146, %v5145
        %v5156 = vsel %vm4255, %v5130, 0
        %5158 = vmatprep.subr.bf16.mxu0 0
        %5159 = vmatpush1.bf16.msra.mxu0 %v5147
        %5160 = vmatprep.subr.bf16.mxu0 0
        %5161 = vmatpush1.bf16.msra.mxu0 %v5148
        %5162 = vmatprep.subr.bf16.mxu0 0
        %5163 = vmatpush1.bf16.msra.mxu0 %v5149
        %5164 = vmatprep.subr.bf16.mxu0 0
        %5165 = vmatpush1.bf16.msra.mxu0 %v5150
        %5166 = vmatprep.subr.bf16.mxu0 0
        %5167 = vmatpush1.bf16.msra.mxu0 0
        %5168 = vmatprep.subr.bf16.mxu0 0
        %5169 = vmatpush1.bf16.msra.mxu0 0
        %5170 = vmatprep.subr.bf16.mxu0 0
        %5171 = vmatpush1.bf16.msra.mxu0 0
        %5172 = vmatprep.subr.bf16.mxu0 0
        %5173 = vmatpush1.bf16.msra.mxu0 0
        %5174 = vmatprep.subr.bf16.mxu0 0
        %5175 = vmatpush1.bf16.msra.mxu0 0
        %5176 = vmatprep.subr.bf16.mxu0 0
        %5177 = vmatpush1.bf16.msra.mxu0 0
        %5178 = vmatprep.subr.bf16.mxu0 0
        %5179 = vmatpush1.bf16.msra.mxu0 0
        %5180 = vmatprep.subr.bf16.mxu0 0
        %5181 = vmatpush1.bf16.msra.mxu0 0
        %5182 = vmatprep.subr.bf16.mxu0 0
        %5183 = vmatpush1.bf16.msra.mxu0 0
        %5184 = vmatprep.subr.bf16.mxu0 0
        %5185 = vmatpush1.bf16.msra.mxu0 0
        %5186 = vmatprep.subr.bf16.mxu0 0
        %5187 = vmatpush1.bf16.msra.mxu0 0
        %5188 = vmatprep.subr.bf16.mxu0 0
        %5189 = vmatpush1.bf16.msra.mxu0 0
        %5190 = vmatprep.mubr.bf16.mxu0 0
        %5191 = vmatmul.mubr.bf16.gmra.mrb[0].mxu0 %v4260
        %v5192 = vpop.f32.mrb[0].mxu0
        %v5193 = vadd.f32 0.0, %v5192
        %v5194 = vpop.f32.mrb[0].mxu0
        %v5195 = vpop.f32.mrb[0].mxu0
        %v5196 = vadd.f32 0.0, %v5195
        %v5197 = vpop.f32.mrb[0].mxu0
        %5198 = vmatprep.mubr.bf16.mxu0 0
        %5199 = vmatmul.mubr.bf16.gmra.mrb[0].mxu0 %v4263
        %v5200 = vpop.f32.mrb[0].mxu0
        %v5201 = vadd.f32 0.0, %v5200
        %v5202 = vpop.f32.mrb[0].mxu0
        %v5203 = vpop.f32.mrb[0].mxu0
        %v5204 = vadd.f32 0.0, %v5203
        %v5205 = vpop.f32.mrb[0].mxu0
        %5206 = vmatprep.mubr.bf16.mxu0 0
        %5207 = vmatmul.mubr.bf16.gmra.mrb[0].mxu0 %v4266
        %v5208 = vpop.f32.mrb[0].mxu0
        %v5209 = vadd.f32 0.0, %v5208
        %v5210 = vpop.f32.mrb[0].mxu0
        %v5211 = vpop.f32.mrb[0].mxu0
        %v5212 = vadd.f32 0.0, %v5211
        %v5213 = vpop.f32.mrb[0].mxu0
        %5214 = vmatprep.mubr.bf16.mxu0 0
        %5215 = vmatmul.mubr.bf16.gmra.mrb[0].mxu0 %v4269
        %v5216 = vpop.f32.mrb[0].mxu0
        %v5217 = vadd.f32 0.0, %v5216
        %v5218 = vpop.f32.mrb[0].mxu0
        %v5219 = vpop.f32.mrb[0].mxu0
        %v5220 = vadd.f32 0.0, %v5219
        %v5221 = vpop.f32.mrb[0].mxu0
        %5222 = vmatprep.mubr.bf16.mxu0 0
        %5223 = vmatmul.mubr.bf16.gmra.mrb[0].mxu0 %v4272
        %v5224 = vpop.f32.mrb[0].mxu0
        %v5225 = vadd.f32 0.0, %v5224
        %v5226 = vpop.f32.mrb[0].mxu0
        %v5227 = vpop.f32.mrb[0].mxu0
        %v5228 = vadd.f32 0.0, %v5227
        %v5229 = vpop.f32.mrb[0].mxu0
        %5230 = vmatprep.mubr.bf16.mxu0 0
        %5231 = vmatmul.mubr.bf16.gmra.mrb[0].mxu0 %v4275
        %v5232 = vpop.f32.mrb[0].mxu0
        %v5233 = vadd.f32 0.0, %v5232
        %v5234 = vpop.f32.mrb[0].mxu0
        %v5235 = vpop.f32.mrb[0].mxu0
        %v5236 = vadd.f32 0.0, %v5235
        %v5237 = vpop.f32.mrb[0].mxu0
        %5238 = vmatprep.mubr.bf16.mxu0 0
        %5239 = vmatmul.mubr.bf16.gmra.mrb[0].mxu0 %v4278
        %v5240 = vpop.f32.mrb[0].mxu0
        %v5241 = vadd.f32 0.0, %v5240
        %v5242 = vpop.f32.mrb[0].mxu0
        %v5243 = vpop.f32.mrb[0].mxu0
        %v5244 = vadd.f32 0.0, %v5243
        %v5245 = vpop.f32.mrb[0].mxu0
        %5246 = vmatprep.mubr.bf16.mxu0 0
        %5247 = vmatmul.mubr.bf16.gmra.mrb[0].mxu0 %v4281
        %v5248 = vpop.f32.mrb[0].mxu0
        %v5249 = vadd.f32 0.0, %v5248
        %v5250 = vpop.f32.mrb[0].mxu0
        %v5251 = vpop.f32.mrb[0].mxu0
        %v5252 = vadd.f32 0.0, %v5251
        %v5253 = vpop.f32.mrb[0].mxu0
        %5254 = vmatprep.mubr.bf16.mxu0 0
        %5255 = vmatmul.mubr.bf16.gmra.mrb[0].mxu0 %v4284
        %v5256 = vpop.f32.mrb[0].mxu0
        %v5257 = vadd.f32 0.0, %v5256
        %v5258 = vpop.f32.mrb[0].mxu0
        %v5259 = vpop.f32.mrb[0].mxu0
        %v5260 = vadd.f32 0.0, %v5259
        %v5261 = vpop.f32.mrb[0].mxu0
        %5262 = vmatprep.mubr.bf16.mxu0 0
        %5263 = vmatmul.mubr.bf16.gmra.mrb[0].mxu0 %v4287
        %v5264 = vpop.f32.mrb[0].mxu0
        %v5265 = vadd.f32 0.0, %v5264
        %v5266 = vpop.f32.mrb[0].mxu0
        %v5267 = vpop.f32.mrb[0].mxu0
        %v5268 = vadd.f32 0.0, %v5267
        %v5269 = vpop.f32.mrb[0].mxu0
        %5270 = vmatprep.mubr.bf16.mxu0 0
        %5271 = vmatmul.mubr.bf16.gmra.mrb[0].mxu0 %v4290
        %v5272 = vpop.f32.mrb[0].mxu0
        %v5273 = vadd.f32 0.0, %v5272
        %v5274 = vpop.f32.mrb[0].mxu0
        %v5275 = vpop.f32.mrb[0].mxu0
        %v5276 = vadd.f32 0.0, %v5275
        %v5277 = vpop.f32.mrb[0].mxu0
        %5278 = vmatprep.mubr.bf16.mxu0 0
        %5279 = vmatmul.mubr.bf16.gmra.mrb[0].mxu0 %v4293
        %v5280 = vpop.f32.mrb[0].mxu0
        %v5281 = vadd.f32 0.0, %v5280
        %v5282 = vpop.f32.mrb[0].mxu0
        %v5283 = vpop.f32.mrb[0].mxu0
        %v5284 = vadd.f32 0.0, %v5283
        %v5285 = vpop.f32.mrb[0].mxu0
        %5286 = vmatprep.mubr.bf16.mxu0 0
        %5287 = vmatmul.mubr.bf16.gmra.mrb[0].mxu0 %v4296
        %v5288 = vpop.f32.mrb[0].mxu0
        %v5289 = vadd.f32 0.0, %v5288
        %v5290 = vpop.f32.mrb[0].mxu0
        %v5291 = vpop.f32.mrb[0].mxu0
        %v5292 = vadd.f32 0.0, %v5291
        %v5293 = vpop.f32.mrb[0].mxu0
        %5294 = vmatprep.mubr.bf16.mxu0 0
        %5295 = vmatmul.mubr.bf16.gmra.mrb[0].mxu0 %v5156
        %v5296 = vpop.f32.mrb[0].mxu0
        %v5297 = vadd.f32 0.0, %v5296
        %v5298 = vpop.f32.mrb[0].mxu0
        %v5299 = vpop.f32.mrb[0].mxu0
        %v5300 = vadd.f32 0.0, %v5299
        %v5301 = vpop.f32.mrb[0].mxu0
        %5302 = vdwg.mxu0
        %v5303 = vadd.f32 %v5095, %v5193
        %v5304 = vadd.f32 %v5096, %v5196
        %v5305 = vadd.f32 %v5097, %v5201
        %v5306 = vadd.f32 %v5098, %v5204
        %v5307 = vadd.f32 %v5099, %v5209
        %v5308 = vadd.f32 %v5100, %v5212
        %v5309 = vadd.f32 %v5101, %v5217
        %v5310 = vadd.f32 %v5102, %v5220
        %v5311 = vadd.f32 %v5103, %v5225
        %v5312 = vadd.f32 %v5104, %v5228
        %v5313 = vadd.f32 %v5105, %v5233
        %v5314 = vadd.f32 %v5106, %v5236
        %v5315 = vadd.f32 %v5107, %v5241
        %v5316 = vadd.f32 %v5108, %v5244
        %v5317 = vadd.f32 %v5109, %v5249
        %v5318 = vadd.f32 %v5110, %v5252
        %v5319 = vadd.f32 %v5111, %v5257
        %v5320 = vadd.f32 %v5112, %v5260
        %v5321 = vadd.f32 %v5113, %v5265
        %v5322 = vadd.f32 %v5114, %v5268
        %v5323 = vadd.f32 %v5115, %v5273
        %v5324 = vadd.f32 %v5116, %v5276
        %v5325 = vadd.f32 %v5117, %v5281
        %v5326 = vadd.f32 %v5118, %v5284
        %v5327 = vadd.f32 %v5119, %v5289
        %v5328 = vadd.f32 %v5120, %v5292
        %v5329 = vadd.f32 %v5121, %v5297
        %v5330 = vadd.f32 %v5122, %v5300
        %v5332 = vrot.slane %v4040, 1
        %v5333 = vsel %vm4655, %v4683, %v5332
        %v5342 = vunpack.c.l.b16 %v4082
        %v5343 = vunpack.c.l.b16 %v4083
        %v5344 = vunpack.c.l.b16 %v4084
        %v5345 = vunpack.c.l.b16 %v4085
        %v5346 = vunpack.c.l.b16 %v4086
        %v5347 = vunpack.c.l.b16 %v4087
        %v5348 = vunpack.c.l.b16 %v4088
        %v5349 = vunpack.c.l.b16 %v4089
        %v5350 = vpack.c.b16 %v5343, %v5342
        %v5351 = vpack.c.b16 %v5345, %v5344
        %v5352 = vpack.c.b16 %v5347, %v5346
        %v5353 = vpack.c.b16 %v5349, %v5348
        %v5359 = vsel %vm4255, %v5333, 0
        %5361 = vmatprep.subr.bf16.mxu0 0
        %5362 = vmatpush1.bf16.msra.mxu0 %v5350
        %5363 = vmatprep.subr.bf16.mxu0 0
        %5364 = vmatpush1.bf16.msra.mxu0 %v5351
        %5365 = vmatprep.subr.bf16.mxu0 0
        %5366 = vmatpush1.bf16.msra.mxu0 %v5352
        %5367 = vmatprep.subr.bf16.mxu0 0
        %5368 = vmatpush1.bf16.msra.mxu0 %v5353
        %5369 = vmatprep.subr.bf16.mxu0 0
        %5370 = vmatpush1.bf16.msra.mxu0 0
        %5371 = vmatprep.subr.bf16.mxu0 0
        %5372 = vmatpush1.bf16.msra.mxu0 0
        %5373 = vmatprep.subr.bf16.mxu0 0
        %5374 = vmatpush1.bf16.msra.mxu0 0
        %5375 = vmatprep.subr.bf16.mxu0 0
        %5376 = vmatpush1.bf16.msra.mxu0 0
        %5377 = vmatprep.subr.bf16.mxu0 0
        %5378 = vmatpush1.bf16.msra.mxu0 0
        %5379 = vmatprep.subr.bf16.mxu0 0
        %5380 = vmatpush1.bf16.msra.mxu0 0
        %5381 = vmatprep.subr.bf16.mxu0 0
        %5382 = vmatpush1.bf16.msra.mxu0 0
        %5383 = vmatprep.subr.bf16.mxu0 0
        %5384 = vmatpush1.bf16.msra.mxu0 0
        %5385 = vmatprep.subr.bf16.mxu0 0
        %5386 = vmatpush1.bf16.msra.mxu0 0
        %5387 = vmatprep.subr.bf16.mxu0 0
        %5388 = vmatpush1.bf16.msra.mxu0 0
        %5389 = vmatprep.subr.bf16.mxu0 0
        %5390 = vmatpush1.bf16.msra.mxu0 0
        %5391 = vmatprep.subr.bf16.mxu0 0
        %5392 = vmatpush1.bf16.msra.mxu0 0
        %5393 = vmatprep.mubr.bf16.mxu0 0
        %5394 = vmatmul.mubr.bf16.gmra.mrb[0].mxu0 %v4713
        %v5395 = vpop.f32.mrb[0].mxu0
        %v5396 = vadd.f32 0.0, %v5395
        %v5397 = vpop.f32.mrb[0].mxu0
        %v5398 = vpop.f32.mrb[0].mxu0
        %v5399 = vadd.f32 0.0, %v5398
        %v5400 = vpop.f32.mrb[0].mxu0
        %5401 = vmatprep.mubr.bf16.mxu0 0
        %5402 = vmatmul.mubr.bf16.gmra.mrb[0].mxu0 %v4716
        %v5403 = vpop.f32.mrb[0].mxu0
        %v5404 = vadd.f32 0.0, %v5403
        %v5405 = vpop.f32.mrb[0].mxu0
        %v5406 = vpop.f32.mrb[0].mxu0
        %v5407 = vadd.f32 0.0, %v5406
        %v5408 = vpop.f32.mrb[0].mxu0
        %5409 = vmatprep.mubr.bf16.mxu0 0
        %5410 = vmatmul.mubr.bf16.gmra.mrb[0].mxu0 %v4719
        %v5411 = vpop.f32.mrb[0].mxu0
        %v5412 = vadd.f32 0.0, %v5411
        %v5413 = vpop.f32.mrb[0].mxu0
        %v5414 = vpop.f32.mrb[0].mxu0
        %v5415 = vadd.f32 0.0, %v5414
        %v5416 = vpop.f32.mrb[0].mxu0
        %5417 = vmatprep.mubr.bf16.mxu0 0
        %5418 = vmatmul.mubr.bf16.gmra.mrb[0].mxu0 %v4722
        %v5419 = vpop.f32.mrb[0].mxu0
        %v5420 = vadd.f32 0.0, %v5419
        %v5421 = vpop.f32.mrb[0].mxu0
        %v5422 = vpop.f32.mrb[0].mxu0
        %v5423 = vadd.f32 0.0, %v5422
        %v5424 = vpop.f32.mrb[0].mxu0
        %5425 = vmatprep.mubr.bf16.mxu0 0
        %5426 = vmatmul.mubr.bf16.gmra.mrb[0].mxu0 %v4725
        %v5427 = vpop.f32.mrb[0].mxu0
        %v5428 = vadd.f32 0.0, %v5427
        %v5429 = vpop.f32.mrb[0].mxu0
        %v5430 = vpop.f32.mrb[0].mxu0
        %v5431 = vadd.f32 0.0, %v5430
        %v5432 = vpop.f32.mrb[0].mxu0
        %5433 = vmatprep.mubr.bf16.mxu0 0
        %5434 = vmatmul.mubr.bf16.gmra.mrb[0].mxu0 %v4728
        %v5435 = vpop.f32.mrb[0].mxu0
        %v5436 = vadd.f32 0.0, %v5435
        %v5437 = vpop.f32.mrb[0].mxu0
        %v5438 = vpop.f32.mrb[0].mxu0
        %v5439 = vadd.f32 0.0, %v5438
        %v5440 = vpop.f32.mrb[0].mxu0
        %5441 = vmatprep.mubr.bf16.mxu0 0
        %5442 = vmatmul.mubr.bf16.gmra.mrb[0].mxu0 %v4731
        %v5443 = vpop.f32.mrb[0].mxu0
        %v5444 = vadd.f32 0.0, %v5443
        %v5445 = vpop.f32.mrb[0].mxu0
        %v5446 = vpop.f32.mrb[0].mxu0
        %v5447 = vadd.f32 0.0, %v5446
        %v5448 = vpop.f32.mrb[0].mxu0
        %5449 = vmatprep.mubr.bf16.mxu0 0
        %5450 = vmatmul.mubr.bf16.gmra.mrb[0].mxu0 %v4734
        %v5451 = vpop.f32.mrb[0].mxu0
        %v5452 = vadd.f32 0.0, %v5451
        %v5453 = vpop.f32.mrb[0].mxu0
        %v5454 = vpop.f32.mrb[0].mxu0
        %v5455 = vadd.f32 0.0, %v5454
        %v5456 = vpop.f32.mrb[0].mxu0
        %5457 = vmatprep.mubr.bf16.mxu0 0
        %5458 = vmatmul.mubr.bf16.gmra.mrb[0].mxu0 %v4737
        %v5459 = vpop.f32.mrb[0].mxu0
        %v5460 = vadd.f32 0.0, %v5459
        %v5461 = vpop.f32.mrb[0].mxu0
        %v5462 = vpop.f32.mrb[0].mxu0
        %v5463 = vadd.f32 0.0, %v5462
        %v5464 = vpop.f32.mrb[0].mxu0
        %5465 = vmatprep.mubr.bf16.mxu0 0
        %5466 = vmatmul.mubr.bf16.gmra.mrb[0].mxu0 %v4740
        %v5467 = vpop.f32.mrb[0].mxu0
        %v5468 = vadd.f32 0.0, %v5467
        %v5469 = vpop.f32.mrb[0].mxu0
        %v5470 = vpop.f32.mrb[0].mxu0
        %v5471 = vadd.f32 0.0, %v5470
        %v5472 = vpop.f32.mrb[0].mxu0
        %5473 = vmatprep.mubr.bf16.mxu0 0
        %5474 = vmatmul.mubr.bf16.gmra.mrb[0].mxu0 %v4743
        %v5475 = vpop.f32.mrb[0].mxu0
        %v5476 = vadd.f32 0.0, %v5475
        %v5477 = vpop.f32.mrb[0].mxu0
        %v5478 = vpop.f32.mrb[0].mxu0
        %v5479 = vadd.f32 0.0, %v5478
        %v5480 = vpop.f32.mrb[0].mxu0
        %5481 = vmatprep.mubr.bf16.mxu0 0
        %5482 = vmatmul.mubr.bf16.gmra.mrb[0].mxu0 %v4746
        %v5483 = vpop.f32.mrb[0].mxu0
        %v5484 = vadd.f32 0.0, %v5483
        %v5485 = vpop.f32.mrb[0].mxu0
        %v5486 = vpop.f32.mrb[0].mxu0
        %v5487 = vadd.f32 0.0, %v5486
        %v5488 = vpop.f32.mrb[0].mxu0
        %5489 = vmatprep.mubr.bf16.mxu0 0
        %5490 = vmatmul.mubr.bf16.gmra.mrb[0].mxu0 %v4749
        %v5491 = vpop.f32.mrb[0].mxu0
        %v5492 = vadd.f32 0.0, %v5491
        %v5493 = vpop.f32.mrb[0].mxu0
        %v5494 = vpop.f32.mrb[0].mxu0
        %v5495 = vadd.f32 0.0, %v5494
        %v5496 = vpop.f32.mrb[0].mxu0
        %5497 = vmatprep.mubr.bf16.mxu0 0
        %5498 = vmatmul.mubr.bf16.gmra.mrb[0].mxu0 %v5359
        %v5499 = vpop.f32.mrb[0].mxu0
        %v5500 = vadd.f32 0.0, %v5499
        %v5501 = vpop.f32.mrb[0].mxu0
        %v5502 = vpop.f32.mrb[0].mxu0
        %v5503 = vadd.f32 0.0, %v5502
        %v5504 = vpop.f32.mrb[0].mxu0
        %5505 = vdwg.mxu0
        %v5506 = vadd.f32 %v5303, %v5396
        %v5507 = vadd.f32 %v5304, %v5399
        %v5508 = vadd.f32 %v5305, %v5404
        %v5509 = vadd.f32 %v5306, %v5407
        %v5510 = vadd.f32 %v5307, %v5412
        %v5511 = vadd.f32 %v5308, %v5415
        %v5512 = vadd.f32 %v5309, %v5420
        %v5513 = vadd.f32 %v5310, %v5423
        %v5514 = vadd.f32 %v5311, %v5428
        %v5515 = vadd.f32 %v5312, %v5431
        %v5516 = vadd.f32 %v5313, %v5436
        %v5517 = vadd.f32 %v5314, %v5439
        %v5518 = vadd.f32 %v5315, %v5444
        %v5519 = vadd.f32 %v5316, %v5447
        %v5520 = vadd.f32 %v5317, %v5452
        %v5521 = vadd.f32 %v5318, %v5455
        %v5522 = vadd.f32 %v5319, %v5460
        %v5523 = vadd.f32 %v5320, %v5463
        %v5524 = vadd.f32 %v5321, %v5468
        %v5525 = vadd.f32 %v5322, %v5471
        %v5526 = vadd.f32 %v5323, %v5476
        %v5527 = vadd.f32 %v5324, %v5479
        %v5528 = vadd.f32 %v5325, %v5484
        %v5529 = vadd.f32 %v5326, %v5487
        %v5530 = vadd.f32 %v5327, %v5492
        %v5531 = vadd.f32 %v5328, %v5495
        %v5532 = vadd.f32 %v5329, %v5500
        %v5533 = vadd.f32 %v5330, %v5503
        %v5542 = vunpack.c.l.b16 %v4090
        %v5543 = vunpack.c.l.b16 %v4091
        %v5544 = vunpack.c.l.b16 %v4092
        %v5545 = vunpack.c.l.b16 %v4093
        %v5546 = vunpack.c.l.b16 %v4094
        %v5547 = vunpack.c.l.b16 %v4095
        %v5548 = vunpack.c.l.b16 %v4096
        %v5549 = vunpack.c.l.b16 %v4097
        %v5550 = vpack.c.b16 %v5543, %v5542
        %v5551 = vpack.c.b16 %v5545, %v5544
        %v5552 = vpack.c.b16 %v5547, %v5546
        %v5553 = vpack.c.b16 %v5549, %v5548
        %v5558 = vsel %vm4255, %v4040, 0
        %5560 = vmatprep.subr.bf16.mxu0 0
        %5561 = vmatpush1.bf16.msra.mxu0 %v5550
        %5562 = vmatprep.subr.bf16.mxu0 0
        %5563 = vmatpush1.bf16.msra.mxu0 %v5551
        %5564 = vmatprep.subr.bf16.mxu0 0
        %5565 = vmatpush1.bf16.msra.mxu0 %v5552
        %5566 = vmatprep.subr.bf16.mxu0 0
        %5567 = vmatpush1.bf16.msra.mxu0 %v5553
        %5568 = vmatprep.subr.bf16.mxu0 0
        %5569 = vmatpush1.bf16.msra.mxu0 0
        %5570 = vmatprep.subr.bf16.mxu0 0
        %5571 = vmatpush1.bf16.msra.mxu0 0
        %5572 = vmatprep.subr.bf16.mxu0 0
        %5573 = vmatpush1.bf16.msra.mxu0 0
        %5574 = vmatprep.subr.bf16.mxu0 0
        %5575 = vmatpush1.bf16.msra.mxu0 0
        %5576 = vmatprep.subr.bf16.mxu0 0
        %5577 = vmatpush1.bf16.msra.mxu0 0
        %5578 = vmatprep.subr.bf16.mxu0 0
        %5579 = vmatpush1.bf16.msra.mxu0 0
        %5580 = vmatprep.subr.bf16.mxu0 0
        %5581 = vmatpush1.bf16.msra.mxu0 0
        %5582 = vmatprep.subr.bf16.mxu0 0
        %5583 = vmatpush1.bf16.msra.mxu0 0
        %5584 = vmatprep.subr.bf16.mxu0 0
        %5585 = vmatpush1.bf16.msra.mxu0 0
        %5586 = vmatprep.subr.bf16.mxu0 0
        %5587 = vmatpush1.bf16.msra.mxu0 0
        %5588 = vmatprep.subr.bf16.mxu0 0
        %5589 = vmatpush1.bf16.msra.mxu0 0
        %5590 = vmatprep.subr.bf16.mxu0 0
        %5591 = vmatpush1.bf16.msra.mxu0 0
        %5592 = vmatprep.mubr.bf16.mxu0 0
        %5593 = vmatmul.mubr.bf16.gmra.mrb[0].mxu0 %v4471
        %v5594 = vpop.f32.mrb[0].mxu0
        %v5595 = vadd.f32 0.0, %v5594
        %v5596 = vpop.f32.mrb[0].mxu0
        %v5597 = vpop.f32.mrb[0].mxu0
        %v5598 = vadd.f32 0.0, %v5597
        %v5599 = vpop.f32.mrb[0].mxu0
        %5600 = vmatprep.mubr.bf16.mxu0 0
        %5601 = vmatmul.mubr.bf16.gmra.mrb[0].mxu0 %v4473
        %v5602 = vpop.f32.mrb[0].mxu0
        %v5603 = vadd.f32 0.0, %v5602
        %v5604 = vpop.f32.mrb[0].mxu0
        %v5605 = vpop.f32.mrb[0].mxu0
        %v5606 = vadd.f32 0.0, %v5605
        %v5607 = vpop.f32.mrb[0].mxu0
        %5608 = vmatprep.mubr.bf16.mxu0 0
        %5609 = vmatmul.mubr.bf16.gmra.mrb[0].mxu0 %v4475
        %v5610 = vpop.f32.mrb[0].mxu0
        %v5611 = vadd.f32 0.0, %v5610
        %v5612 = vpop.f32.mrb[0].mxu0
        %v5613 = vpop.f32.mrb[0].mxu0
        %v5614 = vadd.f32 0.0, %v5613
        %v5615 = vpop.f32.mrb[0].mxu0
        %5616 = vmatprep.mubr.bf16.mxu0 0
        %5617 = vmatmul.mubr.bf16.gmra.mrb[0].mxu0 %v4477
        %v5618 = vpop.f32.mrb[0].mxu0
        %v5619 = vadd.f32 0.0, %v5618
        %v5620 = vpop.f32.mrb[0].mxu0
        %v5621 = vpop.f32.mrb[0].mxu0
        %v5622 = vadd.f32 0.0, %v5621
        %v5623 = vpop.f32.mrb[0].mxu0
        %5624 = vmatprep.mubr.bf16.mxu0 0
        %5625 = vmatmul.mubr.bf16.gmra.mrb[0].mxu0 %v4479
        %v5626 = vpop.f32.mrb[0].mxu0
        %v5627 = vadd.f32 0.0, %v5626
        %v5628 = vpop.f32.mrb[0].mxu0
        %v5629 = vpop.f32.mrb[0].mxu0
        %v5630 = vadd.f32 0.0, %v5629
        %v5631 = vpop.f32.mrb[0].mxu0
        %5632 = vmatprep.mubr.bf16.mxu0 0
        %5633 = vmatmul.mubr.bf16.gmra.mrb[0].mxu0 %v4481
        %v5634 = vpop.f32.mrb[0].mxu0
        %v5635 = vadd.f32 0.0, %v5634
        %v5636 = vpop.f32.mrb[0].mxu0
        %v5637 = vpop.f32.mrb[0].mxu0
        %v5638 = vadd.f32 0.0, %v5637
        %v5639 = vpop.f32.mrb[0].mxu0
        %5640 = vmatprep.mubr.bf16.mxu0 0
        %5641 = vmatmul.mubr.bf16.gmra.mrb[0].mxu0 %v4483
        %v5642 = vpop.f32.mrb[0].mxu0
        %v5643 = vadd.f32 0.0, %v5642
        %v5644 = vpop.f32.mrb[0].mxu0
        %v5645 = vpop.f32.mrb[0].mxu0
        %v5646 = vadd.f32 0.0, %v5645
        %v5647 = vpop.f32.mrb[0].mxu0
        %5648 = vmatprep.mubr.bf16.mxu0 0
        %5649 = vmatmul.mubr.bf16.gmra.mrb[0].mxu0 %v4485
        %v5650 = vpop.f32.mrb[0].mxu0
        %v5651 = vadd.f32 0.0, %v5650
        %v5652 = vpop.f32.mrb[0].mxu0
        %v5653 = vpop.f32.mrb[0].mxu0
        %v5654 = vadd.f32 0.0, %v5653
        %v5655 = vpop.f32.mrb[0].mxu0
        %5656 = vmatprep.mubr.bf16.mxu0 0
        %5657 = vmatmul.mubr.bf16.gmra.mrb[0].mxu0 %v4487
        %v5658 = vpop.f32.mrb[0].mxu0
        %v5659 = vadd.f32 0.0, %v5658
        %v5660 = vpop.f32.mrb[0].mxu0
        %v5661 = vpop.f32.mrb[0].mxu0
        %v5662 = vadd.f32 0.0, %v5661
        %v5663 = vpop.f32.mrb[0].mxu0
        %5664 = vmatprep.mubr.bf16.mxu0 0
        %5665 = vmatmul.mubr.bf16.gmra.mrb[0].mxu0 %v4489
        %v5666 = vpop.f32.mrb[0].mxu0
        %v5667 = vadd.f32 0.0, %v5666
        %v5668 = vpop.f32.mrb[0].mxu0
        %v5669 = vpop.f32.mrb[0].mxu0
        %v5670 = vadd.f32 0.0, %v5669
        %v5671 = vpop.f32.mrb[0].mxu0
        %5672 = vmatprep.mubr.bf16.mxu0 0
        %5673 = vmatmul.mubr.bf16.gmra.mrb[0].mxu0 %v4491
        %v5674 = vpop.f32.mrb[0].mxu0
        %v5675 = vadd.f32 0.0, %v5674
        %v5676 = vpop.f32.mrb[0].mxu0
        %v5677 = vpop.f32.mrb[0].mxu0
        %v5678 = vadd.f32 0.0, %v5677
        %v5679 = vpop.f32.mrb[0].mxu0
        %5680 = vmatprep.mubr.bf16.mxu0 0
        %5681 = vmatmul.mubr.bf16.gmra.mrb[0].mxu0 %v4493
        %v5682 = vpop.f32.mrb[0].mxu0
        %v5683 = vadd.f32 0.0, %v5682
        %v5684 = vpop.f32.mrb[0].mxu0
        %v5685 = vpop.f32.mrb[0].mxu0
        %v5686 = vadd.f32 0.0, %v5685
        %v5687 = vpop.f32.mrb[0].mxu0
        %5688 = vmatprep.mubr.bf16.mxu0 0
        %5689 = vmatmul.mubr.bf16.gmra.mrb[0].mxu0 %v4948
        %v5690 = vpop.f32.mrb[0].mxu0
        %v5691 = vadd.f32 0.0, %v5690
        %v5692 = vpop.f32.mrb[0].mxu0
        %v5693 = vpop.f32.mrb[0].mxu0
        %v5694 = vadd.f32 0.0, %v5693
        %v5695 = vpop.f32.mrb[0].mxu0
        %5696 = vmatprep.mubr.bf16.mxu0 0
        %5697 = vmatmul.mubr.bf16.gmra.mrb[0].mxu0 %v5558
        %v5698 = vpop.f32.mrb[0].mxu0
        %v5699 = vadd.f32 0.0, %v5698
        %v5700 = vpop.f32.mrb[0].mxu0
        %v5701 = vpop.f32.mrb[0].mxu0
        %v5702 = vadd.f32 0.0, %v5701
        %v5703 = vpop.f32.mrb[0].mxu0
        %5704 = vdwg.mxu0
        %v5705 = vadd.f32 %v5506, %v5595
        %v5706 = vadd.f32 %v5507, %v5598
        %v5707 = vadd.f32 %v5508, %v5603
        %v5708 = vadd.f32 %v5509, %v5606
        %v5709 = vadd.f32 %v5510, %v5611
        %v5710 = vadd.f32 %v5511, %v5614
        %v5711 = vadd.f32 %v5512, %v5619
        %v5712 = vadd.f32 %v5513, %v5622
        %v5713 = vadd.f32 %v5514, %v5627
        %v5714 = vadd.f32 %v5515, %v5630
        %v5715 = vadd.f32 %v5516, %v5635
        %v5716 = vadd.f32 %v5517, %v5638
        %v5717 = vadd.f32 %v5518, %v5643
        %v5718 = vadd.f32 %v5519, %v5646
        %v5719 = vadd.f32 %v5520, %v5651
        %v5720 = vadd.f32 %v5521, %v5654
        %v5721 = vadd.f32 %v5522, %v5659
        %v5722 = vadd.f32 %v5523, %v5662
        %v5723 = vadd.f32 %v5524, %v5667
        %v5724 = vadd.f32 %v5525, %v5670
        %v5725 = vadd.f32 %v5526, %v5675
        %v5726 = vadd.f32 %v5527, %v5678
        %v5727 = vadd.f32 %v5528, %v5683
        %v5728 = vadd.f32 %v5529, %v5686
        %v5729 = vadd.f32 %v5530, %v5691
        %v5730 = vadd.f32 %v5531, %v5694
        %v5731 = vadd.f32 %v5532, %v5699
        %v5732 = vadd.f32 %v5533, %v5702
        %v5733 = vshrl.u32 %v4040, 16
        %v5735 = vor.u32 %v5733, %v5129
        %v5737 = vshll.u32 %v4041, 16
        %v5739 = vrot.slane %v5737, 1
        %v5740 = vsel %vm4114, %v5735, %v5739
        %v5749 = vunpack.c.l.b16 %v4098
        %v5750 = vunpack.c.l.b16 %v4099
        %v5751 = vunpack.c.l.b16 %v4100
        %v5752 = vunpack.c.l.b16 %v4101
        %v5753 = vunpack.c.l.b16 %v4102
        %v5754 = vunpack.c.l.b16 %v4103
        %v5755 = vunpack.c.l.b16 %v4104
        %v5756 = vunpack.c.l.b16 %v4105
        %v5757 = vpack.c.b16 %v5750, %v5749
        %v5758 = vpack.c.b16 %v5752, %v5751
        %v5759 = vpack.c.b16 %v5754, %v5753
        %v5760 = vpack.c.b16 %v5756, %v5755
        %v5766 = vsel %vm4255, %v5740, 0
        %5768 = vmatprep.subr.bf16.mxu0 0
        %5769 = vmatpush1.bf16.msra.mxu0 %v5757
        %5770 = vmatprep.subr.bf16.mxu0 0
        %5771 = vmatpush1.bf16.msra.mxu0 %v5758
        %5772 = vmatprep.subr.bf16.mxu0 0
        %5773 = vmatpush1.bf16.msra.mxu0 %v5759
        %5774 = vmatprep.subr.bf16.mxu0 0
        %5775 = vmatpush1.bf16.msra.mxu0 %v5760
        %5776 = vmatprep.subr.bf16.mxu0 0
        %5777 = vmatpush1.bf16.msra.mxu0 0
        %5778 = vmatprep.subr.bf16.mxu0 0
        %5779 = vmatpush1.bf16.msra.mxu0 0
        %5780 = vmatprep.subr.bf16.mxu0 0
        %5781 = vmatpush1.bf16.msra.mxu0 0
        %5782 = vmatprep.subr.bf16.mxu0 0
        %5783 = vmatpush1.bf16.msra.mxu0 0
        %5784 = vmatprep.subr.bf16.mxu0 0
        %5785 = vmatpush1.bf16.msra.mxu0 0
        %5786 = vmatprep.subr.bf16.mxu0 0
        %5787 = vmatpush1.bf16.msra.mxu0 0
        %5788 = vmatprep.subr.bf16.mxu0 0
        %5789 = vmatpush1.bf16.msra.mxu0 0
        %5790 = vmatprep.subr.bf16.mxu0 0
        %5791 = vmatpush1.bf16.msra.mxu0 0
        %5792 = vmatprep.subr.bf16.mxu0 0
        %5793 = vmatpush1.bf16.msra.mxu0 0
        %5794 = vmatprep.subr.bf16.mxu0 0
        %5795 = vmatpush1.bf16.msra.mxu0 0
        %5796 = vmatprep.subr.bf16.mxu0 0
        %5797 = vmatpush1.bf16.msra.mxu0 0
        %5798 = vmatprep.subr.bf16.mxu0 0
        %5799 = vmatpush1.bf16.msra.mxu0 0
        %5800 = vmatprep.mubr.bf16.mxu0 0
        %5801 = vmatmul.mubr.bf16.gmra.mrb[0].mxu0 %v4263
        %v5802 = vpop.f32.mrb[0].mxu0
        %v5803 = vadd.f32 0.0, %v5802
        %v5804 = vpop.f32.mrb[0].mxu0
        %v5805 = vpop.f32.mrb[0].mxu0
        %v5806 = vadd.f32 0.0, %v5805
        %v5807 = vpop.f32.mrb[0].mxu0
        %5808 = vmatprep.mubr.bf16.mxu0 0
        %5809 = vmatmul.mubr.bf16.gmra.mrb[0].mxu0 %v4266
        %v5810 = vpop.f32.mrb[0].mxu0
        %v5811 = vadd.f32 0.0, %v5810
        %v5812 = vpop.f32.mrb[0].mxu0
        %v5813 = vpop.f32.mrb[0].mxu0
        %v5814 = vadd.f32 0.0, %v5813
        %v5815 = vpop.f32.mrb[0].mxu0
        %5816 = vmatprep.mubr.bf16.mxu0 0
        %5817 = vmatmul.mubr.bf16.gmra.mrb[0].mxu0 %v4269
        %v5818 = vpop.f32.mrb[0].mxu0
        %v5819 = vadd.f32 0.0, %v5818
        %v5820 = vpop.f32.mrb[0].mxu0
        %v5821 = vpop.f32.mrb[0].mxu0
        %v5822 = vadd.f32 0.0, %v5821
        %v5823 = vpop.f32.mrb[0].mxu0
        %5824 = vmatprep.mubr.bf16.mxu0 0
        %5825 = vmatmul.mubr.bf16.gmra.mrb[0].mxu0 %v4272
        %v5826 = vpop.f32.mrb[0].mxu0
        %v5827 = vadd.f32 0.0, %v5826
        %v5828 = vpop.f32.mrb[0].mxu0
        %v5829 = vpop.f32.mrb[0].mxu0
        %v5830 = vadd.f32 0.0, %v5829
        %v5831 = vpop.f32.mrb[0].mxu0
        %5832 = vmatprep.mubr.bf16.mxu0 0
        %5833 = vmatmul.mubr.bf16.gmra.mrb[0].mxu0 %v4275
        %v5834 = vpop.f32.mrb[0].mxu0
        %v5835 = vadd.f32 0.0, %v5834
        %v5836 = vpop.f32.mrb[0].mxu0
        %v5837 = vpop.f32.mrb[0].mxu0
        %v5838 = vadd.f32 0.0, %v5837
        %v5839 = vpop.f32.mrb[0].mxu0
        %5840 = vmatprep.mubr.bf16.mxu0 0
        %5841 = vmatmul.mubr.bf16.gmra.mrb[0].mxu0 %v4278
        %v5842 = vpop.f32.mrb[0].mxu0
        %v5843 = vadd.f32 0.0, %v5842
        %v5844 = vpop.f32.mrb[0].mxu0
        %v5845 = vpop.f32.mrb[0].mxu0
        %v5846 = vadd.f32 0.0, %v5845
        %v5847 = vpop.f32.mrb[0].mxu0
        %5848 = vmatprep.mubr.bf16.mxu0 0
        %5849 = vmatmul.mubr.bf16.gmra.mrb[0].mxu0 %v4281
        %v5850 = vpop.f32.mrb[0].mxu0
        %v5851 = vadd.f32 0.0, %v5850
        %v5852 = vpop.f32.mrb[0].mxu0
        %v5853 = vpop.f32.mrb[0].mxu0
        %v5854 = vadd.f32 0.0, %v5853
        %v5855 = vpop.f32.mrb[0].mxu0
        %5856 = vmatprep.mubr.bf16.mxu0 0
        %5857 = vmatmul.mubr.bf16.gmra.mrb[0].mxu0 %v4284
        %v5858 = vpop.f32.mrb[0].mxu0
        %v5859 = vadd.f32 0.0, %v5858
        %v5860 = vpop.f32.mrb[0].mxu0
        %v5861 = vpop.f32.mrb[0].mxu0
        %v5862 = vadd.f32 0.0, %v5861
        %v5863 = vpop.f32.mrb[0].mxu0
        %5864 = vmatprep.mubr.bf16.mxu0 0
        %5865 = vmatmul.mubr.bf16.gmra.mrb[0].mxu0 %v4287
        %v5866 = vpop.f32.mrb[0].mxu0
        %v5867 = vadd.f32 0.0, %v5866
        %v5868 = vpop.f32.mrb[0].mxu0
        %v5869 = vpop.f32.mrb[0].mxu0
        %v5870 = vadd.f32 0.0, %v5869
        %v5871 = vpop.f32.mrb[0].mxu0
        %5872 = vmatprep.mubr.bf16.mxu0 0
        %5873 = vmatmul.mubr.bf16.gmra.mrb[0].mxu0 %v4290
        %v5874 = vpop.f32.mrb[0].mxu0
        %v5875 = vadd.f32 0.0, %v5874
        %v5876 = vpop.f32.mrb[0].mxu0
        %v5877 = vpop.f32.mrb[0].mxu0
        %v5878 = vadd.f32 0.0, %v5877
        %v5879 = vpop.f32.mrb[0].mxu0
        %5880 = vmatprep.mubr.bf16.mxu0 0
        %5881 = vmatmul.mubr.bf16.gmra.mrb[0].mxu0 %v4293
        %v5882 = vpop.f32.mrb[0].mxu0
        %v5883 = vadd.f32 0.0, %v5882
        %v5884 = vpop.f32.mrb[0].mxu0
        %v5885 = vpop.f32.mrb[0].mxu0
        %v5886 = vadd.f32 0.0, %v5885
        %v5887 = vpop.f32.mrb[0].mxu0
        %5888 = vmatprep.mubr.bf16.mxu0 0
        %5889 = vmatmul.mubr.bf16.gmra.mrb[0].mxu0 %v4296
        %v5890 = vpop.f32.mrb[0].mxu0
        %v5891 = vadd.f32 0.0, %v5890
        %v5892 = vpop.f32.mrb[0].mxu0
        %v5893 = vpop.f32.mrb[0].mxu0
        %v5894 = vadd.f32 0.0, %v5893
        %v5895 = vpop.f32.mrb[0].mxu0
        %5896 = vmatprep.mubr.bf16.mxu0 0
        %5897 = vmatmul.mubr.bf16.gmra.mrb[0].mxu0 %v5156
        %v5898 = vpop.f32.mrb[0].mxu0
        %v5899 = vadd.f32 0.0, %v5898
        %v5900 = vpop.f32.mrb[0].mxu0
        %v5901 = vpop.f32.mrb[0].mxu0
        %v5902 = vadd.f32 0.0, %v5901
        %v5903 = vpop.f32.mrb[0].mxu0
        %5904 = vmatprep.mubr.bf16.mxu0 0
        %5905 = vmatmul.mubr.bf16.gmra.mrb[0].mxu0 %v5766
        %v5906 = vpop.f32.mrb[0].mxu0
        %v5907 = vadd.f32 0.0, %v5906
        %v5908 = vpop.f32.mrb[0].mxu0
        %v5909 = vpop.f32.mrb[0].mxu0
        %v5910 = vadd.f32 0.0, %v5909
        %v5911 = vpop.f32.mrb[0].mxu0
        %5912 = vdwg.mxu0
        %v5913 = vadd.f32 %v5705, %v5803
        %v5914 = vadd.f32 %v5706, %v5806
        %v5915 = vadd.f32 %v5707, %v5811
        %v5916 = vadd.f32 %v5708, %v5814
        %v5917 = vadd.f32 %v5709, %v5819
        %v5918 = vadd.f32 %v5710, %v5822
        %v5919 = vadd.f32 %v5711, %v5827
        %v5920 = vadd.f32 %v5712, %v5830
        %v5921 = vadd.f32 %v5713, %v5835
        %v5922 = vadd.f32 %v5714, %v5838
        %v5923 = vadd.f32 %v5715, %v5843
        %v5924 = vadd.f32 %v5716, %v5846
        %v5925 = vadd.f32 %v5717, %v5851
        %v5926 = vadd.f32 %v5718, %v5854
        %v5927 = vadd.f32 %v5719, %v5859
        %v5928 = vadd.f32 %v5720, %v5862
        %v5929 = vadd.f32 %v5721, %v5867
        %v5930 = vadd.f32 %v5722, %v5870
        %v5931 = vadd.f32 %v5723, %v5875
        %v5932 = vadd.f32 %v5724, %v5878
        %v5933 = vadd.f32 %v5725, %v5883
        %v5934 = vadd.f32 %v5726, %v5886
        %v5935 = vadd.f32 %v5727, %v5891
        %v5936 = vadd.f32 %v5728, %v5894
        %v5937 = vadd.f32 %v5729, %v5899
        %v5938 = vadd.f32 %v5730, %v5902
        %v5939 = vadd.f32 %v5731, %v5907
        %v5940 = vadd.f32 %v5732, %v5910
        %v5942 = vrot.slane %v4041, 1
        %v5943 = vsel %vm4655, %v5332, %v5942
        %v5952 = vunpack.c.l.b16 %v4106
        %v5953 = vunpack.c.l.b16 %v4107
        %v5954 = vunpack.c.l.b16 %v4108
        %v5955 = vunpack.c.l.b16 %v4109
        %v5956 = vunpack.c.l.b16 %v4110
        %v5957 = vunpack.c.l.b16 %v4111
        %v5958 = vunpack.c.l.b16 %v4112
        %v5959 = vunpack.c.l.b16 %v4113
        %v5960 = vpack.c.b16 %v5953, %v5952
        %v5961 = vpack.c.b16 %v5955, %v5954
        %v5962 = vpack.c.b16 %v5957, %v5956
        %v5963 = vpack.c.b16 %v5959, %v5958
        %v5969 = vsel %vm4255, %v5943, 0
        %5971 = vmatprep.subr.bf16.mxu0 0
        %5972 = vmatpush1.bf16.msra.mxu0 %v5960
        %5973 = vmatprep.subr.bf16.mxu0 0
        %5974 = vmatpush1.bf16.msra.mxu0 %v5961
        %5975 = vmatprep.subr.bf16.mxu0 0
        %5976 = vmatpush1.bf16.msra.mxu0 %v5962
        %5977 = vmatprep.subr.bf16.mxu0 0
        %5978 = vmatpush1.bf16.msra.mxu0 %v5963
        %5979 = vmatprep.subr.bf16.mxu0 0
        %5980 = vmatpush1.bf16.msra.mxu0 0
        %5981 = vmatprep.subr.bf16.mxu0 0
        %5982 = vmatpush1.bf16.msra.mxu0 0
        %5983 = vmatprep.subr.bf16.mxu0 0
        %5984 = vmatpush1.bf16.msra.mxu0 0
        %5985 = vmatprep.subr.bf16.mxu0 0
        %5986 = vmatpush1.bf16.msra.mxu0 0
        %5987 = vmatprep.subr.bf16.mxu0 0
        %5988 = vmatpush1.bf16.msra.mxu0 0
        %5989 = vmatprep.subr.bf16.mxu0 0
        %5990 = vmatpush1.bf16.msra.mxu0 0
        %5991 = vmatprep.subr.bf16.mxu0 0
        %5992 = vmatpush1.bf16.msra.mxu0 0
        %5993 = vmatprep.subr.bf16.mxu0 0
        %5994 = vmatpush1.bf16.msra.mxu0 0
        %5995 = vmatprep.subr.bf16.mxu0 0
        %5996 = vmatpush1.bf16.msra.mxu0 0
        %5997 = vmatprep.subr.bf16.mxu0 0
        %5998 = vmatpush1.bf16.msra.mxu0 0
        %5999 = vmatprep.subr.bf16.mxu0 0
        %6000 = vmatpush1.bf16.msra.mxu0 0
        %6001 = vmatprep.subr.bf16.mxu0 0
        %6002 = vmatpush1.bf16.msra.mxu0 0
        %6003 = vmatprep.mubr.bf16.mxu0 0
        %6004 = vmatmul.mubr.bf16.gmra.mrb[0].mxu0 %v4716
        %v6005 = vpop.f32.mrb[0].mxu0
        %v6006 = vadd.f32 0.0, %v6005
        %v6007 = vpop.f32.mrb[0].mxu0
        %v6008 = vpop.f32.mrb[0].mxu0
        %v6009 = vadd.f32 0.0, %v6008
        %v6010 = vpop.f32.mrb[0].mxu0
        %6011 = vmatprep.mubr.bf16.mxu0 0
        %6012 = vmatmul.mubr.bf16.gmra.mrb[0].mxu0 %v4719
        %v6013 = vpop.f32.mrb[0].mxu0
        %v6014 = vadd.f32 0.0, %v6013
        %v6015 = vpop.f32.mrb[0].mxu0
        %v6016 = vpop.f32.mrb[0].mxu0
        %v6017 = vadd.f32 0.0, %v6016
        %v6018 = vpop.f32.mrb[0].mxu0
        %6019 = vmatprep.mubr.bf16.mxu0 0
        %6020 = vmatmul.mubr.bf16.gmra.mrb[0].mxu0 %v4722
        %v6021 = vpop.f32.mrb[0].mxu0
        %v6022 = vadd.f32 0.0, %v6021
        %v6023 = vpop.f32.mrb[0].mxu0
        %v6024 = vpop.f32.mrb[0].mxu0
        %v6025 = vadd.f32 0.0, %v6024
        %v6026 = vpop.f32.mrb[0].mxu0
        %6027 = vmatprep.mubr.bf16.mxu0 0
        %6028 = vmatmul.mubr.bf16.gmra.mrb[0].mxu0 %v4725
        %v6029 = vpop.f32.mrb[0].mxu0
        %v6030 = vadd.f32 0.0, %v6029
        %v6031 = vpop.f32.mrb[0].mxu0
        %v6032 = vpop.f32.mrb[0].mxu0
        %v6033 = vadd.f32 0.0, %v6032
        %v6034 = vpop.f32.mrb[0].mxu0
        %6035 = vmatprep.mubr.bf16.mxu0 0
        %6036 = vmatmul.mubr.bf16.gmra.mrb[0].mxu0 %v4728
        %v6037 = vpop.f32.mrb[0].mxu0
        %v6038 = vadd.f32 0.0, %v6037
        %v6039 = vpop.f32.mrb[0].mxu0
        %v6040 = vpop.f32.mrb[0].mxu0
        %v6041 = vadd.f32 0.0, %v6040
        %v6042 = vpop.f32.mrb[0].mxu0
        %6043 = vmatprep.mubr.bf16.mxu0 0
        %6044 = vmatmul.mubr.bf16.gmra.mrb[0].mxu0 %v4731
        %v6045 = vpop.f32.mrb[0].mxu0
        %v6046 = vadd.f32 0.0, %v6045
        %v6047 = vpop.f32.mrb[0].mxu0
        %v6048 = vpop.f32.mrb[0].mxu0
        %v6049 = vadd.f32 0.0, %v6048
        %v6050 = vpop.f32.mrb[0].mxu0
        %6051 = vmatprep.mubr.bf16.mxu0 0
        %6052 = vmatmul.mubr.bf16.gmra.mrb[0].mxu0 %v4734
        %v6053 = vpop.f32.mrb[0].mxu0
        %v6054 = vadd.f32 0.0, %v6053
        %v6055 = vpop.f32.mrb[0].mxu0
        %v6056 = vpop.f32.mrb[0].mxu0
        %v6057 = vadd.f32 0.0, %v6056
        %v6058 = vpop.f32.mrb[0].mxu0
        %6059 = vmatprep.mubr.bf16.mxu0 0
        %6060 = vmatmul.mubr.bf16.gmra.mrb[0].mxu0 %v4737
        %v6061 = vpop.f32.mrb[0].mxu0
        %v6062 = vadd.f32 0.0, %v6061
        %v6063 = vpop.f32.mrb[0].mxu0
        %v6064 = vpop.f32.mrb[0].mxu0
        %v6065 = vadd.f32 0.0, %v6064
        %v6066 = vpop.f32.mrb[0].mxu0
        %6067 = vmatprep.mubr.bf16.mxu0 0
        %6068 = vmatmul.mubr.bf16.gmra.mrb[0].mxu0 %v4740
        %v6069 = vpop.f32.mrb[0].mxu0
        %v6070 = vadd.f32 0.0, %v6069
        %v6071 = vpop.f32.mrb[0].mxu0
        %v6072 = vpop.f32.mrb[0].mxu0
        %v6073 = vadd.f32 0.0, %v6072
        %v6074 = vpop.f32.mrb[0].mxu0
        %6075 = vmatprep.mubr.bf16.mxu0 0
        %6076 = vmatmul.mubr.bf16.gmra.mrb[0].mxu0 %v4743
        %v6077 = vpop.f32.mrb[0].mxu0
        %v6078 = vadd.f32 0.0, %v6077
        %v6079 = vpop.f32.mrb[0].mxu0
        %v6080 = vpop.f32.mrb[0].mxu0
        %v6081 = vadd.f32 0.0, %v6080
        %v6082 = vpop.f32.mrb[0].mxu0
        %6083 = vmatprep.mubr.bf16.mxu0 0
        %6084 = vmatmul.mubr.bf16.gmra.mrb[0].mxu0 %v4746
        %v6085 = vpop.f32.mrb[0].mxu0
        %v6086 = vadd.f32 0.0, %v6085
        %v6087 = vpop.f32.mrb[0].mxu0
        %v6088 = vpop.f32.mrb[0].mxu0
        %v6089 = vadd.f32 0.0, %v6088
        %v6090 = vpop.f32.mrb[0].mxu0
        %6091 = vmatprep.mubr.bf16.mxu0 0
        %6092 = vmatmul.mubr.bf16.gmra.mrb[0].mxu0 %v4749
        %v6093 = vpop.f32.mrb[0].mxu0
        %v6094 = vadd.f32 0.0, %v6093
        %v6095 = vpop.f32.mrb[0].mxu0
        %v6096 = vpop.f32.mrb[0].mxu0
        %v6097 = vadd.f32 0.0, %v6096
        %v6098 = vpop.f32.mrb[0].mxu0
        %6099 = vmatprep.mubr.bf16.mxu0 0
        %6100 = vmatmul.mubr.bf16.gmra.mrb[0].mxu0 %v5359
        %v6101 = vpop.f32.mrb[0].mxu0
        %v6102 = vadd.f32 0.0, %v6101
        %v6103 = vpop.f32.mrb[0].mxu0
        %v6104 = vpop.f32.mrb[0].mxu0
        %v6105 = vadd.f32 0.0, %v6104
        %v6106 = vpop.f32.mrb[0].mxu0
        %6107 = vmatprep.mubr.bf16.mxu0 0
        %6108 = vmatmul.mubr.bf16.gmra.mrb[0].mxu0 %v5969
        %v6109 = vpop.f32.mrb[0].mxu0
        %v6110 = vadd.f32 0.0, %v6109
        %v6111 = vpop.f32.mrb[0].mxu0
        %v6112 = vpop.f32.mrb[0].mxu0
        %v6113 = vadd.f32 0.0, %v6112
        %v6114 = vpop.f32.mrb[0].mxu0
        %6115 = vdwg.mxu0
        %v6116 = vadd.f32 %v5913, %v6006
        %v6117 = vadd.f32 %v5914, %v6009
        %v6118 = vadd.f32 %v5915, %v6014
        %v6119 = vadd.f32 %v5916, %v6017
        %v6120 = vadd.f32 %v5917, %v6022
        %v6121 = vadd.f32 %v5918, %v6025
        %v6122 = vadd.f32 %v5919, %v6030
        %v6123 = vadd.f32 %v5920, %v6033
        %v6124 = vadd.f32 %v5921, %v6038
        %v6125 = vadd.f32 %v5922, %v6041
        %v6126 = vadd.f32 %v5923, %v6046
        %v6127 = vadd.f32 %v5924, %v6049
        %v6128 = vadd.f32 %v5925, %v6054
        %v6129 = vadd.f32 %v5926, %v6057
        %v6130 = vadd.f32 %v5927, %v6062
        %v6131 = vadd.f32 %v5928, %v6065
        %v6132 = vadd.f32 %v5929, %v6070
        %v6133 = vadd.f32 %v5930, %v6073
        %v6134 = vadd.f32 %v5931, %v6078
        %v6135 = vadd.f32 %v5932, %v6081
        %v6136 = vadd.f32 %v5933, %v6086
        %v6137 = vadd.f32 %v5934, %v6089
        %v6138 = vadd.f32 %v5935, %v6094
        %v6139 = vadd.f32 %v5936, %v6097
        %v6140 = vadd.f32 %v5937, %v6102
        %v6141 = vadd.f32 %v5938, %v6105
        %v6142 = vadd.f32 %v5939, %v6110
        %v6143 = vadd.f32 %v5940, %v6113
        %v6144 = vld [vmem:[#allocation7] sm:$0x1]
        %v6146 = vlaneseq
        %v6147 = vshrl.u32 %v6146, 7
        %v6148 = vsub.s32 0, %v6147
        %v6149 = vrot.slane %v6144, %v6148
        %v6151 = vadd.f32 %v6116, %v6149
        %v6152 = vadd.f32 %v6117, %v6149
        %v6153 = vadd.f32 %v6118, %v6149
        %v6154 = vadd.f32 %v6119, %v6149
        %v6155 = vadd.f32 %v6120, %v6149
        %v6156 = vadd.f32 %v6121, %v6149
        %v6157 = vadd.f32 %v6122, %v6149
        %v6158 = vadd.f32 %v6123, %v6149
        %v6159 = vadd.f32 %v6124, %v6149
        %v6160 = vadd.f32 %v6125, %v6149
        %v6161 = vadd.f32 %v6126, %v6149
        %v6162 = vadd.f32 %v6127, %v6149
        %v6163 = vadd.f32 %v6128, %v6149
        %v6164 = vadd.f32 %v6129, %v6149
        %v6165 = vadd.f32 %v6130, %v6149
        %v6166 = vadd.f32 %v6131, %v6149
        %v6167 = vadd.f32 %v6132, %v6149
        %v6168 = vadd.f32 %v6133, %v6149
        %v6169 = vadd.f32 %v6134, %v6149
        %v6170 = vadd.f32 %v6135, %v6149
        %v6171 = vadd.f32 %v6136, %v6149
        %v6172 = vadd.f32 %v6137, %v6149
        %v6173 = vadd.f32 %v6138, %v6149
        %v6174 = vadd.f32 %v6139, %v6149
        %v6175 = vadd.f32 %v6140, %v6149
        %v6176 = vadd.f32 %v6141, %v6149
        %v6177 = vadd.f32 %v6142, %v6149
        %v6178 = vadd.f32 %v6143, %v6149
        %v6179 = vmax.f32 %v6151, 0.0
        %v6180 = vmax.f32 %v6152, 0.0
        %v6181 = vmax.f32 %v6153, 0.0
        %v6182 = vmax.f32 %v6154, 0.0
        %v6183 = vmax.f32 %v6155, 0.0
        %v6184 = vmax.f32 %v6156, 0.0
        %v6185 = vmax.f32 %v6157, 0.0
        %v6186 = vmax.f32 %v6158, 0.0
        %v6187 = vmax.f32 %v6159, 0.0
        %v6188 = vmax.f32 %v6160, 0.0
        %v6189 = vmax.f32 %v6161, 0.0
        %v6190 = vmax.f32 %v6162, 0.0
        %v6191 = vmax.f32 %v6163, 0.0
        %v6192 = vmax.f32 %v6164, 0.0
        %v6193 = vmax.f32 %v6165, 0.0
        %v6194 = vmax.f32 %v6166, 0.0
        %v6195 = vmax.f32 %v6167, 0.0
        %v6196 = vmax.f32 %v6168, 0.0
        %v6197 = vmax.f32 %v6169, 0.0
        %v6198 = vmax.f32 %v6170, 0.0
        %v6199 = vmax.f32 %v6171, 0.0
        %v6200 = vmax.f32 %v6172, 0.0
        %v6201 = vmax.f32 %v6173, 0.0
        %v6202 = vmax.f32 %v6174, 0.0
        %v6203 = vmax.f32 %v6175, 0.0
        %v6204 = vmax.f32 %v6176, 0.0
        %v6205 = vmax.f32 %v6177, 0.0
        %v6206 = vmax.f32 %v6178, 0.0
        %v6233 = vrot.slane %v6179, 1
        %v6234 = vrot.slane %v6180, 1
        %v6235 = vsel %vm1575, %v6233, %v6234
        %v6236 = vrot.slane %v6181, 1
        %v6237 = vsel %vm1575, %v6234, %v6236
        %v6238 = vrot.slane %v6182, 1
        %v6239 = vsel %vm1575, %v6236, %v6238
        %v6240 = vrot.slane %v6183, 1
        %v6241 = vsel %vm1575, %v6238, %v6240
        %v6242 = vrot.slane %v6184, 1
        %v6243 = vsel %vm1575, %v6240, %v6242
        %v6244 = vrot.slane %v6185, 1
        %v6245 = vsel %vm1575, %v6242, %v6244
        %v6246 = vrot.slane %v6186, 1
        %v6247 = vsel %vm1575, %v6244, %v6246
        %v6248 = vrot.slane %v6187, 1
        %v6249 = vsel %vm1575, %v6246, %v6248
        %v6250 = vrot.slane %v6188, 1
        %v6251 = vsel %vm1575, %v6248, %v6250
        %v6252 = vrot.slane %v6189, 1
        %v6253 = vsel %vm1575, %v6250, %v6252
        %v6254 = vrot.slane %v6190, 1
        %v6255 = vsel %vm1575, %v6252, %v6254
        %v6256 = vrot.slane %v6191, 1
        %v6257 = vsel %vm1575, %v6254, %v6256
        %v6258 = vrot.slane %v6192, 1
        %v6259 = vsel %vm1575, %v6256, %v6258
        %v6260 = vrot.slane %v6193, 1
        %v6261 = vsel %vm1575, %v6258, %v6260
        %v6262 = vrot.slane %v6194, 1
        %v6263 = vsel %vm1575, %v6260, %v6262
        %v6264 = vrot.slane %v6195, 1
        %v6265 = vsel %vm1575, %v6262, %v6264
        %v6266 = vrot.slane %v6196, 1
        %v6267 = vsel %vm1575, %v6264, %v6266
        %v6268 = vrot.slane %v6197, 1
        %v6269 = vsel %vm1575, %v6266, %v6268
        %v6270 = vrot.slane %v6198, 1
        %v6271 = vsel %vm1575, %v6268, %v6270
        %v6272 = vrot.slane %v6199, 1
        %v6273 = vsel %vm1575, %v6270, %v6272
        %v6274 = vrot.slane %v6200, 1
        %v6275 = vsel %vm1575, %v6272, %v6274
        %v6276 = vrot.slane %v6201, 1
        %v6277 = vsel %vm1575, %v6274, %v6276
        %v6278 = vrot.slane %v6202, 1
        %v6279 = vsel %vm1575, %v6276, %v6278
        %v6280 = vrot.slane %v6203, 1
        %v6281 = vsel %vm1575, %v6278, %v6280
        %v6282 = vrot.slane %v6204, 1
        %v6283 = vsel %vm1575, %v6280, %v6282
        %v6310 = vmax.f32 %v6179, %v6235
        %v6311 = vmax.f32 %v6180, %v6237
        %v6312 = vmax.f32 %v6181, %v6239
        %v6313 = vmax.f32 %v6182, %v6241
        %v6314 = vmax.f32 %v6183, %v6243
        %v6315 = vmax.f32 %v6184, %v6245
        %v6316 = vmax.f32 %v6185, %v6247
        %v6317 = vmax.f32 %v6186, %v6249
        %v6318 = vmax.f32 %v6187, %v6251
        %v6319 = vmax.f32 %v6188, %v6253
        %v6320 = vmax.f32 %v6189, %v6255
        %v6321 = vmax.f32 %v6190, %v6257
        %v6322 = vmax.f32 %v6191, %v6259
        %v6323 = vmax.f32 %v6192, %v6261
        %v6324 = vmax.f32 %v6193, %v6263
        %v6325 = vmax.f32 %v6194, %v6265
        %v6326 = vmax.f32 %v6195, %v6267
        %v6327 = vmax.f32 %v6196, %v6269
        %v6328 = vmax.f32 %v6197, %v6271
        %v6329 = vmax.f32 %v6198, %v6273
        %v6330 = vmax.f32 %v6199, %v6275
        %v6331 = vmax.f32 %v6200, %v6277
        %v6332 = vmax.f32 %v6201, %v6279
        %v6333 = vmax.f32 %v6202, %v6281
        %v6334 = vmax.f32 %v6203, %v6283
        %v6335 = vmax.f32 %v6204, %v6282
        %v6338 = vrot.slane %v6205, 1
        %v6339 = vsel %vm1575, %v6282, %v6338
        %v6340 = vrot.slane %v6206, 1
        %v6341 = vsel %vm1575, %v6338, %v6340
        %v6345 = vmax.f32 %v6204, %v6339
        %v6346 = vmax.f32 %v6205, %v6341
        %v6347 = vmax.f32 %v6206, %v6340
        %v6348 = vmax.f32 %v6310, %v6312
        %v6349 = vmax.f32 %v6311, %v6313
        %v6350 = vmax.f32 %v6312, %v6314
        %v6351 = vmax.f32 %v6313, %v6315
        %v6352 = vmax.f32 %v6314, %v6316
        %v6353 = vmax.f32 %v6315, %v6317
        %v6354 = vmax.f32 %v6316, %v6318
        %v6355 = vmax.f32 %v6317, %v6319
        %v6356 = vmax.f32 %v6318, %v6320
        %v6357 = vmax.f32 %v6319, %v6321
        %v6358 = vmax.f32 %v6320, %v6322
        %v6359 = vmax.f32 %v6321, %v6323
        %v6360 = vmax.f32 %v6322, %v6324
        %v6361 = vmax.f32 %v6323, %v6325
        %v6362 = vmax.f32 %v6324, %v6326
        %v6363 = vmax.f32 %v6325, %v6327
        %v6364 = vmax.f32 %v6326, %v6328
        %v6365 = vmax.f32 %v6327, %v6329
        %v6366 = vmax.f32 %v6328, %v6330
        %v6367 = vmax.f32 %v6329, %v6331
        %v6368 = vmax.f32 %v6330, %v6332
        %v6369 = vmax.f32 %v6331, %v6333
        %v6370 = vmax.f32 %v6332, %v6334
        %v6371 = vmax.f32 %v6333, %v6345
        %v6372 = vmax.f32 %v6334, %v6346
        %v6373 = vmax.f32 %v6335, %v6347
        %v6374 = vld [vmem:[#allocation10] sm:$0xff]
        %v6375 = vld [vmem:[#allocation10 + $0x8] sm:$0xff]
        %v6376 = vld [vmem:[#allocation10 + $0x10] sm:$0xff]
        %v6377 = vld [vmem:[#allocation10 + $0x18] sm:$0xff]
        %v6378 = vld [vmem:[#allocation10 + $0x20] sm:$0xff]
        %v6379 = vld [vmem:[#allocation10 + $0x28] sm:$0xff]
        %v6380 = vld [vmem:[#allocation10 + $0x30] sm:$0x11]
        %v6381 = vpack.c.bf16 %v6349, %v6348
        %v6382 = vpack.c.bf16 %v6351, %v6350
        %v6383 = vpack.c.bf16 %v6353, %v6352
        %v6384 = vpack.c.bf16 %v6355, %v6354
        %v6385 = vpack.c.bf16 %v6357, %v6356
        %v6386 = vpack.c.bf16 %v6359, %v6358
        %v6387 = vpack.c.bf16 %v6361, %v6360
        %v6388 = vpack.c.bf16 %v6363, %v6362
        %v6389 = vpack.c.bf16 %v6365, %v6364
        %v6390 = vpack.c.bf16 %v6367, %v6366
        %v6391 = vpack.c.bf16 %v6369, %v6368
        %v6392 = vpack.c.bf16 %v6371, %v6370
        %v6393 = vpack.c.bf16 %v6373, %v6372
        %v6401 = vunpack.c.l.b16 %v6374
        %v6402 = vunpack.c.h.b16 %v6374
        %v6403 = vunpack.c.l.b16 %v6375
        %v6404 = vunpack.c.h.b16 %v6375
        %v6405 = vunpack.c.l.b16 %v6376
        %v6406 = vunpack.c.h.b16 %v6376
        %v6407 = vunpack.c.l.b16 %v6377
        %v6408 = vunpack.c.h.b16 %v6377
        %v6409 = vunpack.c.l.b16 %v6378
        %v6410 = vunpack.c.h.b16 %v6378
        %v6411 = vunpack.c.l.b16 %v6379
        %v6412 = vunpack.c.h.b16 %v6379
        %v6413 = vunpack.c.l.b16 %v6380
        %v6414 = vunpack.c.h.b16 %v6380
        %v6415 = vpack.c.b16 %v6403, %v6401
        %v6416 = vpack.c.b16 %v6404, %v6402
        %v6417 = vpack.c.b16 %v6407, %v6405
        %v6418 = vpack.c.b16 %v6408, %v6406
        %v6419 = vpack.c.b16 %v6411, %v6409
        %v6420 = vpack.c.b16 %v6412, %v6410
        %v6421 = vpack.c.b16 %v6413, %v6413
        %v6422 = vpack.c.b16 %v6414, %v6414
        %vm6427 = vcmask 629760
        %v6429 = vsel %vm6427, %v6416, 0
        %v6432 = vsel %vm6427, %v6418, 0
        %v6435 = vsel %vm6427, %v6420, 0
        %v6438 = vsel %vm6427, %v6422, 0
        %vm6440 = vcmask 1045504
        %v6441 = vsel %vm6440, 4294967295, 65535
        %v6442 = vsel %vm1575, %v6441, 0
        %v6444 = vand.u32 %v6393, %v6442
        %6446 = vmatprep.subr.bf16.mxu0 0
        %6447 = vmatpush1.bf16.msra.mxu0 %v6381
        %6448 = vmatprep.subr.bf16.mxu0 0
        %6449 = vmatpush1.bf16.msra.mxu0 %v6382
        %6450 = vmatprep.subr.bf16.mxu0 0
        %6451 = vmatpush1.bf16.msra.mxu0 %v6383
        %6452 = vmatprep.subr.bf16.mxu0 0
        %6453 = vmatpush1.bf16.msra.mxu0 %v6384
        %6454 = vmatprep.subr.bf16.mxu0 0
        %6455 = vmatpush1.bf16.msra.mxu0 %v6385
        %6456 = vmatprep.subr.bf16.mxu0 0
        %6457 = vmatpush1.bf16.msra.mxu0 %v6386
        %6458 = vmatprep.subr.bf16.mxu0 0
        %6459 = vmatpush1.bf16.msra.mxu0 %v6387
        %6460 = vmatprep.subr.bf16.mxu0 0
        %6461 = vmatpush1.bf16.msra.mxu0 %v6388
        %6462 = vmatprep.subr.bf16.mxu0 0
        %6463 = vmatpush1.bf16.msra.mxu0 %v6389
        %6464 = vmatprep.subr.bf16.mxu0 0
        %6465 = vmatpush1.bf16.msra.mxu0 %v6390
        %6466 = vmatprep.subr.bf16.mxu0 0
        %6467 = vmatpush1.bf16.msra.mxu0 %v6391
        %6468 = vmatprep.subr.bf16.mxu0 0
        %6469 = vmatpush1.bf16.msra.mxu0 %v6392
        %6470 = vmatprep.subr.bf16.mxu0 0
        %6471 = vmatpush1.bf16.msra.mxu0 %v6444
        %6472 = vmatprep.subr.bf16.mxu0 0
        %6473 = vmatpush1.bf16.msra.mxu0 0
        %6474 = vmatprep.subr.bf16.mxu0 0
        %6475 = vmatpush1.bf16.msra.mxu0 0
        %6476 = vmatprep.subr.bf16.mxu0 0
        %6477 = vmatpush1.bf16.msra.mxu0 0
        %6478 = vmatprep.mubr.bf16.mxu0 %v6429
        %6479 = vmatmul.mubr.bf16.gmra.mrb[0].mxu0 %v6415
        %v6480 = vpop.f32.mrb[0].mxu0
        %v6481 = vadd.f32 0.0, %v6480
        %v6482 = vpop.f32.mrb[0].mxu0
        %v6483 = vpop.f32.mrb[0].mxu0
        %v6484 = vadd.f32 0.0, %v6483
        %v6485 = vpop.f32.mrb[0].mxu0
        %6486 = vmatprep.mubr.bf16.mxu0 %v6432
        %6487 = vmatmul.mubr.bf16.gmra.mrb[0].mxu0 %v6417
        %v6488 = vpop.f32.mrb[0].mxu0
        %v6489 = vadd.f32 0.0, %v6488
        %v6490 = vpop.f32.mrb[0].mxu0
        %v6491 = vpop.f32.mrb[0].mxu0
        %v6492 = vadd.f32 0.0, %v6491
        %v6493 = vpop.f32.mrb[0].mxu0
        %6494 = vmatprep.mubr.bf16.mxu0 %v6435
        %6495 = vmatmul.mubr.bf16.gmra.mrb[0].mxu0 %v6419
        %v6496 = vpop.f32.mrb[0].mxu0
        %v6497 = vadd.f32 0.0, %v6496
        %v6498 = vpop.f32.mrb[0].mxu0
        %v6499 = vpop.f32.mrb[0].mxu0
        %v6500 = vadd.f32 0.0, %v6499
        %v6501 = vpop.f32.mrb[0].mxu0
        %6502 = vmatprep.mubr.bf16.mxu0 %v6438
        %6503 = vmatmul.mubr.bf16.gmra.mrb[0].mxu0 %v6421
        %v6504 = vpop.f32.mrb[0].mxu0
        %v6505 = vadd.f32 0.0, %v6504
        %v6506 = vpop.f32.mrb[0].mxu0
        %v6507 = vpop.f32.mrb[0].mxu0
        %v6508 = vpop.f32.mrb[0].mxu0
        %6509 = vdwg.mxu0
        %v6510 = vpack.c.bf16 %v6484, %v6481
        %v6511 = vpack.c.bf16 %v6492, %v6489
        %v6512 = vpack.c.bf16 %v6500, %v6497
        %v6513 = vpack.c.bf16 %v6505, %v6505
        %v6518 = vunpack.c.l.b16 %v6510
        %v6519 = vunpack.c.h.b16 %v6510
        %v6520 = vunpack.c.l.b16 %v6511
        %v6521 = vunpack.c.h.b16 %v6511
        %v6522 = vunpack.c.l.b16 %v6512
        %v6523 = vunpack.c.h.b16 %v6512
        %v6524 = vunpack.c.l.b16 %v6513
        %v6525 = vpack.c.b16 %v6518, %v6518
        %v6526 = vpack.c.b16 %v6519, %v6519
        %v6527 = vpack.c.b16 %v6520, %v6520
        %v6528 = vpack.c.b16 %v6521, %v6521
        %v6529 = vpack.c.b16 %v6522, %v6522
        %v6530 = vpack.c.b16 %v6523, %v6523
        %v6531 = vpack.c.b16 %v6524, %v6524
        %6539 = vst [vmem:[%s362] sm:$0xf] %v6525
        %6540 = vst [vmem:[%s362 + $0x4] sm:$0xf] %v6526
        %6541 = vst [vmem:[%s362 + $0x8] sm:$0xf] %v6527
        %6542 = vst [vmem:[%s362 + $0xc] sm:$0xf] %v6528
        %6543 = vst [vmem:[%s362 + $0x10] sm:$0xf] %v6529
        %6544 = vst [vmem:[%s362 + $0x14] sm:$0xf] %v6530
        %vm6545 = vcmask 1040384
        %vm6546 = vsmask.f32 256
        %vm6547 = vmand %vm6545, %vm6546
        %v6548 = vld [vmem:[%s362 + $0x18] sm:$0x1]
        %v6549 = vsel %vm6547, %v6531, %v6548
        %6550 = vst [vmem:[%s362 + $0x18] sm:$0x1] %v6549
        %p6551 = scmp.lt.s32.totalorder %s22, 1
        %s6552 = scalar_select %p6551, %s22, 1
        %s6553 = smul.addr %s6552, 7
        %s6554 = smul.addr %s6553, 4
        %s6555 = scalar_lea.vmem %s7, %s6554
        // Predicated region
        $region73: #{vggnet_forward.2} parent=47 // pred_check
          %p6556 = pneg %p192
        $region74: #{vggnet_forward.2} parent=47 // pred_check_branch
          %6558 = sbr.rel (%p6556) target = $region76
        $region75: #{vggnet_forward.2} parent=47 // pred_region
          _
        $region76: #{vggnet_forward.2} parent=47 // pred_fallthru
          _
      $region48: #{vggnet_forward.2} parent=5 // pred_fallthru
        _
      %p6559 = scmp.le.s32.totalorder 2, %s17
      // Predicated region
      $region77: #{vggnet_forward.2} parent=5 // pred_check
        %p6560 = pneg %p6559
      $region78: #{vggnet_forward.2} parent=5 // pred_check_branch
        %6562 = sbr.rel (%p6560) target = $region80
      $region79: #{vggnet_forward.2} parent=5 // pred_region
        %s6563 = ssub.s32 %s17, 2
        // Predicated region
        $region81: #{vggnet_forward.2} parent=79 // pred_check
          %p6564 = pneg %p198
        $region82: #{vggnet_forward.2} parent=79 // pred_check_branch
          %6566 = sbr.rel (%p6564) target = $region84
        $region83: #{vggnet_forward.2} parent=79 // pred_region
          %p6567 = scmp.lt.s32.totalorder %s23, 1
          %s6568 = scalar_select %p6567, %s23, 1
          %s6569 = smul.addr %s6568, 7
          %s6570 = smul.addr %s6569, 4
          %s6571 = scalar_lea.vmem %s7, %s6570
        $region84: #{vggnet_forward.2} parent=79 // pred_fallthru
          _
      $region80: #{vggnet_forward.2} parent=5 // pred_fallthru
        _
    $region6: #{vggnet_forward.2} parent=1 // loop_footer
      %s21 = sadd.s32 1, %s17
    $region7: #{vggnet_forward.2} parent=1 // loop_footer_branch
      %16 = sbr.rel target = $region3
    $region8: #{vggnet_forward.2} parent=1 // loop_exit
      _
    %6572 = vsyncpa [#allocation3], 1
    %s6573 = scalar_lea.sflag [#allocation3], 1
    %6574 = vsyncpa %s6573, 1
    %6575 = vsyncpa [#allocation5], 1
    %6576 = vsyncpa [#allocation8], 1
    %6577 = vsyncpa [#allocation11], 1

</llo_original>
